<compile_context>
chip_gen: v6e
topology: v6e:2x2x1
jax: 0.10.0
libtpu: 0.0.40
codegen_flags: <defaults>
</compile_context>

<pallas_src>
import functools

import jax
import jax.numpy as jnp
from jax import lax
from jax.experimental import pallas as pl
from jax.experimental.pallas import tpu as pltpu

_VMEM = pl.BlockSpec(memory_space=pltpu.MemorySpace.VMEM)
_PARALLEL1 = pltpu.CompilerParams(dimension_semantics=("parallel",))

IMAGENET_MEAN = (0.485, 0.456, 0.406)
IMAGENET_STD = (0.229, 0.224, 0.225)


# ----------------------------- Pallas kernels ------------------------------

def _stage_kernel(x_ref, w_ref, b_ref, o_ref):
    """One fused backbone stage for BOTH networks: 1x1 conv, stride 2, + ReLU.

    x_ref: (1, Ho, 1, Wo, 2*Cin).  The size-1 block on the row-parity axis
    already selected the even input rows; the first Cin lanes of the merged
    (2*Cin) axis are the even input columns, so the stride-2 1x1 conv reduces
    to a plain channel matmul over the decimated pixels.
    """
    cin, cout = w_ref.shape
    n = o_ref.shape[1]                                   # Ho * Wo rows
    x = x_ref[0, :, 0, :, :]                             # (Ho, Wo, 2*Cin)
    x = x[:, :, :cin]                                    # even cols -> (Ho, Wo, Cin)
    x = x.reshape(n, cin)                                # lane dim unchanged
    y = jnp.dot(x.astype(jnp.bfloat16),                  # bf16 operands,
                w_ref[...].astype(jnp.bfloat16),         # f32 accumulation (MXU)
                preferred_element_type=jnp.float32)
    o_ref[0] = jnp.maximum(y + b_ref[...], 0.0)          # bias + ReLU in f32 (VPU)


def _pool_cosdist_kernel(f_ref, o_ref, *, pool):
    """Fused AvgPool2d(3,1,1) + F.normalize + 0.5*||t_n - s_n||^2 per pixel.

    f_ref: (1, H, W, 2C) with teacher channels [:C] and student channels [C:]
    (C sits on the 128-lane axis).  count_include_pad=True -> divisor 9.
    """
    x = f_ref[0]                                         # (H, W, 2C) f32
    c = x.shape[-1] // 2
    if pool:
        xp = jnp.pad(x, ((1, 1), (0, 0), (0, 0)))        # separable 3x3 box sum:
        x = xp[:-2] + xp[1:-1] + xp[2:]                  #   row pass (2 adds)
        xp = jnp.pad(x, ((0, 0), (1, 1), (0, 0)))
        x = (xp[:, :-2] + xp[:, 1:-1] + xp[:, 2:]) * (1.0 / 9.0)  # col pass
    t = x[..., :c]
    s = x[..., c:]
    eps2 = 1e-24                                         # (F.normalize eps=1e-12)^2
    tn = t * lax.rsqrt(jnp.maximum(jnp.sum(t * t, -1, keepdims=True), eps2))
    sn = s * lax.rsqrt(jnp.maximum(jnp.sum(s * s, -1, keepdims=True), eps2))
    d = tn - sn
    o_ref[0] = 0.5 * jnp.sum(d * d, axis=-1)             # (H, W)


def _combine3_kernel(m1_ref, m2_ref, m3_ref, o_ref):
    # anomaly_map = product over the 3 upsampled per-layer maps (lane-dense view)
    o_ref[...] = m1_ref[...] * m2_ref[...] * m3_ref[...]


# ----------------------------- wrappers -------------------------------------

def fused_conv1x1_s2_relu(x_nhwc, w_cat, b_cat):
    """Stride-2 1x1 conv + bias + ReLU on the concatenated (teacher|student)
    channel stack.  No host-side transposes or strided slices: the reshape
    below is contiguous (free) and the decimation happens in the BlockSpec /
    kernel."""
    bsz, h, wsp, cin = x_nhwc.shape
    cout = w_cat.shape[1]
    ho, wo = h // 2, wsp // 2
    xr = x_nhwc.reshape(bsz, ho, 2, wo, 2 * cin)          # free contiguous reshape
    out = pl.pallas_call(
        _stage_kernel,
        out_shape=jax.ShapeDtypeStruct((bsz, ho * wo, cout), jnp.float32),
        grid=(bsz,),
        in_specs=[
            pl.BlockSpec((1, ho, 1, wo, 2 * cin), lambda i: (i, 0, 0, 0, 0)),
            pl.BlockSpec((cin, cout), lambda i: (0, 0)),
            pl.BlockSpec((1, cout), lambda i: (0, 0)),
        ],
        out_specs=pl.BlockSpec((1, ho * wo, cout), lambda i: (i, 0, 0)),
        compiler_params=_PARALLEL1,
    )(xr, w_cat, b_cat.reshape(1, cout))
    return out.reshape(bsz, ho, wo, cout)                 # free contiguous reshape


def pooled_layer_anomaly_map(feat_cat, use_feature_pooler=True):
    """Fused feature-pooler + per-layer cosine-distance anomaly map."""
    bsz, h, wsp, c2 = feat_cat.shape
    kernel = functools.partial(_pool_cosdist_kernel, pool=use_feature_pooler)
    return pl.pallas_call(
        kernel,
        out_shape=jax.ShapeDtypeStruct((bsz, h, wsp), jnp.float32),
        grid=(bsz,),
        in_specs=[pl.BlockSpec((1, h, wsp, c2), lambda i: (i, 0, 0, 0))],
        out_specs=pl.BlockSpec((1, h, wsp), lambda i: (i, 0, 0)),
        compiler_params=_PARALLEL1,
    )(feat_cat)


def combine_maps(m1, m2, m3):
    # lane-dense (B, H*W) view; tiny arrays -> single gridless call.
    bsz, h, wsp = m1.shape
    n = h * wsp
    out = pl.pallas_call(
        _combine3_kernel,
        out_shape=jax.ShapeDtypeStruct((bsz, n), jnp.float32),
        in_specs=[_VMEM, _VMEM, _VMEM],
        out_specs=_VMEM,
    )(m1.reshape(bsz, n), m2.reshape(bsz, n), m3.reshape(bsz, n))
    return out.reshape(bsz, h, wsp)


# ----------------------------- synthetic backbone ---------------------------

def init_backbone_params(key, cin=3, widths=(64, 64, 64)):
    """Per-network stage params for the synthetic 3-stage stride-2 pyramid."""
    params = []
    c_prev = cin
    for c in widths:
        key, kw, kb = jax.random.split(key, 3)
        w = jax.random.normal(kw, (c_prev, c), jnp.float32) / jnp.sqrt(float(c_prev))
        b = 0.01 * jax.random.normal(kb, (c,), jnp.float32)
        params.append((w, b))
        c_prev = c
    return params


def fuse_backbones(expert_params, apprentice_params):
    """Build per-stage concatenated weights so one matmul per stage evaluates
    expert AND apprentice (teacher channels first, student channels second).
    The ImageNet normalization (x - mean) / std is folded into stage 1."""
    mean = jnp.array(IMAGENET_MEAN, jnp.float32)
    inv_std = 1.0 / jnp.array(IMAGENET_STD, jnp.float32)

    def fold(w, b):
        return w * inv_std[:, None], b - (mean * inv_std) @ w

    fused = []
    for k, ((we, be), (wa, ba)) in enumerate(zip(expert_params, apprentice_params)):
        if k == 0:
            we, be = fold(we, be)
            wa, ba = fold(wa, ba)
            w_cat = jnp.concatenate([we, wa], axis=1)                 # (3, 2C)
        else:
            zt = jnp.zeros((we.shape[0], wa.shape[1]), jnp.float32)
            zb = jnp.zeros((wa.shape[0], we.shape[1]), jnp.float32)
            w_cat = jnp.concatenate(                                  # block-diag
                [jnp.concatenate([we, zt], axis=1),
                 jnp.concatenate([zb, wa], axis=1)], axis=0)          # (2C, 2C)
        b_cat = jnp.concatenate([be, ba])
        fused.append((w_cat, b_cat))
    return fused


# ----------------------------- IKD forward (eval mode) ----------------------

def ikd_forward(x_nchw, fused_params, input_size, use_feature_pooler=True):
    # NCHW (PyTorch convention) -> NHWC once; everything downstream stays NHWC.
    # TODO(synk): Tiler tile/untile path (use_tiler) not implemented.
    x = jnp.transpose(x_nchw, (0, 2, 3, 1)).astype(jnp.float32)
    layer_maps = []
    feat = x
    for (w_cat, b_cat) in fused_params:
        feat = fused_conv1x1_s2_relu(feat, w_cat, b_cat)        # (B, H/2, W/2, 2C)
        lm = pooled_layer_anomaly_map(feat, use_feature_pooler)  # (B, Hf, Wf)
        # TODO(synk): bilinear upsample kept as XLA glue (align_corners=False).
        lm = jax.image.resize(lm, (lm.shape[0],) + tuple(input_size),
                              method="bilinear")
        layer_maps.append(lm)
    # AnomalyMapGenerator: product of per-layer maps == generator()[:, 0, ...]
    return combine_maps(*layer_maps)                             # (B, H, W)


# ----------------------------- demo ------------------------------------------

if __name__ == "__main__":
    key = jax.random.PRNGKey(0)
    kx, ke, ka = jax.random.split(key, 3)

    B, H, W = 2, 64, 64
    x = jax.random.uniform(kx, (B, 3, H, W), jnp.float32)        # image in [0, 1]

    expert_params = init_backbone_params(ke)      # "pretrained" expert (frozen)
    apprentice_params = init_backbone_params(ka)  # apprentice
    fused_params = fuse_backbones(expert_params, apprentice_params)

    fwd = jax.jit(functools.partial(ikd_forward, input_size=(H, W)))
    amap = fwd(x, fused_params)
    jax.block_until_ready(amap)

    assert amap.shape == (B, H, W), amap.shape
    assert amap.dtype == jnp.float32
    assert bool(jnp.all(jnp.isfinite(amap)))
    print("KERNEL_OK")
</pallas_src>

<mosaic_0001>
module attributes {stable_mosaic.version = 11 : i64} {
  func.func @_stage_kernel(%arg0: i32, %arg1: memref<1x32x1x32x6xf32, #tpu.memory_space<vmem>>, %arg2: memref<3x128xf32, #tpu.memory_space<vmem>>, %arg3: memref<1x128xf32, #tpu.memory_space<vmem>>, %arg4: memref<1x1024x128xf32, #tpu.memory_space<vmem>>) attributes {dimension_semantics = [#tpu.dimension_semantics<parallel>], iteration_bounds = array<i64: 2>, scalar_prefetch = 0 : i64, scratch_operands = 0 : i64, tpu.core_type = #tpu.core_type<tc>, window_params = [{transform_indices = @transform_0, window_bounds = array<i64: 1, 32, 1, 32, 6>}, {pipeline_mode = #tpu.pipeline_mode<synchronous>, transform_indices = @transform_1, window_bounds = array<i64: 3, 128>}, {pipeline_mode = #tpu.pipeline_mode<synchronous>, transform_indices = @transform_2, window_bounds = array<i64: 1, 128>}, {transform_indices = @transform_3, window_bounds = array<i64: 1, 1024, 128>}]} {
    %c0 = arith.constant 0 : index
    %c0_0 = arith.constant 0 : index
    %c0_1 = arith.constant 0 : index
    %c0_2 = arith.constant 0 : index
    %c0_3 = arith.constant 0 : index
    %0 = vector.load %arg1[%c0, %c0_0, %c0_1, %c0_2, %c0_3] : memref<1x32x1x32x6xf32, #tpu.memory_space<vmem>>, vector<1x32x1x32x6xf32>
    %1 = vector.shape_cast %0 : vector<1x32x1x32x6xf32> to vector<32x32x6xf32>
    %2 = vector.extract_strided_slice %1 {offsets = [0, 0, 0], sizes = [32, 32, 3], strides = [1, 1, 1]} : vector<32x32x6xf32> to vector<32x32x3xf32>
    %3 = vector.shape_cast %2 : vector<32x32x3xf32> to vector<1024x3xf32>
    %4 = arith.truncf %3 : vector<1024x3xf32> to vector<1024x3xbf16>
    %c0_4 = arith.constant 0 : index
    %c0_5 = arith.constant 0 : index
    %5 = vector.load %arg2[%c0_4, %c0_5] : memref<3x128xf32, #tpu.memory_space<vmem>>, vector<3x128xf32>
    %6 = arith.truncf %5 : vector<3x128xf32> to vector<3x128xbf16>
    %cst = arith.constant dense<0.000000e+00> : vector<1024x128xf32>
    %7 = tpu.matmul %4, %6, %cst {dimension_numbers = #tpu.dot_dimension_numbers<[1], [0], [0], [1], [0, 0, 1, 1], [], []>} : vector<1024x3xbf16>, vector<3x128xbf16>, vector<1024x128xf32> -> vector<1024x128xf32>
    %c0_6 = arith.constant 0 : index
    %c0_7 = arith.constant 0 : index
    %8 = vector.load %arg3[%c0_6, %c0_7] : memref<1x128xf32, #tpu.memory_space<vmem>>, vector<1x128xf32>
    %9 = vector.broadcast %8 : vector<1x128xf32> to vector<1024x128xf32>
    %10 = arith.addf %7, %9 : vector<1024x128xf32>
    %cst_8 = arith.constant 0.000000e+00 : f32
    %11 = vector.broadcast %cst_8 : f32 to vector<1024x128xf32>
    %12 = arith.maximumf %10, %11 : vector<1024x128xf32>
    %c0_9 = arith.constant 0 : index
    %c0_10 = arith.constant 0 : index
    %c0_11 = arith.constant 0 : index
    %13 = vector.load %arg4[%c0_9, %c0_10, %c0_11] : memref<1x1024x128xf32, #tpu.memory_space<vmem>>, vector<1x1024x128xf32>
    %14 = vector.shape_cast %13 : vector<1x1024x128xf32> to vector<1024x128xf32>
    %15 = vector.shape_cast %12 : vector<1024x128xf32> to vector<1x1024x128xf32>
    tpu.vector_store %arg4[%c0_9, %c0_10, %c0_11], %15 {strides = array<i32>} : memref<1x1024x128xf32, #tpu.memory_space<vmem>>, vector<1x1024x128xf32>,
    return
  }
  func.func @transform_0(%arg0: i32) -> (i32, i32, i32, i32, i32) {
    %c0_i32 = arith.constant 0 : i32
    %c0_i32_0 = arith.constant 0 : i32
    %c0_i32_1 = arith.constant 0 : i32
    %c0_i32_2 = arith.constant 0 : i32
    %c0_i32_3 = arith.constant 0 : i32
    return %arg0, %c0_i32, %c0_i32_0, %c0_i32_1, %c0_i32_2 : i32, i32, i32, i32, i32
  }
  func.func @transform_1(%arg0: i32) -> (i32, i32) {
    %c0_i32 = arith.constant 0 : i32
    %c0_i32_0 = arith.constant 0 : i32
    %c0_i32_1 = arith.constant 0 : i32
    return %c0_i32, %c0_i32_0 : i32, i32
  }
  func.func @transform_2(%arg0: i32) -> (i32, i32) {
    %c0_i32 = arith.constant 0 : i32
    %c0_i32_0 = arith.constant 0 : i32
    %c0_i32_1 = arith.constant 0 : i32
    return %c0_i32, %c0_i32_0 : i32, i32
  }
  func.func @transform_3(%arg0: i32) -> (i32, i32, i32) {
    %c0_i32 = arith.constant 0 : i32
    %c0_i32_0 = arith.constant 0 : i32
    %c0_i32_1 = arith.constant 0 : i32
    return %arg0, %c0_i32, %c0_i32_0 : i32, i32, i32
  }
}

module attributes {stable_mosaic.version = 11 : i64} {
  func.func @_pool_cosdist_kernel(%arg0: i32, %arg1: memref<1x32x32x128xf32, #tpu.memory_space<vmem>>, %arg2: memref<1x32x32xf32, #tpu.memory_space<vmem>>) attributes {dimension_semantics = [#tpu.dimension_semantics<parallel>], iteration_bounds = array<i64: 2>, scalar_prefetch = 0 : i64, scratch_operands = 0 : i64, tpu.core_type = #tpu.core_type<tc>, window_params = [{transform_indices = @transform_0, window_bounds = array<i64: 1, 32, 32, 128>}, {transform_indices = @transform_1, window_bounds = array<i64: 1, 32, 32>}]} {
    %c0 = arith.constant 0 : index
    %c0_0 = arith.constant 0 : index
    %c0_1 = arith.constant 0 : index
    %c0_2 = arith.constant 0 : index
    %0 = vector.load %arg1[%c0, %c0_0, %c0_1, %c0_2] : memref<1x32x32x128xf32, #tpu.memory_space<vmem>>, vector<1x32x32x128xf32>
    %1 = vector.shape_cast %0 : vector<1x32x32x128xf32> to vector<32x32x128xf32>
    %c0_i32 = arith.constant 0 : i32
    %2 = arith.sitofp %c0_i32 : i32 to f32
    %3 = vector.broadcast %2 : f32 to vector<1x32x128xf32>
    %4 = tpu.concatenate %3, %1 in 0 : vector<1x32x128xf32>, vector<32x32x128xf32> -> vector<33x32x128xf32>
    %5 = vector.broadcast %2 : f32 to vector<1x32x128xf32>
    %6 = tpu.concatenate %4, %5 in 0 : vector<33x32x128xf32>, vector<1x32x128xf32> -> vector<34x32x128xf32>
    %7 = vector.extract_strided_slice %6 {offsets = [0, 0, 0], sizes = [32, 32, 128], strides = [1, 1, 1]} : vector<34x32x128xf32> to vector<32x32x128xf32>
    %8 = vector.extract_strided_slice %6 {offsets = [1, 0, 0], sizes = [32, 32, 128], strides = [1, 1, 1]} : vector<34x32x128xf32> to vector<32x32x128xf32>
    %9 = arith.addf %7, %8 : vector<32x32x128xf32>
    %10 = vector.extract_strided_slice %6 {offsets = [2, 0, 0], sizes = [32, 32, 128], strides = [1, 1, 1]} : vector<34x32x128xf32> to vector<32x32x128xf32>
    %11 = arith.addf %9, %10 : vector<32x32x128xf32>
    %c0_i32_3 = arith.constant 0 : i32
    %12 = arith.sitofp %c0_i32_3 : i32 to f32
    %13 = vector.broadcast %12 : f32 to vector<32x1x128xf32>
    %14 = tpu.concatenate %13, %11 in 1 : vector<32x1x128xf32>, vector<32x32x128xf32> -> vector<32x33x128xf32>
    %15 = vector.broadcast %12 : f32 to vector<32x1x128xf32>
    %16 = tpu.concatenate %14, %15 in 1 : vector<32x33x128xf32>, vector<32x1x128xf32> -> vector<32x34x128xf32>
    %17 = vector.extract_strided_slice %16 {offsets = [0, 0, 0], sizes = [32, 32, 128], strides = [1, 1, 1]} : vector<32x34x128xf32> to vector<32x32x128xf32>
    %18 = vector.extract_strided_slice %16 {offsets = [0, 1, 0], sizes = [32, 32, 128], strides = [1, 1, 1]} : vector<32x34x128xf32> to vector<32x32x128xf32>
    %19 = arith.addf %17, %18 : vector<32x32x128xf32>
    %20 = vector.extract_strided_slice %16 {offsets = [0, 2, 0], sizes = [32, 32, 128], strides = [1, 1, 1]} : vector<32x34x128xf32> to vector<32x32x128xf32>
    %21 = arith.addf %19, %20 : vector<32x32x128xf32>
    %cst = arith.constant 0.111111112 : f32
    %22 = vector.broadcast %cst : f32 to vector<32x32x128xf32>
    %23 = arith.mulf %21, %22 : vector<32x32x128xf32>
    %24 = vector.extract_strided_slice %23 {offsets = [0, 0, 0], sizes = [32, 32, 64], strides = [1, 1, 1]} : vector<32x32x128xf32> to vector<32x32x64xf32>
    %25 = vector.extract_strided_slice %23 {offsets = [0, 0, 64], sizes = [32, 32, 64], strides = [1, 1, 1]} : vector<32x32x128xf32> to vector<32x32x64xf32>
    %26 = arith.mulf %24, %24 : vector<32x32x64xf32>
    %cst_4 = arith.constant dense<0.000000e+00> : vector<32x32xf32>
    %27 = vector.multi_reduction <add>, %26, %cst_4 [2] : vector<32x32x64xf32> to vector<32x32xf32>
    %28 = vector.shape_cast %27 : vector<32x32xf32> to vector<32x32x1xf32>
    %cst_5 = arith.constant 1.000000e-24 : f32
    %29 = vector.broadcast %cst_5 : f32 to vector<32x32x1xf32>
    %30 = arith.maximumf %28, %29 : vector<32x32x1xf32>
    %31 = math.rsqrt %30 : vector<32x32x1xf32>
    %32 = vector.broadcast %31 : vector<32x32x1xf32> to vector<32x32x64xf32>
    %33 = arith.mulf %24, %32 : vector<32x32x64xf32>
    %34 = arith.mulf %25, %25 : vector<32x32x64xf32>
    %cst_6 = arith.constant dense<0.000000e+00> : vector<32x32xf32>
    %35 = vector.multi_reduction <add>, %34, %cst_6 [2] : vector<32x32x64xf32> to vector<32x32xf32>
    %36 = vector.shape_cast %35 : vector<32x32xf32> to vector<32x32x1xf32>
    %cst_7 = arith.constant 1.000000e-24 : f32
    %37 = vector.broadcast %cst_7 : f32 to vector<32x32x1xf32>
    %38 = arith.maximumf %36, %37 : vector<32x32x1xf32>
    %39 = math.rsqrt %38 : vector<32x32x1xf32>
    %40 = vector.broadcast %39 : vector<32x32x1xf32> to vector<32x32x64xf32>
    %41 = arith.mulf %25, %40 : vector<32x32x64xf32>
    %42 = arith.subf %33, %41 : vector<32x32x64xf32>
    %43 = arith.mulf %42, %42 : vector<32x32x64xf32>
    %cst_8 = arith.constant dense<0.000000e+00> : vector<32x32xf32>
    %44 = vector.multi_reduction <add>, %43, %cst_8 [2] : vector<32x32x64xf32> to vector<32x32xf32>
    %cst_9 = arith.constant 5.000000e-01 : f32
    %45 = vector.broadcast %cst_9 : f32 to vector<32x32xf32>
    %46 = arith.mulf %45, %44 : vector<32x32xf32>
    %c0_10 = arith.constant 0 : index
    %c0_11 = arith.constant 0 : index
    %c0_12 = arith.constant 0 : index
    %47 = vector.load %arg2[%c0_10, %c0_11, %c0_12] : memref<1x32x32xf32, #tpu.memory_space<vmem>>, vector<1x32x32xf32>
    %48 = vector.shape_cast %47 : vector<1x32x32xf32> to vector<32x32xf32>
    %49 = vector.shape_cast %46 : vector<32x32xf32> to vector<1x32x32xf32>
    tpu.vector_store %arg2[%c0_10, %c0_11, %c0_12], %49 {strides = array<i32>} : memref<1x32x32xf32, #tpu.memory_space<vmem>>, vector<1x32x32xf32>,
    return
  }
  func.func @transform_0(%arg0: i32) -> (i32, i32, i32, i32) {
    %c0_i32 = arith.constant 0 : i32
    %c0_i32_0 = arith.constant 0 : i32
    %c0_i32_1 = arith.constant 0 : i32
    %c0_i32_2 = arith.constant 0 : i32
    return %arg0, %c0_i32, %c0_i32_0, %c0_i32_1 : i32, i32, i32, i32
  }
  func.func @transform_1(%arg0: i32) -> (i32, i32, i32) {
    %c0_i32 = arith.constant 0 : i32
    %c0_i32_0 = arith.constant 0 : i32
    %c0_i32_1 = arith.constant 0 : i32
    return %arg0, %c0_i32, %c0_i32_0 : i32, i32, i32
  }
}

module attributes {stable_mosaic.version = 11 : i64} {
  func.func @_stage_kernel(%arg0: i32, %arg1: memref<1x16x1x16x256xf32, #tpu.memory_space<vmem>>, %arg2: memref<128x128xf32, #tpu.memory_space<vmem>>, %arg3: memref<1x128xf32, #tpu.memory_space<vmem>>, %arg4: memref<1x256x128xf32, #tpu.memory_space<vmem>>) attributes {dimension_semantics = [#tpu.dimension_semantics<parallel>], iteration_bounds = array<i64: 2>, scalar_prefetch = 0 : i64, scratch_operands = 0 : i64, tpu.core_type = #tpu.core_type<tc>, window_params = [{transform_indices = @transform_0, window_bounds = array<i64: 1, 16, 1, 16, 256>}, {pipeline_mode = #tpu.pipeline_mode<synchronous>, transform_indices = @transform_1, window_bounds = array<i64: 128, 128>}, {pipeline_mode = #tpu.pipeline_mode<synchronous>, transform_indices = @transform_2, window_bounds = array<i64: 1, 128>}, {transform_indices = @transform_3, window_bounds = array<i64: 1, 256, 128>}]} {
    %c0 = arith.constant 0 : index
    %c0_0 = arith.constant 0 : index
    %c0_1 = arith.constant 0 : index
    %c0_2 = arith.constant 0 : index
    %c0_3 = arith.constant 0 : index
    %0 = vector.load %arg1[%c0, %c0_0, %c0_1, %c0_2, %c0_3] : memref<1x16x1x16x256xf32, #tpu.memory_space<vmem>>, vector<1x16x1x16x256xf32>
    %1 = vector.shape_cast %0 : vector<1x16x1x16x256xf32> to vector<16x16x256xf32>
    %2 = vector.extract_strided_slice %1 {offsets = [0, 0, 0], sizes = [16, 16, 128], strides = [1, 1, 1]} : vector<16x16x256xf32> to vector<16x16x128xf32>
    %3 = vector.shape_cast %2 : vector<16x16x128xf32> to vector<256x128xf32>
    %4 = arith.truncf %3 : vector<256x128xf32> to vector<256x128xbf16>
    %c0_4 = arith.constant 0 : index
    %c0_5 = arith.constant 0 : index
    %5 = vector.load %arg2[%c0_4, %c0_5] : memref<128x128xf32, #tpu.memory_space<vmem>>, vector<128x128xf32>
    %6 = arith.truncf %5 : vector<128x128xf32> to vector<128x128xbf16>
    %cst = arith.constant dense<0.000000e+00> : vector<256x128xf32>
    %7 = tpu.matmul %4, %6, %cst {dimension_numbers = #tpu.dot_dimension_numbers<[1], [0], [0], [1], [0, 0, 1, 1], [], []>} : vector<256x128xbf16>, vector<128x128xbf16>, vector<256x128xf32> -> vector<256x128xf32>
    %c0_6 = arith.constant 0 : index
    %c0_7 = arith.constant 0 : index
    %8 = vector.load %arg3[%c0_6, %c0_7] : memref<1x128xf32, #tpu.memory_space<vmem>>, vector<1x128xf32>
    %9 = vector.broadcast %8 : vector<1x128xf32> to vector<256x128xf32>
    %10 = arith.addf %7, %9 : vector<256x128xf32>
    %cst_8 = arith.constant 0.000000e+00 : f32
    %11 = vector.broadcast %cst_8 : f32 to vector<256x128xf32>
    %12 = arith.maximumf %10, %11 : vector<256x128xf32>
    %c0_9 = arith.constant 0 : index
    %c0_10 = arith.constant 0 : index
    %c0_11 = arith.constant 0 : index
    %13 = vector.load %arg4[%c0_9, %c0_10, %c0_11] : memref<1x256x128xf32, #tpu.memory_space<vmem>>, vector<1x256x128xf32>
    %14 = vector.shape_cast %13 : vector<1x256x128xf32> to vector<256x128xf32>
    %15 = vector.shape_cast %12 : vector<256x128xf32> to vector<1x256x128xf32>
    tpu.vector_store %arg4[%c0_9, %c0_10, %c0_11], %15 {strides = array<i32>} : memref<1x256x128xf32, #tpu.memory_space<vmem>>, vector<1x256x128xf32>,
    return
  }
  func.func @transform_0(%arg0: i32) -> (i32, i32, i32, i32, i32) {
    %c0_i32 = arith.constant 0 : i32
    %c0_i32_0 = arith.constant 0 : i32
    %c0_i32_1 = arith.constant 0 : i32
    %c0_i32_2 = arith.constant 0 : i32
    %c0_i32_3 = arith.constant 0 : i32
    return %arg0, %c0_i32, %c0_i32_0, %c0_i32_1, %c0_i32_2 : i32, i32, i32, i32, i32
  }
  func.func @transform_1(%arg0: i32) -> (i32, i32) {
    %c0_i32 = arith.constant 0 : i32
    %c0_i32_0 = arith.constant 0 : i32
    %c0_i32_1 = arith.constant 0 : i32
    return %c0_i32, %c0_i32_0 : i32, i32
  }
  func.func @transform_2(%arg0: i32) -> (i32, i32) {
    %c0_i32 = arith.constant 0 : i32
    %c0_i32_0 = arith.constant 0 : i32
    %c0_i32_1 = arith.constant 0 : i32
    return %c0_i32, %c0_i32_0 : i32, i32
  }
  func.func @transform_3(%arg0: i32) -> (i32, i32, i32) {
    %c0_i32 = arith.constant 0 : i32
    %c0_i32_0 = arith.constant 0 : i32
    %c0_i32_1 = arith.constant 0 : i32
    return %arg0, %c0_i32, %c0_i32_0 : i32, i32, i32
  }
}

module attributes {stable_mosaic.version = 11 : i64} {
  func.func @_pool_cosdist_kernel(%arg0: i32, %arg1: memref<1x16x16x128xf32, #tpu.memory_space<vmem>>, %arg2: memref<1x16x16xf32, #tpu.memory_space<vmem>>) attributes {dimension_semantics = [#tpu.dimension_semantics<parallel>], iteration_bounds = array<i64: 2>, scalar_prefetch = 0 : i64, scratch_operands = 0 : i64, tpu.core_type = #tpu.core_type<tc>, window_params = [{transform_indices = @transform_0, window_bounds = array<i64: 1, 16, 16, 128>}, {transform_indices = @transform_1, window_bounds = array<i64: 1, 16, 16>}]} {
    %c0 = arith.constant 0 : index
    %c0_0 = arith.constant 0 : index
    %c0_1 = arith.constant 0 : index
    %c0_2 = arith.constant 0 : index
    %0 = vector.load %arg1[%c0, %c0_0, %c0_1, %c0_2] : memref<1x16x16x128xf32, #tpu.memory_space<vmem>>, vector<1x16x16x128xf32>
    %1 = vector.shape_cast %0 : vector<1x16x16x128xf32> to vector<16x16x128xf32>
    %c0_i32 = arith.constant 0 : i32
    %2 = arith.sitofp %c0_i32 : i32 to f32
    %3 = vector.broadcast %2 : f32 to vector<1x16x128xf32>
    %4 = tpu.concatenate %3, %1 in 0 : vector<1x16x128xf32>, vector<16x16x128xf32> -> vector<17x16x128xf32>
    %5 = vector.broadcast %2 : f32 to vector<1x16x128xf32>
    %6 = tpu.concatenate %4, %5 in 0 : vector<17x16x128xf32>, vector<1x16x128xf32> -> vector<18x16x128xf32>
    %7 = vector.extract_strided_slice %6 {offsets = [0, 0, 0], sizes = [16, 16, 128], strides = [1, 1, 1]} : vector<18x16x128xf32> to vector<16x16x128xf32>
    %8 = vector.extract_strided_slice %6 {offsets = [1, 0, 0], sizes = [16, 16, 128], strides = [1, 1, 1]} : vector<18x16x128xf32> to vector<16x16x128xf32>
    %9 = arith.addf %7, %8 : vector<16x16x128xf32>
    %10 = vector.extract_strided_slice %6 {offsets = [2, 0, 0], sizes = [16, 16, 128], strides = [1, 1, 1]} : vector<18x16x128xf32> to vector<16x16x128xf32>
    %11 = arith.addf %9, %10 : vector<16x16x128xf32>
    %c0_i32_3 = arith.constant 0 : i32
    %12 = arith.sitofp %c0_i32_3 : i32 to f32
    %13 = vector.broadcast %12 : f32 to vector<16x1x128xf32>
    %14 = tpu.concatenate %13, %11 in 1 : vector<16x1x128xf32>, vector<16x16x128xf32> -> vector<16x17x128xf32>
    %15 = vector.broadcast %12 : f32 to vector<16x1x128xf32>
    %16 = tpu.concatenate %14, %15 in 1 : vector<16x17x128xf32>, vector<16x1x128xf32> -> vector<16x18x128xf32>
    %17 = vector.extract_strided_slice %16 {offsets = [0, 0, 0], sizes = [16, 16, 128], strides = [1, 1, 1]} : vector<16x18x128xf32> to vector<16x16x128xf32>
    %18 = vector.extract_strided_slice %16 {offsets = [0, 1, 0], sizes = [16, 16, 128], strides = [1, 1, 1]} : vector<16x18x128xf32> to vector<16x16x128xf32>
    %19 = arith.addf %17, %18 : vector<16x16x128xf32>
    %20 = vector.extract_strided_slice %16 {offsets = [0, 2, 0], sizes = [16, 16, 128], strides = [1, 1, 1]} : vector<16x18x128xf32> to vector<16x16x128xf32>
    %21 = arith.addf %19, %20 : vector<16x16x128xf32>
    %cst = arith.constant 0.111111112 : f32
    %22 = vector.broadcast %cst : f32 to vector<16x16x128xf32>
    %23 = arith.mulf %21, %22 : vector<16x16x128xf32>
    %24 = vector.extract_strided_slice %23 {offsets = [0, 0, 0], sizes = [16, 16, 64], strides = [1, 1, 1]} : vector<16x16x128xf32> to vector<16x16x64xf32>
    %25 = vector.extract_strided_slice %23 {offsets = [0, 0, 64], sizes = [16, 16, 64], strides = [1, 1, 1]} : vector<16x16x128xf32> to vector<16x16x64xf32>
    %26 = arith.mulf %24, %24 : vector<16x16x64xf32>
    %cst_4 = arith.constant dense<0.000000e+00> : vector<16x16xf32>
    %27 = vector.multi_reduction <add>, %26, %cst_4 [2] : vector<16x16x64xf32> to vector<16x16xf32>
    %28 = vector.shape_cast %27 : vector<16x16xf32> to vector<16x16x1xf32>
    %cst_5 = arith.constant 1.000000e-24 : f32
    %29 = vector.broadcast %cst_5 : f32 to vector<16x16x1xf32>
    %30 = arith.maximumf %28, %29 : vector<16x16x1xf32>
    %31 = math.rsqrt %30 : vector<16x16x1xf32>
    %32 = vector.broadcast %31 : vector<16x16x1xf32> to vector<16x16x64xf32>
    %33 = arith.mulf %24, %32 : vector<16x16x64xf32>
    %34 = arith.mulf %25, %25 : vector<16x16x64xf32>
    %cst_6 = arith.constant dense<0.000000e+00> : vector<16x16xf32>
    %35 = vector.multi_reduction <add>, %34, %cst_6 [2] : vector<16x16x64xf32> to vector<16x16xf32>
    %36 = vector.shape_cast %35 : vector<16x16xf32> to vector<16x16x1xf32>
    %cst_7 = arith.constant 1.000000e-24 : f32
    %37 = vector.broadcast %cst_7 : f32 to vector<16x16x1xf32>
    %38 = arith.maximumf %36, %37 : vector<16x16x1xf32>
    %39 = math.rsqrt %38 : vector<16x16x1xf32>
    %40 = vector.broadcast %39 : vector<16x16x1xf32> to vector<16x16x64xf32>
    %41 = arith.mulf %25, %40 : vector<16x16x64xf32>
    %42 = arith.subf %33, %41 : vector<16x16x64xf32>
    %43 = arith.mulf %42, %42 : vector<16x16x64xf32>
    %cst_8 = arith.constant dense<0.000000e+00> : vector<16x16xf32>
    %44 = vector.multi_reduction <add>, %43, %cst_8 [2] : vector<16x16x64xf32> to vector<16x16xf32>
    %cst_9 = arith.constant 5.000000e-01 : f32
    %45 = vector.broadcast %cst_9 : f32 to vector<16x16xf32>
    %46 = arith.mulf %45, %44 : vector<16x16xf32>
    %c0_10 = arith.constant 0 : index
    %c0_11 = arith.constant 0 : index
    %c0_12 = arith.constant 0 : index
    %47 = vector.load %arg2[%c0_10, %c0_11, %c0_12] : memref<1x16x16xf32, #tpu.memory_space<vmem>>, vector<1x16x16xf32>
    %48 = vector.shape_cast %47 : vector<1x16x16xf32> to vector<16x16xf32>
    %49 = vector.shape_cast %46 : vector<16x16xf32> to vector<1x16x16xf32>
    tpu.vector_store %arg2[%c0_10, %c0_11, %c0_12], %49 {strides = array<i32>} : memref<1x16x16xf32, #tpu.memory_space<vmem>>, vector<1x16x16xf32>,
    return
  }
  func.func @transform_0(%arg0: i32) -> (i32, i32, i32, i32) {
    %c0_i32 = arith.constant 0 : i32
    %c0_i32_0 = arith.constant 0 : i32
    %c0_i32_1 = arith.constant 0 : i32
    %c0_i32_2 = arith.constant 0 : i32
    return %arg0, %c0_i32, %c0_i32_0, %c0_i32_1 : i32, i32, i32, i32
  }
  func.func @transform_1(%arg0: i32) -> (i32, i32, i32) {
    %c0_i32 = arith.constant 0 : i32
    %c0_i32_0 = arith.constant 0 : i32
    %c0_i32_1 = arith.constant 0 : i32
    return %arg0, %c0_i32, %c0_i32_0 : i32, i32, i32
  }
}

module attributes {stable_mosaic.version = 11 : i64} {
  func.func @_stage_kernel(%arg0: i32, %arg1: memref<1x8x1x8x256xf32, #tpu.memory_space<vmem>>, %arg2: memref<128x128xf32, #tpu.memory_space<vmem>>, %arg3: memref<1x128xf32, #tpu.memory_space<vmem>>, %arg4: memref<1x64x128xf32, #tpu.memory_space<vmem>>) attributes {dimension_semantics = [#tpu.dimension_semantics<parallel>], iteration_bounds = array<i64: 2>, scalar_prefetch = 0 : i64, scratch_operands = 0 : i64, tpu.core_type = #tpu.core_type<tc>, window_params = [{transform_indices = @transform_0, window_bounds = array<i64: 1, 8, 1, 8, 256>}, {pipeline_mode = #tpu.pipeline_mode<synchronous>, transform_indices = @transform_1, window_bounds = array<i64: 128, 128>}, {pipeline_mode = #tpu.pipeline_mode<synchronous>, transform_indices = @transform_2, window_bounds = array<i64: 1, 128>}, {transform_indices = @transform_3, window_bounds = array<i64: 1, 64, 128>}]} {
    %c0 = arith.constant 0 : index
    %c0_0 = arith.constant 0 : index
    %c0_1 = arith.constant 0 : index
    %c0_2 = arith.constant 0 : index
    %c0_3 = arith.constant 0 : index
    %0 = vector.load %arg1[%c0, %c0_0, %c0_1, %c0_2, %c0_3] : memref<1x8x1x8x256xf32, #tpu.memory_space<vmem>>, vector<1x8x1x8x256xf32>
    %1 = vector.shape_cast %0 : vector<1x8x1x8x256xf32> to vector<8x8x256xf32>
    %2 = vector.extract_strided_slice %1 {offsets = [0, 0, 0], sizes = [8, 8, 128], strides = [1, 1, 1]} : vector<8x8x256xf32> to vector<8x8x128xf32>
    %3 = vector.shape_cast %2 : vector<8x8x128xf32> to vector<64x128xf32>
    %4 = arith.truncf %3 : vector<64x128xf32> to vector<64x128xbf16>
    %c0_4 = arith.constant 0 : index
    %c0_5 = arith.constant 0 : index
    %5 = vector.load %arg2[%c0_4, %c0_5] : memref<128x128xf32, #tpu.memory_space<vmem>>, vector<128x128xf32>
    %6 = arith.truncf %5 : vector<128x128xf32> to vector<128x128xbf16>
    %cst = arith.constant dense<0.000000e+00> : vector<64x128xf32>
    %7 = tpu.matmul %4, %6, %cst {dimension_numbers = #tpu.dot_dimension_numbers<[1], [0], [0], [1], [0, 0, 1, 1], [], []>} : vector<64x128xbf16>, vector<128x128xbf16>, vector<64x128xf32> -> vector<64x128xf32>
    %c0_6 = arith.constant 0 : index
    %c0_7 = arith.constant 0 : index
    %8 = vector.load %arg3[%c0_6, %c0_7] : memref<1x128xf32, #tpu.memory_space<vmem>>, vector<1x128xf32>
    %9 = vector.broadcast %8 : vector<1x128xf32> to vector<64x128xf32>
    %10 = arith.addf %7, %9 : vector<64x128xf32>
    %cst_8 = arith.constant 0.000000e+00 : f32
    %11 = vector.broadcast %cst_8 : f32 to vector<64x128xf32>
    %12 = arith.maximumf %10, %11 : vector<64x128xf32>
    %c0_9 = arith.constant 0 : index
    %c0_10 = arith.constant 0 : index
    %c0_11 = arith.constant 0 : index
    %13 = vector.load %arg4[%c0_9, %c0_10, %c0_11] : memref<1x64x128xf32, #tpu.memory_space<vmem>>, vector<1x64x128xf32>
    %14 = vector.shape_cast %13 : vector<1x64x128xf32> to vector<64x128xf32>
    %15 = vector.shape_cast %12 : vector<64x128xf32> to vector<1x64x128xf32>
    tpu.vector_store %arg4[%c0_9, %c0_10, %c0_11], %15 {strides = array<i32>} : memref<1x64x128xf32, #tpu.memory_space<vmem>>, vector<1x64x128xf32>,
    return
  }
  func.func @transform_0(%arg0: i32) -> (i32, i32, i32, i32, i32) {
    %c0_i32 = arith.constant 0 : i32
    %c0_i32_0 = arith.constant 0 : i32
    %c0_i32_1 = arith.constant 0 : i32
    %c0_i32_2 = arith.constant 0 : i32
    %c0_i32_3 = arith.constant 0 : i32
    return %arg0, %c0_i32, %c0_i32_0, %c0_i32_1, %c0_i32_2 : i32, i32, i32, i32, i32
  }
  func.func @transform_1(%arg0: i32) -> (i32, i32) {
    %c0_i32 = arith.constant 0 : i32
    %c0_i32_0 = arith.constant 0 : i32
    %c0_i32_1 = arith.constant 0 : i32
    return %c0_i32, %c0_i32_0 : i32, i32
  }
  func.func @transform_2(%arg0: i32) -> (i32, i32) {
    %c0_i32 = arith.constant 0 : i32
    %c0_i32_0 = arith.constant 0 : i32
    %c0_i32_1 = arith.constant 0 : i32
    return %c0_i32, %c0_i32_0 : i32, i32
  }
  func.func @transform_3(%arg0: i32) -> (i32, i32, i32) {
    %c0_i32 = arith.constant 0 : i32
    %c0_i32_0 = arith.constant 0 : i32
    %c0_i32_1 = arith.constant 0 : i32
    return %arg0, %c0_i32, %c0_i32_0 : i32, i32, i32
  }
}

module attributes {stable_mosaic.version = 11 : i64} {
  func.func @_pool_cosdist_kernel(%arg0: i32, %arg1: memref<1x8x8x128xf32, #tpu.memory_space<vmem>>, %arg2: memref<1x8x8xf32, #tpu.memory_space<vmem>>) attributes {dimension_semantics = [#tpu.dimension_semantics<parallel>], iteration_bounds = array<i64: 2>, scalar_prefetch = 0 : i64, scratch_operands = 0 : i64, tpu.core_type = #tpu.core_type<tc>, window_params = [{transform_indices = @transform_0, window_bounds = array<i64: 1, 8, 8, 128>}, {transform_indices = @transform_1, window_bounds = array<i64: 1, 8, 8>}]} {
    %c0 = arith.constant 0 : index
    %c0_0 = arith.constant 0 : index
    %c0_1 = arith.constant 0 : index
    %c0_2 = arith.constant 0 : index
    %0 = vector.load %arg1[%c0, %c0_0, %c0_1, %c0_2] : memref<1x8x8x128xf32, #tpu.memory_space<vmem>>, vector<1x8x8x128xf32>
    %1 = vector.shape_cast %0 : vector<1x8x8x128xf32> to vector<8x8x128xf32>
    %c0_i32 = arith.constant 0 : i32
    %2 = arith.sitofp %c0_i32 : i32 to f32
    %3 = vector.broadcast %2 : f32 to vector<1x8x128xf32>
    %4 = tpu.concatenate %3, %1 in 0 : vector<1x8x128xf32>, vector<8x8x128xf32> -> vector<9x8x128xf32>
    %5 = vector.broadcast %2 : f32 to vector<1x8x128xf32>
    %6 = tpu.concatenate %4, %5 in 0 : vector<9x8x128xf32>, vector<1x8x128xf32> -> vector<10x8x128xf32>
    %7 = vector.extract_strided_slice %6 {offsets = [0, 0, 0], sizes = [8, 8, 128], strides = [1, 1, 1]} : vector<10x8x128xf32> to vector<8x8x128xf32>
    %8 = vector.extract_strided_slice %6 {offsets = [1, 0, 0], sizes = [8, 8, 128], strides = [1, 1, 1]} : vector<10x8x128xf32> to vector<8x8x128xf32>
    %9 = arith.addf %7, %8 : vector<8x8x128xf32>
    %10 = vector.extract_strided_slice %6 {offsets = [2, 0, 0], sizes = [8, 8, 128], strides = [1, 1, 1]} : vector<10x8x128xf32> to vector<8x8x128xf32>
    %11 = arith.addf %9, %10 : vector<8x8x128xf32>
    %c0_i32_3 = arith.constant 0 : i32
    %12 = arith.sitofp %c0_i32_3 : i32 to f32
    %13 = vector.broadcast %12 : f32 to vector<8x1x128xf32>
    %14 = tpu.concatenate %13, %11 in 1 : vector<8x1x128xf32>, vector<8x8x128xf32> -> vector<8x9x128xf32>
    %15 = vector.broadcast %12 : f32 to vector<8x1x128xf32>
    %16 = tpu.concatenate %14, %15 in 1 : vector<8x9x128xf32>, vector<8x1x128xf32> -> vector<8x10x128xf32>
    %17 = vector.extract_strided_slice %16 {offsets = [0, 0, 0], sizes = [8, 8, 128], strides = [1, 1, 1]} : vector<8x10x128xf32> to vector<8x8x128xf32>
    %18 = vector.extract_strided_slice %16 {offsets = [0, 1, 0], sizes = [8, 8, 128], strides = [1, 1, 1]} : vector<8x10x128xf32> to vector<8x8x128xf32>
    %19 = arith.addf %17, %18 : vector<8x8x128xf32>
    %20 = vector.extract_strided_slice %16 {offsets = [0, 2, 0], sizes = [8, 8, 128], strides = [1, 1, 1]} : vector<8x10x128xf32> to vector<8x8x128xf32>
    %21 = arith.addf %19, %20 : vector<8x8x128xf32>
    %cst = arith.constant 0.111111112 : f32
    %22 = vector.broadcast %cst : f32 to vector<8x8x128xf32>
    %23 = arith.mulf %21, %22 : vector<8x8x128xf32>
    %24 = vector.extract_strided_slice %23 {offsets = [0, 0, 0], sizes = [8, 8, 64], strides = [1, 1, 1]} : vector<8x8x128xf32> to vector<8x8x64xf32>
    %25 = vector.extract_strided_slice %23 {offsets = [0, 0, 64], sizes = [8, 8, 64], strides = [1, 1, 1]} : vector<8x8x128xf32> to vector<8x8x64xf32>
    %26 = arith.mulf %24, %24 : vector<8x8x64xf32>
    %cst_4 = arith.constant dense<0.000000e+00> : vector<8x8xf32>
    %27 = vector.multi_reduction <add>, %26, %cst_4 [2] : vector<8x8x64xf32> to vector<8x8xf32>
    %28 = vector.shape_cast %27 : vector<8x8xf32> to vector<8x8x1xf32>
    %cst_5 = arith.constant 1.000000e-24 : f32
    %29 = vector.broadcast %cst_5 : f32 to vector<8x8x1xf32>
    %30 = arith.maximumf %28, %29 : vector<8x8x1xf32>
    %31 = math.rsqrt %30 : vector<8x8x1xf32>
    %32 = vector.broadcast %31 : vector<8x8x1xf32> to vector<8x8x64xf32>
    %33 = arith.mulf %24, %32 : vector<8x8x64xf32>
    %34 = arith.mulf %25, %25 : vector<8x8x64xf32>
    %cst_6 = arith.constant dense<0.000000e+00> : vector<8x8xf32>
    %35 = vector.multi_reduction <add>, %34, %cst_6 [2] : vector<8x8x64xf32> to vector<8x8xf32>
    %36 = vector.shape_cast %35 : vector<8x8xf32> to vector<8x8x1xf32>
    %cst_7 = arith.constant 1.000000e-24 : f32
    %37 = vector.broadcast %cst_7 : f32 to vector<8x8x1xf32>
    %38 = arith.maximumf %36, %37 : vector<8x8x1xf32>
    %39 = math.rsqrt %38 : vector<8x8x1xf32>
    %40 = vector.broadcast %39 : vector<8x8x1xf32> to vector<8x8x64xf32>
    %41 = arith.mulf %25, %40 : vector<8x8x64xf32>
    %42 = arith.subf %33, %41 : vector<8x8x64xf32>
    %43 = arith.mulf %42, %42 : vector<8x8x64xf32>
    %cst_8 = arith.constant dense<0.000000e+00> : vector<8x8xf32>
    %44 = vector.multi_reduction <add>, %43, %cst_8 [2] : vector<8x8x64xf32> to vector<8x8xf32>
    %cst_9 = arith.constant 5.000000e-01 : f32
    %45 = vector.broadcast %cst_9 : f32 to vector<8x8xf32>
    %46 = arith.mulf %45, %44 : vector<8x8xf32>
    %c0_10 = arith.constant 0 : index
    %c0_11 = arith.constant 0 : index
    %c0_12 = arith.constant 0 : index
    %47 = vector.load %arg2[%c0_10, %c0_11, %c0_12] : memref<1x8x8xf32, #tpu.memory_space<vmem>>, vector<1x8x8xf32>
    %48 = vector.shape_cast %47 : vector<1x8x8xf32> to vector<8x8xf32>
    %49 = vector.shape_cast %46 : vector<8x8xf32> to vector<1x8x8xf32>
    tpu.vector_store %arg2[%c0_10, %c0_11, %c0_12], %49 {strides = array<i32>} : memref<1x8x8xf32, #tpu.memory_space<vmem>>, vector<1x8x8xf32>,
    return
  }
  func.func @transform_0(%arg0: i32) -> (i32, i32, i32, i32) {
    %c0_i32 = arith.constant 0 : i32
    %c0_i32_0 = arith.constant 0 : i32
    %c0_i32_1 = arith.constant 0 : i32
    %c0_i32_2 = arith.constant 0 : i32
    return %arg0, %c0_i32, %c0_i32_0, %c0_i32_1 : i32, i32, i32, i32
  }
  func.func @transform_1(%arg0: i32) -> (i32, i32, i32) {
    %c0_i32 = arith.constant 0 : i32
    %c0_i32_0 = arith.constant 0 : i32
    %c0_i32_1 = arith.constant 0 : i32
    return %arg0, %c0_i32, %c0_i32_0 : i32, i32, i32
  }
}

module attributes {stable_mosaic.version = 11 : i64} {
  func.func @_combine3_kernel(%arg0: memref<2x4096xf32, #tpu.memory_space<vmem>>, %arg1: memref<2x4096xf32, #tpu.memory_space<vmem>>, %arg2: memref<2x4096xf32, #tpu.memory_space<vmem>>, %arg3: memref<2x4096xf32, #tpu.memory_space<vmem>>) attributes {dimension_semantics = [], scalar_prefetch = 0 : i64, scratch_operands = 0 : i64, tpu.core_type = #tpu.core_type<tc>} {
    %c0 = arith.constant 0 : index
    %c0_0 = arith.constant 0 : index
    %0 = vector.load %arg0[%c0, %c0_0] : memref<2x4096xf32, #tpu.memory_space<vmem>>, vector<2x4096xf32>
    %c0_1 = arith.constant 0 : index
    %c0_2 = arith.constant 0 : index
    %1 = vector.load %arg1[%c0_1, %c0_2] : memref<2x4096xf32, #tpu.memory_space<vmem>>, vector<2x4096xf32>
    %2 = arith.mulf %0, %1 : vector<2x4096xf32>
    %c0_3 = arith.constant 0 : index
    %c0_4 = arith.constant 0 : index
    %3 = vector.load %arg2[%c0_3, %c0_4] : memref<2x4096xf32, #tpu.memory_space<vmem>>, vector<2x4096xf32>
    %4 = arith.mulf %2, %3 : vector<2x4096xf32>
    %c0_5 = arith.constant 0 : index
    %c0_6 = arith.constant 0 : index
    %5 = vector.load %arg3[%c0_5, %c0_6] : memref<2x4096xf32, #tpu.memory_space<vmem>>, vector<2x4096xf32>
    tpu.vector_store %arg3[%c0_5, %c0_6], %4 {strides = array<i32>} : memref<2x4096xf32, #tpu.memory_space<vmem>>, vector<2x4096xf32>,
    return
  }
}

</mosaic_0001>

<llo_original>
// kernel: ikd_forward.7
$region0: #{ikd_forward.7}
  #allocation0 [shape = 'u32[]', space=smem, size = 0x4, offset = 0x4, fixed_abs, tag = 'smem constant byte address 0x4 - core index']
  #allocation1 [shape = 'u32[144,128]{1,0:T(1,128)}', space=vmem, size = 0x12000, scoped, tag = 'internal scratch']
  %s0 = inlined_call_operand.vmem [shape: f32[2,32,2,32,6], index: 0, kind: input, shape index: {}]
  %s1 = inlined_call_operand.vmem [shape: f32[3,128], index: 1, kind: input, shape index: {}]
  %s2 = inlined_call_operand.vmem [shape: f32[1,128], index: 2, kind: input, shape index: {}]
  %s3 = inlined_call_operand.vmem [shape: f32[2,1024,128], index: 3, kind: output, shape index: {}]
  %s4 = sld [smem:[#allocation0]]
  $region83: #{ikd_forward.7} parent=0
    _
  %s6 = ssub.s32 1, %s4
  %s7 = scalar_select 0, %s6, %s4
  $region1: #{ikd_forward.7} parent=0
    #allocation2 [shape = 'u8[1048576]{0}', space=vmem, size = 0x100000, scoped, tag = 'input window, operand 0']
    loop: start=0, step=1, limit=4
    $region2: #{ikd_forward.7} parent=1 // loop_pre_header
      _
    $region3: #{ikd_forward.7} parent=1 // loop_header
      %s9 = sphi 0, %s13
      %p10 = scmp.ge.s32.totalorder %s9, 4
      %s19 = sphi 0, %s21
      %s22 = sphi 0, %s19
      %s23 = sphi 0, %s22
      %s39 = sphi 0, %s23
      %s43 = sphi 0, %s43
      %s45 = sphi 0, %s43
      %s46 = sphi 0, %s45
      %s60 = sphi 0, %s46
      %s64 = sphi 0, %s64
      %s66 = sphi 0, %s64
      %s67 = sphi 0, %s66
      %s81 = sphi 0, %s67
      %s87 = sphi 0, %s89
      %s90 = sphi 0, %s87
      %s91 = sphi 0, %s90
      %s107 = sphi 0, %s91
    $region4: #{ikd_forward.7} parent=1 // loop_header_branch
      %12 = sbr.rel (%p10) target = $region8
    $region5: #{ikd_forward.7} parent=1 // loop_body
      %s14 = ssub.s32 %s9, 1
      %s15 = ssub.s32 %s9, 2
      %s16 = sadd.s32 %s9, 1
      %s17 = ssub.s32 %s9, %s16
      %p18 = scmp.eq.s32.totalorder %s17, 0
      %s20 = sadd.s32 %s19, 1
      %s21 = scalar_select %p18, %s19, %s20
      %p24 = pneg %p18
      %p25 = scmp.eq.s32.totalorder %s9, 1
      %p26 = por %p24, %p25
      %p27 = scmp.ne.s32.totalorder %s19, %s22
      %p28 = scmp.eq.s32.totalorder %s9, 0
      %p29 = por %p27, %p28
      %p30 = scmp.ne.s32.totalorder %s19, %s22
      %p31 = scmp.eq.s32.totalorder %s14, 1
      %p32 = por %p30, %p31
      %p33 = scmp.ne.s32.totalorder %s22, %s23
      %p34 = scmp.eq.s32.totalorder %s14, 0
      %p35 = por %p33, %p34
      %p36 = scmp.ne.s32.totalorder %s22, %s23
      %p37 = scmp.eq.s32.totalorder %s15, 1
      %p38 = por %p36, %p37
      %p40 = scmp.ne.s32.totalorder %s23, %s39
      %p41 = scmp.eq.s32.totalorder %s15, 0
      %p42 = por %p40, %p41
      %s44 = sadd.s32 %s43, 1
      %p47 = scmp.eq.s32.totalorder %s9, 1
      %p48 = scmp.ne.s32.totalorder %s43, %s45
      %p49 = scmp.eq.s32.totalorder %s9, 0
      %p50 = por %p48, %p49
      %p51 = scmp.ne.s32.totalorder %s43, %s45
      %p52 = scmp.eq.s32.totalorder %s14, 1
      %p53 = por %p51, %p52
      %p54 = scmp.ne.s32.totalorder %s45, %s46
      %p55 = scmp.eq.s32.totalorder %s14, 0
      %p56 = por %p54, %p55
      %p57 = scmp.ne.s32.totalorder %s45, %s46
      %p58 = scmp.eq.s32.totalorder %s15, 1
      %p59 = por %p57, %p58
      %p61 = scmp.ne.s32.totalorder %s46, %s60
      %p62 = scmp.eq.s32.totalorder %s15, 0
      %p63 = por %p61, %p62
      %s65 = sadd.s32 %s64, 1
      %p68 = scmp.eq.s32.totalorder %s9, 1
      %p69 = scmp.ne.s32.totalorder %s64, %s66
      %p70 = scmp.eq.s32.totalorder %s9, 0
      %p71 = por %p69, %p70
      %p72 = scmp.ne.s32.totalorder %s64, %s66
      %p73 = scmp.eq.s32.totalorder %s14, 1
      %p74 = por %p72, %p73
      %p75 = scmp.ne.s32.totalorder %s66, %s67
      %p76 = scmp.eq.s32.totalorder %s14, 0
      %p77 = por %p75, %p76
      %p78 = scmp.ne.s32.totalorder %s66, %s67
      %p79 = scmp.eq.s32.totalorder %s15, 1
      %p80 = por %p78, %p79
      %p82 = scmp.ne.s32.totalorder %s67, %s81
      %p83 = scmp.eq.s32.totalorder %s15, 0
      %p84 = por %p82, %p83
      %s85 = ssub.s32 %s9, %s16
      %p86 = scmp.eq.s32.totalorder %s85, 0
      %s88 = sadd.s32 %s87, 1
      %s89 = scalar_select %p86, %s87, %s88
      %p92 = pneg %p86
      %p93 = scmp.eq.s32.totalorder %s9, 1
      %p94 = por %p92, %p93
      %p95 = scmp.ne.s32.totalorder %s87, %s90
      %p96 = scmp.eq.s32.totalorder %s9, 0
      %p97 = por %p95, %p96
      %p98 = scmp.ne.s32.totalorder %s87, %s90
      %p99 = scmp.eq.s32.totalorder %s14, 1
      %p100 = por %p98, %p99
      %p101 = scmp.ne.s32.totalorder %s90, %s91
      %p102 = scmp.eq.s32.totalorder %s14, 0
      %p103 = por %p101, %p102
      %p104 = scmp.ne.s32.totalorder %s90, %s91
      %p105 = scmp.eq.s32.totalorder %s15, 1
      %p106 = por %p104, %p105
      %p108 = scmp.ne.s32.totalorder %s91, %s107
      %p109 = scmp.eq.s32.totalorder %s15, 0
      %p110 = por %p108, %p109
      %p111 = scmp.le.s32.totalorder 1, %s9
      %p112 = scmp.lt.s32.totalorder %s9, 3
      %p113 = pnand %p111, %p112
      %p114 = pneg %p113
      // Predicated region
      $region9: #{ikd_forward.7} parent=5 // pred_check
        _
      $region10: #{ikd_forward.7} parent=5 // pred_check_branch
        %116 = sbr.rel (%p113) target = $region12
      $region11: #{ikd_forward.7} parent=5 // pred_region
        %s117 = ssub.s32 %s9, 1
        // Predicated region
        $region13: #{ikd_forward.7} parent=11 // pred_check
          %p118 = pneg %p56
        $region14: #{ikd_forward.7} parent=11 // pred_check_branch
          %120 = sbr.rel (%p118) target = $region16
        $region15: #{ikd_forward.7} parent=11 // pred_region
          _
        $region16: #{ikd_forward.7} parent=11 // pred_fallthru
          _
        // Predicated region
        $region17: #{ikd_forward.7} parent=11 // pred_check
          %p121 = pneg %p77
        $region18: #{ikd_forward.7} parent=11 // pred_check_branch
          %123 = sbr.rel (%p121) target = $region20
        $region19: #{ikd_forward.7} parent=11 // pred_region
          _
        $region20: #{ikd_forward.7} parent=11 // pred_fallthru
          _
      $region12: #{ikd_forward.7} parent=5 // pred_fallthru
        _
      %p124 = scmp.lt.s32.totalorder %s9, 2
      // Predicated region
      $region21: #{ikd_forward.7} parent=5 // pred_check
        %p125 = pneg %p124
      $region22: #{ikd_forward.7} parent=5 // pred_check_branch
        %127 = sbr.rel (%p125) target = $region24
      $region23: #{ikd_forward.7} parent=5 // pred_region
        // Predicated region
        $region25: #{ikd_forward.7} parent=23 // pred_check
          %p128 = pneg %p29
        $region26: #{ikd_forward.7} parent=23 // pred_check_branch
          %130 = sbr.rel (%p128) target = $region28
        $region27: #{ikd_forward.7} parent=23 // pred_region
          %s131 = sand.u32 %s19, 1
          %s132 = sand.u32 %s19, 1
          %s133 = smul.addr %s132, 1024
          %s134 = scalar_lea.vmem [#allocation2], %s133
          %s135 = smul.addr %s9, 256
          %s136 = smul.addr %s135, 8
          %s137 = scalar_lea.vmem %s0, %s136
          // Predicated region
          $region29: #{ikd_forward.7} parent=27 // pred_check
            _
          $region30: #{ikd_forward.7} parent=27 // pred_check_branch
            %139 = sbr.rel (0) target = $region32
          $region31: #{ikd_forward.7} parent=27 // pred_region
            // Predicated region
            $region33: #{ikd_forward.7} parent=31 // pred_check
              _
            $region34: #{ikd_forward.7} parent=31 // pred_check_branch
              %141 = sbr.rel (0) target = $region36
            $region35: #{ikd_forward.7} parent=31 // pred_region
              // Predicated region
              $region48: #{ikd_forward.7} parent=35 // pred_check
                _
              $region49: #{ikd_forward.7} parent=35 // pred_check_branch
                %411 = sbr.rel (0) target = $region51
              $region50: #{ikd_forward.7} parent=35 // pred_region
                loop: start=0, step=1, limit=1
                $region52: #{ikd_forward.7} parent=50 // loop_pre_header
                  _
                $region53: #{ikd_forward.7} parent=50 // loop_header
                  %s413 = sphi 0, %s417
                  %p414 = scmp.ge.s32.totalorder %s413, 1
                  %s418 = sphi %s137, %s137
                  %s419 = sphi %s134, %s134
                $region54: #{ikd_forward.7} parent=50 // loop_header_branch
                  %416 = sbr.rel (%p414) target = $region58
                $region55: #{ikd_forward.7} parent=50 // loop_body
                  %v420 = vld [vmem:[%s418] sm:$0xff]
                  %421 = vst [vmem:[%s419] sm:$0xff] %v420
                  %v422 = vld [vmem:[%s418 + $0x8] sm:$0xff]
                  %423 = vst [vmem:[%s419 + $0x8] sm:$0xff] %v422
                  %v424 = vld [vmem:[%s418 + $0x10] sm:$0xff]
                  %425 = vst [vmem:[%s419 + $0x10] sm:$0xff] %v424
                  %v426 = vld [vmem:[%s418 + $0x18] sm:$0xff]
                  %427 = vst [vmem:[%s419 + $0x18] sm:$0xff] %v426
                  %v428 = vld [vmem:[%s418 + $0x40] sm:$0xff]
                  %429 = vst [vmem:[%s419 + $0x20] sm:$0xff] %v428
                  %v430 = vld [vmem:[%s418 + $0x48] sm:$0xff]
                  %431 = vst [vmem:[%s419 + $0x28] sm:$0xff] %v430
                  %v432 = vld [vmem:[%s418 + $0x50] sm:$0xff]
                  %433 = vst [vmem:[%s419 + $0x30] sm:$0xff] %v432
                  %v434 = vld [vmem:[%s418 + $0x58] sm:$0xff]
                  %435 = vst [vmem:[%s419 + $0x38] sm:$0xff] %v434
                  %v436 = vld [vmem:[%s418 + $0x80] sm:$0xff]
                  %437 = vst [vmem:[%s419 + $0x40] sm:$0xff] %v436
                  %v438 = vld [vmem:[%s418 + $0x88] sm:$0xff]
                  %439 = vst [vmem:[%s419 + $0x48] sm:$0xff] %v438
                  %v440 = vld [vmem:[%s418 + $0x90] sm:$0xff]
                  %441 = vst [vmem:[%s419 + $0x50] sm:$0xff] %v440
                  %v442 = vld [vmem:[%s418 + $0x98] sm:$0xff]
                  %443 = vst [vmem:[%s419 + $0x58] sm:$0xff] %v442
                  %v444 = vld [vmem:[%s418 + $0xc0] sm:$0xff]
                  %445 = vst [vmem:[%s419 + $0x60] sm:$0xff] %v444
                  %v446 = vld [vmem:[%s418 + $0xc8] sm:$0xff]
                  %447 = vst [vmem:[%s419 + $0x68] sm:$0xff] %v446
                  %v448 = vld [vmem:[%s418 + $0xd0] sm:$0xff]
                  %449 = vst [vmem:[%s419 + $0x70] sm:$0xff] %v448
                  %v450 = vld [vmem:[%s418 + $0xd8] sm:$0xff]
                  %451 = vst [vmem:[%s419 + $0x78] sm:$0xff] %v450
                  %v452 = vld [vmem:[%s418 + $0x100] sm:$0xff]
                  %453 = vst [vmem:[%s419 + $0x80] sm:$0xff] %v452
                  %v454 = vld [vmem:[%s418 + $0x108] sm:$0xff]
                  %455 = vst [vmem:[%s419 + $0x88] sm:$0xff] %v454
                  %v456 = vld [vmem:[%s418 + $0x110] sm:$0xff]
                  %457 = vst [vmem:[%s419 + $0x90] sm:$0xff] %v456
                  %v458 = vld [vmem:[%s418 + $0x118] sm:$0xff]
                  %459 = vst [vmem:[%s419 + $0x98] sm:$0xff] %v458
                  %v460 = vld [vmem:[%s418 + $0x140] sm:$0xff]
                  %461 = vst [vmem:[%s419 + $0xa0] sm:$0xff] %v460
                  %v462 = vld [vmem:[%s418 + $0x148] sm:$0xff]
                  %463 = vst [vmem:[%s419 + $0xa8] sm:$0xff] %v462
                  %v464 = vld [vmem:[%s418 + $0x150] sm:$0xff]
                  %465 = vst [vmem:[%s419 + $0xb0] sm:$0xff] %v464
                  %v466 = vld [vmem:[%s418 + $0x158] sm:$0xff]
                  %467 = vst [vmem:[%s419 + $0xb8] sm:$0xff] %v466
                  %v468 = vld [vmem:[%s418 + $0x180] sm:$0xff]
                  %469 = vst [vmem:[%s419 + $0xc0] sm:$0xff] %v468
                  %v470 = vld [vmem:[%s418 + $0x188] sm:$0xff]
                  %471 = vst [vmem:[%s419 + $0xc8] sm:$0xff] %v470
                  %v472 = vld [vmem:[%s418 + $0x190] sm:$0xff]
                  %473 = vst [vmem:[%s419 + $0xd0] sm:$0xff] %v472
                  %v474 = vld [vmem:[%s418 + $0x198] sm:$0xff]
                  %475 = vst [vmem:[%s419 + $0xd8] sm:$0xff] %v474
                  %v476 = vld [vmem:[%s418 + $0x1c0] sm:$0xff]
                  %477 = vst [vmem:[%s419 + $0xe0] sm:$0xff] %v476
                  %v478 = vld [vmem:[%s418 + $0x1c8] sm:$0xff]
                  %479 = vst [vmem:[%s419 + $0xe8] sm:$0xff] %v478
                  %v480 = vld [vmem:[%s418 + $0x1d0] sm:$0xff]
                  %481 = vst [vmem:[%s419 + $0xf0] sm:$0xff] %v480
                  %v482 = vld [vmem:[%s418 + $0x1d8] sm:$0xff]
                  %483 = vst [vmem:[%s419 + $0xf8] sm:$0xff] %v482
                  %v484 = vld [vmem:[%s418 + $0x200] sm:$0xff]
                  %485 = vst [vmem:[%s419 + $0x100] sm:$0xff] %v484
                  %v486 = vld [vmem:[%s418 + $0x208] sm:$0xff]
                  %487 = vst [vmem:[%s419 + $0x108] sm:$0xff] %v486
                  %v488 = vld [vmem:[%s418 + $0x210] sm:$0xff]
                  %489 = vst [vmem:[%s419 + $0x110] sm:$0xff] %v488
                  %v490 = vld [vmem:[%s418 + $0x218] sm:$0xff]
                  %491 = vst [vmem:[%s419 + $0x118] sm:$0xff] %v490
                  %v492 = vld [vmem:[%s418 + $0x240] sm:$0xff]
                  %493 = vst [vmem:[%s419 + $0x120] sm:$0xff] %v492
                  %v494 = vld [vmem:[%s418 + $0x248] sm:$0xff]
                  %495 = vst [vmem:[%s419 + $0x128] sm:$0xff] %v494
                  %v496 = vld [vmem:[%s418 + $0x250] sm:$0xff]
                  %497 = vst [vmem:[%s419 + $0x130] sm:$0xff] %v496
                  %v498 = vld [vmem:[%s418 + $0x258] sm:$0xff]
                  %499 = vst [vmem:[%s419 + $0x138] sm:$0xff] %v498
                  %v500 = vld [vmem:[%s418 + $0x280] sm:$0xff]
                  %501 = vst [vmem:[%s419 + $0x140] sm:$0xff] %v500
                  %v502 = vld [vmem:[%s418 + $0x288] sm:$0xff]
                  %503 = vst [vmem:[%s419 + $0x148] sm:$0xff] %v502
                  %v504 = vld [vmem:[%s418 + $0x290] sm:$0xff]
                  %505 = vst [vmem:[%s419 + $0x150] sm:$0xff] %v504
                  %v506 = vld [vmem:[%s418 + $0x298] sm:$0xff]
                  %507 = vst [vmem:[%s419 + $0x158] sm:$0xff] %v506
                  %v508 = vld [vmem:[%s418 + $0x2c0] sm:$0xff]
                  %509 = vst [vmem:[%s419 + $0x160] sm:$0xff] %v508
                  %v510 = vld [vmem:[%s418 + $0x2c8] sm:$0xff]
                  %511 = vst [vmem:[%s419 + $0x168] sm:$0xff] %v510
                  %v512 = vld [vmem:[%s418 + $0x2d0] sm:$0xff]
                  %513 = vst [vmem:[%s419 + $0x170] sm:$0xff] %v512
                  %v514 = vld [vmem:[%s418 + $0x2d8] sm:$0xff]
                  %515 = vst [vmem:[%s419 + $0x178] sm:$0xff] %v514
                  %v516 = vld [vmem:[%s418 + $0x300] sm:$0xff]
                  %517 = vst [vmem:[%s419 + $0x180] sm:$0xff] %v516
                  %v518 = vld [vmem:[%s418 + $0x308] sm:$0xff]
                  %519 = vst [vmem:[%s419 + $0x188] sm:$0xff] %v518
                  %v520 = vld [vmem:[%s418 + $0x310] sm:$0xff]
                  %521 = vst [vmem:[%s419 + $0x190] sm:$0xff] %v520
                  %v522 = vld [vmem:[%s418 + $0x318] sm:$0xff]
                  %523 = vst [vmem:[%s419 + $0x198] sm:$0xff] %v522
                  %v524 = vld [vmem:[%s418 + $0x340] sm:$0xff]
                  %525 = vst [vmem:[%s419 + $0x1a0] sm:$0xff] %v524
                  %v526 = vld [vmem:[%s418 + $0x348] sm:$0xff]
                  %527 = vst [vmem:[%s419 + $0x1a8] sm:$0xff] %v526
                  %v528 = vld [vmem:[%s418 + $0x350] sm:$0xff]
                  %529 = vst [vmem:[%s419 + $0x1b0] sm:$0xff] %v528
                  %v530 = vld [vmem:[%s418 + $0x358] sm:$0xff]
                  %531 = vst [vmem:[%s419 + $0x1b8] sm:$0xff] %v530
                  %v532 = vld [vmem:[%s418 + $0x380] sm:$0xff]
                  %533 = vst [vmem:[%s419 + $0x1c0] sm:$0xff] %v532
                  %v534 = vld [vmem:[%s418 + $0x388] sm:$0xff]
                  %535 = vst [vmem:[%s419 + $0x1c8] sm:$0xff] %v534
                  %v536 = vld [vmem:[%s418 + $0x390] sm:$0xff]
                  %537 = vst [vmem:[%s419 + $0x1d0] sm:$0xff] %v536
                  %v538 = vld [vmem:[%s418 + $0x398] sm:$0xff]
                  %539 = vst [vmem:[%s419 + $0x1d8] sm:$0xff] %v538
                  %v540 = vld [vmem:[%s418 + $0x3c0] sm:$0xff]
                  %541 = vst [vmem:[%s419 + $0x1e0] sm:$0xff] %v540
                  %v542 = vld [vmem:[%s418 + $0x3c8] sm:$0xff]
                  %543 = vst [vmem:[%s419 + $0x1e8] sm:$0xff] %v542
                  %v544 = vld [vmem:[%s418 + $0x3d0] sm:$0xff]
                  %545 = vst [vmem:[%s419 + $0x1f0] sm:$0xff] %v544
                  %v546 = vld [vmem:[%s418 + $0x3d8] sm:$0xff]
                  %547 = vst [vmem:[%s419 + $0x1f8] sm:$0xff] %v546
                  %v548 = vld [vmem:[%s418 + $0x400] sm:$0xff]
                  %549 = vst [vmem:[%s419 + $0x200] sm:$0xff] %v548
                  %v550 = vld [vmem:[%s418 + $0x408] sm:$0xff]
                  %551 = vst [vmem:[%s419 + $0x208] sm:$0xff] %v550
                  %v552 = vld [vmem:[%s418 + $0x410] sm:$0xff]
                  %553 = vst [vmem:[%s419 + $0x210] sm:$0xff] %v552
                  %v554 = vld [vmem:[%s418 + $0x418] sm:$0xff]
                  %555 = vst [vmem:[%s419 + $0x218] sm:$0xff] %v554
                  %v556 = vld [vmem:[%s418 + $0x440] sm:$0xff]
                  %557 = vst [vmem:[%s419 + $0x220] sm:$0xff] %v556
                  %v558 = vld [vmem:[%s418 + $0x448] sm:$0xff]
                  %559 = vst [vmem:[%s419 + $0x228] sm:$0xff] %v558
                  %v560 = vld [vmem:[%s418 + $0x450] sm:$0xff]
                  %561 = vst [vmem:[%s419 + $0x230] sm:$0xff] %v560
                  %v562 = vld [vmem:[%s418 + $0x458] sm:$0xff]
                  %563 = vst [vmem:[%s419 + $0x238] sm:$0xff] %v562
                  %v564 = vld [vmem:[%s418 + $0x480] sm:$0xff]
                  %565 = vst [vmem:[%s419 + $0x240] sm:$0xff] %v564
                  %v566 = vld [vmem:[%s418 + $0x488] sm:$0xff]
                  %567 = vst [vmem:[%s419 + $0x248] sm:$0xff] %v566
                  %v568 = vld [vmem:[%s418 + $0x490] sm:$0xff]
                  %569 = vst [vmem:[%s419 + $0x250] sm:$0xff] %v568
                  %v570 = vld [vmem:[%s418 + $0x498] sm:$0xff]
                  %571 = vst [vmem:[%s419 + $0x258] sm:$0xff] %v570
                  %v572 = vld [vmem:[%s418 + $0x4c0] sm:$0xff]
                  %573 = vst [vmem:[%s419 + $0x260] sm:$0xff] %v572
                  %v574 = vld [vmem:[%s418 + $0x4c8] sm:$0xff]
                  %575 = vst [vmem:[%s419 + $0x268] sm:$0xff] %v574
                  %v576 = vld [vmem:[%s418 + $0x4d0] sm:$0xff]
                  %577 = vst [vmem:[%s419 + $0x270] sm:$0xff] %v576
                  %v578 = vld [vmem:[%s418 + $0x4d8] sm:$0xff]
                  %579 = vst [vmem:[%s419 + $0x278] sm:$0xff] %v578
                  %v580 = vld [vmem:[%s418 + $0x500] sm:$0xff]
                  %581 = vst [vmem:[%s419 + $0x280] sm:$0xff] %v580
                  %v582 = vld [vmem:[%s418 + $0x508] sm:$0xff]
                  %583 = vst [vmem:[%s419 + $0x288] sm:$0xff] %v582
                  %v584 = vld [vmem:[%s418 + $0x510] sm:$0xff]
                  %585 = vst [vmem:[%s419 + $0x290] sm:$0xff] %v584
                  %v586 = vld [vmem:[%s418 + $0x518] sm:$0xff]
                  %587 = vst [vmem:[%s419 + $0x298] sm:$0xff] %v586
                  %v588 = vld [vmem:[%s418 + $0x540] sm:$0xff]
                  %589 = vst [vmem:[%s419 + $0x2a0] sm:$0xff] %v588
                  %v590 = vld [vmem:[%s418 + $0x548] sm:$0xff]
                  %591 = vst [vmem:[%s419 + $0x2a8] sm:$0xff] %v590
                  %v592 = vld [vmem:[%s418 + $0x550] sm:$0xff]
                  %593 = vst [vmem:[%s419 + $0x2b0] sm:$0xff] %v592
                  %v594 = vld [vmem:[%s418 + $0x558] sm:$0xff]
                  %595 = vst [vmem:[%s419 + $0x2b8] sm:$0xff] %v594
                  %v596 = vld [vmem:[%s418 + $0x580] sm:$0xff]
                  %597 = vst [vmem:[%s419 + $0x2c0] sm:$0xff] %v596
                  %v598 = vld [vmem:[%s418 + $0x588] sm:$0xff]
                  %599 = vst [vmem:[%s419 + $0x2c8] sm:$0xff] %v598
                  %v600 = vld [vmem:[%s418 + $0x590] sm:$0xff]
                  %601 = vst [vmem:[%s419 + $0x2d0] sm:$0xff] %v600
                  %v602 = vld [vmem:[%s418 + $0x598] sm:$0xff]
                  %603 = vst [vmem:[%s419 + $0x2d8] sm:$0xff] %v602
                  %v604 = vld [vmem:[%s418 + $0x5c0] sm:$0xff]
                  %605 = vst [vmem:[%s419 + $0x2e0] sm:$0xff] %v604
                  %v606 = vld [vmem:[%s418 + $0x5c8] sm:$0xff]
                  %607 = vst [vmem:[%s419 + $0x2e8] sm:$0xff] %v606
                  %v608 = vld [vmem:[%s418 + $0x5d0] sm:$0xff]
                  %609 = vst [vmem:[%s419 + $0x2f0] sm:$0xff] %v608
                  %v610 = vld [vmem:[%s418 + $0x5d8] sm:$0xff]
                  %611 = vst [vmem:[%s419 + $0x2f8] sm:$0xff] %v610
                  %v612 = vld [vmem:[%s418 + $0x600] sm:$0xff]
                  %613 = vst [vmem:[%s419 + $0x300] sm:$0xff] %v612
                  %v614 = vld [vmem:[%s418 + $0x608] sm:$0xff]
                  %615 = vst [vmem:[%s419 + $0x308] sm:$0xff] %v614
                  %v616 = vld [vmem:[%s418 + $0x610] sm:$0xff]
                  %617 = vst [vmem:[%s419 + $0x310] sm:$0xff] %v616
                  %v618 = vld [vmem:[%s418 + $0x618] sm:$0xff]
                  %619 = vst [vmem:[%s419 + $0x318] sm:$0xff] %v618
                  %v620 = vld [vmem:[%s418 + $0x640] sm:$0xff]
                  %621 = vst [vmem:[%s419 + $0x320] sm:$0xff] %v620
                  %v622 = vld [vmem:[%s418 + $0x648] sm:$0xff]
                  %623 = vst [vmem:[%s419 + $0x328] sm:$0xff] %v622
                  %v624 = vld [vmem:[%s418 + $0x650] sm:$0xff]
                  %625 = vst [vmem:[%s419 + $0x330] sm:$0xff] %v624
                  %v626 = vld [vmem:[%s418 + $0x658] sm:$0xff]
                  %627 = vst [vmem:[%s419 + $0x338] sm:$0xff] %v626
                  %v628 = vld [vmem:[%s418 + $0x680] sm:$0xff]
                  %629 = vst [vmem:[%s419 + $0x340] sm:$0xff] %v628
                  %v630 = vld [vmem:[%s418 + $0x688] sm:$0xff]
                  %631 = vst [vmem:[%s419 + $0x348] sm:$0xff] %v630
                  %v632 = vld [vmem:[%s418 + $0x690] sm:$0xff]
                  %633 = vst [vmem:[%s419 + $0x350] sm:$0xff] %v632
                  %v634 = vld [vmem:[%s418 + $0x698] sm:$0xff]
                  %635 = vst [vmem:[%s419 + $0x358] sm:$0xff] %v634
                  %v636 = vld [vmem:[%s418 + $0x6c0] sm:$0xff]
                  %637 = vst [vmem:[%s419 + $0x360] sm:$0xff] %v636
                  %v638 = vld [vmem:[%s418 + $0x6c8] sm:$0xff]
                  %639 = vst [vmem:[%s419 + $0x368] sm:$0xff] %v638
                  %v640 = vld [vmem:[%s418 + $0x6d0] sm:$0xff]
                  %641 = vst [vmem:[%s419 + $0x370] sm:$0xff] %v640
                  %v642 = vld [vmem:[%s418 + $0x6d8] sm:$0xff]
                  %643 = vst [vmem:[%s419 + $0x378] sm:$0xff] %v642
                  %v644 = vld [vmem:[%s418 + $0x700] sm:$0xff]
                  %645 = vst [vmem:[%s419 + $0x380] sm:$0xff] %v644
                  %v646 = vld [vmem:[%s418 + $0x708] sm:$0xff]
                  %647 = vst [vmem:[%s419 + $0x388] sm:$0xff] %v646
                  %v648 = vld [vmem:[%s418 + $0x710] sm:$0xff]
                  %649 = vst [vmem:[%s419 + $0x390] sm:$0xff] %v648
                  %v650 = vld [vmem:[%s418 + $0x718] sm:$0xff]
                  %651 = vst [vmem:[%s419 + $0x398] sm:$0xff] %v650
                  %v652 = vld [vmem:[%s418 + $0x740] sm:$0xff]
                  %653 = vst [vmem:[%s419 + $0x3a0] sm:$0xff] %v652
                  %v654 = vld [vmem:[%s418 + $0x748] sm:$0xff]
                  %655 = vst [vmem:[%s419 + $0x3a8] sm:$0xff] %v654
                  %v656 = vld [vmem:[%s418 + $0x750] sm:$0xff]
                  %657 = vst [vmem:[%s419 + $0x3b0] sm:$0xff] %v656
                  %v658 = vld [vmem:[%s418 + $0x758] sm:$0xff]
                  %659 = vst [vmem:[%s419 + $0x3b8] sm:$0xff] %v658
                  %v660 = vld [vmem:[%s418 + $0x780] sm:$0xff]
                  %661 = vst [vmem:[%s419 + $0x3c0] sm:$0xff] %v660
                  %v662 = vld [vmem:[%s418 + $0x788] sm:$0xff]
                  %663 = vst [vmem:[%s419 + $0x3c8] sm:$0xff] %v662
                  %v664 = vld [vmem:[%s418 + $0x790] sm:$0xff]
                  %665 = vst [vmem:[%s419 + $0x3d0] sm:$0xff] %v664
                  %v666 = vld [vmem:[%s418 + $0x798] sm:$0xff]
                  %667 = vst [vmem:[%s419 + $0x3d8] sm:$0xff] %v666
                  %v668 = vld [vmem:[%s418 + $0x7c0] sm:$0xff]
                  %669 = vst [vmem:[%s419 + $0x3e0] sm:$0xff] %v668
                  %v670 = vld [vmem:[%s418 + $0x7c8] sm:$0xff]
                  %671 = vst [vmem:[%s419 + $0x3e8] sm:$0xff] %v670
                  %v672 = vld [vmem:[%s418 + $0x7d0] sm:$0xff]
                  %673 = vst [vmem:[%s419 + $0x3f0] sm:$0xff] %v672
                  %v674 = vld [vmem:[%s418 + $0x7d8] sm:$0xff]
                  %675 = vst [vmem:[%s419 + $0x3f8] sm:$0xff] %v674
                $region56: #{ikd_forward.7} parent=50 // loop_footer
                  %s417 = sadd.s32 1, %s413
                $region57: #{ikd_forward.7} parent=50 // loop_footer_branch
                  %412 = sbr.rel target = $region53
                $region58: #{ikd_forward.7} parent=50 // loop_exit
                  _
              $region51: #{ikd_forward.7} parent=35 // pred_fallthru
                _
              // Predicated region
              $region59: #{ikd_forward.7} parent=35 // pred_check
                _
              $region60: #{ikd_forward.7} parent=35 // pred_check_branch
                %677 = sbr.rel target = $region62
              $region61: #{ikd_forward.7} parent=35 // pred_region
                _
              $region62: #{ikd_forward.7} parent=35 // pred_fallthru
                _
            $region36: #{ikd_forward.7} parent=31 // pred_fallthru
              _
            // Predicated region
            $region37: #{ikd_forward.7} parent=31 // pred_check
              _
            $region38: #{ikd_forward.7} parent=31 // pred_check_branch
              %143 = sbr.rel target = $region40
            $region39: #{ikd_forward.7} parent=31 // pred_region
              %s145 = ssub.s32 256, 1
              loop: start=0, step=1, limit=1
              $region41: #{ikd_forward.7} parent=39 // loop_pre_header
                _
              $region42: #{ikd_forward.7} parent=39 // loop_header
                %s147 = sphi 0, %s151
                %p148 = scmp.ge.s32.totalorder %s147, 1
                %s152 = sphi %s137, %s137
                %s153 = sphi %s134, %s134
              $region43: #{ikd_forward.7} parent=39 // loop_header_branch
                %150 = sbr.rel (%p148) target = $region47
              $region44: #{ikd_forward.7} parent=39 // loop_body
                %v154 = vld [vmem:[%s152] sm:%s145]
                %155 = vst [vmem:[%s153] sm:%s145] %v154
                %v156 = vld [vmem:[%s152 + $0x8] sm:%s145]
                %157 = vst [vmem:[%s153 + $0x8] sm:%s145] %v156
                %v158 = vld [vmem:[%s152 + $0x10] sm:%s145]
                %159 = vst [vmem:[%s153 + $0x10] sm:%s145] %v158
                %v160 = vld [vmem:[%s152 + $0x18] sm:%s145]
                %161 = vst [vmem:[%s153 + $0x18] sm:%s145] %v160
                %v162 = vld [vmem:[%s152 + $0x40] sm:%s145]
                %163 = vst [vmem:[%s153 + $0x20] sm:%s145] %v162
                %v164 = vld [vmem:[%s152 + $0x48] sm:%s145]
                %165 = vst [vmem:[%s153 + $0x28] sm:%s145] %v164
                %v166 = vld [vmem:[%s152 + $0x50] sm:%s145]
                %167 = vst [vmem:[%s153 + $0x30] sm:%s145] %v166
                %v168 = vld [vmem:[%s152 + $0x58] sm:%s145]
                %169 = vst [vmem:[%s153 + $0x38] sm:%s145] %v168
                %v170 = vld [vmem:[%s152 + $0x80] sm:%s145]
                %171 = vst [vmem:[%s153 + $0x40] sm:%s145] %v170
                %v172 = vld [vmem:[%s152 + $0x88] sm:%s145]
                %173 = vst [vmem:[%s153 + $0x48] sm:%s145] %v172
                %v174 = vld [vmem:[%s152 + $0x90] sm:%s145]
                %175 = vst [vmem:[%s153 + $0x50] sm:%s145] %v174
                %v176 = vld [vmem:[%s152 + $0x98] sm:%s145]
                %177 = vst [vmem:[%s153 + $0x58] sm:%s145] %v176
                %v178 = vld [vmem:[%s152 + $0xc0] sm:%s145]
                %179 = vst [vmem:[%s153 + $0x60] sm:%s145] %v178
                %v180 = vld [vmem:[%s152 + $0xc8] sm:%s145]
                %181 = vst [vmem:[%s153 + $0x68] sm:%s145] %v180
                %v182 = vld [vmem:[%s152 + $0xd0] sm:%s145]
                %183 = vst [vmem:[%s153 + $0x70] sm:%s145] %v182
                %v184 = vld [vmem:[%s152 + $0xd8] sm:%s145]
                %185 = vst [vmem:[%s153 + $0x78] sm:%s145] %v184
                %v186 = vld [vmem:[%s152 + $0x100] sm:%s145]
                %187 = vst [vmem:[%s153 + $0x80] sm:%s145] %v186
                %v188 = vld [vmem:[%s152 + $0x108] sm:%s145]
                %189 = vst [vmem:[%s153 + $0x88] sm:%s145] %v188
                %v190 = vld [vmem:[%s152 + $0x110] sm:%s145]
                %191 = vst [vmem:[%s153 + $0x90] sm:%s145] %v190
                %v192 = vld [vmem:[%s152 + $0x118] sm:%s145]
                %193 = vst [vmem:[%s153 + $0x98] sm:%s145] %v192
                %v194 = vld [vmem:[%s152 + $0x140] sm:%s145]
                %195 = vst [vmem:[%s153 + $0xa0] sm:%s145] %v194
                %v196 = vld [vmem:[%s152 + $0x148] sm:%s145]
                %197 = vst [vmem:[%s153 + $0xa8] sm:%s145] %v196
                %v198 = vld [vmem:[%s152 + $0x150] sm:%s145]
                %199 = vst [vmem:[%s153 + $0xb0] sm:%s145] %v198
                %v200 = vld [vmem:[%s152 + $0x158] sm:%s145]
                %201 = vst [vmem:[%s153 + $0xb8] sm:%s145] %v200
                %v202 = vld [vmem:[%s152 + $0x180] sm:%s145]
                %203 = vst [vmem:[%s153 + $0xc0] sm:%s145] %v202
                %v204 = vld [vmem:[%s152 + $0x188] sm:%s145]
                %205 = vst [vmem:[%s153 + $0xc8] sm:%s145] %v204
                %v206 = vld [vmem:[%s152 + $0x190] sm:%s145]
                %207 = vst [vmem:[%s153 + $0xd0] sm:%s145] %v206
                %v208 = vld [vmem:[%s152 + $0x198] sm:%s145]
                %209 = vst [vmem:[%s153 + $0xd8] sm:%s145] %v208
                %v210 = vld [vmem:[%s152 + $0x1c0] sm:%s145]
                %211 = vst [vmem:[%s153 + $0xe0] sm:%s145] %v210
                %v212 = vld [vmem:[%s152 + $0x1c8] sm:%s145]
                %213 = vst [vmem:[%s153 + $0xe8] sm:%s145] %v212
                %v214 = vld [vmem:[%s152 + $0x1d0] sm:%s145]
                %215 = vst [vmem:[%s153 + $0xf0] sm:%s145] %v214
                %v216 = vld [vmem:[%s152 + $0x1d8] sm:%s145]
                %217 = vst [vmem:[%s153 + $0xf8] sm:%s145] %v216
                %v218 = vld [vmem:[%s152 + $0x200] sm:%s145]
                %219 = vst [vmem:[%s153 + $0x100] sm:%s145] %v218
                %v220 = vld [vmem:[%s152 + $0x208] sm:%s145]
                %221 = vst [vmem:[%s153 + $0x108] sm:%s145] %v220
                %v222 = vld [vmem:[%s152 + $0x210] sm:%s145]
                %223 = vst [vmem:[%s153 + $0x110] sm:%s145] %v222
                %v224 = vld [vmem:[%s152 + $0x218] sm:%s145]
                %225 = vst [vmem:[%s153 + $0x118] sm:%s145] %v224
                %v226 = vld [vmem:[%s152 + $0x240] sm:%s145]
                %227 = vst [vmem:[%s153 + $0x120] sm:%s145] %v226
                %v228 = vld [vmem:[%s152 + $0x248] sm:%s145]
                %229 = vst [vmem:[%s153 + $0x128] sm:%s145] %v228
                %v230 = vld [vmem:[%s152 + $0x250] sm:%s145]
                %231 = vst [vmem:[%s153 + $0x130] sm:%s145] %v230
                %v232 = vld [vmem:[%s152 + $0x258] sm:%s145]
                %233 = vst [vmem:[%s153 + $0x138] sm:%s145] %v232
                %v234 = vld [vmem:[%s152 + $0x280] sm:%s145]
                %235 = vst [vmem:[%s153 + $0x140] sm:%s145] %v234
                %v236 = vld [vmem:[%s152 + $0x288] sm:%s145]
                %237 = vst [vmem:[%s153 + $0x148] sm:%s145] %v236
                %v238 = vld [vmem:[%s152 + $0x290] sm:%s145]
                %239 = vst [vmem:[%s153 + $0x150] sm:%s145] %v238
                %v240 = vld [vmem:[%s152 + $0x298] sm:%s145]
                %241 = vst [vmem:[%s153 + $0x158] sm:%s145] %v240
                %v242 = vld [vmem:[%s152 + $0x2c0] sm:%s145]
                %243 = vst [vmem:[%s153 + $0x160] sm:%s145] %v242
                %v244 = vld [vmem:[%s152 + $0x2c8] sm:%s145]
                %245 = vst [vmem:[%s153 + $0x168] sm:%s145] %v244
                %v246 = vld [vmem:[%s152 + $0x2d0] sm:%s145]
                %247 = vst [vmem:[%s153 + $0x170] sm:%s145] %v246
                %v248 = vld [vmem:[%s152 + $0x2d8] sm:%s145]
                %249 = vst [vmem:[%s153 + $0x178] sm:%s145] %v248
                %v250 = vld [vmem:[%s152 + $0x300] sm:%s145]
                %251 = vst [vmem:[%s153 + $0x180] sm:%s145] %v250
                %v252 = vld [vmem:[%s152 + $0x308] sm:%s145]
                %253 = vst [vmem:[%s153 + $0x188] sm:%s145] %v252
                %v254 = vld [vmem:[%s152 + $0x310] sm:%s145]
                %255 = vst [vmem:[%s153 + $0x190] sm:%s145] %v254
                %v256 = vld [vmem:[%s152 + $0x318] sm:%s145]
                %257 = vst [vmem:[%s153 + $0x198] sm:%s145] %v256
                %v258 = vld [vmem:[%s152 + $0x340] sm:%s145]
                %259 = vst [vmem:[%s153 + $0x1a0] sm:%s145] %v258
                %v260 = vld [vmem:[%s152 + $0x348] sm:%s145]
                %261 = vst [vmem:[%s153 + $0x1a8] sm:%s145] %v260
                %v262 = vld [vmem:[%s152 + $0x350] sm:%s145]
                %263 = vst [vmem:[%s153 + $0x1b0] sm:%s145] %v262
                %v264 = vld [vmem:[%s152 + $0x358] sm:%s145]
                %265 = vst [vmem:[%s153 + $0x1b8] sm:%s145] %v264
                %v266 = vld [vmem:[%s152 + $0x380] sm:%s145]
                %267 = vst [vmem:[%s153 + $0x1c0] sm:%s145] %v266
                %v268 = vld [vmem:[%s152 + $0x388] sm:%s145]
                %269 = vst [vmem:[%s153 + $0x1c8] sm:%s145] %v268
                %v270 = vld [vmem:[%s152 + $0x390] sm:%s145]
                %271 = vst [vmem:[%s153 + $0x1d0] sm:%s145] %v270
                %v272 = vld [vmem:[%s152 + $0x398] sm:%s145]
                %273 = vst [vmem:[%s153 + $0x1d8] sm:%s145] %v272
                %v274 = vld [vmem:[%s152 + $0x3c0] sm:%s145]
                %275 = vst [vmem:[%s153 + $0x1e0] sm:%s145] %v274
                %v276 = vld [vmem:[%s152 + $0x3c8] sm:%s145]
                %277 = vst [vmem:[%s153 + $0x1e8] sm:%s145] %v276
                %v278 = vld [vmem:[%s152 + $0x3d0] sm:%s145]
                %279 = vst [vmem:[%s153 + $0x1f0] sm:%s145] %v278
                %v280 = vld [vmem:[%s152 + $0x3d8] sm:%s145]
                %281 = vst [vmem:[%s153 + $0x1f8] sm:%s145] %v280
                %v282 = vld [vmem:[%s152 + $0x400] sm:%s145]
                %283 = vst [vmem:[%s153 + $0x200] sm:%s145] %v282
                %v284 = vld [vmem:[%s152 + $0x408] sm:%s145]
                %285 = vst [vmem:[%s153 + $0x208] sm:%s145] %v284
                %v286 = vld [vmem:[%s152 + $0x410] sm:%s145]
                %287 = vst [vmem:[%s153 + $0x210] sm:%s145] %v286
                %v288 = vld [vmem:[%s152 + $0x418] sm:%s145]
                %289 = vst [vmem:[%s153 + $0x218] sm:%s145] %v288
                %v290 = vld [vmem:[%s152 + $0x440] sm:%s145]
                %291 = vst [vmem:[%s153 + $0x220] sm:%s145] %v290
                %v292 = vld [vmem:[%s152 + $0x448] sm:%s145]
                %293 = vst [vmem:[%s153 + $0x228] sm:%s145] %v292
                %v294 = vld [vmem:[%s152 + $0x450] sm:%s145]
                %295 = vst [vmem:[%s153 + $0x230] sm:%s145] %v294
                %v296 = vld [vmem:[%s152 + $0x458] sm:%s145]
                %297 = vst [vmem:[%s153 + $0x238] sm:%s145] %v296
                %v298 = vld [vmem:[%s152 + $0x480] sm:%s145]
                %299 = vst [vmem:[%s153 + $0x240] sm:%s145] %v298
                %v300 = vld [vmem:[%s152 + $0x488] sm:%s145]
                %301 = vst [vmem:[%s153 + $0x248] sm:%s145] %v300
                %v302 = vld [vmem:[%s152 + $0x490] sm:%s145]
                %303 = vst [vmem:[%s153 + $0x250] sm:%s145] %v302
                %v304 = vld [vmem:[%s152 + $0x498] sm:%s145]
                %305 = vst [vmem:[%s153 + $0x258] sm:%s145] %v304
                %v306 = vld [vmem:[%s152 + $0x4c0] sm:%s145]
                %307 = vst [vmem:[%s153 + $0x260] sm:%s145] %v306
                %v308 = vld [vmem:[%s152 + $0x4c8] sm:%s145]
                %309 = vst [vmem:[%s153 + $0x268] sm:%s145] %v308
                %v310 = vld [vmem:[%s152 + $0x4d0] sm:%s145]
                %311 = vst [vmem:[%s153 + $0x270] sm:%s145] %v310
                %v312 = vld [vmem:[%s152 + $0x4d8] sm:%s145]
                %313 = vst [vmem:[%s153 + $0x278] sm:%s145] %v312
                %v314 = vld [vmem:[%s152 + $0x500] sm:%s145]
                %315 = vst [vmem:[%s153 + $0x280] sm:%s145] %v314
                %v316 = vld [vmem:[%s152 + $0x508] sm:%s145]
                %317 = vst [vmem:[%s153 + $0x288] sm:%s145] %v316
                %v318 = vld [vmem:[%s152 + $0x510] sm:%s145]
                %319 = vst [vmem:[%s153 + $0x290] sm:%s145] %v318
                %v320 = vld [vmem:[%s152 + $0x518] sm:%s145]
                %321 = vst [vmem:[%s153 + $0x298] sm:%s145] %v320
                %v322 = vld [vmem:[%s152 + $0x540] sm:%s145]
                %323 = vst [vmem:[%s153 + $0x2a0] sm:%s145] %v322
                %v324 = vld [vmem:[%s152 + $0x548] sm:%s145]
                %325 = vst [vmem:[%s153 + $0x2a8] sm:%s145] %v324
                %v326 = vld [vmem:[%s152 + $0x550] sm:%s145]
                %327 = vst [vmem:[%s153 + $0x2b0] sm:%s145] %v326
                %v328 = vld [vmem:[%s152 + $0x558] sm:%s145]
                %329 = vst [vmem:[%s153 + $0x2b8] sm:%s145] %v328
                %v330 = vld [vmem:[%s152 + $0x580] sm:%s145]
                %331 = vst [vmem:[%s153 + $0x2c0] sm:%s145] %v330
                %v332 = vld [vmem:[%s152 + $0x588] sm:%s145]
                %333 = vst [vmem:[%s153 + $0x2c8] sm:%s145] %v332
                %v334 = vld [vmem:[%s152 + $0x590] sm:%s145]
                %335 = vst [vmem:[%s153 + $0x2d0] sm:%s145] %v334
                %v336 = vld [vmem:[%s152 + $0x598] sm:%s145]
                %337 = vst [vmem:[%s153 + $0x2d8] sm:%s145] %v336
                %v338 = vld [vmem:[%s152 + $0x5c0] sm:%s145]
                %339 = vst [vmem:[%s153 + $0x2e0] sm:%s145] %v338
                %v340 = vld [vmem:[%s152 + $0x5c8] sm:%s145]
                %341 = vst [vmem:[%s153 + $0x2e8] sm:%s145] %v340
                %v342 = vld [vmem:[%s152 + $0x5d0] sm:%s145]
                %343 = vst [vmem:[%s153 + $0x2f0] sm:%s145] %v342
                %v344 = vld [vmem:[%s152 + $0x5d8] sm:%s145]
                %345 = vst [vmem:[%s153 + $0x2f8] sm:%s145] %v344
                %v346 = vld [vmem:[%s152 + $0x600] sm:%s145]
                %347 = vst [vmem:[%s153 + $0x300] sm:%s145] %v346
                %v348 = vld [vmem:[%s152 + $0x608] sm:%s145]
                %349 = vst [vmem:[%s153 + $0x308] sm:%s145] %v348
                %v350 = vld [vmem:[%s152 + $0x610] sm:%s145]
                %351 = vst [vmem:[%s153 + $0x310] sm:%s145] %v350
                %v352 = vld [vmem:[%s152 + $0x618] sm:%s145]
                %353 = vst [vmem:[%s153 + $0x318] sm:%s145] %v352
                %v354 = vld [vmem:[%s152 + $0x640] sm:%s145]
                %355 = vst [vmem:[%s153 + $0x320] sm:%s145] %v354
                %v356 = vld [vmem:[%s152 + $0x648] sm:%s145]
                %357 = vst [vmem:[%s153 + $0x328] sm:%s145] %v356
                %v358 = vld [vmem:[%s152 + $0x650] sm:%s145]
                %359 = vst [vmem:[%s153 + $0x330] sm:%s145] %v358
                %v360 = vld [vmem:[%s152 + $0x658] sm:%s145]
                %361 = vst [vmem:[%s153 + $0x338] sm:%s145] %v360
                %v362 = vld [vmem:[%s152 + $0x680] sm:%s145]
                %363 = vst [vmem:[%s153 + $0x340] sm:%s145] %v362
                %v364 = vld [vmem:[%s152 + $0x688] sm:%s145]
                %365 = vst [vmem:[%s153 + $0x348] sm:%s145] %v364
                %v366 = vld [vmem:[%s152 + $0x690] sm:%s145]
                %367 = vst [vmem:[%s153 + $0x350] sm:%s145] %v366
                %v368 = vld [vmem:[%s152 + $0x698] sm:%s145]
                %369 = vst [vmem:[%s153 + $0x358] sm:%s145] %v368
                %v370 = vld [vmem:[%s152 + $0x6c0] sm:%s145]
                %371 = vst [vmem:[%s153 + $0x360] sm:%s145] %v370
                %v372 = vld [vmem:[%s152 + $0x6c8] sm:%s145]
                %373 = vst [vmem:[%s153 + $0x368] sm:%s145] %v372
                %v374 = vld [vmem:[%s152 + $0x6d0] sm:%s145]
                %375 = vst [vmem:[%s153 + $0x370] sm:%s145] %v374
                %v376 = vld [vmem:[%s152 + $0x6d8] sm:%s145]
                %377 = vst [vmem:[%s153 + $0x378] sm:%s145] %v376
                %v378 = vld [vmem:[%s152 + $0x700] sm:%s145]
                %379 = vst [vmem:[%s153 + $0x380] sm:%s145] %v378
                %v380 = vld [vmem:[%s152 + $0x708] sm:%s145]
                %381 = vst [vmem:[%s153 + $0x388] sm:%s145] %v380
                %v382 = vld [vmem:[%s152 + $0x710] sm:%s145]
                %383 = vst [vmem:[%s153 + $0x390] sm:%s145] %v382
                %v384 = vld [vmem:[%s152 + $0x718] sm:%s145]
                %385 = vst [vmem:[%s153 + $0x398] sm:%s145] %v384
                %v386 = vld [vmem:[%s152 + $0x740] sm:%s145]
                %387 = vst [vmem:[%s153 + $0x3a0] sm:%s145] %v386
                %v388 = vld [vmem:[%s152 + $0x748] sm:%s145]
                %389 = vst [vmem:[%s153 + $0x3a8] sm:%s145] %v388
                %v390 = vld [vmem:[%s152 + $0x750] sm:%s145]
                %391 = vst [vmem:[%s153 + $0x3b0] sm:%s145] %v390
                %v392 = vld [vmem:[%s152 + $0x758] sm:%s145]
                %393 = vst [vmem:[%s153 + $0x3b8] sm:%s145] %v392
                %v394 = vld [vmem:[%s152 + $0x780] sm:%s145]
                %395 = vst [vmem:[%s153 + $0x3c0] sm:%s145] %v394
                %v396 = vld [vmem:[%s152 + $0x788] sm:%s145]
                %397 = vst [vmem:[%s153 + $0x3c8] sm:%s145] %v396
                %v398 = vld [vmem:[%s152 + $0x790] sm:%s145]
                %399 = vst [vmem:[%s153 + $0x3d0] sm:%s145] %v398
                %v400 = vld [vmem:[%s152 + $0x798] sm:%s145]
                %401 = vst [vmem:[%s153 + $0x3d8] sm:%s145] %v400
                %v402 = vld [vmem:[%s152 + $0x7c0] sm:%s145]
                %403 = vst [vmem:[%s153 + $0x3e0] sm:%s145] %v402
                %v404 = vld [vmem:[%s152 + $0x7c8] sm:%s145]
                %405 = vst [vmem:[%s153 + $0x3e8] sm:%s145] %v404
                %v406 = vld [vmem:[%s152 + $0x7d0] sm:%s145]
                %407 = vst [vmem:[%s153 + $0x3f0] sm:%s145] %v406
                %v408 = vld [vmem:[%s152 + $0x7d8] sm:%s145]
                %409 = vst [vmem:[%s153 + $0x3f8] sm:%s145] %v408
              $region45: #{ikd_forward.7} parent=39 // loop_footer
                %s151 = sadd.s32 1, %s147
              $region46: #{ikd_forward.7} parent=39 // loop_footer_branch
                %146 = sbr.rel target = $region42
              $region47: #{ikd_forward.7} parent=39 // loop_exit
                _
            $region40: #{ikd_forward.7} parent=31 // pred_fallthru
              _
          $region32: #{ikd_forward.7} parent=27 // pred_fallthru
            _
          %678 = vnop
        $region28: #{ikd_forward.7} parent=23 // pred_fallthru
          _
      $region24: #{ikd_forward.7} parent=5 // pred_fallthru
        _
      %p679 = scmp.le.s32.totalorder 1, %s9
      %p680 = scmp.lt.s32.totalorder %s9, 3
      %p681 = pnand %p679, %p680
      %p682 = pneg %p681
      // Predicated region
      $region63: #{ikd_forward.7} parent=5 // pred_check
        _
      $region64: #{ikd_forward.7} parent=5 // pred_check_branch
        %684 = sbr.rel (%p681) target = $region66
      $region65: #{ikd_forward.7} parent=5 // pred_region
        %s685 = ssub.s32 %s9, 1
        %s686 = sand.u32 %s22, 1
        %s687 = sand.u32 %s22, 1
        %s688 = smul.addr %s687, 1024
        %s689 = scalar_lea.vmem [#allocation2], %s688
        // Predicated region
        $region67: #{ikd_forward.7} parent=65 // pred_check
          %p690 = pneg %p35
        $region68: #{ikd_forward.7} parent=65 // pred_check_branch
          %692 = sbr.rel (%p690) target = $region70
        $region69: #{ikd_forward.7} parent=65 // pred_region
          _
        $region70: #{ikd_forward.7} parent=65 // pred_fallthru
          _
        %s693 = sand.u32 %s22, 1
        %s694 = sand.u32 %s22, 1
        %s695 = smul.addr %s694, 1024
        %s696 = scalar_lea.vmem [#allocation2], %s695
        %p697 = pneg %p35
        %p698 = pneg %p32
        %p699 = pneg %p56
        %p700 = pneg %p53
        %p701 = pneg %p77
        %p702 = pneg %p74
        %p703 = pneg %p103
        %p704 = pneg %p100
        %p705 = scmp.lt.s32.totalorder %s14, 1
        %s706 = scalar_select %p705, %s14, 1
        %s707 = smul.addr %s706, 128
        %s708 = smul.addr %s707, 8
        %s709 = scalar_lea.vmem %s3, %s708
        %p710 = scmp.lt.s32.totalorder %s14, 1
        %s711 = scalar_select %p710, %s14, 1
        %s712 = smul.addr %s711, 128
        %s713 = smul.addr %s712, 8
        %s714 = scalar_lea.vmem %s3, %s713
        %v716 = vld [vmem:[%s689] sm:$0xff]
        %v717 = vld [vmem:[%s689 + $0x8] sm:$0xff]
        %v718 = vld [vmem:[%s689 + $0x10] sm:$0xff]
        %v719 = vld [vmem:[%s689 + $0x18] sm:$0xff]
        %v720 = vld [vmem:[%s689 + $0x20] sm:$0xff]
        %v721 = vld [vmem:[%s689 + $0x28] sm:$0xff]
        %v722 = vld [vmem:[%s689 + $0x30] sm:$0xff]
        %v723 = vld [vmem:[%s689 + $0x38] sm:$0xff]
        %v724 = vld [vmem:[%s689 + $0x40] sm:$0xff]
        %v725 = vld [vmem:[%s689 + $0x48] sm:$0xff]
        %v726 = vld [vmem:[%s689 + $0x50] sm:$0xff]
        %v727 = vld [vmem:[%s689 + $0x58] sm:$0xff]
        %v728 = vld [vmem:[%s689 + $0x60] sm:$0xff]
        %v729 = vld [vmem:[%s689 + $0x68] sm:$0xff]
        %v730 = vld [vmem:[%s689 + $0x70] sm:$0xff]
        %v731 = vld [vmem:[%s689 + $0x78] sm:$0xff]
        %v732 = vld [vmem:[%s689 + $0x80] sm:$0xff]
        %v733 = vld [vmem:[%s689 + $0x88] sm:$0xff]
        %v734 = vld [vmem:[%s689 + $0x90] sm:$0xff]
        %v735 = vld [vmem:[%s689 + $0x98] sm:$0xff]
        %v736 = vld [vmem:[%s689 + $0xa0] sm:$0xff]
        %v737 = vld [vmem:[%s689 + $0xa8] sm:$0xff]
        %v738 = vld [vmem:[%s689 + $0xb0] sm:$0xff]
        %v739 = vld [vmem:[%s689 + $0xb8] sm:$0xff]
        %v740 = vld [vmem:[%s689 + $0xc0] sm:$0xff]
        %v741 = vld [vmem:[%s689 + $0xc8] sm:$0xff]
        %v742 = vld [vmem:[%s689 + $0xd0] sm:$0xff]
        %v743 = vld [vmem:[%s689 + $0xd8] sm:$0xff]
        %v744 = vld [vmem:[%s689 + $0xe0] sm:$0xff]
        %v745 = vld [vmem:[%s689 + $0xe8] sm:$0xff]
        %v746 = vld [vmem:[%s689 + $0xf0] sm:$0xff]
        %v747 = vld [vmem:[%s689 + $0xf8] sm:$0xff]
        %v748 = vld [vmem:[%s689 + $0x100] sm:$0xff]
        %v749 = vld [vmem:[%s689 + $0x108] sm:$0xff]
        %v750 = vld [vmem:[%s689 + $0x110] sm:$0xff]
        %v751 = vld [vmem:[%s689 + $0x118] sm:$0xff]
        %v752 = vld [vmem:[%s689 + $0x120] sm:$0xff]
        %v753 = vld [vmem:[%s689 + $0x128] sm:$0xff]
        %v754 = vld [vmem:[%s689 + $0x130] sm:$0xff]
        %v755 = vld [vmem:[%s689 + $0x138] sm:$0xff]
        %v756 = vld [vmem:[%s689 + $0x140] sm:$0xff]
        %v757 = vld [vmem:[%s689 + $0x148] sm:$0xff]
        %v758 = vld [vmem:[%s689 + $0x150] sm:$0xff]
        %v759 = vld [vmem:[%s689 + $0x158] sm:$0xff]
        %v760 = vld [vmem:[%s689 + $0x160] sm:$0xff]
        %v761 = vld [vmem:[%s689 + $0x168] sm:$0xff]
        %v762 = vld [vmem:[%s689 + $0x170] sm:$0xff]
        %v763 = vld [vmem:[%s689 + $0x178] sm:$0xff]
        %v764 = vld [vmem:[%s689 + $0x180] sm:$0xff]
        %v765 = vld [vmem:[%s689 + $0x188] sm:$0xff]
        %v766 = vld [vmem:[%s689 + $0x190] sm:$0xff]
        %v767 = vld [vmem:[%s689 + $0x198] sm:$0xff]
        %v768 = vld [vmem:[%s689 + $0x1a0] sm:$0xff]
        %v769 = vld [vmem:[%s689 + $0x1a8] sm:$0xff]
        %v770 = vld [vmem:[%s689 + $0x1b0] sm:$0xff]
        %v771 = vld [vmem:[%s689 + $0x1b8] sm:$0xff]
        %v772 = vld [vmem:[%s689 + $0x1c0] sm:$0xff]
        %v773 = vld [vmem:[%s689 + $0x1c8] sm:$0xff]
        %v774 = vld [vmem:[%s689 + $0x1d0] sm:$0xff]
        %v775 = vld [vmem:[%s689 + $0x1d8] sm:$0xff]
        %v776 = vld [vmem:[%s689 + $0x1e0] sm:$0xff]
        %v777 = vld [vmem:[%s689 + $0x1e8] sm:$0xff]
        %v778 = vld [vmem:[%s689 + $0x1f0] sm:$0xff]
        %v779 = vld [vmem:[%s689 + $0x1f8] sm:$0xff]
        %v780 = vld [vmem:[%s689 + $0x200] sm:$0xff]
        %v781 = vld [vmem:[%s689 + $0x208] sm:$0xff]
        %v782 = vld [vmem:[%s689 + $0x210] sm:$0xff]
        %v783 = vld [vmem:[%s689 + $0x218] sm:$0xff]
        %v784 = vld [vmem:[%s689 + $0x220] sm:$0xff]
        %v785 = vld [vmem:[%s689 + $0x228] sm:$0xff]
        %v786 = vld [vmem:[%s689 + $0x230] sm:$0xff]
        %v787 = vld [vmem:[%s689 + $0x238] sm:$0xff]
        %v788 = vld [vmem:[%s689 + $0x240] sm:$0xff]
        %v789 = vld [vmem:[%s689 + $0x248] sm:$0xff]
        %v790 = vld [vmem:[%s689 + $0x250] sm:$0xff]
        %v791 = vld [vmem:[%s689 + $0x258] sm:$0xff]
        %v792 = vld [vmem:[%s689 + $0x260] sm:$0xff]
        %v793 = vld [vmem:[%s689 + $0x268] sm:$0xff]
        %v794 = vld [vmem:[%s689 + $0x270] sm:$0xff]
        %v795 = vld [vmem:[%s689 + $0x278] sm:$0xff]
        %v796 = vld [vmem:[%s689 + $0x280] sm:$0xff]
        %v797 = vld [vmem:[%s689 + $0x288] sm:$0xff]
        %v798 = vld [vmem:[%s689 + $0x290] sm:$0xff]
        %v799 = vld [vmem:[%s689 + $0x298] sm:$0xff]
        %v800 = vld [vmem:[%s689 + $0x2a0] sm:$0xff]
        %v801 = vld [vmem:[%s689 + $0x2a8] sm:$0xff]
        %v802 = vld [vmem:[%s689 + $0x2b0] sm:$0xff]
        %v803 = vld [vmem:[%s689 + $0x2b8] sm:$0xff]
        %v804 = vld [vmem:[%s689 + $0x2c0] sm:$0xff]
        %v805 = vld [vmem:[%s689 + $0x2c8] sm:$0xff]
        %v806 = vld [vmem:[%s689 + $0x2d0] sm:$0xff]
        %v807 = vld [vmem:[%s689 + $0x2d8] sm:$0xff]
        %v808 = vld [vmem:[%s689 + $0x2e0] sm:$0xff]
        %v809 = vld [vmem:[%s689 + $0x2e8] sm:$0xff]
        %v810 = vld [vmem:[%s689 + $0x2f0] sm:$0xff]
        %v811 = vld [vmem:[%s689 + $0x2f8] sm:$0xff]
        %v812 = vld [vmem:[%s689 + $0x300] sm:$0xff]
        %v813 = vld [vmem:[%s689 + $0x308] sm:$0xff]
        %v814 = vld [vmem:[%s689 + $0x310] sm:$0xff]
        %v815 = vld [vmem:[%s689 + $0x318] sm:$0xff]
        %v816 = vld [vmem:[%s689 + $0x320] sm:$0xff]
        %v817 = vld [vmem:[%s689 + $0x328] sm:$0xff]
        %v818 = vld [vmem:[%s689 + $0x330] sm:$0xff]
        %v819 = vld [vmem:[%s689 + $0x338] sm:$0xff]
        %v820 = vld [vmem:[%s689 + $0x340] sm:$0xff]
        %v821 = vld [vmem:[%s689 + $0x348] sm:$0xff]
        %v822 = vld [vmem:[%s689 + $0x350] sm:$0xff]
        %v823 = vld [vmem:[%s689 + $0x358] sm:$0xff]
        %v824 = vld [vmem:[%s689 + $0x360] sm:$0xff]
        %v825 = vld [vmem:[%s689 + $0x368] sm:$0xff]
        %v826 = vld [vmem:[%s689 + $0x370] sm:$0xff]
        %v827 = vld [vmem:[%s689 + $0x378] sm:$0xff]
        %v828 = vld [vmem:[%s689 + $0x380] sm:$0xff]
        %v829 = vld [vmem:[%s689 + $0x388] sm:$0xff]
        %v830 = vld [vmem:[%s689 + $0x390] sm:$0xff]
        %v831 = vld [vmem:[%s689 + $0x398] sm:$0xff]
        %v832 = vld [vmem:[%s689 + $0x3a0] sm:$0xff]
        %v833 = vld [vmem:[%s689 + $0x3a8] sm:$0xff]
        %v834 = vld [vmem:[%s689 + $0x3b0] sm:$0xff]
        %v835 = vld [vmem:[%s689 + $0x3b8] sm:$0xff]
        %v836 = vld [vmem:[%s689 + $0x3c0] sm:$0xff]
        %v837 = vld [vmem:[%s689 + $0x3c8] sm:$0xff]
        %v838 = vld [vmem:[%s689 + $0x3d0] sm:$0xff]
        %v839 = vld [vmem:[%s689 + $0x3d8] sm:$0xff]
        %v840 = vld [vmem:[%s689 + $0x3e0] sm:$0xff]
        %v841 = vld [vmem:[%s689 + $0x3e8] sm:$0xff]
        %v842 = vld [vmem:[%s689 + $0x3f0] sm:$0xff]
        %v843 = vld [vmem:[%s689 + $0x3f8] sm:$0xff]
        %v844 = vpack.c.bf16 %v717, %v716
        %v845 = vpack.c.bf16 %v719, %v718
        %v846 = vpack.c.bf16 %v721, %v720
        %v847 = vpack.c.bf16 %v723, %v722
        %v848 = vpack.c.bf16 %v725, %v724
        %v849 = vpack.c.bf16 %v727, %v726
        %v850 = vpack.c.bf16 %v729, %v728
        %v851 = vpack.c.bf16 %v731, %v730
        %v852 = vpack.c.bf16 %v733, %v732
        %v853 = vpack.c.bf16 %v735, %v734
        %v854 = vpack.c.bf16 %v737, %v736
        %v855 = vpack.c.bf16 %v739, %v738
        %v856 = vpack.c.bf16 %v741, %v740
        %v857 = vpack.c.bf16 %v743, %v742
        %v858 = vpack.c.bf16 %v745, %v744
        %v859 = vpack.c.bf16 %v747, %v746
        %v860 = vpack.c.bf16 %v749, %v748
        %v861 = vpack.c.bf16 %v751, %v750
        %v862 = vpack.c.bf16 %v753, %v752
        %v863 = vpack.c.bf16 %v755, %v754
        %v864 = vpack.c.bf16 %v757, %v756
        %v865 = vpack.c.bf16 %v759, %v758
        %v866 = vpack.c.bf16 %v761, %v760
        %v867 = vpack.c.bf16 %v763, %v762
        %v868 = vpack.c.bf16 %v765, %v764
        %v869 = vpack.c.bf16 %v767, %v766
        %v870 = vpack.c.bf16 %v769, %v768
        %v871 = vpack.c.bf16 %v771, %v770
        %v872 = vpack.c.bf16 %v773, %v772
        %v873 = vpack.c.bf16 %v775, %v774
        %v874 = vpack.c.bf16 %v777, %v776
        %v875 = vpack.c.bf16 %v779, %v778
        %v876 = vpack.c.bf16 %v781, %v780
        %v877 = vpack.c.bf16 %v783, %v782
        %v878 = vpack.c.bf16 %v785, %v784
        %v879 = vpack.c.bf16 %v787, %v786
        %v880 = vpack.c.bf16 %v789, %v788
        %v881 = vpack.c.bf16 %v791, %v790
        %v882 = vpack.c.bf16 %v793, %v792
        %v883 = vpack.c.bf16 %v795, %v794
        %v884 = vpack.c.bf16 %v797, %v796
        %v885 = vpack.c.bf16 %v799, %v798
        %v886 = vpack.c.bf16 %v801, %v800
        %v887 = vpack.c.bf16 %v803, %v802
        %v888 = vpack.c.bf16 %v805, %v804
        %v889 = vpack.c.bf16 %v807, %v806
        %v890 = vpack.c.bf16 %v809, %v808
        %v891 = vpack.c.bf16 %v811, %v810
        %v892 = vpack.c.bf16 %v813, %v812
        %v893 = vpack.c.bf16 %v815, %v814
        %v894 = vpack.c.bf16 %v817, %v816
        %v895 = vpack.c.bf16 %v819, %v818
        %v896 = vpack.c.bf16 %v821, %v820
        %v897 = vpack.c.bf16 %v823, %v822
        %v898 = vpack.c.bf16 %v825, %v824
        %v899 = vpack.c.bf16 %v827, %v826
        %v900 = vpack.c.bf16 %v829, %v828
        %v901 = vpack.c.bf16 %v831, %v830
        %v902 = vpack.c.bf16 %v833, %v832
        %v903 = vpack.c.bf16 %v835, %v834
        %v904 = vpack.c.bf16 %v837, %v836
        %v905 = vpack.c.bf16 %v839, %v838
        %v906 = vpack.c.bf16 %v841, %v840
        %v907 = vpack.c.bf16 %v843, %v842
        %v908 = vld [vmem:[%s1] sm:$0x7]
        %v909 = vpack.c.bf16 %v908, %v908
        %v910 = vld [vmem:[%s2] sm:$0x1]
        %v912 = vlaneseq
        %v913 = vshrl.u32 %v912, 7
        %v914 = vsub.s32 0, %v913
        %v915 = vrot.slane %v910, %v914
        %vm917 = vcmask 23552
        %v919 = vsel %vm917, %v844, 0
        %v922 = vsel %vm917, %v845, 0
        %v925 = vsel %vm917, %v846, 0
        %v928 = vsel %vm917, %v847, 0
        %v931 = vsel %vm917, %v848, 0
        %v934 = vsel %vm917, %v849, 0
        %v937 = vsel %vm917, %v850, 0
        %v940 = vsel %vm917, %v851, 0
        %v943 = vsel %vm917, %v852, 0
        %v946 = vsel %vm917, %v853, 0
        %v949 = vsel %vm917, %v854, 0
        %v952 = vsel %vm917, %v855, 0
        %v955 = vsel %vm917, %v856, 0
        %v958 = vsel %vm917, %v857, 0
        %v961 = vsel %vm917, %v858, 0
        %v964 = vsel %vm917, %v859, 0
        %v967 = vsel %vm917, %v860, 0
        %v970 = vsel %vm917, %v861, 0
        %v973 = vsel %vm917, %v862, 0
        %v976 = vsel %vm917, %v863, 0
        %v979 = vsel %vm917, %v864, 0
        %v982 = vsel %vm917, %v865, 0
        %v985 = vsel %vm917, %v866, 0
        %v988 = vsel %vm917, %v867, 0
        %v991 = vsel %vm917, %v868, 0
        %v994 = vsel %vm917, %v869, 0
        %v997 = vsel %vm917, %v870, 0
        %v1000 = vsel %vm917, %v871, 0
        %v1003 = vsel %vm917, %v872, 0
        %v1006 = vsel %vm917, %v873, 0
        %v1009 = vsel %vm917, %v874, 0
        %v1012 = vsel %vm917, %v875, 0
        %v1015 = vsel %vm917, %v876, 0
        %v1018 = vsel %vm917, %v877, 0
        %v1021 = vsel %vm917, %v878, 0
        %v1024 = vsel %vm917, %v879, 0
        %v1027 = vsel %vm917, %v880, 0
        %v1030 = vsel %vm917, %v881, 0
        %v1033 = vsel %vm917, %v882, 0
        %v1036 = vsel %vm917, %v883, 0
        %v1039 = vsel %vm917, %v884, 0
        %v1042 = vsel %vm917, %v885, 0
        %v1045 = vsel %vm917, %v886, 0
        %v1048 = vsel %vm917, %v887, 0
        %v1051 = vsel %vm917, %v888, 0
        %v1054 = vsel %vm917, %v889, 0
        %v1057 = vsel %vm917, %v890, 0
        %v1060 = vsel %vm917, %v891, 0
        %v1063 = vsel %vm917, %v892, 0
        %v1066 = vsel %vm917, %v893, 0
        %v1069 = vsel %vm917, %v894, 0
        %v1072 = vsel %vm917, %v895, 0
        %v1075 = vsel %vm917, %v896, 0
        %v1078 = vsel %vm917, %v897, 0
        %v1081 = vsel %vm917, %v898, 0
        %v1084 = vsel %vm917, %v899, 0
        %v1087 = vsel %vm917, %v900, 0
        %v1090 = vsel %vm917, %v901, 0
        %v1093 = vsel %vm917, %v902, 0
        %v1096 = vsel %vm917, %v903, 0
        %v1099 = vsel %vm917, %v904, 0
        %v1102 = vsel %vm917, %v905, 0
        %v1105 = vsel %vm917, %v906, 0
        %v1108 = vsel %vm917, %v907, 0
        %vm1110 = vcmask 1040384
        %vm1111 = vcmask 1041408
        %v1112 = vsel %vm1110, 4294967295, 65535
        %v1113 = vsel %vm1111, %v1112, 0
        %v1115 = vand.u32 %v909, %v1113
        %1117 = vmatprep.subr.bf16.mxu0 0
        %1118 = vmatpush1.bf16.msra.mxu0 0
        %1119 = vmatprep.subr.bf16.mxu0 0
        %1120 = vmatpush1.bf16.msra.mxu0 0
        %1121 = vmatprep.subr.bf16.mxu0 0
        %1122 = vmatpush1.bf16.msra.mxu0 0
        %1123 = vmatprep.subr.bf16.mxu0 0
        %1124 = vmatpush1.bf16.msra.mxu0 0
        %1125 = vmatprep.subr.bf16.mxu0 0
        %1126 = vmatpush1.bf16.msra.mxu0 0
        %1127 = vmatprep.subr.bf16.mxu0 0
        %1128 = vmatpush1.bf16.msra.mxu0 0
        %1129 = vmatprep.subr.bf16.mxu0 0
        %1130 = vmatpush1.bf16.msra.mxu0 0
        %1131 = vmatprep.subr.bf16.mxu0 0
        %1132 = vmatpush1.bf16.msra.mxu0 %v1115
        %1133 = vmatprep.subr.bf16.mxu0 0
        %1134 = vmatpush2.bf16.msra.mxu0 0
        %1135 = vmatprep.subr.bf16.mxu0 0
        %1136 = vmatpush2.bf16.msra.mxu0 0
        %1137 = vmatprep.subr.bf16.mxu0 0
        %1138 = vmatpush2.bf16.msra.mxu0 0
        %1139 = vmatprep.subr.bf16.mxu0 0
        %1140 = vmatpush2.bf16.msra.mxu0 0
        %1141 = vmatprep.subr.bf16.mxu0 0
        %1142 = vmatpush2.bf16.msra.mxu0 0
        %1143 = vmatprep.subr.bf16.mxu0 0
        %1144 = vmatpush2.bf16.msra.mxu0 0
        %1145 = vmatprep.subr.bf16.mxu0 0
        %1146 = vmatpush2.bf16.msra.mxu0 0
        %1147 = vmatprep.subr.bf16.mxu0 0
        %1148 = vmatpush2.bf16.msra.mxu0 0
        %1149 = vmatprep.mubr.bf16.mxu0 0
        %1150 = vmatmul.mubr.bf16.gmra.mxu0 %v919
        %v1151 = vpop.f32.mrf.mxu0
        %v1152 = vadd.f32 %v915, %v1151
        %v1153 = vpop.f32.mrf.mxu0
        %v1154 = vpop.f32.mrf.mxu0
        %v1155 = vadd.f32 %v915, %v1154
        %v1156 = vpop.f32.mrf.mxu0
        %1157 = vmatprep.mubr.bf16.mxu0 0
        %1158 = vmatmul.mubr.bf16.gmra.mxu0 %v922
        %v1159 = vpop.f32.mrf.mxu0
        %v1160 = vadd.f32 %v915, %v1159
        %v1161 = vpop.f32.mrf.mxu0
        %v1162 = vpop.f32.mrf.mxu0
        %v1163 = vadd.f32 %v915, %v1162
        %v1164 = vpop.f32.mrf.mxu0
        %1165 = vmatprep.mubr.bf16.mxu0 0
        %1166 = vmatmul.mubr.bf16.gmra.mxu0 %v925
        %v1167 = vpop.f32.mrf.mxu0
        %v1168 = vadd.f32 %v915, %v1167
        %v1169 = vpop.f32.mrf.mxu0
        %v1170 = vpop.f32.mrf.mxu0
        %v1171 = vadd.f32 %v915, %v1170
        %v1172 = vpop.f32.mrf.mxu0
        %1173 = vmatprep.mubr.bf16.mxu0 0
        %1174 = vmatmul.mubr.bf16.gmra.mxu0 %v928
        %v1175 = vpop.f32.mrf.mxu0
        %v1176 = vadd.f32 %v915, %v1175
        %v1177 = vpop.f32.mrf.mxu0
        %v1178 = vpop.f32.mrf.mxu0
        %v1179 = vadd.f32 %v915, %v1178
        %v1180 = vpop.f32.mrf.mxu0
        %1181 = vmatprep.mubr.bf16.mxu0 0
        %1182 = vmatmul.mubr.bf16.gmra.mxu0 %v931
        %v1183 = vpop.f32.mrf.mxu0
        %v1184 = vadd.f32 %v915, %v1183
        %v1185 = vpop.f32.mrf.mxu0
        %v1186 = vpop.f32.mrf.mxu0
        %v1187 = vadd.f32 %v915, %v1186
        %v1188 = vpop.f32.mrf.mxu0
        %1189 = vmatprep.mubr.bf16.mxu0 0
        %1190 = vmatmul.mubr.bf16.gmra.mxu0 %v934
        %v1191 = vpop.f32.mrf.mxu0
        %v1192 = vadd.f32 %v915, %v1191
        %v1193 = vpop.f32.mrf.mxu0
        %v1194 = vpop.f32.mrf.mxu0
        %v1195 = vadd.f32 %v915, %v1194
        %v1196 = vpop.f32.mrf.mxu0
        %1197 = vmatprep.mubr.bf16.mxu0 0
        %1198 = vmatmul.mubr.bf16.gmra.mxu0 %v937
        %v1199 = vpop.f32.mrf.mxu0
        %v1200 = vadd.f32 %v915, %v1199
        %v1201 = vpop.f32.mrf.mxu0
        %v1202 = vpop.f32.mrf.mxu0
        %v1203 = vadd.f32 %v915, %v1202
        %v1204 = vpop.f32.mrf.mxu0
        %1205 = vmatprep.mubr.bf16.mxu0 0
        %1206 = vmatmul.mubr.bf16.gmra.mxu0 %v940
        %v1207 = vpop.f32.mrf.mxu0
        %v1208 = vadd.f32 %v915, %v1207
        %v1209 = vpop.f32.mrf.mxu0
        %v1210 = vpop.f32.mrf.mxu0
        %v1211 = vadd.f32 %v915, %v1210
        %v1212 = vpop.f32.mrf.mxu0
        %1213 = vmatprep.mubr.bf16.mxu0 0
        %1214 = vmatmul.mubr.bf16.gmra.mxu0 %v943
        %v1215 = vpop.f32.mrf.mxu0
        %v1216 = vadd.f32 %v915, %v1215
        %v1217 = vpop.f32.mrf.mxu0
        %v1218 = vpop.f32.mrf.mxu0
        %v1219 = vadd.f32 %v915, %v1218
        %v1220 = vpop.f32.mrf.mxu0
        %1221 = vmatprep.mubr.bf16.mxu0 0
        %1222 = vmatmul.mubr.bf16.gmra.mxu0 %v946
        %v1223 = vpop.f32.mrf.mxu0
        %v1224 = vadd.f32 %v915, %v1223
        %v1225 = vpop.f32.mrf.mxu0
        %v1226 = vpop.f32.mrf.mxu0
        %v1227 = vadd.f32 %v915, %v1226
        %v1228 = vpop.f32.mrf.mxu0
        %1229 = vmatprep.mubr.bf16.mxu0 0
        %1230 = vmatmul.mubr.bf16.gmra.mxu0 %v949
        %v1231 = vpop.f32.mrf.mxu0
        %v1232 = vadd.f32 %v915, %v1231
        %v1233 = vpop.f32.mrf.mxu0
        %v1234 = vpop.f32.mrf.mxu0
        %v1235 = vadd.f32 %v915, %v1234
        %v1236 = vpop.f32.mrf.mxu0
        %1237 = vmatprep.mubr.bf16.mxu0 0
        %1238 = vmatmul.mubr.bf16.gmra.mxu0 %v952
        %v1239 = vpop.f32.mrf.mxu0
        %v1240 = vadd.f32 %v915, %v1239
        %v1241 = vpop.f32.mrf.mxu0
        %v1242 = vpop.f32.mrf.mxu0
        %v1243 = vadd.f32 %v915, %v1242
        %v1244 = vpop.f32.mrf.mxu0
        %1245 = vmatprep.mubr.bf16.mxu0 0
        %1246 = vmatmul.mubr.bf16.gmra.mxu0 %v955
        %v1247 = vpop.f32.mrf.mxu0
        %v1248 = vadd.f32 %v915, %v1247
        %v1249 = vpop.f32.mrf.mxu0
        %v1250 = vpop.f32.mrf.mxu0
        %v1251 = vadd.f32 %v915, %v1250
        %v1252 = vpop.f32.mrf.mxu0
        %1253 = vmatprep.mubr.bf16.mxu0 0
        %1254 = vmatmul.mubr.bf16.gmra.mxu0 %v958
        %v1255 = vpop.f32.mrf.mxu0
        %v1256 = vadd.f32 %v915, %v1255
        %v1257 = vpop.f32.mrf.mxu0
        %v1258 = vpop.f32.mrf.mxu0
        %v1259 = vadd.f32 %v915, %v1258
        %v1260 = vpop.f32.mrf.mxu0
        %1261 = vmatprep.mubr.bf16.mxu0 0
        %1262 = vmatmul.mubr.bf16.gmra.mxu0 %v961
        %v1263 = vpop.f32.mrf.mxu0
        %v1264 = vadd.f32 %v915, %v1263
        %v1265 = vpop.f32.mrf.mxu0
        %v1266 = vpop.f32.mrf.mxu0
        %v1267 = vadd.f32 %v915, %v1266
        %v1268 = vpop.f32.mrf.mxu0
        %1269 = vmatprep.mubr.bf16.mxu0 0
        %1270 = vmatmul.mubr.bf16.gmra.mxu0 %v964
        %v1271 = vpop.f32.mrf.mxu0
        %v1272 = vadd.f32 %v915, %v1271
        %v1273 = vpop.f32.mrf.mxu0
        %v1274 = vpop.f32.mrf.mxu0
        %v1275 = vadd.f32 %v915, %v1274
        %v1276 = vpop.f32.mrf.mxu0
        %1277 = vmatprep.mubr.bf16.mxu0 0
        %1278 = vmatmul.mubr.bf16.gmra.mxu0 %v967
        %v1279 = vpop.f32.mrf.mxu0
        %v1280 = vadd.f32 %v915, %v1279
        %v1281 = vpop.f32.mrf.mxu0
        %v1282 = vpop.f32.mrf.mxu0
        %v1283 = vadd.f32 %v915, %v1282
        %v1284 = vpop.f32.mrf.mxu0
        %1285 = vmatprep.mubr.bf16.mxu0 0
        %1286 = vmatmul.mubr.bf16.gmra.mxu0 %v970
        %v1287 = vpop.f32.mrf.mxu0
        %v1288 = vadd.f32 %v915, %v1287
        %v1289 = vpop.f32.mrf.mxu0
        %v1290 = vpop.f32.mrf.mxu0
        %v1291 = vadd.f32 %v915, %v1290
        %v1292 = vpop.f32.mrf.mxu0
        %1293 = vmatprep.mubr.bf16.mxu0 0
        %1294 = vmatmul.mubr.bf16.gmra.mxu0 %v973
        %v1295 = vpop.f32.mrf.mxu0
        %v1296 = vadd.f32 %v915, %v1295
        %v1297 = vpop.f32.mrf.mxu0
        %v1298 = vpop.f32.mrf.mxu0
        %v1299 = vadd.f32 %v915, %v1298
        %v1300 = vpop.f32.mrf.mxu0
        %1301 = vmatprep.mubr.bf16.mxu0 0
        %1302 = vmatmul.mubr.bf16.gmra.mxu0 %v976
        %v1303 = vpop.f32.mrf.mxu0
        %v1304 = vadd.f32 %v915, %v1303
        %v1305 = vpop.f32.mrf.mxu0
        %v1306 = vpop.f32.mrf.mxu0
        %v1307 = vadd.f32 %v915, %v1306
        %v1308 = vpop.f32.mrf.mxu0
        %1309 = vmatprep.mubr.bf16.mxu0 0
        %1310 = vmatmul.mubr.bf16.gmra.mxu0 %v979
        %v1311 = vpop.f32.mrf.mxu0
        %v1312 = vadd.f32 %v915, %v1311
        %v1313 = vpop.f32.mrf.mxu0
        %v1314 = vpop.f32.mrf.mxu0
        %v1315 = vadd.f32 %v915, %v1314
        %v1316 = vpop.f32.mrf.mxu0
        %1317 = vmatprep.mubr.bf16.mxu0 0
        %1318 = vmatmul.mubr.bf16.gmra.mxu0 %v982
        %v1319 = vpop.f32.mrf.mxu0
        %v1320 = vadd.f32 %v915, %v1319
        %v1321 = vpop.f32.mrf.mxu0
        %v1322 = vpop.f32.mrf.mxu0
        %v1323 = vadd.f32 %v915, %v1322
        %v1324 = vpop.f32.mrf.mxu0
        %1325 = vmatprep.mubr.bf16.mxu0 0
        %1326 = vmatmul.mubr.bf16.gmra.mxu0 %v985
        %v1327 = vpop.f32.mrf.mxu0
        %v1328 = vadd.f32 %v915, %v1327
        %v1329 = vpop.f32.mrf.mxu0
        %v1330 = vpop.f32.mrf.mxu0
        %v1331 = vadd.f32 %v915, %v1330
        %v1332 = vpop.f32.mrf.mxu0
        %1333 = vmatprep.mubr.bf16.mxu0 0
        %1334 = vmatmul.mubr.bf16.gmra.mxu0 %v988
        %v1335 = vpop.f32.mrf.mxu0
        %v1336 = vadd.f32 %v915, %v1335
        %v1337 = vpop.f32.mrf.mxu0
        %v1338 = vpop.f32.mrf.mxu0
        %v1339 = vadd.f32 %v915, %v1338
        %v1340 = vpop.f32.mrf.mxu0
        %1341 = vmatprep.mubr.bf16.mxu0 0
        %1342 = vmatmul.mubr.bf16.gmra.mxu0 %v991
        %v1343 = vpop.f32.mrf.mxu0
        %v1344 = vadd.f32 %v915, %v1343
        %v1345 = vpop.f32.mrf.mxu0
        %v1346 = vpop.f32.mrf.mxu0
        %v1347 = vadd.f32 %v915, %v1346
        %v1348 = vpop.f32.mrf.mxu0
        %1349 = vmatprep.mubr.bf16.mxu0 0
        %1350 = vmatmul.mubr.bf16.gmra.mxu0 %v994
        %v1351 = vpop.f32.mrf.mxu0
        %v1352 = vadd.f32 %v915, %v1351
        %v1353 = vpop.f32.mrf.mxu0
        %v1354 = vpop.f32.mrf.mxu0
        %v1355 = vadd.f32 %v915, %v1354
        %v1356 = vpop.f32.mrf.mxu0
        %1357 = vmatprep.mubr.bf16.mxu0 0
        %1358 = vmatmul.mubr.bf16.gmra.mxu0 %v997
        %v1359 = vpop.f32.mrf.mxu0
        %v1360 = vadd.f32 %v915, %v1359
        %v1361 = vpop.f32.mrf.mxu0
        %v1362 = vpop.f32.mrf.mxu0
        %v1363 = vadd.f32 %v915, %v1362
        %v1364 = vpop.f32.mrf.mxu0
        %1365 = vmatprep.mubr.bf16.mxu0 0
        %1366 = vmatmul.mubr.bf16.gmra.mxu0 %v1000
        %v1367 = vpop.f32.mrf.mxu0
        %v1368 = vadd.f32 %v915, %v1367
        %v1369 = vpop.f32.mrf.mxu0
        %v1370 = vpop.f32.mrf.mxu0
        %v1371 = vadd.f32 %v915, %v1370
        %v1372 = vpop.f32.mrf.mxu0
        %1373 = vmatprep.mubr.bf16.mxu0 0
        %1374 = vmatmul.mubr.bf16.gmra.mxu0 %v1003
        %v1375 = vpop.f32.mrf.mxu0
        %v1376 = vadd.f32 %v915, %v1375
        %v1377 = vpop.f32.mrf.mxu0
        %v1378 = vpop.f32.mrf.mxu0
        %v1379 = vadd.f32 %v915, %v1378
        %v1380 = vpop.f32.mrf.mxu0
        %1381 = vmatprep.mubr.bf16.mxu0 0
        %1382 = vmatmul.mubr.bf16.gmra.mxu0 %v1006
        %v1383 = vpop.f32.mrf.mxu0
        %v1384 = vadd.f32 %v915, %v1383
        %v1385 = vpop.f32.mrf.mxu0
        %v1386 = vpop.f32.mrf.mxu0
        %v1387 = vadd.f32 %v915, %v1386
        %v1388 = vpop.f32.mrf.mxu0
        %1389 = vmatprep.mubr.bf16.mxu0 0
        %1390 = vmatmul.mubr.bf16.gmra.mxu0 %v1009
        %v1391 = vpop.f32.mrf.mxu0
        %v1392 = vadd.f32 %v915, %v1391
        %v1393 = vpop.f32.mrf.mxu0
        %v1394 = vpop.f32.mrf.mxu0
        %v1395 = vadd.f32 %v915, %v1394
        %v1396 = vpop.f32.mrf.mxu0
        %1397 = vmatprep.mubr.bf16.mxu0 0
        %1398 = vmatmul.mubr.bf16.gmra.mxu0 %v1012
        %v1399 = vpop.f32.mrf.mxu0
        %v1400 = vadd.f32 %v915, %v1399
        %v1401 = vpop.f32.mrf.mxu0
        %v1402 = vpop.f32.mrf.mxu0
        %v1403 = vadd.f32 %v915, %v1402
        %v1404 = vpop.f32.mrf.mxu0
        %1405 = vmatprep.mubr.bf16.mxu0 0
        %1406 = vmatmul.mubr.bf16.gmra.mxu0 %v1015
        %v1407 = vpop.f32.mrf.mxu0
        %v1408 = vadd.f32 %v915, %v1407
        %v1409 = vpop.f32.mrf.mxu0
        %v1410 = vpop.f32.mrf.mxu0
        %v1411 = vadd.f32 %v915, %v1410
        %v1412 = vpop.f32.mrf.mxu0
        %1413 = vmatprep.mubr.bf16.mxu0 0
        %1414 = vmatmul.mubr.bf16.gmra.mxu0 %v1018
        %v1415 = vpop.f32.mrf.mxu0
        %v1416 = vadd.f32 %v915, %v1415
        %v1417 = vpop.f32.mrf.mxu0
        %v1418 = vpop.f32.mrf.mxu0
        %v1419 = vadd.f32 %v915, %v1418
        %v1420 = vpop.f32.mrf.mxu0
        %1421 = vmatprep.mubr.bf16.mxu0 0
        %1422 = vmatmul.mubr.bf16.gmra.mxu0 %v1021
        %v1423 = vpop.f32.mrf.mxu0
        %v1424 = vadd.f32 %v915, %v1423
        %v1425 = vpop.f32.mrf.mxu0
        %v1426 = vpop.f32.mrf.mxu0
        %v1427 = vadd.f32 %v915, %v1426
        %v1428 = vpop.f32.mrf.mxu0
        %1429 = vmatprep.mubr.bf16.mxu0 0
        %1430 = vmatmul.mubr.bf16.gmra.mxu0 %v1024
        %v1431 = vpop.f32.mrf.mxu0
        %v1432 = vadd.f32 %v915, %v1431
        %v1433 = vpop.f32.mrf.mxu0
        %v1434 = vpop.f32.mrf.mxu0
        %v1435 = vadd.f32 %v915, %v1434
        %v1436 = vpop.f32.mrf.mxu0
        %1437 = vmatprep.mubr.bf16.mxu0 0
        %1438 = vmatmul.mubr.bf16.gmra.mxu0 %v1027
        %v1439 = vpop.f32.mrf.mxu0
        %v1440 = vadd.f32 %v915, %v1439
        %v1441 = vpop.f32.mrf.mxu0
        %v1442 = vpop.f32.mrf.mxu0
        %v1443 = vadd.f32 %v915, %v1442
        %v1444 = vpop.f32.mrf.mxu0
        %1445 = vmatprep.mubr.bf16.mxu0 0
        %1446 = vmatmul.mubr.bf16.gmra.mxu0 %v1030
        %v1447 = vpop.f32.mrf.mxu0
        %v1448 = vadd.f32 %v915, %v1447
        %v1449 = vpop.f32.mrf.mxu0
        %v1450 = vpop.f32.mrf.mxu0
        %v1451 = vadd.f32 %v915, %v1450
        %v1452 = vpop.f32.mrf.mxu0
        %1453 = vmatprep.mubr.bf16.mxu0 0
        %1454 = vmatmul.mubr.bf16.gmra.mxu0 %v1033
        %v1455 = vpop.f32.mrf.mxu0
        %v1456 = vadd.f32 %v915, %v1455
        %v1457 = vpop.f32.mrf.mxu0
        %v1458 = vpop.f32.mrf.mxu0
        %v1459 = vadd.f32 %v915, %v1458
        %v1460 = vpop.f32.mrf.mxu0
        %1461 = vmatprep.mubr.bf16.mxu0 0
        %1462 = vmatmul.mubr.bf16.gmra.mxu0 %v1036
        %v1463 = vpop.f32.mrf.mxu0
        %v1464 = vadd.f32 %v915, %v1463
        %v1465 = vpop.f32.mrf.mxu0
        %v1466 = vpop.f32.mrf.mxu0
        %v1467 = vadd.f32 %v915, %v1466
        %v1468 = vpop.f32.mrf.mxu0
        %1469 = vmatprep.mubr.bf16.mxu0 0
        %1470 = vmatmul.mubr.bf16.gmra.mxu0 %v1039
        %v1471 = vpop.f32.mrf.mxu0
        %v1472 = vadd.f32 %v915, %v1471
        %v1473 = vpop.f32.mrf.mxu0
        %v1474 = vpop.f32.mrf.mxu0
        %v1475 = vadd.f32 %v915, %v1474
        %v1476 = vpop.f32.mrf.mxu0
        %1477 = vmatprep.mubr.bf16.mxu0 0
        %1478 = vmatmul.mubr.bf16.gmra.mxu0 %v1042
        %v1479 = vpop.f32.mrf.mxu0
        %v1480 = vadd.f32 %v915, %v1479
        %v1481 = vpop.f32.mrf.mxu0
        %v1482 = vpop.f32.mrf.mxu0
        %v1483 = vadd.f32 %v915, %v1482
        %v1484 = vpop.f32.mrf.mxu0
        %1485 = vmatprep.mubr.bf16.mxu0 0
        %1486 = vmatmul.mubr.bf16.gmra.mxu0 %v1045
        %v1487 = vpop.f32.mrf.mxu0
        %v1488 = vadd.f32 %v915, %v1487
        %v1489 = vpop.f32.mrf.mxu0
        %v1490 = vpop.f32.mrf.mxu0
        %v1491 = vadd.f32 %v915, %v1490
        %v1492 = vpop.f32.mrf.mxu0
        %1493 = vmatprep.mubr.bf16.mxu0 0
        %1494 = vmatmul.mubr.bf16.gmra.mxu0 %v1048
        %v1495 = vpop.f32.mrf.mxu0
        %v1496 = vadd.f32 %v915, %v1495
        %v1497 = vpop.f32.mrf.mxu0
        %v1498 = vpop.f32.mrf.mxu0
        %v1499 = vadd.f32 %v915, %v1498
        %v1500 = vpop.f32.mrf.mxu0
        %1501 = vmatprep.mubr.bf16.mxu0 0
        %1502 = vmatmul.mubr.bf16.gmra.mxu0 %v1051
        %v1503 = vpop.f32.mrf.mxu0
        %v1504 = vadd.f32 %v915, %v1503
        %v1505 = vpop.f32.mrf.mxu0
        %v1506 = vpop.f32.mrf.mxu0
        %v1507 = vadd.f32 %v915, %v1506
        %v1508 = vpop.f32.mrf.mxu0
        %1509 = vmatprep.mubr.bf16.mxu0 0
        %1510 = vmatmul.mubr.bf16.gmra.mxu0 %v1054
        %v1511 = vpop.f32.mrf.mxu0
        %v1512 = vadd.f32 %v915, %v1511
        %v1513 = vpop.f32.mrf.mxu0
        %v1514 = vpop.f32.mrf.mxu0
        %v1515 = vadd.f32 %v915, %v1514
        %v1516 = vpop.f32.mrf.mxu0
        %1517 = vmatprep.mubr.bf16.mxu0 0
        %1518 = vmatmul.mubr.bf16.gmra.mxu0 %v1057
        %v1519 = vpop.f32.mrf.mxu0
        %v1520 = vadd.f32 %v915, %v1519
        %v1521 = vpop.f32.mrf.mxu0
        %v1522 = vpop.f32.mrf.mxu0
        %v1523 = vadd.f32 %v915, %v1522
        %v1524 = vpop.f32.mrf.mxu0
        %1525 = vmatprep.mubr.bf16.mxu0 0
        %1526 = vmatmul.mubr.bf16.gmra.mxu0 %v1060
        %v1527 = vpop.f32.mrf.mxu0
        %v1528 = vadd.f32 %v915, %v1527
        %v1529 = vpop.f32.mrf.mxu0
        %v1530 = vpop.f32.mrf.mxu0
        %v1531 = vadd.f32 %v915, %v1530
        %v1532 = vpop.f32.mrf.mxu0
        %1533 = vmatprep.mubr.bf16.mxu0 0
        %1534 = vmatmul.mubr.bf16.gmra.mxu0 %v1063
        %v1535 = vpop.f32.mrf.mxu0
        %v1536 = vadd.f32 %v915, %v1535
        %v1537 = vpop.f32.mrf.mxu0
        %v1538 = vpop.f32.mrf.mxu0
        %v1539 = vadd.f32 %v915, %v1538
        %v1540 = vpop.f32.mrf.mxu0
        %1541 = vmatprep.mubr.bf16.mxu0 0
        %1542 = vmatmul.mubr.bf16.gmra.mxu0 %v1066
        %v1543 = vpop.f32.mrf.mxu0
        %v1544 = vadd.f32 %v915, %v1543
        %v1545 = vpop.f32.mrf.mxu0
        %v1546 = vpop.f32.mrf.mxu0
        %v1547 = vadd.f32 %v915, %v1546
        %v1548 = vpop.f32.mrf.mxu0
        %1549 = vmatprep.mubr.bf16.mxu0 0
        %1550 = vmatmul.mubr.bf16.gmra.mxu0 %v1069
        %v1551 = vpop.f32.mrf.mxu0
        %v1552 = vadd.f32 %v915, %v1551
        %v1553 = vpop.f32.mrf.mxu0
        %v1554 = vpop.f32.mrf.mxu0
        %v1555 = vadd.f32 %v915, %v1554
        %v1556 = vpop.f32.mrf.mxu0
        %1557 = vmatprep.mubr.bf16.mxu0 0
        %1558 = vmatmul.mubr.bf16.gmra.mxu0 %v1072
        %v1559 = vpop.f32.mrf.mxu0
        %v1560 = vadd.f32 %v915, %v1559
        %v1561 = vpop.f32.mrf.mxu0
        %v1562 = vpop.f32.mrf.mxu0
        %v1563 = vadd.f32 %v915, %v1562
        %v1564 = vpop.f32.mrf.mxu0
        %1565 = vmatprep.mubr.bf16.mxu0 0
        %1566 = vmatmul.mubr.bf16.gmra.mxu0 %v1075
        %v1567 = vpop.f32.mrf.mxu0
        %v1568 = vadd.f32 %v915, %v1567
        %v1569 = vpop.f32.mrf.mxu0
        %v1570 = vpop.f32.mrf.mxu0
        %v1571 = vadd.f32 %v915, %v1570
        %v1572 = vpop.f32.mrf.mxu0
        %1573 = vmatprep.mubr.bf16.mxu0 0
        %1574 = vmatmul.mubr.bf16.gmra.mxu0 %v1078
        %v1575 = vpop.f32.mrf.mxu0
        %v1576 = vadd.f32 %v915, %v1575
        %v1577 = vpop.f32.mrf.mxu0
        %v1578 = vpop.f32.mrf.mxu0
        %v1579 = vadd.f32 %v915, %v1578
        %v1580 = vpop.f32.mrf.mxu0
        %1581 = vmatprep.mubr.bf16.mxu0 0
        %1582 = vmatmul.mubr.bf16.gmra.mxu0 %v1081
        %v1583 = vpop.f32.mrf.mxu0
        %v1584 = vadd.f32 %v915, %v1583
        %v1585 = vpop.f32.mrf.mxu0
        %v1586 = vpop.f32.mrf.mxu0
        %v1587 = vadd.f32 %v915, %v1586
        %v1588 = vpop.f32.mrf.mxu0
        %1589 = vmatprep.mubr.bf16.mxu0 0
        %1590 = vmatmul.mubr.bf16.gmra.mxu0 %v1084
        %v1591 = vpop.f32.mrf.mxu0
        %v1592 = vadd.f32 %v915, %v1591
        %v1593 = vpop.f32.mrf.mxu0
        %v1594 = vpop.f32.mrf.mxu0
        %v1595 = vadd.f32 %v915, %v1594
        %v1596 = vpop.f32.mrf.mxu0
        %1597 = vmatprep.mubr.bf16.mxu0 0
        %1598 = vmatmul.mubr.bf16.gmra.mxu0 %v1087
        %v1599 = vpop.f32.mrf.mxu0
        %v1600 = vadd.f32 %v915, %v1599
        %v1601 = vpop.f32.mrf.mxu0
        %v1602 = vpop.f32.mrf.mxu0
        %v1603 = vadd.f32 %v915, %v1602
        %v1604 = vpop.f32.mrf.mxu0
        %1605 = vmatprep.mubr.bf16.mxu0 0
        %1606 = vmatmul.mubr.bf16.gmra.mxu0 %v1090
        %v1607 = vpop.f32.mrf.mxu0
        %v1608 = vadd.f32 %v915, %v1607
        %v1609 = vpop.f32.mrf.mxu0
        %v1610 = vpop.f32.mrf.mxu0
        %v1611 = vadd.f32 %v915, %v1610
        %v1612 = vpop.f32.mrf.mxu0
        %1613 = vmatprep.mubr.bf16.mxu0 0
        %1614 = vmatmul.mubr.bf16.gmra.mxu0 %v1093
        %v1615 = vpop.f32.mrf.mxu0
        %v1616 = vadd.f32 %v915, %v1615
        %v1617 = vpop.f32.mrf.mxu0
        %v1618 = vpop.f32.mrf.mxu0
        %v1619 = vadd.f32 %v915, %v1618
        %v1620 = vpop.f32.mrf.mxu0
        %1621 = vmatprep.mubr.bf16.mxu0 0
        %1622 = vmatmul.mubr.bf16.gmra.mxu0 %v1096
        %v1623 = vpop.f32.mrf.mxu0
        %v1624 = vadd.f32 %v915, %v1623
        %v1625 = vpop.f32.mrf.mxu0
        %v1626 = vpop.f32.mrf.mxu0
        %v1627 = vadd.f32 %v915, %v1626
        %v1628 = vpop.f32.mrf.mxu0
        %1629 = vmatprep.mubr.bf16.mxu0 0
        %1630 = vmatmul.mubr.bf16.gmra.mxu0 %v1099
        %v1631 = vpop.f32.mrf.mxu0
        %v1632 = vadd.f32 %v915, %v1631
        %v1633 = vpop.f32.mrf.mxu0
        %v1634 = vpop.f32.mrf.mxu0
        %v1635 = vadd.f32 %v915, %v1634
        %v1636 = vpop.f32.mrf.mxu0
        %1637 = vmatprep.mubr.bf16.mxu0 0
        %1638 = vmatmul.mubr.bf16.gmra.mxu0 %v1102
        %v1639 = vpop.f32.mrf.mxu0
        %v1640 = vadd.f32 %v915, %v1639
        %v1641 = vpop.f32.mrf.mxu0
        %v1642 = vpop.f32.mrf.mxu0
        %v1643 = vadd.f32 %v915, %v1642
        %v1644 = vpop.f32.mrf.mxu0
        %1645 = vmatprep.mubr.bf16.mxu0 0
        %1646 = vmatmul.mubr.bf16.gmra.mxu0 %v1105
        %v1647 = vpop.f32.mrf.mxu0
        %v1648 = vadd.f32 %v915, %v1647
        %v1649 = vpop.f32.mrf.mxu0
        %v1650 = vpop.f32.mrf.mxu0
        %v1651 = vadd.f32 %v915, %v1650
        %v1652 = vpop.f32.mrf.mxu0
        %1653 = vmatprep.mubr.bf16.mxu0 0
        %1654 = vmatmul.mubr.bf16.gmra.mxu0 %v1108
        %v1655 = vpop.f32.mrf.mxu0
        %v1656 = vadd.f32 %v915, %v1655
        %v1657 = vpop.f32.mrf.mxu0
        %v1658 = vpop.f32.mrf.mxu0
        %v1659 = vadd.f32 %v915, %v1658
        %v1660 = vpop.f32.mrf.mxu0
        %1661 = vdwg.mxu0
        %v1662 = vmax.f32 %v1152, 0.0
        %v1663 = vmax.f32 %v1155, 0.0
        %v1664 = vmax.f32 %v1160, 0.0
        %v1665 = vmax.f32 %v1163, 0.0
        %v1666 = vmax.f32 %v1168, 0.0
        %v1667 = vmax.f32 %v1171, 0.0
        %v1668 = vmax.f32 %v1176, 0.0
        %v1669 = vmax.f32 %v1179, 0.0
        %v1670 = vmax.f32 %v1184, 0.0
        %v1671 = vmax.f32 %v1187, 0.0
        %v1672 = vmax.f32 %v1192, 0.0
        %v1673 = vmax.f32 %v1195, 0.0
        %v1674 = vmax.f32 %v1200, 0.0
        %v1675 = vmax.f32 %v1203, 0.0
        %v1676 = vmax.f32 %v1208, 0.0
        %v1677 = vmax.f32 %v1211, 0.0
        %v1678 = vmax.f32 %v1216, 0.0
        %v1679 = vmax.f32 %v1219, 0.0
        %v1680 = vmax.f32 %v1224, 0.0
        %v1681 = vmax.f32 %v1227, 0.0
        %v1682 = vmax.f32 %v1232, 0.0
        %v1683 = vmax.f32 %v1235, 0.0
        %v1684 = vmax.f32 %v1240, 0.0
        %v1685 = vmax.f32 %v1243, 0.0
        %v1686 = vmax.f32 %v1248, 0.0
        %v1687 = vmax.f32 %v1251, 0.0
        %v1688 = vmax.f32 %v1256, 0.0
        %v1689 = vmax.f32 %v1259, 0.0
        %v1690 = vmax.f32 %v1264, 0.0
        %v1691 = vmax.f32 %v1267, 0.0
        %v1692 = vmax.f32 %v1272, 0.0
        %v1693 = vmax.f32 %v1275, 0.0
        %v1694 = vmax.f32 %v1280, 0.0
        %v1695 = vmax.f32 %v1283, 0.0
        %v1696 = vmax.f32 %v1288, 0.0
        %v1697 = vmax.f32 %v1291, 0.0
        %v1698 = vmax.f32 %v1296, 0.0
        %v1699 = vmax.f32 %v1299, 0.0
        %v1700 = vmax.f32 %v1304, 0.0
        %v1701 = vmax.f32 %v1307, 0.0
        %v1702 = vmax.f32 %v1312, 0.0
        %v1703 = vmax.f32 %v1315, 0.0
        %v1704 = vmax.f32 %v1320, 0.0
        %v1705 = vmax.f32 %v1323, 0.0
        %v1706 = vmax.f32 %v1328, 0.0
        %v1707 = vmax.f32 %v1331, 0.0
        %v1708 = vmax.f32 %v1336, 0.0
        %v1709 = vmax.f32 %v1339, 0.0
        %v1710 = vmax.f32 %v1344, 0.0
        %v1711 = vmax.f32 %v1347, 0.0
        %v1712 = vmax.f32 %v1352, 0.0
        %v1713 = vmax.f32 %v1355, 0.0
        %v1714 = vmax.f32 %v1360, 0.0
        %v1715 = vmax.f32 %v1363, 0.0
        %v1716 = vmax.f32 %v1368, 0.0
        %v1717 = vmax.f32 %v1371, 0.0
        %v1718 = vmax.f32 %v1376, 0.0
        %v1719 = vmax.f32 %v1379, 0.0
        %v1720 = vmax.f32 %v1384, 0.0
        %v1721 = vmax.f32 %v1387, 0.0
        %v1722 = vmax.f32 %v1392, 0.0
        %v1723 = vmax.f32 %v1395, 0.0
        %v1724 = vmax.f32 %v1400, 0.0
        %v1725 = vmax.f32 %v1403, 0.0
        %v1726 = vmax.f32 %v1408, 0.0
        %v1727 = vmax.f32 %v1411, 0.0
        %v1728 = vmax.f32 %v1416, 0.0
        %v1729 = vmax.f32 %v1419, 0.0
        %v1730 = vmax.f32 %v1424, 0.0
        %v1731 = vmax.f32 %v1427, 0.0
        %v1732 = vmax.f32 %v1432, 0.0
        %v1733 = vmax.f32 %v1435, 0.0
        %v1734 = vmax.f32 %v1440, 0.0
        %v1735 = vmax.f32 %v1443, 0.0
        %v1736 = vmax.f32 %v1448, 0.0
        %v1737 = vmax.f32 %v1451, 0.0
        %v1738 = vmax.f32 %v1456, 0.0
        %v1739 = vmax.f32 %v1459, 0.0
        %v1740 = vmax.f32 %v1464, 0.0
        %v1741 = vmax.f32 %v1467, 0.0
        %v1742 = vmax.f32 %v1472, 0.0
        %v1743 = vmax.f32 %v1475, 0.0
        %v1744 = vmax.f32 %v1480, 0.0
        %v1745 = vmax.f32 %v1483, 0.0
        %v1746 = vmax.f32 %v1488, 0.0
        %v1747 = vmax.f32 %v1491, 0.0
        %v1748 = vmax.f32 %v1496, 0.0
        %v1749 = vmax.f32 %v1499, 0.0
        %v1750 = vmax.f32 %v1504, 0.0
        %v1751 = vmax.f32 %v1507, 0.0
        %v1752 = vmax.f32 %v1512, 0.0
        %v1753 = vmax.f32 %v1515, 0.0
        %v1754 = vmax.f32 %v1520, 0.0
        %v1755 = vmax.f32 %v1523, 0.0
        %v1756 = vmax.f32 %v1528, 0.0
        %v1757 = vmax.f32 %v1531, 0.0
        %v1758 = vmax.f32 %v1536, 0.0
        %v1759 = vmax.f32 %v1539, 0.0
        %v1760 = vmax.f32 %v1544, 0.0
        %v1761 = vmax.f32 %v1547, 0.0
        %v1762 = vmax.f32 %v1552, 0.0
        %v1763 = vmax.f32 %v1555, 0.0
        %v1764 = vmax.f32 %v1560, 0.0
        %v1765 = vmax.f32 %v1563, 0.0
        %v1766 = vmax.f32 %v1568, 0.0
        %v1767 = vmax.f32 %v1571, 0.0
        %v1768 = vmax.f32 %v1576, 0.0
        %v1769 = vmax.f32 %v1579, 0.0
        %v1770 = vmax.f32 %v1584, 0.0
        %v1771 = vmax.f32 %v1587, 0.0
        %v1772 = vmax.f32 %v1592, 0.0
        %v1773 = vmax.f32 %v1595, 0.0
        %v1774 = vmax.f32 %v1600, 0.0
        %v1775 = vmax.f32 %v1603, 0.0
        %v1776 = vmax.f32 %v1608, 0.0
        %v1777 = vmax.f32 %v1611, 0.0
        %v1778 = vmax.f32 %v1616, 0.0
        %v1779 = vmax.f32 %v1619, 0.0
        %v1780 = vmax.f32 %v1624, 0.0
        %v1781 = vmax.f32 %v1627, 0.0
        %v1782 = vmax.f32 %v1632, 0.0
        %v1783 = vmax.f32 %v1635, 0.0
        %v1784 = vmax.f32 %v1640, 0.0
        %v1785 = vmax.f32 %v1643, 0.0
        %v1786 = vmax.f32 %v1648, 0.0
        %v1787 = vmax.f32 %v1651, 0.0
        %v1788 = vmax.f32 %v1656, 0.0
        %v1789 = vmax.f32 %v1659, 0.0
        %1790 = vst [vmem:[%s714] sm:$0xff] %v1662
        %1791 = vst [vmem:[%s714 + $0x8] sm:$0xff] %v1663
        %1792 = vst [vmem:[%s714 + $0x10] sm:$0xff] %v1664
        %1793 = vst [vmem:[%s714 + $0x18] sm:$0xff] %v1665
        %1794 = vst [vmem:[%s714 + $0x20] sm:$0xff] %v1666
        %1795 = vst [vmem:[%s714 + $0x28] sm:$0xff] %v1667
        %1796 = vst [vmem:[%s714 + $0x30] sm:$0xff] %v1668
        %1797 = vst [vmem:[%s714 + $0x38] sm:$0xff] %v1669
        %1798 = vst [vmem:[%s714 + $0x40] sm:$0xff] %v1670
        %1799 = vst [vmem:[%s714 + $0x48] sm:$0xff] %v1671
        %1800 = vst [vmem:[%s714 + $0x50] sm:$0xff] %v1672
        %1801 = vst [vmem:[%s714 + $0x58] sm:$0xff] %v1673
        %1802 = vst [vmem:[%s714 + $0x60] sm:$0xff] %v1674
        %1803 = vst [vmem:[%s714 + $0x68] sm:$0xff] %v1675
        %1804 = vst [vmem:[%s714 + $0x70] sm:$0xff] %v1676
        %1805 = vst [vmem:[%s714 + $0x78] sm:$0xff] %v1677
        %1806 = vst [vmem:[%s714 + $0x80] sm:$0xff] %v1678
        %1807 = vst [vmem:[%s714 + $0x88] sm:$0xff] %v1679
        %1808 = vst [vmem:[%s714 + $0x90] sm:$0xff] %v1680
        %1809 = vst [vmem:[%s714 + $0x98] sm:$0xff] %v1681
        %1810 = vst [vmem:[%s714 + $0xa0] sm:$0xff] %v1682
        %1811 = vst [vmem:[%s714 + $0xa8] sm:$0xff] %v1683
        %1812 = vst [vmem:[%s714 + $0xb0] sm:$0xff] %v1684
        %1813 = vst [vmem:[%s714 + $0xb8] sm:$0xff] %v1685
        %1814 = vst [vmem:[%s714 + $0xc0] sm:$0xff] %v1686
        %1815 = vst [vmem:[%s714 + $0xc8] sm:$0xff] %v1687
        %1816 = vst [vmem:[%s714 + $0xd0] sm:$0xff] %v1688
        %1817 = vst [vmem:[%s714 + $0xd8] sm:$0xff] %v1689
        %1818 = vst [vmem:[%s714 + $0xe0] sm:$0xff] %v1690
        %1819 = vst [vmem:[%s714 + $0xe8] sm:$0xff] %v1691
        %1820 = vst [vmem:[%s714 + $0xf0] sm:$0xff] %v1692
        %1821 = vst [vmem:[%s714 + $0xf8] sm:$0xff] %v1693
        %1822 = vst [vmem:[%s714 + $0x100] sm:$0xff] %v1694
        %1823 = vst [vmem:[%s714 + $0x108] sm:$0xff] %v1695
        %1824 = vst [vmem:[%s714 + $0x110] sm:$0xff] %v1696
        %1825 = vst [vmem:[%s714 + $0x118] sm:$0xff] %v1697
        %1826 = vst [vmem:[%s714 + $0x120] sm:$0xff] %v1698
        %1827 = vst [vmem:[%s714 + $0x128] sm:$0xff] %v1699
        %1828 = vst [vmem:[%s714 + $0x130] sm:$0xff] %v1700
        %1829 = vst [vmem:[%s714 + $0x138] sm:$0xff] %v1701
        %1830 = vst [vmem:[%s714 + $0x140] sm:$0xff] %v1702
        %1831 = vst [vmem:[%s714 + $0x148] sm:$0xff] %v1703
        %1832 = vst [vmem:[%s714 + $0x150] sm:$0xff] %v1704
        %1833 = vst [vmem:[%s714 + $0x158] sm:$0xff] %v1705
        %1834 = vst [vmem:[%s714 + $0x160] sm:$0xff] %v1706
        %1835 = vst [vmem:[%s714 + $0x168] sm:$0xff] %v1707
        %1836 = vst [vmem:[%s714 + $0x170] sm:$0xff] %v1708
        %1837 = vst [vmem:[%s714 + $0x178] sm:$0xff] %v1709
        %1838 = vst [vmem:[%s714 + $0x180] sm:$0xff] %v1710
        %1839 = vst [vmem:[%s714 + $0x188] sm:$0xff] %v1711
        %1840 = vst [vmem:[%s714 + $0x190] sm:$0xff] %v1712
        %1841 = vst [vmem:[%s714 + $0x198] sm:$0xff] %v1713
        %1842 = vst [vmem:[%s714 + $0x1a0] sm:$0xff] %v1714
        %1843 = vst [vmem:[%s714 + $0x1a8] sm:$0xff] %v1715
        %1844 = vst [vmem:[%s714 + $0x1b0] sm:$0xff] %v1716
        %1845 = vst [vmem:[%s714 + $0x1b8] sm:$0xff] %v1717
        %1846 = vst [vmem:[%s714 + $0x1c0] sm:$0xff] %v1718
        %1847 = vst [vmem:[%s714 + $0x1c8] sm:$0xff] %v1719
        %1848 = vst [vmem:[%s714 + $0x1d0] sm:$0xff] %v1720
        %1849 = vst [vmem:[%s714 + $0x1d8] sm:$0xff] %v1721
        %1850 = vst [vmem:[%s714 + $0x1e0] sm:$0xff] %v1722
        %1851 = vst [vmem:[%s714 + $0x1e8] sm:$0xff] %v1723
        %1852 = vst [vmem:[%s714 + $0x1f0] sm:$0xff] %v1724
        %1853 = vst [vmem:[%s714 + $0x1f8] sm:$0xff] %v1725
        %1854 = vst [vmem:[%s714 + $0x200] sm:$0xff] %v1726
        %1855 = vst [vmem:[%s714 + $0x208] sm:$0xff] %v1727
        %1856 = vst [vmem:[%s714 + $0x210] sm:$0xff] %v1728
        %1857 = vst [vmem:[%s714 + $0x218] sm:$0xff] %v1729
        %1858 = vst [vmem:[%s714 + $0x220] sm:$0xff] %v1730
        %1859 = vst [vmem:[%s714 + $0x228] sm:$0xff] %v1731
        %1860 = vst [vmem:[%s714 + $0x230] sm:$0xff] %v1732
        %1861 = vst [vmem:[%s714 + $0x238] sm:$0xff] %v1733
        %1862 = vst [vmem:[%s714 + $0x240] sm:$0xff] %v1734
        %1863 = vst [vmem:[%s714 + $0x248] sm:$0xff] %v1735
        %1864 = vst [vmem:[%s714 + $0x250] sm:$0xff] %v1736
        %1865 = vst [vmem:[%s714 + $0x258] sm:$0xff] %v1737
        %1866 = vst [vmem:[%s714 + $0x260] sm:$0xff] %v1738
        %1867 = vst [vmem:[%s714 + $0x268] sm:$0xff] %v1739
        %1868 = vst [vmem:[%s714 + $0x270] sm:$0xff] %v1740
        %1869 = vst [vmem:[%s714 + $0x278] sm:$0xff] %v1741
        %1870 = vst [vmem:[%s714 + $0x280] sm:$0xff] %v1742
        %1871 = vst [vmem:[%s714 + $0x288] sm:$0xff] %v1743
        %1872 = vst [vmem:[%s714 + $0x290] sm:$0xff] %v1744
        %1873 = vst [vmem:[%s714 + $0x298] sm:$0xff] %v1745
        %1874 = vst [vmem:[%s714 + $0x2a0] sm:$0xff] %v1746
        %1875 = vst [vmem:[%s714 + $0x2a8] sm:$0xff] %v1747
        %1876 = vst [vmem:[%s714 + $0x2b0] sm:$0xff] %v1748
        %1877 = vst [vmem:[%s714 + $0x2b8] sm:$0xff] %v1749
        %1878 = vst [vmem:[%s714 + $0x2c0] sm:$0xff] %v1750
        %1879 = vst [vmem:[%s714 + $0x2c8] sm:$0xff] %v1751
        %1880 = vst [vmem:[%s714 + $0x2d0] sm:$0xff] %v1752
        %1881 = vst [vmem:[%s714 + $0x2d8] sm:$0xff] %v1753
        %1882 = vst [vmem:[%s714 + $0x2e0] sm:$0xff] %v1754
        %1883 = vst [vmem:[%s714 + $0x2e8] sm:$0xff] %v1755
        %1884 = vst [vmem:[%s714 + $0x2f0] sm:$0xff] %v1756
        %1885 = vst [vmem:[%s714 + $0x2f8] sm:$0xff] %v1757
        %1886 = vst [vmem:[%s714 + $0x300] sm:$0xff] %v1758
        %1887 = vst [vmem:[%s714 + $0x308] sm:$0xff] %v1759
        %1888 = vst [vmem:[%s714 + $0x310] sm:$0xff] %v1760
        %1889 = vst [vmem:[%s714 + $0x318] sm:$0xff] %v1761
        %1890 = vst [vmem:[%s714 + $0x320] sm:$0xff] %v1762
        %1891 = vst [vmem:[%s714 + $0x328] sm:$0xff] %v1763
        %1892 = vst [vmem:[%s714 + $0x330] sm:$0xff] %v1764
        %1893 = vst [vmem:[%s714 + $0x338] sm:$0xff] %v1765
        %1894 = vst [vmem:[%s714 + $0x340] sm:$0xff] %v1766
        %1895 = vst [vmem:[%s714 + $0x348] sm:$0xff] %v1767
        %1896 = vst [vmem:[%s714 + $0x350] sm:$0xff] %v1768
        %1897 = vst [vmem:[%s714 + $0x358] sm:$0xff] %v1769
        %1898 = vst [vmem:[%s714 + $0x360] sm:$0xff] %v1770
        %1899 = vst [vmem:[%s714 + $0x368] sm:$0xff] %v1771
        %1900 = vst [vmem:[%s714 + $0x370] sm:$0xff] %v1772
        %1901 = vst [vmem:[%s714 + $0x378] sm:$0xff] %v1773
        %1902 = vst [vmem:[%s714 + $0x380] sm:$0xff] %v1774
        %1903 = vst [vmem:[%s714 + $0x388] sm:$0xff] %v1775
        %1904 = vst [vmem:[%s714 + $0x390] sm:$0xff] %v1776
        %1905 = vst [vmem:[%s714 + $0x398] sm:$0xff] %v1777
        %1906 = vst [vmem:[%s714 + $0x3a0] sm:$0xff] %v1778
        %1907 = vst [vmem:[%s714 + $0x3a8] sm:$0xff] %v1779
        %1908 = vst [vmem:[%s714 + $0x3b0] sm:$0xff] %v1780
        %1909 = vst [vmem:[%s714 + $0x3b8] sm:$0xff] %v1781
        %1910 = vst [vmem:[%s714 + $0x3c0] sm:$0xff] %v1782
        %1911 = vst [vmem:[%s714 + $0x3c8] sm:$0xff] %v1783
        %1912 = vst [vmem:[%s714 + $0x3d0] sm:$0xff] %v1784
        %1913 = vst [vmem:[%s714 + $0x3d8] sm:$0xff] %v1785
        %1914 = vst [vmem:[%s714 + $0x3e0] sm:$0xff] %v1786
        %1915 = vst [vmem:[%s714 + $0x3e8] sm:$0xff] %v1787
        %1916 = vst [vmem:[%s714 + $0x3f0] sm:$0xff] %v1788
        %1917 = vst [vmem:[%s714 + $0x3f8] sm:$0xff] %v1789
        %p1918 = scmp.lt.s32.totalorder %s14, 1
        %s1919 = scalar_select %p1918, %s14, 1
        %s1920 = smul.addr %s1919, 128
        %s1921 = smul.addr %s1920, 8
        %s1922 = scalar_lea.vmem %s3, %s1921
        // Predicated region
        $region71: #{ikd_forward.7} parent=65 // pred_check
          %p1923 = pneg %p100
        $region72: #{ikd_forward.7} parent=65 // pred_check_branch
          %1925 = sbr.rel (%p1923) target = $region74
        $region73: #{ikd_forward.7} parent=65 // pred_region
          _
        $region74: #{ikd_forward.7} parent=65 // pred_fallthru
          _
      $region66: #{ikd_forward.7} parent=5 // pred_fallthru
        _
      %p1926 = scmp.le.s32.totalorder 2, %s9
      // Predicated region
      $region75: #{ikd_forward.7} parent=5 // pred_check
        %p1927 = pneg %p1926
      $region76: #{ikd_forward.7} parent=5 // pred_check_branch
        %1929 = sbr.rel (%p1927) target = $region78
      $region77: #{ikd_forward.7} parent=5 // pred_region
        %s1930 = ssub.s32 %s9, 2
        // Predicated region
        $region79: #{ikd_forward.7} parent=77 // pred_check
          %p1931 = pneg %p106
        $region80: #{ikd_forward.7} parent=77 // pred_check_branch
          %1933 = sbr.rel (%p1931) target = $region82
        $region81: #{ikd_forward.7} parent=77 // pred_region
          %p1934 = scmp.lt.s32.totalorder %s15, 1
          %s1935 = scalar_select %p1934, %s15, 1
          %s1936 = smul.addr %s1935, 128
          %s1937 = smul.addr %s1936, 8
          %s1938 = scalar_lea.vmem %s3, %s1937
        $region82: #{ikd_forward.7} parent=77 // pred_fallthru
          _
      $region78: #{ikd_forward.7} parent=5 // pred_fallthru
        _
    $region6: #{ikd_forward.7} parent=1 // loop_footer
      %s13 = sadd.s32 1, %s9
    $region7: #{ikd_forward.7} parent=1 // loop_footer_branch
      %8 = sbr.rel target = $region3
    $region8: #{ikd_forward.7} parent=1 // loop_exit
      _

// kernel: ikd_forward.9
$region0: #{ikd_forward.9}
  #allocation0 [shape = 'u32[]', space=smem, size = 0x4, offset = 0x4, fixed_abs, tag = 'smem constant byte address 0x4 - core index']
  #allocation1 [shape = 'u32[144,128]{1,0:T(1,128)}', space=vmem, size = 0x12000, scoped, tag = 'internal scratch']
  %s0 = inlined_call_operand.vmem [shape: f32[2,16,2,16,256], index: 0, kind: input, shape index: {}]
  %s1 = inlined_call_operand.vmem [shape: f32[128,128], index: 1, kind: input, shape index: {}]
  %s2 = inlined_call_operand.vmem [shape: f32[1,128], index: 2, kind: input, shape index: {}]
  %s3 = inlined_call_operand.vmem [shape: f32[2,256,128], index: 3, kind: output, shape index: {}]
  %s4 = sld [smem:[#allocation0]]
  $region68: #{ikd_forward.9} parent=0
    _
  %s6 = ssub.s32 1, %s4
  %s7 = scalar_select 0, %s6, %s4
  $region1: #{ikd_forward.9} parent=0
    #allocation2 [shape = 'u8[524288]{0}', space=vmem, size = 0x80000, scoped, tag = 'input window, operand 0']
    loop: start=0, step=1, limit=4
    $region2: #{ikd_forward.9} parent=1 // loop_pre_header
      _
    $region3: #{ikd_forward.9} parent=1 // loop_header
      %s9 = sphi 0, %s13
      %p10 = scmp.ge.s32.totalorder %s9, 4
      %s19 = sphi 0, %s21
      %s22 = sphi 0, %s19
      %s23 = sphi 0, %s22
      %s39 = sphi 0, %s23
      %s43 = sphi 0, %s43
      %s45 = sphi 0, %s43
      %s46 = sphi 0, %s45
      %s60 = sphi 0, %s46
      %s64 = sphi 0, %s64
      %s66 = sphi 0, %s64
      %s67 = sphi 0, %s66
      %s81 = sphi 0, %s67
      %s87 = sphi 0, %s89
      %s90 = sphi 0, %s87
      %s91 = sphi 0, %s90
      %s107 = sphi 0, %s91
    $region4: #{ikd_forward.9} parent=1 // loop_header_branch
      %12 = sbr.rel (%p10) target = $region8
    $region5: #{ikd_forward.9} parent=1 // loop_body
      %s14 = ssub.s32 %s9, 1
      %s15 = ssub.s32 %s9, 2
      %s16 = sadd.s32 %s9, 1
      %s17 = ssub.s32 %s9, %s16
      %p18 = scmp.eq.s32.totalorder %s17, 0
      %s20 = sadd.s32 %s19, 1
      %s21 = scalar_select %p18, %s19, %s20
      %p24 = pneg %p18
      %p25 = scmp.eq.s32.totalorder %s9, 1
      %p26 = por %p24, %p25
      %p27 = scmp.ne.s32.totalorder %s19, %s22
      %p28 = scmp.eq.s32.totalorder %s9, 0
      %p29 = por %p27, %p28
      %p30 = scmp.ne.s32.totalorder %s19, %s22
      %p31 = scmp.eq.s32.totalorder %s14, 1
      %p32 = por %p30, %p31
      %p33 = scmp.ne.s32.totalorder %s22, %s23
      %p34 = scmp.eq.s32.totalorder %s14, 0
      %p35 = por %p33, %p34
      %p36 = scmp.ne.s32.totalorder %s22, %s23
      %p37 = scmp.eq.s32.totalorder %s15, 1
      %p38 = por %p36, %p37
      %p40 = scmp.ne.s32.totalorder %s23, %s39
      %p41 = scmp.eq.s32.totalorder %s15, 0
      %p42 = por %p40, %p41
      %s44 = sadd.s32 %s43, 1
      %p47 = scmp.eq.s32.totalorder %s9, 1
      %p48 = scmp.ne.s32.totalorder %s43, %s45
      %p49 = scmp.eq.s32.totalorder %s9, 0
      %p50 = por %p48, %p49
      %p51 = scmp.ne.s32.totalorder %s43, %s45
      %p52 = scmp.eq.s32.totalorder %s14, 1
      %p53 = por %p51, %p52
      %p54 = scmp.ne.s32.totalorder %s45, %s46
      %p55 = scmp.eq.s32.totalorder %s14, 0
      %p56 = por %p54, %p55
      %p57 = scmp.ne.s32.totalorder %s45, %s46
      %p58 = scmp.eq.s32.totalorder %s15, 1
      %p59 = por %p57, %p58
      %p61 = scmp.ne.s32.totalorder %s46, %s60
      %p62 = scmp.eq.s32.totalorder %s15, 0
      %p63 = por %p61, %p62
      %s65 = sadd.s32 %s64, 1
      %p68 = scmp.eq.s32.totalorder %s9, 1
      %p69 = scmp.ne.s32.totalorder %s64, %s66
      %p70 = scmp.eq.s32.totalorder %s9, 0
      %p71 = por %p69, %p70
      %p72 = scmp.ne.s32.totalorder %s64, %s66
      %p73 = scmp.eq.s32.totalorder %s14, 1
      %p74 = por %p72, %p73
      %p75 = scmp.ne.s32.totalorder %s66, %s67
      %p76 = scmp.eq.s32.totalorder %s14, 0
      %p77 = por %p75, %p76
      %p78 = scmp.ne.s32.totalorder %s66, %s67
      %p79 = scmp.eq.s32.totalorder %s15, 1
      %p80 = por %p78, %p79
      %p82 = scmp.ne.s32.totalorder %s67, %s81
      %p83 = scmp.eq.s32.totalorder %s15, 0
      %p84 = por %p82, %p83
      %s85 = ssub.s32 %s9, %s16
      %p86 = scmp.eq.s32.totalorder %s85, 0
      %s88 = sadd.s32 %s87, 1
      %s89 = scalar_select %p86, %s87, %s88
      %p92 = pneg %p86
      %p93 = scmp.eq.s32.totalorder %s9, 1
      %p94 = por %p92, %p93
      %p95 = scmp.ne.s32.totalorder %s87, %s90
      %p96 = scmp.eq.s32.totalorder %s9, 0
      %p97 = por %p95, %p96
      %p98 = scmp.ne.s32.totalorder %s87, %s90
      %p99 = scmp.eq.s32.totalorder %s14, 1
      %p100 = por %p98, %p99
      %p101 = scmp.ne.s32.totalorder %s90, %s91
      %p102 = scmp.eq.s32.totalorder %s14, 0
      %p103 = por %p101, %p102
      %p104 = scmp.ne.s32.totalorder %s90, %s91
      %p105 = scmp.eq.s32.totalorder %s15, 1
      %p106 = por %p104, %p105
      %p108 = scmp.ne.s32.totalorder %s91, %s107
      %p109 = scmp.eq.s32.totalorder %s15, 0
      %p110 = por %p108, %p109
      %p111 = scmp.le.s32.totalorder 1, %s9
      %p112 = scmp.lt.s32.totalorder %s9, 3
      %p113 = pnand %p111, %p112
      %p114 = pneg %p113
      // Predicated region
      $region9: #{ikd_forward.9} parent=5 // pred_check
        _
      $region10: #{ikd_forward.9} parent=5 // pred_check_branch
        %116 = sbr.rel (%p113) target = $region12
      $region11: #{ikd_forward.9} parent=5 // pred_region
        %s117 = ssub.s32 %s9, 1
        // Predicated region
        $region13: #{ikd_forward.9} parent=11 // pred_check
          %p118 = pneg %p56
        $region14: #{ikd_forward.9} parent=11 // pred_check_branch
          %120 = sbr.rel (%p118) target = $region16
        $region15: #{ikd_forward.9} parent=11 // pred_region
          _
        $region16: #{ikd_forward.9} parent=11 // pred_fallthru
          _
        // Predicated region
        $region17: #{ikd_forward.9} parent=11 // pred_check
          %p121 = pneg %p77
        $region18: #{ikd_forward.9} parent=11 // pred_check_branch
          %123 = sbr.rel (%p121) target = $region20
        $region19: #{ikd_forward.9} parent=11 // pred_region
          _
        $region20: #{ikd_forward.9} parent=11 // pred_fallthru
          _
      $region12: #{ikd_forward.9} parent=5 // pred_fallthru
        _
      %p124 = scmp.lt.s32.totalorder %s9, 2
      // Predicated region
      $region21: #{ikd_forward.9} parent=5 // pred_check
        %p125 = pneg %p124
      $region22: #{ikd_forward.9} parent=5 // pred_check_branch
        %127 = sbr.rel (%p125) target = $region24
      $region23: #{ikd_forward.9} parent=5 // pred_region
        // Predicated region
        $region25: #{ikd_forward.9} parent=23 // pred_check
          %p128 = pneg %p29
        $region26: #{ikd_forward.9} parent=23 // pred_check_branch
          %130 = sbr.rel (%p128) target = $region28
        $region27: #{ikd_forward.9} parent=23 // pred_region
          %s131 = sand.u32 %s19, 1
          %s132 = sand.u32 %s19, 1
          %s133 = smul.addr %s132, 512
          %s134 = scalar_lea.vmem [#allocation2], %s133
          %s135 = smul.addr %s9, 128
          %s136 = smul.addr %s135, 8
          %s137 = scalar_lea.vmem %s0, %s136
          // Predicated region
          $region29: #{ikd_forward.9} parent=27 // pred_check
            _
          $region30: #{ikd_forward.9} parent=27 // pred_check_branch
            %139 = sbr.rel (0) target = $region32
          $region31: #{ikd_forward.9} parent=27 // pred_region
            // Predicated region
            $region33: #{ikd_forward.9} parent=31 // pred_check
              _
            $region34: #{ikd_forward.9} parent=31 // pred_check_branch
              %141 = sbr.rel (0) target = $region36
            $region35: #{ikd_forward.9} parent=31 // pred_region
              loop: start=0, step=1, limit=1
              $region37: #{ikd_forward.9} parent=35 // loop_pre_header
                _
              $region38: #{ikd_forward.9} parent=35 // loop_header
                %s143 = sphi 0, %s147
                %p144 = scmp.ge.s32.totalorder %s143, 1
                %s148 = sphi %s137, %s137
                %s149 = sphi %s134, %s134
              $region39: #{ikd_forward.9} parent=35 // loop_header_branch
                %146 = sbr.rel (%p144) target = $region43
              $region40: #{ikd_forward.9} parent=35 // loop_body
                %v150 = vld [vmem:[%s148] sm:$0xff]
                %151 = vst [vmem:[%s149] sm:$0xff] %v150
                %v152 = vld [vmem:[%s148 + $0x8] sm:$0xff]
                %153 = vst [vmem:[%s149 + $0x8] sm:$0xff] %v152
                %v154 = vld [vmem:[%s148 + $0x10] sm:$0xff]
                %155 = vst [vmem:[%s149 + $0x10] sm:$0xff] %v154
                %v156 = vld [vmem:[%s148 + $0x18] sm:$0xff]
                %157 = vst [vmem:[%s149 + $0x18] sm:$0xff] %v156
                %v158 = vld [vmem:[%s148 + $0x40] sm:$0xff]
                %159 = vst [vmem:[%s149 + $0x20] sm:$0xff] %v158
                %v160 = vld [vmem:[%s148 + $0x48] sm:$0xff]
                %161 = vst [vmem:[%s149 + $0x28] sm:$0xff] %v160
                %v162 = vld [vmem:[%s148 + $0x50] sm:$0xff]
                %163 = vst [vmem:[%s149 + $0x30] sm:$0xff] %v162
                %v164 = vld [vmem:[%s148 + $0x58] sm:$0xff]
                %165 = vst [vmem:[%s149 + $0x38] sm:$0xff] %v164
                %v166 = vld [vmem:[%s148 + $0x80] sm:$0xff]
                %167 = vst [vmem:[%s149 + $0x40] sm:$0xff] %v166
                %v168 = vld [vmem:[%s148 + $0x88] sm:$0xff]
                %169 = vst [vmem:[%s149 + $0x48] sm:$0xff] %v168
                %v170 = vld [vmem:[%s148 + $0x90] sm:$0xff]
                %171 = vst [vmem:[%s149 + $0x50] sm:$0xff] %v170
                %v172 = vld [vmem:[%s148 + $0x98] sm:$0xff]
                %173 = vst [vmem:[%s149 + $0x58] sm:$0xff] %v172
                %v174 = vld [vmem:[%s148 + $0xc0] sm:$0xff]
                %175 = vst [vmem:[%s149 + $0x60] sm:$0xff] %v174
                %v176 = vld [vmem:[%s148 + $0xc8] sm:$0xff]
                %177 = vst [vmem:[%s149 + $0x68] sm:$0xff] %v176
                %v178 = vld [vmem:[%s148 + $0xd0] sm:$0xff]
                %179 = vst [vmem:[%s149 + $0x70] sm:$0xff] %v178
                %v180 = vld [vmem:[%s148 + $0xd8] sm:$0xff]
                %181 = vst [vmem:[%s149 + $0x78] sm:$0xff] %v180
                %v182 = vld [vmem:[%s148 + $0x100] sm:$0xff]
                %183 = vst [vmem:[%s149 + $0x80] sm:$0xff] %v182
                %v184 = vld [vmem:[%s148 + $0x108] sm:$0xff]
                %185 = vst [vmem:[%s149 + $0x88] sm:$0xff] %v184
                %v186 = vld [vmem:[%s148 + $0x110] sm:$0xff]
                %187 = vst [vmem:[%s149 + $0x90] sm:$0xff] %v186
                %v188 = vld [vmem:[%s148 + $0x118] sm:$0xff]
                %189 = vst [vmem:[%s149 + $0x98] sm:$0xff] %v188
                %v190 = vld [vmem:[%s148 + $0x140] sm:$0xff]
                %191 = vst [vmem:[%s149 + $0xa0] sm:$0xff] %v190
                %v192 = vld [vmem:[%s148 + $0x148] sm:$0xff]
                %193 = vst [vmem:[%s149 + $0xa8] sm:$0xff] %v192
                %v194 = vld [vmem:[%s148 + $0x150] sm:$0xff]
                %195 = vst [vmem:[%s149 + $0xb0] sm:$0xff] %v194
                %v196 = vld [vmem:[%s148 + $0x158] sm:$0xff]
                %197 = vst [vmem:[%s149 + $0xb8] sm:$0xff] %v196
                %v198 = vld [vmem:[%s148 + $0x180] sm:$0xff]
                %199 = vst [vmem:[%s149 + $0xc0] sm:$0xff] %v198
                %v200 = vld [vmem:[%s148 + $0x188] sm:$0xff]
                %201 = vst [vmem:[%s149 + $0xc8] sm:$0xff] %v200
                %v202 = vld [vmem:[%s148 + $0x190] sm:$0xff]
                %203 = vst [vmem:[%s149 + $0xd0] sm:$0xff] %v202
                %v204 = vld [vmem:[%s148 + $0x198] sm:$0xff]
                %205 = vst [vmem:[%s149 + $0xd8] sm:$0xff] %v204
                %v206 = vld [vmem:[%s148 + $0x1c0] sm:$0xff]
                %207 = vst [vmem:[%s149 + $0xe0] sm:$0xff] %v206
                %v208 = vld [vmem:[%s148 + $0x1c8] sm:$0xff]
                %209 = vst [vmem:[%s149 + $0xe8] sm:$0xff] %v208
                %v210 = vld [vmem:[%s148 + $0x1d0] sm:$0xff]
                %211 = vst [vmem:[%s149 + $0xf0] sm:$0xff] %v210
                %v212 = vld [vmem:[%s148 + $0x1d8] sm:$0xff]
                %213 = vst [vmem:[%s149 + $0xf8] sm:$0xff] %v212
                %v214 = vld [vmem:[%s148 + $0x200] sm:$0xff]
                %215 = vst [vmem:[%s149 + $0x100] sm:$0xff] %v214
                %v216 = vld [vmem:[%s148 + $0x208] sm:$0xff]
                %217 = vst [vmem:[%s149 + $0x108] sm:$0xff] %v216
                %v218 = vld [vmem:[%s148 + $0x210] sm:$0xff]
                %219 = vst [vmem:[%s149 + $0x110] sm:$0xff] %v218
                %v220 = vld [vmem:[%s148 + $0x218] sm:$0xff]
                %221 = vst [vmem:[%s149 + $0x118] sm:$0xff] %v220
                %v222 = vld [vmem:[%s148 + $0x240] sm:$0xff]
                %223 = vst [vmem:[%s149 + $0x120] sm:$0xff] %v222
                %v224 = vld [vmem:[%s148 + $0x248] sm:$0xff]
                %225 = vst [vmem:[%s149 + $0x128] sm:$0xff] %v224
                %v226 = vld [vmem:[%s148 + $0x250] sm:$0xff]
                %227 = vst [vmem:[%s149 + $0x130] sm:$0xff] %v226
                %v228 = vld [vmem:[%s148 + $0x258] sm:$0xff]
                %229 = vst [vmem:[%s149 + $0x138] sm:$0xff] %v228
                %v230 = vld [vmem:[%s148 + $0x280] sm:$0xff]
                %231 = vst [vmem:[%s149 + $0x140] sm:$0xff] %v230
                %v232 = vld [vmem:[%s148 + $0x288] sm:$0xff]
                %233 = vst [vmem:[%s149 + $0x148] sm:$0xff] %v232
                %v234 = vld [vmem:[%s148 + $0x290] sm:$0xff]
                %235 = vst [vmem:[%s149 + $0x150] sm:$0xff] %v234
                %v236 = vld [vmem:[%s148 + $0x298] sm:$0xff]
                %237 = vst [vmem:[%s149 + $0x158] sm:$0xff] %v236
                %v238 = vld [vmem:[%s148 + $0x2c0] sm:$0xff]
                %239 = vst [vmem:[%s149 + $0x160] sm:$0xff] %v238
                %v240 = vld [vmem:[%s148 + $0x2c8] sm:$0xff]
                %241 = vst [vmem:[%s149 + $0x168] sm:$0xff] %v240
                %v242 = vld [vmem:[%s148 + $0x2d0] sm:$0xff]
                %243 = vst [vmem:[%s149 + $0x170] sm:$0xff] %v242
                %v244 = vld [vmem:[%s148 + $0x2d8] sm:$0xff]
                %245 = vst [vmem:[%s149 + $0x178] sm:$0xff] %v244
                %v246 = vld [vmem:[%s148 + $0x300] sm:$0xff]
                %247 = vst [vmem:[%s149 + $0x180] sm:$0xff] %v246
                %v248 = vld [vmem:[%s148 + $0x308] sm:$0xff]
                %249 = vst [vmem:[%s149 + $0x188] sm:$0xff] %v248
                %v250 = vld [vmem:[%s148 + $0x310] sm:$0xff]
                %251 = vst [vmem:[%s149 + $0x190] sm:$0xff] %v250
                %v252 = vld [vmem:[%s148 + $0x318] sm:$0xff]
                %253 = vst [vmem:[%s149 + $0x198] sm:$0xff] %v252
                %v254 = vld [vmem:[%s148 + $0x340] sm:$0xff]
                %255 = vst [vmem:[%s149 + $0x1a0] sm:$0xff] %v254
                %v256 = vld [vmem:[%s148 + $0x348] sm:$0xff]
                %257 = vst [vmem:[%s149 + $0x1a8] sm:$0xff] %v256
                %v258 = vld [vmem:[%s148 + $0x350] sm:$0xff]
                %259 = vst [vmem:[%s149 + $0x1b0] sm:$0xff] %v258
                %v260 = vld [vmem:[%s148 + $0x358] sm:$0xff]
                %261 = vst [vmem:[%s149 + $0x1b8] sm:$0xff] %v260
                %v262 = vld [vmem:[%s148 + $0x380] sm:$0xff]
                %263 = vst [vmem:[%s149 + $0x1c0] sm:$0xff] %v262
                %v264 = vld [vmem:[%s148 + $0x388] sm:$0xff]
                %265 = vst [vmem:[%s149 + $0x1c8] sm:$0xff] %v264
                %v266 = vld [vmem:[%s148 + $0x390] sm:$0xff]
                %267 = vst [vmem:[%s149 + $0x1d0] sm:$0xff] %v266
                %v268 = vld [vmem:[%s148 + $0x398] sm:$0xff]
                %269 = vst [vmem:[%s149 + $0x1d8] sm:$0xff] %v268
                %v270 = vld [vmem:[%s148 + $0x3c0] sm:$0xff]
                %271 = vst [vmem:[%s149 + $0x1e0] sm:$0xff] %v270
                %v272 = vld [vmem:[%s148 + $0x3c8] sm:$0xff]
                %273 = vst [vmem:[%s149 + $0x1e8] sm:$0xff] %v272
                %v274 = vld [vmem:[%s148 + $0x3d0] sm:$0xff]
                %275 = vst [vmem:[%s149 + $0x1f0] sm:$0xff] %v274
                %v276 = vld [vmem:[%s148 + $0x3d8] sm:$0xff]
                %277 = vst [vmem:[%s149 + $0x1f8] sm:$0xff] %v276
              $region41: #{ikd_forward.9} parent=35 // loop_footer
                %s147 = sadd.s32 1, %s143
              $region42: #{ikd_forward.9} parent=35 // loop_footer_branch
                %142 = sbr.rel target = $region38
              $region43: #{ikd_forward.9} parent=35 // loop_exit
                _
            $region36: #{ikd_forward.9} parent=31 // pred_fallthru
              _
            // Predicated region
            $region44: #{ikd_forward.9} parent=31 // pred_check
              _
            $region45: #{ikd_forward.9} parent=31 // pred_check_branch
              %279 = sbr.rel target = $region47
            $region46: #{ikd_forward.9} parent=31 // pred_region
              _
            $region47: #{ikd_forward.9} parent=31 // pred_fallthru
              _
          $region32: #{ikd_forward.9} parent=27 // pred_fallthru
            _
          %280 = vnop
        $region28: #{ikd_forward.9} parent=23 // pred_fallthru
          _
      $region24: #{ikd_forward.9} parent=5 // pred_fallthru
        _
      %p281 = scmp.le.s32.totalorder 1, %s9
      %p282 = scmp.lt.s32.totalorder %s9, 3
      %p283 = pnand %p281, %p282
      %p284 = pneg %p283
      // Predicated region
      $region48: #{ikd_forward.9} parent=5 // pred_check
        _
      $region49: #{ikd_forward.9} parent=5 // pred_check_branch
        %286 = sbr.rel (%p283) target = $region51
      $region50: #{ikd_forward.9} parent=5 // pred_region
        %s287 = ssub.s32 %s9, 1
        %s288 = sand.u32 %s22, 1
        %s289 = sand.u32 %s22, 1
        %s290 = smul.addr %s289, 512
        %s291 = scalar_lea.vmem [#allocation2], %s290
        // Predicated region
        $region52: #{ikd_forward.9} parent=50 // pred_check
          %p292 = pneg %p35
        $region53: #{ikd_forward.9} parent=50 // pred_check_branch
          %294 = sbr.rel (%p292) target = $region55
        $region54: #{ikd_forward.9} parent=50 // pred_region
          _
        $region55: #{ikd_forward.9} parent=50 // pred_fallthru
          _
        %s295 = sand.u32 %s22, 1
        %s296 = sand.u32 %s22, 1
        %s297 = smul.addr %s296, 512
        %s298 = scalar_lea.vmem [#allocation2], %s297
        %p299 = pneg %p35
        %p300 = pneg %p32
        %p301 = pneg %p56
        %p302 = pneg %p53
        %p303 = pneg %p77
        %p304 = pneg %p74
        %p305 = pneg %p103
        %p306 = pneg %p100
        %p307 = scmp.lt.s32.totalorder %s14, 1
        %s308 = scalar_select %p307, %s14, 1
        %s309 = smul.addr %s308, 32
        %s310 = smul.addr %s309, 8
        %s311 = scalar_lea.vmem %s3, %s310
        %p312 = scmp.lt.s32.totalorder %s14, 1
        %s313 = scalar_select %p312, %s14, 1
        %s314 = smul.addr %s313, 32
        %s315 = smul.addr %s314, 8
        %s316 = scalar_lea.vmem %s3, %s315
        %v318 = vld [vmem:[%s291] sm:$0xff]
        %v319 = vld [vmem:[%s291 + $0x10] sm:$0xff]
        %v320 = vld [vmem:[%s291 + $0x20] sm:$0xff]
        %v321 = vld [vmem:[%s291 + $0x30] sm:$0xff]
        %v322 = vld [vmem:[%s291 + $0x40] sm:$0xff]
        %v323 = vld [vmem:[%s291 + $0x50] sm:$0xff]
        %v324 = vld [vmem:[%s291 + $0x60] sm:$0xff]
        %v325 = vld [vmem:[%s291 + $0x70] sm:$0xff]
        %v326 = vld [vmem:[%s291 + $0x80] sm:$0xff]
        %v327 = vld [vmem:[%s291 + $0x90] sm:$0xff]
        %v328 = vld [vmem:[%s291 + $0xa0] sm:$0xff]
        %v329 = vld [vmem:[%s291 + $0xb0] sm:$0xff]
        %v330 = vld [vmem:[%s291 + $0xc0] sm:$0xff]
        %v331 = vld [vmem:[%s291 + $0xd0] sm:$0xff]
        %v332 = vld [vmem:[%s291 + $0xe0] sm:$0xff]
        %v333 = vld [vmem:[%s291 + $0xf0] sm:$0xff]
        %v334 = vld [vmem:[%s291 + $0x100] sm:$0xff]
        %v335 = vld [vmem:[%s291 + $0x110] sm:$0xff]
        %v336 = vld [vmem:[%s291 + $0x120] sm:$0xff]
        %v337 = vld [vmem:[%s291 + $0x130] sm:$0xff]
        %v338 = vld [vmem:[%s291 + $0x140] sm:$0xff]
        %v339 = vld [vmem:[%s291 + $0x150] sm:$0xff]
        %v340 = vld [vmem:[%s291 + $0x160] sm:$0xff]
        %v341 = vld [vmem:[%s291 + $0x170] sm:$0xff]
        %v342 = vld [vmem:[%s291 + $0x180] sm:$0xff]
        %v343 = vld [vmem:[%s291 + $0x190] sm:$0xff]
        %v344 = vld [vmem:[%s291 + $0x1a0] sm:$0xff]
        %v345 = vld [vmem:[%s291 + $0x1b0] sm:$0xff]
        %v346 = vld [vmem:[%s291 + $0x1c0] sm:$0xff]
        %v347 = vld [vmem:[%s291 + $0x1d0] sm:$0xff]
        %v348 = vld [vmem:[%s291 + $0x1e0] sm:$0xff]
        %v349 = vld [vmem:[%s291 + $0x1f0] sm:$0xff]
        %v350 = vpack.c.bf16 %v319, %v318
        %v351 = vpack.c.bf16 %v321, %v320
        %v352 = vpack.c.bf16 %v323, %v322
        %v353 = vpack.c.bf16 %v325, %v324
        %v354 = vpack.c.bf16 %v327, %v326
        %v355 = vpack.c.bf16 %v329, %v328
        %v356 = vpack.c.bf16 %v331, %v330
        %v357 = vpack.c.bf16 %v333, %v332
        %v358 = vpack.c.bf16 %v335, %v334
        %v359 = vpack.c.bf16 %v337, %v336
        %v360 = vpack.c.bf16 %v339, %v338
        %v361 = vpack.c.bf16 %v341, %v340
        %v362 = vpack.c.bf16 %v343, %v342
        %v363 = vpack.c.bf16 %v345, %v344
        %v364 = vpack.c.bf16 %v347, %v346
        %v365 = vpack.c.bf16 %v349, %v348
        %v366 = vld [vmem:[%s1] sm:$0xff]
        %v367 = vld [vmem:[%s1 + $0x8] sm:$0xff]
        %v368 = vld [vmem:[%s1 + $0x10] sm:$0xff]
        %v369 = vld [vmem:[%s1 + $0x18] sm:$0xff]
        %v370 = vld [vmem:[%s1 + $0x20] sm:$0xff]
        %v371 = vld [vmem:[%s1 + $0x28] sm:$0xff]
        %v372 = vld [vmem:[%s1 + $0x30] sm:$0xff]
        %v373 = vld [vmem:[%s1 + $0x38] sm:$0xff]
        %v374 = vld [vmem:[%s1 + $0x40] sm:$0xff]
        %v375 = vld [vmem:[%s1 + $0x48] sm:$0xff]
        %v376 = vld [vmem:[%s1 + $0x50] sm:$0xff]
        %v377 = vld [vmem:[%s1 + $0x58] sm:$0xff]
        %v378 = vld [vmem:[%s1 + $0x60] sm:$0xff]
        %v379 = vld [vmem:[%s1 + $0x68] sm:$0xff]
        %v380 = vld [vmem:[%s1 + $0x70] sm:$0xff]
        %v381 = vld [vmem:[%s1 + $0x78] sm:$0xff]
        %v382 = vpack.c.bf16 %v367, %v366
        %v383 = vpack.c.bf16 %v369, %v368
        %v384 = vpack.c.bf16 %v371, %v370
        %v385 = vpack.c.bf16 %v373, %v372
        %v386 = vpack.c.bf16 %v375, %v374
        %v387 = vpack.c.bf16 %v377, %v376
        %v388 = vpack.c.bf16 %v379, %v378
        %v389 = vpack.c.bf16 %v381, %v380
        %v390 = vld [vmem:[%s2] sm:$0x1]
        %v392 = vlaneseq
        %v393 = vshrl.u32 %v392, 7
        %v394 = vsub.s32 0, %v393
        %v395 = vrot.slane %v390, %v394
        %397 = vmatprep.subr.bf16.mxu0 0
        %398 = vmatpush1.bf16.msra.mxu0 %v389
        %399 = vmatprep.subr.bf16.mxu0 0
        %400 = vmatpush1.bf16.msra.mxu0 %v388
        %401 = vmatprep.subr.bf16.mxu0 0
        %402 = vmatpush1.bf16.msra.mxu0 %v387
        %403 = vmatprep.subr.bf16.mxu0 0
        %404 = vmatpush1.bf16.msra.mxu0 %v386
        %405 = vmatprep.subr.bf16.mxu0 0
        %406 = vmatpush1.bf16.msra.mxu0 %v385
        %407 = vmatprep.subr.bf16.mxu0 0
        %408 = vmatpush1.bf16.msra.mxu0 %v384
        %409 = vmatprep.subr.bf16.mxu0 0
        %410 = vmatpush1.bf16.msra.mxu0 %v383
        %411 = vmatprep.subr.bf16.mxu0 0
        %412 = vmatpush1.bf16.msra.mxu0 %v382
        %413 = vmatprep.subr.bf16.mxu0 0
        %414 = vmatpush2.bf16.msra.mxu0 0
        %415 = vmatprep.subr.bf16.mxu0 0
        %416 = vmatpush2.bf16.msra.mxu0 0
        %417 = vmatprep.subr.bf16.mxu0 0
        %418 = vmatpush2.bf16.msra.mxu0 0
        %419 = vmatprep.subr.bf16.mxu0 0
        %420 = vmatpush2.bf16.msra.mxu0 0
        %421 = vmatprep.subr.bf16.mxu0 0
        %422 = vmatpush2.bf16.msra.mxu0 0
        %423 = vmatprep.subr.bf16.mxu0 0
        %424 = vmatpush2.bf16.msra.mxu0 0
        %425 = vmatprep.subr.bf16.mxu0 0
        %426 = vmatpush2.bf16.msra.mxu0 0
        %427 = vmatprep.subr.bf16.mxu0 0
        %428 = vmatpush2.bf16.msra.mxu0 0
        %429 = vmatprep.mubr.bf16.mxu0 0
        %430 = vmatmul.mubr.bf16.gmra.mxu0 %v350
        %v431 = vpop.f32.mrf.mxu0
        %v432 = vadd.f32 %v395, %v431
        %v433 = vpop.f32.mrf.mxu0
        %v434 = vpop.f32.mrf.mxu0
        %v435 = vadd.f32 %v395, %v434
        %v436 = vpop.f32.mrf.mxu0
        %437 = vmatprep.mubr.bf16.mxu0 0
        %438 = vmatmul.mubr.bf16.gmra.mxu0 %v351
        %v439 = vpop.f32.mrf.mxu0
        %v440 = vadd.f32 %v395, %v439
        %v441 = vpop.f32.mrf.mxu0
        %v442 = vpop.f32.mrf.mxu0
        %v443 = vadd.f32 %v395, %v442
        %v444 = vpop.f32.mrf.mxu0
        %445 = vmatprep.mubr.bf16.mxu0 0
        %446 = vmatmul.mubr.bf16.gmra.mxu0 %v352
        %v447 = vpop.f32.mrf.mxu0
        %v448 = vadd.f32 %v395, %v447
        %v449 = vpop.f32.mrf.mxu0
        %v450 = vpop.f32.mrf.mxu0
        %v451 = vadd.f32 %v395, %v450
        %v452 = vpop.f32.mrf.mxu0
        %453 = vmatprep.mubr.bf16.mxu0 0
        %454 = vmatmul.mubr.bf16.gmra.mxu0 %v353
        %v455 = vpop.f32.mrf.mxu0
        %v456 = vadd.f32 %v395, %v455
        %v457 = vpop.f32.mrf.mxu0
        %v458 = vpop.f32.mrf.mxu0
        %v459 = vadd.f32 %v395, %v458
        %v460 = vpop.f32.mrf.mxu0
        %461 = vmatprep.mubr.bf16.mxu0 0
        %462 = vmatmul.mubr.bf16.gmra.mxu0 %v354
        %v463 = vpop.f32.mrf.mxu0
        %v464 = vadd.f32 %v395, %v463
        %v465 = vpop.f32.mrf.mxu0
        %v466 = vpop.f32.mrf.mxu0
        %v467 = vadd.f32 %v395, %v466
        %v468 = vpop.f32.mrf.mxu0
        %469 = vmatprep.mubr.bf16.mxu0 0
        %470 = vmatmul.mubr.bf16.gmra.mxu0 %v355
        %v471 = vpop.f32.mrf.mxu0
        %v472 = vadd.f32 %v395, %v471
        %v473 = vpop.f32.mrf.mxu0
        %v474 = vpop.f32.mrf.mxu0
        %v475 = vadd.f32 %v395, %v474
        %v476 = vpop.f32.mrf.mxu0
        %477 = vmatprep.mubr.bf16.mxu0 0
        %478 = vmatmul.mubr.bf16.gmra.mxu0 %v356
        %v479 = vpop.f32.mrf.mxu0
        %v480 = vadd.f32 %v395, %v479
        %v481 = vpop.f32.mrf.mxu0
        %v482 = vpop.f32.mrf.mxu0
        %v483 = vadd.f32 %v395, %v482
        %v484 = vpop.f32.mrf.mxu0
        %485 = vmatprep.mubr.bf16.mxu0 0
        %486 = vmatmul.mubr.bf16.gmra.mxu0 %v357
        %v487 = vpop.f32.mrf.mxu0
        %v488 = vadd.f32 %v395, %v487
        %v489 = vpop.f32.mrf.mxu0
        %v490 = vpop.f32.mrf.mxu0
        %v491 = vadd.f32 %v395, %v490
        %v492 = vpop.f32.mrf.mxu0
        %493 = vmatprep.mubr.bf16.mxu0 0
        %494 = vmatmul.mubr.bf16.gmra.mxu0 %v358
        %v495 = vpop.f32.mrf.mxu0
        %v496 = vadd.f32 %v395, %v495
        %v497 = vpop.f32.mrf.mxu0
        %v498 = vpop.f32.mrf.mxu0
        %v499 = vadd.f32 %v395, %v498
        %v500 = vpop.f32.mrf.mxu0
        %501 = vmatprep.mubr.bf16.mxu0 0
        %502 = vmatmul.mubr.bf16.gmra.mxu0 %v359
        %v503 = vpop.f32.mrf.mxu0
        %v504 = vadd.f32 %v395, %v503
        %v505 = vpop.f32.mrf.mxu0
        %v506 = vpop.f32.mrf.mxu0
        %v507 = vadd.f32 %v395, %v506
        %v508 = vpop.f32.mrf.mxu0
        %509 = vmatprep.mubr.bf16.mxu0 0
        %510 = vmatmul.mubr.bf16.gmra.mxu0 %v360
        %v511 = vpop.f32.mrf.mxu0
        %v512 = vadd.f32 %v395, %v511
        %v513 = vpop.f32.mrf.mxu0
        %v514 = vpop.f32.mrf.mxu0
        %v515 = vadd.f32 %v395, %v514
        %v516 = vpop.f32.mrf.mxu0
        %517 = vmatprep.mubr.bf16.mxu0 0
        %518 = vmatmul.mubr.bf16.gmra.mxu0 %v361
        %v519 = vpop.f32.mrf.mxu0
        %v520 = vadd.f32 %v395, %v519
        %v521 = vpop.f32.mrf.mxu0
        %v522 = vpop.f32.mrf.mxu0
        %v523 = vadd.f32 %v395, %v522
        %v524 = vpop.f32.mrf.mxu0
        %525 = vmatprep.mubr.bf16.mxu0 0
        %526 = vmatmul.mubr.bf16.gmra.mxu0 %v362
        %v527 = vpop.f32.mrf.mxu0
        %v528 = vadd.f32 %v395, %v527
        %v529 = vpop.f32.mrf.mxu0
        %v530 = vpop.f32.mrf.mxu0
        %v531 = vadd.f32 %v395, %v530
        %v532 = vpop.f32.mrf.mxu0
        %533 = vmatprep.mubr.bf16.mxu0 0
        %534 = vmatmul.mubr.bf16.gmra.mxu0 %v363
        %v535 = vpop.f32.mrf.mxu0
        %v536 = vadd.f32 %v395, %v535
        %v537 = vpop.f32.mrf.mxu0
        %v538 = vpop.f32.mrf.mxu0
        %v539 = vadd.f32 %v395, %v538
        %v540 = vpop.f32.mrf.mxu0
        %541 = vmatprep.mubr.bf16.mxu0 0
        %542 = vmatmul.mubr.bf16.gmra.mxu0 %v364
        %v543 = vpop.f32.mrf.mxu0
        %v544 = vadd.f32 %v395, %v543
        %v545 = vpop.f32.mrf.mxu0
        %v546 = vpop.f32.mrf.mxu0
        %v547 = vadd.f32 %v395, %v546
        %v548 = vpop.f32.mrf.mxu0
        %549 = vmatprep.mubr.bf16.mxu0 0
        %550 = vmatmul.mubr.bf16.gmra.mxu0 %v365
        %v551 = vpop.f32.mrf.mxu0
        %v552 = vadd.f32 %v395, %v551
        %v553 = vpop.f32.mrf.mxu0
        %v554 = vpop.f32.mrf.mxu0
        %v555 = vadd.f32 %v395, %v554
        %v556 = vpop.f32.mrf.mxu0
        %557 = vdwg.mxu0
        %v558 = vmax.f32 %v432, 0.0
        %v559 = vmax.f32 %v435, 0.0
        %v560 = vmax.f32 %v440, 0.0
        %v561 = vmax.f32 %v443, 0.0
        %v562 = vmax.f32 %v448, 0.0
        %v563 = vmax.f32 %v451, 0.0
        %v564 = vmax.f32 %v456, 0.0
        %v565 = vmax.f32 %v459, 0.0
        %v566 = vmax.f32 %v464, 0.0
        %v567 = vmax.f32 %v467, 0.0
        %v568 = vmax.f32 %v472, 0.0
        %v569 = vmax.f32 %v475, 0.0
        %v570 = vmax.f32 %v480, 0.0
        %v571 = vmax.f32 %v483, 0.0
        %v572 = vmax.f32 %v488, 0.0
        %v573 = vmax.f32 %v491, 0.0
        %v574 = vmax.f32 %v496, 0.0
        %v575 = vmax.f32 %v499, 0.0
        %v576 = vmax.f32 %v504, 0.0
        %v577 = vmax.f32 %v507, 0.0
        %v578 = vmax.f32 %v512, 0.0
        %v579 = vmax.f32 %v515, 0.0
        %v580 = vmax.f32 %v520, 0.0
        %v581 = vmax.f32 %v523, 0.0
        %v582 = vmax.f32 %v528, 0.0
        %v583 = vmax.f32 %v531, 0.0
        %v584 = vmax.f32 %v536, 0.0
        %v585 = vmax.f32 %v539, 0.0
        %v586 = vmax.f32 %v544, 0.0
        %v587 = vmax.f32 %v547, 0.0
        %v588 = vmax.f32 %v552, 0.0
        %v589 = vmax.f32 %v555, 0.0
        %590 = vst [vmem:[%s316] sm:$0xff] %v558
        %591 = vst [vmem:[%s316 + $0x8] sm:$0xff] %v559
        %592 = vst [vmem:[%s316 + $0x10] sm:$0xff] %v560
        %593 = vst [vmem:[%s316 + $0x18] sm:$0xff] %v561
        %594 = vst [vmem:[%s316 + $0x20] sm:$0xff] %v562
        %595 = vst [vmem:[%s316 + $0x28] sm:$0xff] %v563
        %596 = vst [vmem:[%s316 + $0x30] sm:$0xff] %v564
        %597 = vst [vmem:[%s316 + $0x38] sm:$0xff] %v565
        %598 = vst [vmem:[%s316 + $0x40] sm:$0xff] %v566
        %599 = vst [vmem:[%s316 + $0x48] sm:$0xff] %v567
        %600 = vst [vmem:[%s316 + $0x50] sm:$0xff] %v568
        %601 = vst [vmem:[%s316 + $0x58] sm:$0xff] %v569
        %602 = vst [vmem:[%s316 + $0x60] sm:$0xff] %v570
        %603 = vst [vmem:[%s316 + $0x68] sm:$0xff] %v571
        %604 = vst [vmem:[%s316 + $0x70] sm:$0xff] %v572
        %605 = vst [vmem:[%s316 + $0x78] sm:$0xff] %v573
        %606 = vst [vmem:[%s316 + $0x80] sm:$0xff] %v574
        %607 = vst [vmem:[%s316 + $0x88] sm:$0xff] %v575
        %608 = vst [vmem:[%s316 + $0x90] sm:$0xff] %v576
        %609 = vst [vmem:[%s316 + $0x98] sm:$0xff] %v577
        %610 = vst [vmem:[%s316 + $0xa0] sm:$0xff] %v578
        %611 = vst [vmem:[%s316 + $0xa8] sm:$0xff] %v579
        %612 = vst [vmem:[%s316 + $0xb0] sm:$0xff] %v580
        %613 = vst [vmem:[%s316 + $0xb8] sm:$0xff] %v581
        %614 = vst [vmem:[%s316 + $0xc0] sm:$0xff] %v582
        %615 = vst [vmem:[%s316 + $0xc8] sm:$0xff] %v583
        %616 = vst [vmem:[%s316 + $0xd0] sm:$0xff] %v584
        %617 = vst [vmem:[%s316 + $0xd8] sm:$0xff] %v585
        %618 = vst [vmem:[%s316 + $0xe0] sm:$0xff] %v586
        %619 = vst [vmem:[%s316 + $0xe8] sm:$0xff] %v587
        %620 = vst [vmem:[%s316 + $0xf0] sm:$0xff] %v588
        %621 = vst [vmem:[%s316 + $0xf8] sm:$0xff] %v589
        %p622 = scmp.lt.s32.totalorder %s14, 1
        %s623 = scalar_select %p622, %s14, 1
        %s624 = smul.addr %s623, 32
        %s625 = smul.addr %s624, 8
        %s626 = scalar_lea.vmem %s3, %s625
        // Predicated region
        $region56: #{ikd_forward.9} parent=50 // pred_check
          %p627 = pneg %p100
        $region57: #{ikd_forward.9} parent=50 // pred_check_branch
          %629 = sbr.rel (%p627) target = $region59
        $region58: #{ikd_forward.9} parent=50 // pred_region
          _
        $region59: #{ikd_forward.9} parent=50 // pred_fallthru
          _
      $region51: #{ikd_forward.9} parent=5 // pred_fallthru
        _
      %p630 = scmp.le.s32.totalorder 2, %s9
      // Predicated region
      $region60: #{ikd_forward.9} parent=5 // pred_check
        %p631 = pneg %p630
      $region61: #{ikd_forward.9} parent=5 // pred_check_branch
        %633 = sbr.rel (%p631) target = $region63
      $region62: #{ikd_forward.9} parent=5 // pred_region
        %s634 = ssub.s32 %s9, 2
        // Predicated region
        $region64: #{ikd_forward.9} parent=62 // pred_check
          %p635 = pneg %p106
        $region65: #{ikd_forward.9} parent=62 // pred_check_branch
          %637 = sbr.rel (%p635) target = $region67
        $region66: #{ikd_forward.9} parent=62 // pred_region
          %p638 = scmp.lt.s32.totalorder %s15, 1
          %s639 = scalar_select %p638, %s15, 1
          %s640 = smul.addr %s639, 32
          %s641 = smul.addr %s640, 8
          %s642 = scalar_lea.vmem %s3, %s641
        $region67: #{ikd_forward.9} parent=62 // pred_fallthru
          _
      $region63: #{ikd_forward.9} parent=5 // pred_fallthru
        _
    $region6: #{ikd_forward.9} parent=1 // loop_footer
      %s13 = sadd.s32 1, %s9
    $region7: #{ikd_forward.9} parent=1 // loop_footer_branch
      %8 = sbr.rel target = $region3
    $region8: #{ikd_forward.9} parent=1 // loop_exit
      _

// kernel: ikd_forward.10
$region0: #{ikd_forward.10}
  #allocation0 [shape = 'u32[]', space=smem, size = 0x4, offset = 0x4, fixed_abs, tag = 'smem constant byte address 0x4 - core index']
  #allocation1 [shape = 'u32[144,128]{1,0:T(1,128)}', space=vmem, size = 0x12000, scoped, tag = 'internal scratch']
  %s0 = inlined_call_operand.vmem [shape: f32[2,16,16,128], index: 0, kind: input, shape index: {}]
  %s1 = inlined_call_operand.vmem [shape: f32[2,16,16], index: 1, kind: output, shape index: {}]
  %s2 = sld [smem:[#allocation0]]
  $region37: #{ikd_forward.10} parent=0
    _
  %s4 = ssub.s32 1, %s2
  %s5 = scalar_select 0, %s4, %s2
  loop: start=0, step=1, limit=4
  $region2: #{ikd_forward.10} parent=0 // loop_pre_header
    _
  $region3: #{ikd_forward.10} parent=0 // loop_header
    %s7 = sphi 0, %s11
    %p8 = scmp.ge.s32.totalorder %s7, 4
    %s17 = sphi 0, %s19
    %s20 = sphi 0, %s17
    %s21 = sphi 0, %s20
    %s37 = sphi 0, %s21
    %s43 = sphi 0, %s45
    %s46 = sphi 0, %s43
    %s47 = sphi 0, %s46
    %s63 = sphi 0, %s47
  $region4: #{ikd_forward.10} parent=0 // loop_header_branch
    %10 = sbr.rel (%p8) target = $region8
  $region5: #{ikd_forward.10} parent=0 // loop_body
    %s12 = ssub.s32 %s7, 1
    %s13 = ssub.s32 %s7, 2
    %s14 = sadd.s32 %s7, 1
    %s15 = ssub.s32 %s7, %s14
    %p16 = scmp.eq.s32.totalorder %s15, 0
    %s18 = sadd.s32 %s17, 1
    %s19 = scalar_select %p16, %s17, %s18
    %p22 = pneg %p16
    %p23 = scmp.eq.s32.totalorder %s7, 1
    %p24 = por %p22, %p23
    %p25 = scmp.ne.s32.totalorder %s17, %s20
    %p26 = scmp.eq.s32.totalorder %s7, 0
    %p27 = por %p25, %p26
    %p28 = scmp.ne.s32.totalorder %s17, %s20
    %p29 = scmp.eq.s32.totalorder %s12, 1
    %p30 = por %p28, %p29
    %p31 = scmp.ne.s32.totalorder %s20, %s21
    %p32 = scmp.eq.s32.totalorder %s12, 0
    %p33 = por %p31, %p32
    %p34 = scmp.ne.s32.totalorder %s20, %s21
    %p35 = scmp.eq.s32.totalorder %s13, 1
    %p36 = por %p34, %p35
    %p38 = scmp.ne.s32.totalorder %s21, %s37
    %p39 = scmp.eq.s32.totalorder %s13, 0
    %p40 = por %p38, %p39
    %s41 = ssub.s32 %s7, %s14
    %p42 = scmp.eq.s32.totalorder %s41, 0
    %s44 = sadd.s32 %s43, 1
    %s45 = scalar_select %p42, %s43, %s44
    %p48 = pneg %p42
    %p49 = scmp.eq.s32.totalorder %s7, 1
    %p50 = por %p48, %p49
    %p51 = scmp.ne.s32.totalorder %s43, %s46
    %p52 = scmp.eq.s32.totalorder %s7, 0
    %p53 = por %p51, %p52
    %p54 = scmp.ne.s32.totalorder %s43, %s46
    %p55 = scmp.eq.s32.totalorder %s12, 1
    %p56 = por %p54, %p55
    %p57 = scmp.ne.s32.totalorder %s46, %s47
    %p58 = scmp.eq.s32.totalorder %s12, 0
    %p59 = por %p57, %p58
    %p60 = scmp.ne.s32.totalorder %s46, %s47
    %p61 = scmp.eq.s32.totalorder %s13, 1
    %p62 = por %p60, %p61
    %p64 = scmp.ne.s32.totalorder %s47, %s63
    %p65 = scmp.eq.s32.totalorder %s13, 0
    %p66 = por %p64, %p65
    %p67 = scmp.le.s32.totalorder 1, %s7
    %p68 = scmp.lt.s32.totalorder %s7, 3
    %p69 = pnand %p67, %p68
    %p70 = pneg %p69
    // Predicated region
    $region9: #{ikd_forward.10} parent=5 // pred_check
      _
    $region10: #{ikd_forward.10} parent=5 // pred_check_branch
      %72 = sbr.rel (%p69) target = $region12
    $region11: #{ikd_forward.10} parent=5 // pred_region
      %s73 = ssub.s32 %s7, 1
    $region12: #{ikd_forward.10} parent=5 // pred_fallthru
      _
    %p74 = scmp.lt.s32.totalorder %s7, 2
    // Predicated region
    $region13: #{ikd_forward.10} parent=5 // pred_check
      %p75 = pneg %p74
    $region14: #{ikd_forward.10} parent=5 // pred_check_branch
      %77 = sbr.rel (%p75) target = $region16
    $region15: #{ikd_forward.10} parent=5 // pred_region
      // Predicated region
      $region17: #{ikd_forward.10} parent=15 // pred_check
        %p78 = pneg %p27
      $region18: #{ikd_forward.10} parent=15 // pred_check_branch
        %80 = sbr.rel (%p78) target = $region20
      $region19: #{ikd_forward.10} parent=15 // pred_region
        %p81 = scmp.lt.s32.totalorder %s7, 1
        %s82 = scalar_select %p81, %s7, 1
        %s83 = smul.addr %s82, 32
        %s84 = smul.addr %s83, 8
        %s85 = scalar_lea.vmem %s0, %s84
      $region20: #{ikd_forward.10} parent=15 // pred_fallthru
        _
    $region16: #{ikd_forward.10} parent=5 // pred_fallthru
      _
    %p86 = scmp.le.s32.totalorder 1, %s7
    %p87 = scmp.lt.s32.totalorder %s7, 3
    %p88 = pnand %p86, %p87
    %p89 = pneg %p88
    // Predicated region
    $region21: #{ikd_forward.10} parent=5 // pred_check
      _
    $region22: #{ikd_forward.10} parent=5 // pred_check_branch
      %91 = sbr.rel (%p88) target = $region24
    $region23: #{ikd_forward.10} parent=5 // pred_region
      %s92 = ssub.s32 %s7, 1
      %p93 = scmp.lt.s32.totalorder %s12, 1
      %s94 = scalar_select %p93, %s12, 1
      %s95 = smul.addr %s94, 32
      %s96 = smul.addr %s95, 8
      %s97 = scalar_lea.vmem %s0, %s96
      %p98 = pneg %p33
      %p99 = pneg %p30
      %p100 = pneg %p59
      %p101 = pneg %p56
      %p102 = scmp.lt.s32.totalorder %s12, 1
      %s103 = scalar_select %p102, %s12, 1
      %s104 = smul.addr %s103, 2
      %s105 = smul.addr %s104, 8
      %s106 = scalar_lea.vmem %s1, %s105
      %p107 = scmp.lt.s32.totalorder %s12, 1
      %s108 = scalar_select %p107, %s12, 1
      %s109 = smul.addr %s108, 32
      %s110 = smul.addr %s109, 8
      %s111 = scalar_lea.vmem %s0, %s110
      %p112 = scmp.lt.s32.totalorder %s12, 1
      %s113 = scalar_select %p112, %s12, 1
      %s114 = smul.addr %s113, 2
      %s115 = smul.addr %s114, 8
      %s116 = scalar_lea.vmem %s1, %s115
      %v117 = vld [vmem:[%s111] sm:$0xff]
      %v118 = vld [vmem:[%s111 + $0x8] sm:$0xff]
      %v119 = vld [vmem:[%s111 + $0x10] sm:$0xff]
      %v120 = vld [vmem:[%s111 + $0x18] sm:$0xff]
      %v121 = vld [vmem:[%s111 + $0x20] sm:$0xff]
      %v122 = vld [vmem:[%s111 + $0x28] sm:$0xff]
      %v123 = vld [vmem:[%s111 + $0x30] sm:$0xff]
      %v124 = vld [vmem:[%s111 + $0x38] sm:$0xff]
      %v125 = vld [vmem:[%s111 + $0x40] sm:$0xff]
      %v126 = vld [vmem:[%s111 + $0x48] sm:$0xff]
      %v127 = vld [vmem:[%s111 + $0x50] sm:$0xff]
      %v128 = vld [vmem:[%s111 + $0x58] sm:$0xff]
      %v129 = vld [vmem:[%s111 + $0x60] sm:$0xff]
      %v130 = vld [vmem:[%s111 + $0x68] sm:$0xff]
      %v131 = vld [vmem:[%s111 + $0x70] sm:$0xff]
      %v132 = vld [vmem:[%s111 + $0x78] sm:$0xff]
      %v133 = vld [vmem:[%s111 + $0x80] sm:$0xff]
      %v134 = vld [vmem:[%s111 + $0x88] sm:$0xff]
      %v135 = vld [vmem:[%s111 + $0x90] sm:$0xff]
      %v136 = vld [vmem:[%s111 + $0x98] sm:$0xff]
      %v137 = vld [vmem:[%s111 + $0xa0] sm:$0xff]
      %v138 = vld [vmem:[%s111 + $0xa8] sm:$0xff]
      %v139 = vld [vmem:[%s111 + $0xb0] sm:$0xff]
      %v140 = vld [vmem:[%s111 + $0xb8] sm:$0xff]
      %v141 = vld [vmem:[%s111 + $0xc0] sm:$0xff]
      %v142 = vld [vmem:[%s111 + $0xc8] sm:$0xff]
      %v143 = vld [vmem:[%s111 + $0xd0] sm:$0xff]
      %v144 = vld [vmem:[%s111 + $0xd8] sm:$0xff]
      %v145 = vld [vmem:[%s111 + $0xe0] sm:$0xff]
      %v146 = vld [vmem:[%s111 + $0xe8] sm:$0xff]
      %v147 = vld [vmem:[%s111 + $0xf0] sm:$0xff]
      %v148 = vld [vmem:[%s111 + $0xf8] sm:$0xff]
      %v149 = vadd.f32 %v117, 0.0
      %v150 = vadd.f32 %v118, 0.0
      %v151 = vadd.f32 %v117, %v119
      %v152 = vadd.f32 %v118, %v120
      %v153 = vadd.f32 %v119, %v121
      %v154 = vadd.f32 %v120, %v122
      %v155 = vadd.f32 %v121, %v123
      %v156 = vadd.f32 %v122, %v124
      %v157 = vadd.f32 %v123, %v125
      %v158 = vadd.f32 %v124, %v126
      %v159 = vadd.f32 %v125, %v127
      %v160 = vadd.f32 %v126, %v128
      %v161 = vadd.f32 %v127, %v129
      %v162 = vadd.f32 %v128, %v130
      %v163 = vadd.f32 %v129, %v131
      %v164 = vadd.f32 %v130, %v132
      %v165 = vadd.f32 %v131, %v133
      %v166 = vadd.f32 %v132, %v134
      %v167 = vadd.f32 %v133, %v135
      %v168 = vadd.f32 %v134, %v136
      %v169 = vadd.f32 %v135, %v137
      %v170 = vadd.f32 %v136, %v138
      %v171 = vadd.f32 %v137, %v139
      %v172 = vadd.f32 %v138, %v140
      %v173 = vadd.f32 %v139, %v141
      %v174 = vadd.f32 %v140, %v142
      %v175 = vadd.f32 %v141, %v143
      %v176 = vadd.f32 %v142, %v144
      %v177 = vadd.f32 %v143, %v145
      %v178 = vadd.f32 %v144, %v146
      %v179 = vadd.f32 %v145, %v147
      %v180 = vadd.f32 %v146, %v148
      %v181 = vadd.f32 %v149, %v119
      %v182 = vadd.f32 %v150, %v120
      %v183 = vadd.f32 %v151, %v121
      %v184 = vadd.f32 %v152, %v122
      %v185 = vadd.f32 %v153, %v123
      %v186 = vadd.f32 %v154, %v124
      %v187 = vadd.f32 %v155, %v125
      %v188 = vadd.f32 %v156, %v126
      %v189 = vadd.f32 %v157, %v127
      %v190 = vadd.f32 %v158, %v128
      %v191 = vadd.f32 %v159, %v129
      %v192 = vadd.f32 %v160, %v130
      %v193 = vadd.f32 %v161, %v131
      %v194 = vadd.f32 %v162, %v132
      %v195 = vadd.f32 %v163, %v133
      %v196 = vadd.f32 %v164, %v134
      %v197 = vadd.f32 %v165, %v135
      %v198 = vadd.f32 %v166, %v136
      %v199 = vadd.f32 %v167, %v137
      %v200 = vadd.f32 %v168, %v138
      %v201 = vadd.f32 %v169, %v139
      %v202 = vadd.f32 %v170, %v140
      %v203 = vadd.f32 %v171, %v141
      %v204 = vadd.f32 %v172, %v142
      %v205 = vadd.f32 %v173, %v143
      %v206 = vadd.f32 %v174, %v144
      %v207 = vadd.f32 %v175, %v145
      %v208 = vadd.f32 %v176, %v146
      %v209 = vadd.f32 %v177, %v147
      %v210 = vadd.f32 %v178, %v148
      %v211 = vadd.f32 %v179, 0.0
      %v212 = vadd.f32 %v180, 0.0
      %vm245 = vcmask 1040384
      %v246 = vrot.slane %v181, 7
      %v247 = vrot.slane %v182, 7
      %v248 = vsel %vm245, %v246, %v247
      %v249 = vrot.slane %v183, 7
      %v250 = vrot.slane %v184, 7
      %v251 = vsel %vm245, %v249, %v250
      %v252 = vrot.slane %v185, 7
      %v253 = vrot.slane %v186, 7
      %v254 = vsel %vm245, %v252, %v253
      %v255 = vrot.slane %v187, 7
      %v256 = vrot.slane %v188, 7
      %v257 = vsel %vm245, %v255, %v256
      %v258 = vrot.slane %v189, 7
      %v259 = vrot.slane %v190, 7
      %v260 = vsel %vm245, %v258, %v259
      %v261 = vrot.slane %v191, 7
      %v262 = vrot.slane %v192, 7
      %v263 = vsel %vm245, %v261, %v262
      %v264 = vrot.slane %v193, 7
      %v265 = vrot.slane %v194, 7
      %v266 = vsel %vm245, %v264, %v265
      %v267 = vrot.slane %v195, 7
      %v268 = vrot.slane %v196, 7
      %v269 = vsel %vm245, %v267, %v268
      %v270 = vrot.slane %v197, 7
      %v271 = vrot.slane %v198, 7
      %v272 = vsel %vm245, %v270, %v271
      %v273 = vrot.slane %v199, 7
      %v274 = vrot.slane %v200, 7
      %v275 = vsel %vm245, %v273, %v274
      %v276 = vrot.slane %v201, 7
      %v277 = vrot.slane %v202, 7
      %v278 = vsel %vm245, %v276, %v277
      %v279 = vrot.slane %v203, 7
      %v280 = vrot.slane %v204, 7
      %v281 = vsel %vm245, %v279, %v280
      %v282 = vrot.slane %v205, 7
      %v283 = vrot.slane %v206, 7
      %v284 = vsel %vm245, %v282, %v283
      %v285 = vrot.slane %v207, 7
      %v286 = vrot.slane %v208, 7
      %v287 = vsel %vm245, %v285, %v286
      %v288 = vrot.slane %v209, 7
      %v289 = vrot.slane %v210, 7
      %v290 = vsel %vm245, %v288, %v289
      %v291 = vrot.slane %v211, 7
      %v292 = vrot.slane %v212, 7
      %v293 = vsel %vm245, %v291, %v292
      %v342 = vsel %vm245, 0.0, %v246
      %v343 = vsel %vm245, 0.0, %v249
      %v344 = vsel %vm245, 0.0, %v252
      %v345 = vsel %vm245, 0.0, %v255
      %v346 = vsel %vm245, 0.0, %v258
      %v347 = vsel %vm245, 0.0, %v261
      %v348 = vsel %vm245, 0.0, %v264
      %v349 = vsel %vm245, 0.0, %v267
      %v350 = vsel %vm245, 0.0, %v270
      %v351 = vsel %vm245, 0.0, %v273
      %v352 = vsel %vm245, 0.0, %v276
      %v353 = vsel %vm245, 0.0, %v279
      %v354 = vsel %vm245, 0.0, %v282
      %v355 = vsel %vm245, 0.0, %v285
      %v356 = vsel %vm245, 0.0, %v288
      %v357 = vsel %vm245, 0.0, %v291
      %v358 = vsel %vm245, %v247, 0.0
      %v359 = vsel %vm245, %v250, 0.0
      %v360 = vsel %vm245, %v253, 0.0
      %v361 = vsel %vm245, %v256, 0.0
      %v362 = vsel %vm245, %v259, 0.0
      %v363 = vsel %vm245, %v262, 0.0
      %v364 = vsel %vm245, %v265, 0.0
      %v365 = vsel %vm245, %v268, 0.0
      %v366 = vsel %vm245, %v271, 0.0
      %v367 = vsel %vm245, %v274, 0.0
      %v368 = vsel %vm245, %v277, 0.0
      %v369 = vsel %vm245, %v280, 0.0
      %v370 = vsel %vm245, %v283, 0.0
      %v371 = vsel %vm245, %v286, 0.0
      %v372 = vsel %vm245, %v289, 0.0
      %v373 = vsel %vm245, %v292, 0.0
      %vm406 = vcmask 1046528
      %v407 = vrot.slane %v342, 1
      %v408 = vrot.slane %v248, 1
      %v409 = vsel %vm406, %v407, %v408
      %v410 = vrot.slane %v358, 1
      %v411 = vsel %vm406, %v408, %v410
      %v412 = vrot.slane %v343, 1
      %v413 = vrot.slane %v251, 1
      %v414 = vsel %vm406, %v412, %v413
      %v415 = vrot.slane %v359, 1
      %v416 = vsel %vm406, %v413, %v415
      %v417 = vrot.slane %v344, 1
      %v418 = vrot.slane %v254, 1
      %v419 = vsel %vm406, %v417, %v418
      %v420 = vrot.slane %v360, 1
      %v421 = vsel %vm406, %v418, %v420
      %v422 = vrot.slane %v345, 1
      %v423 = vrot.slane %v257, 1
      %v424 = vsel %vm406, %v422, %v423
      %v425 = vrot.slane %v361, 1
      %v426 = vsel %vm406, %v423, %v425
      %v427 = vrot.slane %v346, 1
      %v428 = vrot.slane %v260, 1
      %v429 = vsel %vm406, %v427, %v428
      %v430 = vrot.slane %v362, 1
      %v431 = vsel %vm406, %v428, %v430
      %v432 = vrot.slane %v347, 1
      %v433 = vrot.slane %v263, 1
      %v434 = vsel %vm406, %v432, %v433
      %v435 = vrot.slane %v363, 1
      %v436 = vsel %vm406, %v433, %v435
      %v437 = vrot.slane %v348, 1
      %v438 = vrot.slane %v266, 1
      %v439 = vsel %vm406, %v437, %v438
      %v440 = vrot.slane %v364, 1
      %v441 = vsel %vm406, %v438, %v440
      %v442 = vrot.slane %v349, 1
      %v443 = vrot.slane %v269, 1
      %v444 = vsel %vm406, %v442, %v443
      %v445 = vrot.slane %v365, 1
      %v446 = vsel %vm406, %v443, %v445
      %v447 = vrot.slane %v350, 1
      %v448 = vrot.slane %v272, 1
      %v449 = vsel %vm406, %v447, %v448
      %v450 = vrot.slane %v366, 1
      %v451 = vsel %vm406, %v448, %v450
      %v452 = vrot.slane %v351, 1
      %v453 = vrot.slane %v275, 1
      %v454 = vsel %vm406, %v452, %v453
      %v455 = vrot.slane %v367, 1
      %v456 = vsel %vm406, %v453, %v455
      %v457 = vrot.slane %v352, 1
      %v458 = vrot.slane %v278, 1
      %v459 = vsel %vm406, %v457, %v458
      %v460 = vrot.slane %v368, 1
      %v461 = vsel %vm406, %v458, %v460
      %v462 = vrot.slane %v353, 1
      %v463 = vrot.slane %v281, 1
      %v464 = vsel %vm406, %v462, %v463
      %v465 = vrot.slane %v369, 1
      %v466 = vsel %vm406, %v463, %v465
      %v467 = vrot.slane %v354, 1
      %v468 = vrot.slane %v284, 1
      %v469 = vsel %vm406, %v467, %v468
      %v470 = vrot.slane %v370, 1
      %v471 = vsel %vm406, %v468, %v470
      %v472 = vrot.slane %v355, 1
      %v473 = vrot.slane %v287, 1
      %v474 = vsel %vm406, %v472, %v473
      %v475 = vrot.slane %v371, 1
      %v476 = vsel %vm406, %v473, %v475
      %v477 = vrot.slane %v356, 1
      %v478 = vrot.slane %v290, 1
      %v479 = vsel %vm406, %v477, %v478
      %v480 = vrot.slane %v372, 1
      %v481 = vsel %vm406, %v478, %v480
      %v482 = vrot.slane %v357, 1
      %v483 = vrot.slane %v293, 1
      %v484 = vsel %vm406, %v482, %v483
      %v485 = vrot.slane %v373, 1
      %v486 = vsel %vm406, %v483, %v485
      %v519 = vadd.f32 %v342, %v409
      %v520 = vadd.f32 %v248, %v411
      %v521 = vadd.f32 %v343, %v414
      %v522 = vadd.f32 %v251, %v416
      %v523 = vadd.f32 %v344, %v419
      %v524 = vadd.f32 %v254, %v421
      %v525 = vadd.f32 %v345, %v424
      %v526 = vadd.f32 %v257, %v426
      %v527 = vadd.f32 %v346, %v429
      %v528 = vadd.f32 %v260, %v431
      %v529 = vadd.f32 %v347, %v434
      %v530 = vadd.f32 %v263, %v436
      %v531 = vadd.f32 %v348, %v439
      %v532 = vadd.f32 %v266, %v441
      %v533 = vadd.f32 %v349, %v444
      %v534 = vadd.f32 %v269, %v446
      %v535 = vadd.f32 %v350, %v449
      %v536 = vadd.f32 %v272, %v451
      %v537 = vadd.f32 %v351, %v454
      %v538 = vadd.f32 %v275, %v456
      %v539 = vadd.f32 %v352, %v459
      %v540 = vadd.f32 %v278, %v461
      %v541 = vadd.f32 %v353, %v464
      %v542 = vadd.f32 %v281, %v466
      %v543 = vadd.f32 %v354, %v469
      %v544 = vadd.f32 %v284, %v471
      %v545 = vadd.f32 %v355, %v474
      %v546 = vadd.f32 %v287, %v476
      %v547 = vadd.f32 %v356, %v479
      %v548 = vadd.f32 %v290, %v481
      %v549 = vadd.f32 %v357, %v484
      %v550 = vadd.f32 %v293, %v486
      %vm551 = vcmask 1045504
      %v552 = vrot.slane %v342, 2
      %v553 = vrot.slane %v248, 2
      %v554 = vsel %vm551, %v552, %v553
      %v555 = vrot.slane %v358, 2
      %v556 = vsel %vm551, %v553, %v555
      %v557 = vrot.slane %v343, 2
      %v558 = vrot.slane %v251, 2
      %v559 = vsel %vm551, %v557, %v558
      %v560 = vrot.slane %v359, 2
      %v561 = vsel %vm551, %v558, %v560
      %v562 = vrot.slane %v344, 2
      %v563 = vrot.slane %v254, 2
      %v564 = vsel %vm551, %v562, %v563
      %v565 = vrot.slane %v360, 2
      %v566 = vsel %vm551, %v563, %v565
      %v567 = vrot.slane %v345, 2
      %v568 = vrot.slane %v257, 2
      %v569 = vsel %vm551, %v567, %v568
      %v570 = vrot.slane %v361, 2
      %v571 = vsel %vm551, %v568, %v570
      %v572 = vrot.slane %v346, 2
      %v573 = vrot.slane %v260, 2
      %v574 = vsel %vm551, %v572, %v573
      %v575 = vrot.slane %v362, 2
      %v576 = vsel %vm551, %v573, %v575
      %v577 = vrot.slane %v347, 2
      %v578 = vrot.slane %v263, 2
      %v579 = vsel %vm551, %v577, %v578
      %v580 = vrot.slane %v363, 2
      %v581 = vsel %vm551, %v578, %v580
      %v582 = vrot.slane %v348, 2
      %v583 = vrot.slane %v266, 2
      %v584 = vsel %vm551, %v582, %v583
      %v585 = vrot.slane %v364, 2
      %v586 = vsel %vm551, %v583, %v585
      %v587 = vrot.slane %v349, 2
      %v588 = vrot.slane %v269, 2
      %v589 = vsel %vm551, %v587, %v588
      %v590 = vrot.slane %v365, 2
      %v591 = vsel %vm551, %v588, %v590
      %v592 = vrot.slane %v350, 2
      %v593 = vrot.slane %v272, 2
      %v594 = vsel %vm551, %v592, %v593
      %v595 = vrot.slane %v366, 2
      %v596 = vsel %vm551, %v593, %v595
      %v597 = vrot.slane %v351, 2
      %v598 = vrot.slane %v275, 2
      %v599 = vsel %vm551, %v597, %v598
      %v600 = vrot.slane %v367, 2
      %v601 = vsel %vm551, %v598, %v600
      %v602 = vrot.slane %v352, 2
      %v603 = vrot.slane %v278, 2
      %v604 = vsel %vm551, %v602, %v603
      %v605 = vrot.slane %v368, 2
      %v606 = vsel %vm551, %v603, %v605
      %v607 = vrot.slane %v353, 2
      %v608 = vrot.slane %v281, 2
      %v609 = vsel %vm551, %v607, %v608
      %v610 = vrot.slane %v369, 2
      %v611 = vsel %vm551, %v608, %v610
      %v612 = vrot.slane %v354, 2
      %v613 = vrot.slane %v284, 2
      %v614 = vsel %vm551, %v612, %v613
      %v615 = vrot.slane %v370, 2
      %v616 = vsel %vm551, %v613, %v615
      %v617 = vrot.slane %v355, 2
      %v618 = vrot.slane %v287, 2
      %v619 = vsel %vm551, %v617, %v618
      %v620 = vrot.slane %v371, 2
      %v621 = vsel %vm551, %v618, %v620
      %v622 = vrot.slane %v356, 2
      %v623 = vrot.slane %v290, 2
      %v624 = vsel %vm551, %v622, %v623
      %v625 = vrot.slane %v372, 2
      %v626 = vsel %vm551, %v623, %v625
      %v627 = vrot.slane %v357, 2
      %v628 = vrot.slane %v293, 2
      %v629 = vsel %vm551, %v627, %v628
      %v630 = vrot.slane %v373, 2
      %v631 = vsel %vm551, %v628, %v630
      %v664 = vadd.f32 %v519, %v554
      %v665 = vadd.f32 %v520, %v556
      %v666 = vadd.f32 %v521, %v559
      %v667 = vadd.f32 %v522, %v561
      %v668 = vadd.f32 %v523, %v564
      %v669 = vadd.f32 %v524, %v566
      %v670 = vadd.f32 %v525, %v569
      %v671 = vadd.f32 %v526, %v571
      %v672 = vadd.f32 %v527, %v574
      %v673 = vadd.f32 %v528, %v576
      %v674 = vadd.f32 %v529, %v579
      %v675 = vadd.f32 %v530, %v581
      %v676 = vadd.f32 %v531, %v584
      %v677 = vadd.f32 %v532, %v586
      %v678 = vadd.f32 %v533, %v589
      %v679 = vadd.f32 %v534, %v591
      %v680 = vadd.f32 %v535, %v594
      %v681 = vadd.f32 %v536, %v596
      %v682 = vadd.f32 %v537, %v599
      %v683 = vadd.f32 %v538, %v601
      %v684 = vadd.f32 %v539, %v604
      %v685 = vadd.f32 %v540, %v606
      %v686 = vadd.f32 %v541, %v609
      %v687 = vadd.f32 %v542, %v611
      %v688 = vadd.f32 %v543, %v614
      %v689 = vadd.f32 %v544, %v616
      %v690 = vadd.f32 %v545, %v619
      %v691 = vadd.f32 %v546, %v621
      %v692 = vadd.f32 %v547, %v624
      %v693 = vadd.f32 %v548, %v626
      %v694 = vadd.f32 %v549, %v629
      %v695 = vadd.f32 %v550, %v631
      %v696 = vmul.f32 %v664, 0.11111111
      %v697 = vmul.f32 %v665, 0.11111111
      %v698 = vmul.f32 %v666, 0.11111111
      %v699 = vmul.f32 %v667, 0.11111111
      %v700 = vmul.f32 %v668, 0.11111111
      %v701 = vmul.f32 %v669, 0.11111111
      %v702 = vmul.f32 %v670, 0.11111111
      %v703 = vmul.f32 %v671, 0.11111111
      %v704 = vmul.f32 %v672, 0.11111111
      %v705 = vmul.f32 %v673, 0.11111111
      %v706 = vmul.f32 %v674, 0.11111111
      %v707 = vmul.f32 %v675, 0.11111111
      %v708 = vmul.f32 %v676, 0.11111111
      %v709 = vmul.f32 %v677, 0.11111111
      %v710 = vmul.f32 %v678, 0.11111111
      %v711 = vmul.f32 %v679, 0.11111111
      %v712 = vmul.f32 %v680, 0.11111111
      %v713 = vmul.f32 %v681, 0.11111111
      %v714 = vmul.f32 %v682, 0.11111111
      %v715 = vmul.f32 %v683, 0.11111111
      %v716 = vmul.f32 %v684, 0.11111111
      %v717 = vmul.f32 %v685, 0.11111111
      %v718 = vmul.f32 %v686, 0.11111111
      %v719 = vmul.f32 %v687, 0.11111111
      %v720 = vmul.f32 %v688, 0.11111111
      %v721 = vmul.f32 %v689, 0.11111111
      %v722 = vmul.f32 %v690, 0.11111111
      %v723 = vmul.f32 %v691, 0.11111111
      %v724 = vmul.f32 %v692, 0.11111111
      %v725 = vmul.f32 %v693, 0.11111111
      %v726 = vmul.f32 %v694, 0.11111111
      %v727 = vmul.f32 %v695, 0.11111111
      %v728 = vmul.f32 %v696, %v696
      %v729 = vmul.f32 %v697, %v697
      %v730 = vmul.f32 %v698, %v698
      %v731 = vmul.f32 %v699, %v699
      %v732 = vmul.f32 %v700, %v700
      %v733 = vmul.f32 %v701, %v701
      %v734 = vmul.f32 %v702, %v702
      %v735 = vmul.f32 %v703, %v703
      %v736 = vmul.f32 %v704, %v704
      %v737 = vmul.f32 %v705, %v705
      %v738 = vmul.f32 %v706, %v706
      %v739 = vmul.f32 %v707, %v707
      %v740 = vmul.f32 %v708, %v708
      %v741 = vmul.f32 %v709, %v709
      %v742 = vmul.f32 %v710, %v710
      %v743 = vmul.f32 %v711, %v711
      %v744 = vmul.f32 %v712, %v712
      %v745 = vmul.f32 %v713, %v713
      %v746 = vmul.f32 %v714, %v714
      %v747 = vmul.f32 %v715, %v715
      %v748 = vmul.f32 %v716, %v716
      %v749 = vmul.f32 %v717, %v717
      %v750 = vmul.f32 %v718, %v718
      %v751 = vmul.f32 %v719, %v719
      %v752 = vmul.f32 %v720, %v720
      %v753 = vmul.f32 %v721, %v721
      %v754 = vmul.f32 %v722, %v722
      %v755 = vmul.f32 %v723, %v723
      %v756 = vmul.f32 %v724, %v724
      %v757 = vmul.f32 %v725, %v725
      %v758 = vmul.f32 %v726, %v726
      %v759 = vmul.f32 %v727, %v727
      %vm760 = vcmask 523264
      %v761 = vsel %vm760, %v728, 0.0
      %762 = vadd.xlane.f32.xlu0 %v761
      %v763 = vpop.xlane.xlu0 %762
      %v764 = vsel %vm760, %v729, 0.0
      %765 = vadd.xlane.f32.xlu0 %v764
      %v766 = vpop.xlane.xlu0 %765
      %v767 = vsel %vm760, %v730, 0.0
      %768 = vadd.xlane.f32.xlu0 %v767
      %v769 = vpop.xlane.xlu0 %768
      %v770 = vsel %vm760, %v731, 0.0
      %771 = vadd.xlane.f32.xlu0 %v770
      %v772 = vpop.xlane.xlu0 %771
      %v773 = vsel %vm760, %v732, 0.0
      %774 = vadd.xlane.f32.xlu0 %v773
      %v775 = vpop.xlane.xlu0 %774
      %v776 = vsel %vm760, %v733, 0.0
      %777 = vadd.xlane.f32.xlu0 %v776
      %v778 = vpop.xlane.xlu0 %777
      %v779 = vsel %vm760, %v734, 0.0
      %780 = vadd.xlane.f32.xlu0 %v779
      %v781 = vpop.xlane.xlu0 %780
      %v782 = vsel %vm760, %v735, 0.0
      %783 = vadd.xlane.f32.xlu0 %v782
      %v784 = vpop.xlane.xlu0 %783
      %v785 = vsel %vm760, %v736, 0.0
      %786 = vadd.xlane.f32.xlu0 %v785
      %v787 = vpop.xlane.xlu0 %786
      %v788 = vsel %vm760, %v737, 0.0
      %789 = vadd.xlane.f32.xlu0 %v788
      %v790 = vpop.xlane.xlu0 %789
      %v791 = vsel %vm760, %v738, 0.0
      %792 = vadd.xlane.f32.xlu0 %v791
      %v793 = vpop.xlane.xlu0 %792
      %v794 = vsel %vm760, %v739, 0.0
      %795 = vadd.xlane.f32.xlu0 %v794
      %v796 = vpop.xlane.xlu0 %795
      %v797 = vsel %vm760, %v740, 0.0
      %798 = vadd.xlane.f32.xlu0 %v797
      %v799 = vpop.xlane.xlu0 %798
      %v800 = vsel %vm760, %v741, 0.0
      %801 = vadd.xlane.f32.xlu0 %v800
      %v802 = vpop.xlane.xlu0 %801
      %v803 = vsel %vm760, %v742, 0.0
      %804 = vadd.xlane.f32.xlu0 %v803
      %v805 = vpop.xlane.xlu0 %804
      %v806 = vsel %vm760, %v743, 0.0
      %807 = vadd.xlane.f32.xlu0 %v806
      %v808 = vpop.xlane.xlu0 %807
      %v809 = vsel %vm760, %v744, 0.0
      %810 = vadd.xlane.f32.xlu0 %v809
      %v811 = vpop.xlane.xlu0 %810
      %v812 = vsel %vm760, %v745, 0.0
      %813 = vadd.xlane.f32.xlu0 %v812
      %v814 = vpop.xlane.xlu0 %813
      %v815 = vsel %vm760, %v746, 0.0
      %816 = vadd.xlane.f32.xlu0 %v815
      %v817 = vpop.xlane.xlu0 %816
      %v818 = vsel %vm760, %v747, 0.0
      %819 = vadd.xlane.f32.xlu0 %v818
      %v820 = vpop.xlane.xlu0 %819
      %v821 = vsel %vm760, %v748, 0.0
      %822 = vadd.xlane.f32.xlu0 %v821
      %v823 = vpop.xlane.xlu0 %822
      %v824 = vsel %vm760, %v749, 0.0
      %825 = vadd.xlane.f32.xlu0 %v824
      %v826 = vpop.xlane.xlu0 %825
      %v827 = vsel %vm760, %v750, 0.0
      %828 = vadd.xlane.f32.xlu0 %v827
      %v829 = vpop.xlane.xlu0 %828
      %v830 = vsel %vm760, %v751, 0.0
      %831 = vadd.xlane.f32.xlu0 %v830
      %v832 = vpop.xlane.xlu0 %831
      %v833 = vsel %vm760, %v752, 0.0
      %834 = vadd.xlane.f32.xlu0 %v833
      %v835 = vpop.xlane.xlu0 %834
      %v836 = vsel %vm760, %v753, 0.0
      %837 = vadd.xlane.f32.xlu0 %v836
      %v838 = vpop.xlane.xlu0 %837
      %v839 = vsel %vm760, %v754, 0.0
      %840 = vadd.xlane.f32.xlu0 %v839
      %v841 = vpop.xlane.xlu0 %840
      %v842 = vsel %vm760, %v755, 0.0
      %843 = vadd.xlane.f32.xlu0 %v842
      %v844 = vpop.xlane.xlu0 %843
      %v845 = vsel %vm760, %v756, 0.0
      %846 = vadd.xlane.f32.xlu0 %v845
      %v847 = vpop.xlane.xlu0 %846
      %v848 = vsel %vm760, %v757, 0.0
      %849 = vadd.xlane.f32.xlu0 %v848
      %v850 = vpop.xlane.xlu0 %849
      %v851 = vsel %vm760, %v758, 0.0
      %852 = vadd.xlane.f32.xlu0 %v851
      %v853 = vpop.xlane.xlu0 %852
      %v854 = vsel %vm760, %v759, 0.0
      %855 = vadd.xlane.f32.xlu0 %v854
      %v856 = vpop.xlane.xlu0 %855
      %v857 = vmax.f32 %v763, 1e-24
      %v858 = vmax.f32 %v766, 1e-24
      %v859 = vmax.f32 %v769, 1e-24
      %v860 = vmax.f32 %v772, 1e-24
      %v861 = vmax.f32 %v775, 1e-24
      %v862 = vmax.f32 %v778, 1e-24
      %v863 = vmax.f32 %v781, 1e-24
      %v864 = vmax.f32 %v784, 1e-24
      %v865 = vmax.f32 %v787, 1e-24
      %v866 = vmax.f32 %v790, 1e-24
      %v867 = vmax.f32 %v793, 1e-24
      %v868 = vmax.f32 %v796, 1e-24
      %v869 = vmax.f32 %v799, 1e-24
      %v870 = vmax.f32 %v802, 1e-24
      %v871 = vmax.f32 %v805, 1e-24
      %v872 = vmax.f32 %v808, 1e-24
      %v873 = vmax.f32 %v811, 1e-24
      %v874 = vmax.f32 %v814, 1e-24
      %v875 = vmax.f32 %v817, 1e-24
      %v876 = vmax.f32 %v820, 1e-24
      %v877 = vmax.f32 %v823, 1e-24
      %v878 = vmax.f32 %v826, 1e-24
      %v879 = vmax.f32 %v829, 1e-24
      %v880 = vmax.f32 %v832, 1e-24
      %v881 = vmax.f32 %v835, 1e-24
      %v882 = vmax.f32 %v838, 1e-24
      %v883 = vmax.f32 %v841, 1e-24
      %v884 = vmax.f32 %v844, 1e-24
      %v885 = vmax.f32 %v847, 1e-24
      %v886 = vmax.f32 %v850, 1e-24
      %v887 = vmax.f32 %v853, 1e-24
      %v888 = vmax.f32 %v856, 1e-24
      %v889 = vrsqrt.pop %v857
      %v890 = vrsqrt.pop %v858
      %v891 = vrsqrt.pop %v859
      %v892 = vrsqrt.pop %v860
      %v893 = vrsqrt.pop %v861
      %v894 = vrsqrt.pop %v862
      %v895 = vrsqrt.pop %v863
      %v896 = vrsqrt.pop %v864
      %v897 = vrsqrt.pop %v865
      %v898 = vrsqrt.pop %v866
      %v899 = vrsqrt.pop %v867
      %v900 = vrsqrt.pop %v868
      %v901 = vrsqrt.pop %v869
      %v902 = vrsqrt.pop %v870
      %v903 = vrsqrt.pop %v871
      %v904 = vrsqrt.pop %v872
      %v905 = vrsqrt.pop %v873
      %v906 = vrsqrt.pop %v874
      %v907 = vrsqrt.pop %v875
      %v908 = vrsqrt.pop %v876
      %v909 = vrsqrt.pop %v877
      %v910 = vrsqrt.pop %v878
      %v911 = vrsqrt.pop %v879
      %v912 = vrsqrt.pop %v880
      %v913 = vrsqrt.pop %v881
      %v914 = vrsqrt.pop %v882
      %v915 = vrsqrt.pop %v883
      %v916 = vrsqrt.pop %v884
      %v917 = vrsqrt.pop %v885
      %v918 = vrsqrt.pop %v886
      %v919 = vrsqrt.pop %v887
      %v920 = vrsqrt.pop %v888
      %v921 = vmul.f32 %v696, %v889
      %v922 = vmul.f32 %v697, %v890
      %v923 = vmul.f32 %v698, %v891
      %v924 = vmul.f32 %v699, %v892
      %v925 = vmul.f32 %v700, %v893
      %v926 = vmul.f32 %v701, %v894
      %v927 = vmul.f32 %v702, %v895
      %v928 = vmul.f32 %v703, %v896
      %v929 = vmul.f32 %v704, %v897
      %v930 = vmul.f32 %v705, %v898
      %v931 = vmul.f32 %v706, %v899
      %v932 = vmul.f32 %v707, %v900
      %v933 = vmul.f32 %v708, %v901
      %v934 = vmul.f32 %v709, %v902
      %v935 = vmul.f32 %v710, %v903
      %v936 = vmul.f32 %v711, %v904
      %v937 = vmul.f32 %v712, %v905
      %v938 = vmul.f32 %v713, %v906
      %v939 = vmul.f32 %v714, %v907
      %v940 = vmul.f32 %v715, %v908
      %v941 = vmul.f32 %v716, %v909
      %v942 = vmul.f32 %v717, %v910
      %v943 = vmul.f32 %v718, %v911
      %v944 = vmul.f32 %v719, %v912
      %v945 = vmul.f32 %v720, %v913
      %v946 = vmul.f32 %v721, %v914
      %v947 = vmul.f32 %v722, %v915
      %v948 = vmul.f32 %v723, %v916
      %v949 = vmul.f32 %v724, %v917
      %v950 = vmul.f32 %v725, %v918
      %v951 = vmul.f32 %v726, %v919
      %v952 = vmul.f32 %v727, %v920
      %985 = vrot.lane.b32.xlu0 %v728, 64
      %v986 = vpop.permute.xlu0 %985
      %987 = vrot.lane.b32.xlu0 %v729, 64
      %v988 = vpop.permute.xlu0 %987
      %989 = vrot.lane.b32.xlu0 %v730, 64
      %v990 = vpop.permute.xlu0 %989
      %991 = vrot.lane.b32.xlu0 %v731, 64
      %v992 = vpop.permute.xlu0 %991
      %993 = vrot.lane.b32.xlu0 %v732, 64
      %v994 = vpop.permute.xlu0 %993
      %995 = vrot.lane.b32.xlu0 %v733, 64
      %v996 = vpop.permute.xlu0 %995
      %997 = vrot.lane.b32.xlu0 %v734, 64
      %v998 = vpop.permute.xlu0 %997
      %999 = vrot.lane.b32.xlu0 %v735, 64
      %v1000 = vpop.permute.xlu0 %999
      %1001 = vrot.lane.b32.xlu0 %v736, 64
      %v1002 = vpop.permute.xlu0 %1001
      %1003 = vrot.lane.b32.xlu0 %v737, 64
      %v1004 = vpop.permute.xlu0 %1003
      %1005 = vrot.lane.b32.xlu0 %v738, 64
      %v1006 = vpop.permute.xlu0 %1005
      %1007 = vrot.lane.b32.xlu0 %v739, 64
      %v1008 = vpop.permute.xlu0 %1007
      %1009 = vrot.lane.b32.xlu0 %v740, 64
      %v1010 = vpop.permute.xlu0 %1009
      %1011 = vrot.lane.b32.xlu0 %v741, 64
      %v1012 = vpop.permute.xlu0 %1011
      %1013 = vrot.lane.b32.xlu0 %v742, 64
      %v1014 = vpop.permute.xlu0 %1013
      %1015 = vrot.lane.b32.xlu0 %v743, 64
      %v1016 = vpop.permute.xlu0 %1015
      %1017 = vrot.lane.b32.xlu0 %v744, 64
      %v1018 = vpop.permute.xlu0 %1017
      %1019 = vrot.lane.b32.xlu0 %v745, 64
      %v1020 = vpop.permute.xlu0 %1019
      %1021 = vrot.lane.b32.xlu0 %v746, 64
      %v1022 = vpop.permute.xlu0 %1021
      %1023 = vrot.lane.b32.xlu0 %v747, 64
      %v1024 = vpop.permute.xlu0 %1023
      %1025 = vrot.lane.b32.xlu0 %v748, 64
      %v1026 = vpop.permute.xlu0 %1025
      %1027 = vrot.lane.b32.xlu0 %v749, 64
      %v1028 = vpop.permute.xlu0 %1027
      %1029 = vrot.lane.b32.xlu0 %v750, 64
      %v1030 = vpop.permute.xlu0 %1029
      %1031 = vrot.lane.b32.xlu0 %v751, 64
      %v1032 = vpop.permute.xlu0 %1031
      %1033 = vrot.lane.b32.xlu0 %v752, 64
      %v1034 = vpop.permute.xlu0 %1033
      %1035 = vrot.lane.b32.xlu0 %v753, 64
      %v1036 = vpop.permute.xlu0 %1035
      %1037 = vrot.lane.b32.xlu0 %v754, 64
      %v1038 = vpop.permute.xlu0 %1037
      %1039 = vrot.lane.b32.xlu0 %v755, 64
      %v1040 = vpop.permute.xlu0 %1039
      %1041 = vrot.lane.b32.xlu0 %v756, 64
      %v1042 = vpop.permute.xlu0 %1041
      %1043 = vrot.lane.b32.xlu0 %v757, 64
      %v1044 = vpop.permute.xlu0 %1043
      %1045 = vrot.lane.b32.xlu0 %v758, 64
      %v1046 = vpop.permute.xlu0 %1045
      %1047 = vrot.lane.b32.xlu0 %v759, 64
      %v1048 = vpop.permute.xlu0 %1047
      %v1081 = vsel %vm760, %v986, 0.0
      %1082 = vadd.xlane.f32.xlu0 %v1081
      %v1083 = vpop.xlane.xlu0 %1082
      %v1084 = vsel %vm760, %v988, 0.0
      %1085 = vadd.xlane.f32.xlu0 %v1084
      %v1086 = vpop.xlane.xlu0 %1085
      %v1087 = vsel %vm760, %v990, 0.0
      %1088 = vadd.xlane.f32.xlu0 %v1087
      %v1089 = vpop.xlane.xlu0 %1088
      %v1090 = vsel %vm760, %v992, 0.0
      %1091 = vadd.xlane.f32.xlu0 %v1090
      %v1092 = vpop.xlane.xlu0 %1091
      %v1093 = vsel %vm760, %v994, 0.0
      %1094 = vadd.xlane.f32.xlu0 %v1093
      %v1095 = vpop.xlane.xlu0 %1094
      %v1096 = vsel %vm760, %v996, 0.0
      %1097 = vadd.xlane.f32.xlu0 %v1096
      %v1098 = vpop.xlane.xlu0 %1097
      %v1099 = vsel %vm760, %v998, 0.0
      %1100 = vadd.xlane.f32.xlu0 %v1099
      %v1101 = vpop.xlane.xlu0 %1100
      %v1102 = vsel %vm760, %v1000, 0.0
      %1103 = vadd.xlane.f32.xlu0 %v1102
      %v1104 = vpop.xlane.xlu0 %1103
      %v1105 = vsel %vm760, %v1002, 0.0
      %1106 = vadd.xlane.f32.xlu0 %v1105
      %v1107 = vpop.xlane.xlu0 %1106
      %v1108 = vsel %vm760, %v1004, 0.0
      %1109 = vadd.xlane.f32.xlu0 %v1108
      %v1110 = vpop.xlane.xlu0 %1109
      %v1111 = vsel %vm760, %v1006, 0.0
      %1112 = vadd.xlane.f32.xlu0 %v1111
      %v1113 = vpop.xlane.xlu0 %1112
      %v1114 = vsel %vm760, %v1008, 0.0
      %1115 = vadd.xlane.f32.xlu0 %v1114
      %v1116 = vpop.xlane.xlu0 %1115
      %v1117 = vsel %vm760, %v1010, 0.0
      %1118 = vadd.xlane.f32.xlu0 %v1117
      %v1119 = vpop.xlane.xlu0 %1118
      %v1120 = vsel %vm760, %v1012, 0.0
      %1121 = vadd.xlane.f32.xlu0 %v1120
      %v1122 = vpop.xlane.xlu0 %1121
      %v1123 = vsel %vm760, %v1014, 0.0
      %1124 = vadd.xlane.f32.xlu0 %v1123
      %v1125 = vpop.xlane.xlu0 %1124
      %v1126 = vsel %vm760, %v1016, 0.0
      %1127 = vadd.xlane.f32.xlu0 %v1126
      %v1128 = vpop.xlane.xlu0 %1127
      %v1129 = vsel %vm760, %v1018, 0.0
      %1130 = vadd.xlane.f32.xlu0 %v1129
      %v1131 = vpop.xlane.xlu0 %1130
      %v1132 = vsel %vm760, %v1020, 0.0
      %1133 = vadd.xlane.f32.xlu0 %v1132
      %v1134 = vpop.xlane.xlu0 %1133
      %v1135 = vsel %vm760, %v1022, 0.0
      %1136 = vadd.xlane.f32.xlu0 %v1135
      %v1137 = vpop.xlane.xlu0 %1136
      %v1138 = vsel %vm760, %v1024, 0.0
      %1139 = vadd.xlane.f32.xlu0 %v1138
      %v1140 = vpop.xlane.xlu0 %1139
      %v1141 = vsel %vm760, %v1026, 0.0
      %1142 = vadd.xlane.f32.xlu0 %v1141
      %v1143 = vpop.xlane.xlu0 %1142
      %v1144 = vsel %vm760, %v1028, 0.0
      %1145 = vadd.xlane.f32.xlu0 %v1144
      %v1146 = vpop.xlane.xlu0 %1145
      %v1147 = vsel %vm760, %v1030, 0.0
      %1148 = vadd.xlane.f32.xlu0 %v1147
      %v1149 = vpop.xlane.xlu0 %1148
      %v1150 = vsel %vm760, %v1032, 0.0
      %1151 = vadd.xlane.f32.xlu0 %v1150
      %v1152 = vpop.xlane.xlu0 %1151
      %v1153 = vsel %vm760, %v1034, 0.0
      %1154 = vadd.xlane.f32.xlu0 %v1153
      %v1155 = vpop.xlane.xlu0 %1154
      %v1156 = vsel %vm760, %v1036, 0.0
      %1157 = vadd.xlane.f32.xlu0 %v1156
      %v1158 = vpop.xlane.xlu0 %1157
      %v1159 = vsel %vm760, %v1038, 0.0
      %1160 = vadd.xlane.f32.xlu0 %v1159
      %v1161 = vpop.xlane.xlu0 %1160
      %v1162 = vsel %vm760, %v1040, 0.0
      %1163 = vadd.xlane.f32.xlu0 %v1162
      %v1164 = vpop.xlane.xlu0 %1163
      %v1165 = vsel %vm760, %v1042, 0.0
      %1166 = vadd.xlane.f32.xlu0 %v1165
      %v1167 = vpop.xlane.xlu0 %1166
      %v1168 = vsel %vm760, %v1044, 0.0
      %1169 = vadd.xlane.f32.xlu0 %v1168
      %v1170 = vpop.xlane.xlu0 %1169
      %v1171 = vsel %vm760, %v1046, 0.0
      %1172 = vadd.xlane.f32.xlu0 %v1171
      %v1173 = vpop.xlane.xlu0 %1172
      %v1174 = vsel %vm760, %v1048, 0.0
      %1175 = vadd.xlane.f32.xlu0 %v1174
      %v1176 = vpop.xlane.xlu0 %1175
      %v1177 = vmax.f32 %v1083, 1e-24
      %v1178 = vmax.f32 %v1086, 1e-24
      %v1179 = vmax.f32 %v1089, 1e-24
      %v1180 = vmax.f32 %v1092, 1e-24
      %v1181 = vmax.f32 %v1095, 1e-24
      %v1182 = vmax.f32 %v1098, 1e-24
      %v1183 = vmax.f32 %v1101, 1e-24
      %v1184 = vmax.f32 %v1104, 1e-24
      %v1185 = vmax.f32 %v1107, 1e-24
      %v1186 = vmax.f32 %v1110, 1e-24
      %v1187 = vmax.f32 %v1113, 1e-24
      %v1188 = vmax.f32 %v1116, 1e-24
      %v1189 = vmax.f32 %v1119, 1e-24
      %v1190 = vmax.f32 %v1122, 1e-24
      %v1191 = vmax.f32 %v1125, 1e-24
      %v1192 = vmax.f32 %v1128, 1e-24
      %v1193 = vmax.f32 %v1131, 1e-24
      %v1194 = vmax.f32 %v1134, 1e-24
      %v1195 = vmax.f32 %v1137, 1e-24
      %v1196 = vmax.f32 %v1140, 1e-24
      %v1197 = vmax.f32 %v1143, 1e-24
      %v1198 = vmax.f32 %v1146, 1e-24
      %v1199 = vmax.f32 %v1149, 1e-24
      %v1200 = vmax.f32 %v1152, 1e-24
      %v1201 = vmax.f32 %v1155, 1e-24
      %v1202 = vmax.f32 %v1158, 1e-24
      %v1203 = vmax.f32 %v1161, 1e-24
      %v1204 = vmax.f32 %v1164, 1e-24
      %v1205 = vmax.f32 %v1167, 1e-24
      %v1206 = vmax.f32 %v1170, 1e-24
      %v1207 = vmax.f32 %v1173, 1e-24
      %v1208 = vmax.f32 %v1176, 1e-24
      %v1209 = vrsqrt.pop %v1177
      %v1210 = vrsqrt.pop %v1178
      %v1211 = vrsqrt.pop %v1179
      %v1212 = vrsqrt.pop %v1180
      %v1213 = vrsqrt.pop %v1181
      %v1214 = vrsqrt.pop %v1182
      %v1215 = vrsqrt.pop %v1183
      %v1216 = vrsqrt.pop %v1184
      %v1217 = vrsqrt.pop %v1185
      %v1218 = vrsqrt.pop %v1186
      %v1219 = vrsqrt.pop %v1187
      %v1220 = vrsqrt.pop %v1188
      %v1221 = vrsqrt.pop %v1189
      %v1222 = vrsqrt.pop %v1190
      %v1223 = vrsqrt.pop %v1191
      %v1224 = vrsqrt.pop %v1192
      %v1225 = vrsqrt.pop %v1193
      %v1226 = vrsqrt.pop %v1194
      %v1227 = vrsqrt.pop %v1195
      %v1228 = vrsqrt.pop %v1196
      %v1229 = vrsqrt.pop %v1197
      %v1230 = vrsqrt.pop %v1198
      %v1231 = vrsqrt.pop %v1199
      %v1232 = vrsqrt.pop %v1200
      %v1233 = vrsqrt.pop %v1201
      %v1234 = vrsqrt.pop %v1202
      %v1235 = vrsqrt.pop %v1203
      %v1236 = vrsqrt.pop %v1204
      %v1237 = vrsqrt.pop %v1205
      %v1238 = vrsqrt.pop %v1206
      %v1239 = vrsqrt.pop %v1207
      %v1240 = vrsqrt.pop %v1208
      %v1241 = vmul.f32 %v696, %v1209
      %v1242 = vmul.f32 %v697, %v1210
      %v1243 = vmul.f32 %v698, %v1211
      %v1244 = vmul.f32 %v699, %v1212
      %v1245 = vmul.f32 %v700, %v1213
      %v1246 = vmul.f32 %v701, %v1214
      %v1247 = vmul.f32 %v702, %v1215
      %v1248 = vmul.f32 %v703, %v1216
      %v1249 = vmul.f32 %v704, %v1217
      %v1250 = vmul.f32 %v705, %v1218
      %v1251 = vmul.f32 %v706, %v1219
      %v1252 = vmul.f32 %v707, %v1220
      %v1253 = vmul.f32 %v708, %v1221
      %v1254 = vmul.f32 %v709, %v1222
      %v1255 = vmul.f32 %v710, %v1223
      %v1256 = vmul.f32 %v711, %v1224
      %v1257 = vmul.f32 %v712, %v1225
      %v1258 = vmul.f32 %v713, %v1226
      %v1259 = vmul.f32 %v714, %v1227
      %v1260 = vmul.f32 %v715, %v1228
      %v1261 = vmul.f32 %v716, %v1229
      %v1262 = vmul.f32 %v717, %v1230
      %v1263 = vmul.f32 %v718, %v1231
      %v1264 = vmul.f32 %v719, %v1232
      %v1265 = vmul.f32 %v720, %v1233
      %v1266 = vmul.f32 %v721, %v1234
      %v1267 = vmul.f32 %v722, %v1235
      %v1268 = vmul.f32 %v723, %v1236
      %v1269 = vmul.f32 %v724, %v1237
      %v1270 = vmul.f32 %v725, %v1238
      %v1271 = vmul.f32 %v726, %v1239
      %v1272 = vmul.f32 %v727, %v1240
      %1305 = vrot.lane.b32.xlu0 %v1241, 64
      %v1306 = vpop.permute.xlu0 %1305
      %1307 = vrot.lane.b32.xlu0 %v1242, 64
      %v1308 = vpop.permute.xlu0 %1307
      %1309 = vrot.lane.b32.xlu0 %v1243, 64
      %v1310 = vpop.permute.xlu0 %1309
      %1311 = vrot.lane.b32.xlu0 %v1244, 64
      %v1312 = vpop.permute.xlu0 %1311
      %1313 = vrot.lane.b32.xlu0 %v1245, 64
      %v1314 = vpop.permute.xlu0 %1313
      %1315 = vrot.lane.b32.xlu0 %v1246, 64
      %v1316 = vpop.permute.xlu0 %1315
      %1317 = vrot.lane.b32.xlu0 %v1247, 64
      %v1318 = vpop.permute.xlu0 %1317
      %1319 = vrot.lane.b32.xlu0 %v1248, 64
      %v1320 = vpop.permute.xlu0 %1319
      %1321 = vrot.lane.b32.xlu0 %v1249, 64
      %v1322 = vpop.permute.xlu0 %1321
      %1323 = vrot.lane.b32.xlu0 %v1250, 64
      %v1324 = vpop.permute.xlu0 %1323
      %1325 = vrot.lane.b32.xlu0 %v1251, 64
      %v1326 = vpop.permute.xlu0 %1325
      %1327 = vrot.lane.b32.xlu0 %v1252, 64
      %v1328 = vpop.permute.xlu0 %1327
      %1329 = vrot.lane.b32.xlu0 %v1253, 64
      %v1330 = vpop.permute.xlu0 %1329
      %1331 = vrot.lane.b32.xlu0 %v1254, 64
      %v1332 = vpop.permute.xlu0 %1331
      %1333 = vrot.lane.b32.xlu0 %v1255, 64
      %v1334 = vpop.permute.xlu0 %1333
      %1335 = vrot.lane.b32.xlu0 %v1256, 64
      %v1336 = vpop.permute.xlu0 %1335
      %1337 = vrot.lane.b32.xlu0 %v1257, 64
      %v1338 = vpop.permute.xlu0 %1337
      %1339 = vrot.lane.b32.xlu0 %v1258, 64
      %v1340 = vpop.permute.xlu0 %1339
      %1341 = vrot.lane.b32.xlu0 %v1259, 64
      %v1342 = vpop.permute.xlu0 %1341
      %1343 = vrot.lane.b32.xlu0 %v1260, 64
      %v1344 = vpop.permute.xlu0 %1343
      %1345 = vrot.lane.b32.xlu0 %v1261, 64
      %v1346 = vpop.permute.xlu0 %1345
      %1347 = vrot.lane.b32.xlu0 %v1262, 64
      %v1348 = vpop.permute.xlu0 %1347
      %1349 = vrot.lane.b32.xlu0 %v1263, 64
      %v1350 = vpop.permute.xlu0 %1349
      %1351 = vrot.lane.b32.xlu0 %v1264, 64
      %v1352 = vpop.permute.xlu0 %1351
      %1353 = vrot.lane.b32.xlu0 %v1265, 64
      %v1354 = vpop.permute.xlu0 %1353
      %1355 = vrot.lane.b32.xlu0 %v1266, 64
      %v1356 = vpop.permute.xlu0 %1355
      %1357 = vrot.lane.b32.xlu0 %v1267, 64
      %v1358 = vpop.permute.xlu0 %1357
      %1359 = vrot.lane.b32.xlu0 %v1268, 64
      %v1360 = vpop.permute.xlu0 %1359
      %1361 = vrot.lane.b32.xlu0 %v1269, 64
      %v1362 = vpop.permute.xlu0 %1361
      %1363 = vrot.lane.b32.xlu0 %v1270, 64
      %v1364 = vpop.permute.xlu0 %1363
      %1365 = vrot.lane.b32.xlu0 %v1271, 64
      %v1366 = vpop.permute.xlu0 %1365
      %1367 = vrot.lane.b32.xlu0 %v1272, 64
      %v1368 = vpop.permute.xlu0 %1367
      %v1401 = vsub.f32 %v921, %v1306
      %v1402 = vsub.f32 %v922, %v1308
      %v1403 = vsub.f32 %v923, %v1310
      %v1404 = vsub.f32 %v924, %v1312
      %v1405 = vsub.f32 %v925, %v1314
      %v1406 = vsub.f32 %v926, %v1316
      %v1407 = vsub.f32 %v927, %v1318
      %v1408 = vsub.f32 %v928, %v1320
      %v1409 = vsub.f32 %v929, %v1322
      %v1410 = vsub.f32 %v930, %v1324
      %v1411 = vsub.f32 %v931, %v1326
      %v1412 = vsub.f32 %v932, %v1328
      %v1413 = vsub.f32 %v933, %v1330
      %v1414 = vsub.f32 %v934, %v1332
      %v1415 = vsub.f32 %v935, %v1334
      %v1416 = vsub.f32 %v936, %v1336
      %v1417 = vsub.f32 %v937, %v1338
      %v1418 = vsub.f32 %v938, %v1340
      %v1419 = vsub.f32 %v939, %v1342
      %v1420 = vsub.f32 %v940, %v1344
      %v1421 = vsub.f32 %v941, %v1346
      %v1422 = vsub.f32 %v942, %v1348
      %v1423 = vsub.f32 %v943, %v1350
      %v1424 = vsub.f32 %v944, %v1352
      %v1425 = vsub.f32 %v945, %v1354
      %v1426 = vsub.f32 %v946, %v1356
      %v1427 = vsub.f32 %v947, %v1358
      %v1428 = vsub.f32 %v948, %v1360
      %v1429 = vsub.f32 %v949, %v1362
      %v1430 = vsub.f32 %v950, %v1364
      %v1431 = vsub.f32 %v951, %v1366
      %v1432 = vsub.f32 %v952, %v1368
      %v1433 = vmul.f32 %v1401, %v1401
      %v1434 = vmul.f32 %v1402, %v1402
      %v1435 = vmul.f32 %v1403, %v1403
      %v1436 = vmul.f32 %v1404, %v1404
      %v1437 = vmul.f32 %v1405, %v1405
      %v1438 = vmul.f32 %v1406, %v1406
      %v1439 = vmul.f32 %v1407, %v1407
      %v1440 = vmul.f32 %v1408, %v1408
      %v1441 = vmul.f32 %v1409, %v1409
      %v1442 = vmul.f32 %v1410, %v1410
      %v1443 = vmul.f32 %v1411, %v1411
      %v1444 = vmul.f32 %v1412, %v1412
      %v1445 = vmul.f32 %v1413, %v1413
      %v1446 = vmul.f32 %v1414, %v1414
      %v1447 = vmul.f32 %v1415, %v1415
      %v1448 = vmul.f32 %v1416, %v1416
      %v1449 = vmul.f32 %v1417, %v1417
      %v1450 = vmul.f32 %v1418, %v1418
      %v1451 = vmul.f32 %v1419, %v1419
      %v1452 = vmul.f32 %v1420, %v1420
      %v1453 = vmul.f32 %v1421, %v1421
      %v1454 = vmul.f32 %v1422, %v1422
      %v1455 = vmul.f32 %v1423, %v1423
      %v1456 = vmul.f32 %v1424, %v1424
      %v1457 = vmul.f32 %v1425, %v1425
      %v1458 = vmul.f32 %v1426, %v1426
      %v1459 = vmul.f32 %v1427, %v1427
      %v1460 = vmul.f32 %v1428, %v1428
      %v1461 = vmul.f32 %v1429, %v1429
      %v1462 = vmul.f32 %v1430, %v1430
      %v1463 = vmul.f32 %v1431, %v1431
      %v1464 = vmul.f32 %v1432, %v1432
      %v1465 = vsel %vm760, %v1433, 0.0
      %1466 = vadd.xlane.f32.xlu0 %v1465
      %v1467 = vpop.xlane.xlu0 %1466
      %v1468 = vsel %vm760, %v1434, 0.0
      %1469 = vadd.xlane.f32.xlu0 %v1468
      %v1470 = vpop.xlane.xlu0 %1469
      %v1471 = vsel %vm760, %v1435, 0.0
      %1472 = vadd.xlane.f32.xlu0 %v1471
      %v1473 = vpop.xlane.xlu0 %1472
      %v1474 = vsel %vm760, %v1436, 0.0
      %1475 = vadd.xlane.f32.xlu0 %v1474
      %v1476 = vpop.xlane.xlu0 %1475
      %v1477 = vsel %vm760, %v1437, 0.0
      %1478 = vadd.xlane.f32.xlu0 %v1477
      %v1479 = vpop.xlane.xlu0 %1478
      %v1480 = vsel %vm760, %v1438, 0.0
      %1481 = vadd.xlane.f32.xlu0 %v1480
      %v1482 = vpop.xlane.xlu0 %1481
      %v1483 = vsel %vm760, %v1439, 0.0
      %1484 = vadd.xlane.f32.xlu0 %v1483
      %v1485 = vpop.xlane.xlu0 %1484
      %v1486 = vsel %vm760, %v1440, 0.0
      %1487 = vadd.xlane.f32.xlu0 %v1486
      %v1488 = vpop.xlane.xlu0 %1487
      %v1489 = vsel %vm760, %v1441, 0.0
      %1490 = vadd.xlane.f32.xlu0 %v1489
      %v1491 = vpop.xlane.xlu0 %1490
      %v1492 = vsel %vm760, %v1442, 0.0
      %1493 = vadd.xlane.f32.xlu0 %v1492
      %v1494 = vpop.xlane.xlu0 %1493
      %v1495 = vsel %vm760, %v1443, 0.0
      %1496 = vadd.xlane.f32.xlu0 %v1495
      %v1497 = vpop.xlane.xlu0 %1496
      %v1498 = vsel %vm760, %v1444, 0.0
      %1499 = vadd.xlane.f32.xlu0 %v1498
      %v1500 = vpop.xlane.xlu0 %1499
      %v1501 = vsel %vm760, %v1445, 0.0
      %1502 = vadd.xlane.f32.xlu0 %v1501
      %v1503 = vpop.xlane.xlu0 %1502
      %v1504 = vsel %vm760, %v1446, 0.0
      %1505 = vadd.xlane.f32.xlu0 %v1504
      %v1506 = vpop.xlane.xlu0 %1505
      %v1507 = vsel %vm760, %v1447, 0.0
      %1508 = vadd.xlane.f32.xlu0 %v1507
      %v1509 = vpop.xlane.xlu0 %1508
      %v1510 = vsel %vm760, %v1448, 0.0
      %1511 = vadd.xlane.f32.xlu0 %v1510
      %v1512 = vpop.xlane.xlu0 %1511
      %v1513 = vsel %vm760, %v1449, 0.0
      %1514 = vadd.xlane.f32.xlu0 %v1513
      %v1515 = vpop.xlane.xlu0 %1514
      %v1516 = vsel %vm760, %v1450, 0.0
      %1517 = vadd.xlane.f32.xlu0 %v1516
      %v1518 = vpop.xlane.xlu0 %1517
      %v1519 = vsel %vm760, %v1451, 0.0
      %1520 = vadd.xlane.f32.xlu0 %v1519
      %v1521 = vpop.xlane.xlu0 %1520
      %v1522 = vsel %vm760, %v1452, 0.0
      %1523 = vadd.xlane.f32.xlu0 %v1522
      %v1524 = vpop.xlane.xlu0 %1523
      %v1525 = vsel %vm760, %v1453, 0.0
      %1526 = vadd.xlane.f32.xlu0 %v1525
      %v1527 = vpop.xlane.xlu0 %1526
      %v1528 = vsel %vm760, %v1454, 0.0
      %1529 = vadd.xlane.f32.xlu0 %v1528
      %v1530 = vpop.xlane.xlu0 %1529
      %v1531 = vsel %vm760, %v1455, 0.0
      %1532 = vadd.xlane.f32.xlu0 %v1531
      %v1533 = vpop.xlane.xlu0 %1532
      %v1534 = vsel %vm760, %v1456, 0.0
      %1535 = vadd.xlane.f32.xlu0 %v1534
      %v1536 = vpop.xlane.xlu0 %1535
      %v1537 = vsel %vm760, %v1457, 0.0
      %1538 = vadd.xlane.f32.xlu0 %v1537
      %v1539 = vpop.xlane.xlu0 %1538
      %v1540 = vsel %vm760, %v1458, 0.0
      %1541 = vadd.xlane.f32.xlu0 %v1540
      %v1542 = vpop.xlane.xlu0 %1541
      %v1543 = vsel %vm760, %v1459, 0.0
      %1544 = vadd.xlane.f32.xlu0 %v1543
      %v1545 = vpop.xlane.xlu0 %1544
      %v1546 = vsel %vm760, %v1460, 0.0
      %1547 = vadd.xlane.f32.xlu0 %v1546
      %v1548 = vpop.xlane.xlu0 %1547
      %v1549 = vsel %vm760, %v1461, 0.0
      %1550 = vadd.xlane.f32.xlu0 %v1549
      %v1551 = vpop.xlane.xlu0 %1550
      %v1552 = vsel %vm760, %v1462, 0.0
      %1553 = vadd.xlane.f32.xlu0 %v1552
      %v1554 = vpop.xlane.xlu0 %1553
      %v1555 = vsel %vm760, %v1463, 0.0
      %1556 = vadd.xlane.f32.xlu0 %v1555
      %v1557 = vpop.xlane.xlu0 %1556
      %v1558 = vsel %vm760, %v1464, 0.0
      %1559 = vadd.xlane.f32.xlu0 %v1558
      %v1560 = vpop.xlane.xlu0 %1559
      %v1561 = vmul.f32 %v1467, 0.5
      %v1562 = vmul.f32 %v1470, 0.5
      %v1563 = vmul.f32 %v1473, 0.5
      %v1564 = vmul.f32 %v1476, 0.5
      %v1565 = vmul.f32 %v1479, 0.5
      %v1566 = vmul.f32 %v1482, 0.5
      %v1567 = vmul.f32 %v1485, 0.5
      %v1568 = vmul.f32 %v1488, 0.5
      %v1569 = vmul.f32 %v1491, 0.5
      %v1570 = vmul.f32 %v1494, 0.5
      %v1571 = vmul.f32 %v1497, 0.5
      %v1572 = vmul.f32 %v1500, 0.5
      %v1573 = vmul.f32 %v1503, 0.5
      %v1574 = vmul.f32 %v1506, 0.5
      %v1575 = vmul.f32 %v1509, 0.5
      %v1576 = vmul.f32 %v1512, 0.5
      %v1577 = vmul.f32 %v1515, 0.5
      %v1578 = vmul.f32 %v1518, 0.5
      %v1579 = vmul.f32 %v1521, 0.5
      %v1580 = vmul.f32 %v1524, 0.5
      %v1581 = vmul.f32 %v1527, 0.5
      %v1582 = vmul.f32 %v1530, 0.5
      %v1583 = vmul.f32 %v1533, 0.5
      %v1584 = vmul.f32 %v1536, 0.5
      %v1585 = vmul.f32 %v1539, 0.5
      %v1586 = vmul.f32 %v1542, 0.5
      %v1587 = vmul.f32 %v1545, 0.5
      %v1588 = vmul.f32 %v1548, 0.5
      %v1589 = vmul.f32 %v1551, 0.5
      %v1590 = vmul.f32 %v1554, 0.5
      %v1591 = vmul.f32 %v1557, 0.5
      %v1592 = vmul.f32 %v1560, 0.5
      %v1625 = vlaneseq
      %v1626 = vand.u32 %v1625, 127
      %v1627 = vlaneseq
      %v1628 = vshrl.u32 %v1627, 7
      %v1629 = vsub.s32 %v1626, %v1628
      %v1630 = vrot.slane %v1561, %v1629
      %v1631 = vadd.s32 %v1626, 4294967288
      %v1632 = vlaneseq
      %v1633 = vshrl.u32 %v1632, 7
      %v1634 = vsub.s32 %v1631, %v1633
      %v1635 = vrot.slane %v1562, %v1634
      %vm1636 = vcmask 130112
      %v1637 = vsel %vm1636, %v1635, %v1630
      %v1638 = vlaneseq
      %v1639 = vshrl.u32 %v1638, 7
      %v1640 = vsub.s32 %v1626, %v1639
      %v1641 = vrot.slane %v1563, %v1640
      %v1642 = vlaneseq
      %v1643 = vshrl.u32 %v1642, 7
      %v1644 = vsub.s32 %v1631, %v1643
      %v1645 = vrot.slane %v1564, %v1644
      %v1646 = vsel %vm1636, %v1645, %v1641
      %v1647 = vlaneseq
      %v1648 = vshrl.u32 %v1647, 7
      %v1649 = vsub.s32 %v1626, %v1648
      %v1650 = vrot.slane %v1565, %v1649
      %v1651 = vlaneseq
      %v1652 = vshrl.u32 %v1651, 7
      %v1653 = vsub.s32 %v1631, %v1652
      %v1654 = vrot.slane %v1566, %v1653
      %v1655 = vsel %vm1636, %v1654, %v1650
      %v1656 = vlaneseq
      %v1657 = vshrl.u32 %v1656, 7
      %v1658 = vsub.s32 %v1626, %v1657
      %v1659 = vrot.slane %v1567, %v1658
      %v1660 = vlaneseq
      %v1661 = vshrl.u32 %v1660, 7
      %v1662 = vsub.s32 %v1631, %v1661
      %v1663 = vrot.slane %v1568, %v1662
      %v1664 = vsel %vm1636, %v1663, %v1659
      %v1665 = vlaneseq
      %v1666 = vshrl.u32 %v1665, 7
      %v1667 = vsub.s32 %v1626, %v1666
      %v1668 = vrot.slane %v1569, %v1667
      %v1669 = vlaneseq
      %v1670 = vshrl.u32 %v1669, 7
      %v1671 = vsub.s32 %v1631, %v1670
      %v1672 = vrot.slane %v1570, %v1671
      %v1673 = vsel %vm1636, %v1672, %v1668
      %v1674 = vlaneseq
      %v1675 = vshrl.u32 %v1674, 7
      %v1676 = vsub.s32 %v1626, %v1675
      %v1677 = vrot.slane %v1571, %v1676
      %v1678 = vlaneseq
      %v1679 = vshrl.u32 %v1678, 7
      %v1680 = vsub.s32 %v1631, %v1679
      %v1681 = vrot.slane %v1572, %v1680
      %v1682 = vsel %vm1636, %v1681, %v1677
      %v1683 = vlaneseq
      %v1684 = vshrl.u32 %v1683, 7
      %v1685 = vsub.s32 %v1626, %v1684
      %v1686 = vrot.slane %v1573, %v1685
      %v1687 = vlaneseq
      %v1688 = vshrl.u32 %v1687, 7
      %v1689 = vsub.s32 %v1631, %v1688
      %v1690 = vrot.slane %v1574, %v1689
      %v1691 = vsel %vm1636, %v1690, %v1686
      %v1692 = vlaneseq
      %v1693 = vshrl.u32 %v1692, 7
      %v1694 = vsub.s32 %v1626, %v1693
      %v1695 = vrot.slane %v1575, %v1694
      %v1696 = vlaneseq
      %v1697 = vshrl.u32 %v1696, 7
      %v1698 = vsub.s32 %v1631, %v1697
      %v1699 = vrot.slane %v1576, %v1698
      %v1700 = vsel %vm1636, %v1699, %v1695
      %v1701 = vlaneseq
      %v1702 = vshrl.u32 %v1701, 7
      %v1703 = vsub.s32 %v1626, %v1702
      %v1704 = vrot.slane %v1577, %v1703
      %v1705 = vlaneseq
      %v1706 = vshrl.u32 %v1705, 7
      %v1707 = vsub.s32 %v1631, %v1706
      %v1708 = vrot.slane %v1578, %v1707
      %v1709 = vsel %vm1636, %v1708, %v1704
      %v1710 = vlaneseq
      %v1711 = vshrl.u32 %v1710, 7
      %v1712 = vsub.s32 %v1626, %v1711
      %v1713 = vrot.slane %v1579, %v1712
      %v1714 = vlaneseq
      %v1715 = vshrl.u32 %v1714, 7
      %v1716 = vsub.s32 %v1631, %v1715
      %v1717 = vrot.slane %v1580, %v1716
      %v1718 = vsel %vm1636, %v1717, %v1713
      %v1719 = vlaneseq
      %v1720 = vshrl.u32 %v1719, 7
      %v1721 = vsub.s32 %v1626, %v1720
      %v1722 = vrot.slane %v1581, %v1721
      %v1723 = vlaneseq
      %v1724 = vshrl.u32 %v1723, 7
      %v1725 = vsub.s32 %v1631, %v1724
      %v1726 = vrot.slane %v1582, %v1725
      %v1727 = vsel %vm1636, %v1726, %v1722
      %v1728 = vlaneseq
      %v1729 = vshrl.u32 %v1728, 7
      %v1730 = vsub.s32 %v1626, %v1729
      %v1731 = vrot.slane %v1583, %v1730
      %v1732 = vlaneseq
      %v1733 = vshrl.u32 %v1732, 7
      %v1734 = vsub.s32 %v1631, %v1733
      %v1735 = vrot.slane %v1584, %v1734
      %v1736 = vsel %vm1636, %v1735, %v1731
      %v1737 = vlaneseq
      %v1738 = vshrl.u32 %v1737, 7
      %v1739 = vsub.s32 %v1626, %v1738
      %v1740 = vrot.slane %v1585, %v1739
      %v1741 = vlaneseq
      %v1742 = vshrl.u32 %v1741, 7
      %v1743 = vsub.s32 %v1631, %v1742
      %v1744 = vrot.slane %v1586, %v1743
      %v1745 = vsel %vm1636, %v1744, %v1740
      %v1746 = vlaneseq
      %v1747 = vshrl.u32 %v1746, 7
      %v1748 = vsub.s32 %v1626, %v1747
      %v1749 = vrot.slane %v1587, %v1748
      %v1750 = vlaneseq
      %v1751 = vshrl.u32 %v1750, 7
      %v1752 = vsub.s32 %v1631, %v1751
      %v1753 = vrot.slane %v1588, %v1752
      %v1754 = vsel %vm1636, %v1753, %v1749
      %v1755 = vlaneseq
      %v1756 = vshrl.u32 %v1755, 7
      %v1757 = vsub.s32 %v1626, %v1756
      %v1758 = vrot.slane %v1589, %v1757
      %v1759 = vlaneseq
      %v1760 = vshrl.u32 %v1759, 7
      %v1761 = vsub.s32 %v1631, %v1760
      %v1762 = vrot.slane %v1590, %v1761
      %v1763 = vsel %vm1636, %v1762, %v1758
      %v1764 = vlaneseq
      %v1765 = vshrl.u32 %v1764, 7
      %v1766 = vsub.s32 %v1626, %v1765
      %v1767 = vrot.slane %v1591, %v1766
      %v1768 = vlaneseq
      %v1769 = vshrl.u32 %v1768, 7
      %v1770 = vsub.s32 %v1631, %v1769
      %v1771 = vrot.slane %v1592, %v1770
      %v1772 = vsel %vm1636, %v1771, %v1767
      %vm1773 = vcmask 1041409
      %v1774 = vsel %vm1773, %v1646, %v1637
      %vm1775 = vcmask 1042434
      %v1776 = vsel %vm1775, %v1655, %v1774
      %vm1777 = vcmask 1043459
      %v1778 = vsel %vm1777, %v1664, %v1776
      %vm1779 = vcmask 1044484
      %v1780 = vsel %vm1779, %v1673, %v1778
      %vm1781 = vcmask 1045509
      %v1782 = vsel %vm1781, %v1682, %v1780
      %vm1783 = vcmask 1046534
      %v1784 = vsel %vm1783, %v1691, %v1782
      %vm1785 = vcmask 1047559
      %v1786 = vsel %vm1785, %v1700, %v1784
      %v1787 = vsel %vm1773, %v1718, %v1709
      %v1788 = vsel %vm1775, %v1727, %v1787
      %v1789 = vsel %vm1777, %v1736, %v1788
      %v1790 = vsel %vm1779, %v1745, %v1789
      %v1791 = vsel %vm1781, %v1754, %v1790
      %v1792 = vsel %vm1783, %v1763, %v1791
      %v1793 = vsel %vm1785, %v1772, %v1792
      %vm1796 = vcmask 130048
      %1797 = vst.msk [vmem:[%s116] sm:$0xff] %vm1796, %v1786
      %1798 = vst.msk [vmem:[%s116 + $0x8] sm:$0xff] %vm1796, %v1793
      %p1799 = scmp.lt.s32.totalorder %s12, 1
      %s1800 = scalar_select %p1799, %s12, 1
      %s1801 = smul.addr %s1800, 2
      %s1802 = smul.addr %s1801, 8
      %s1803 = scalar_lea.vmem %s1, %s1802
      // Predicated region
      $region25: #{ikd_forward.10} parent=23 // pred_check
        %p1804 = pneg %p56
      $region26: #{ikd_forward.10} parent=23 // pred_check_branch
        %1806 = sbr.rel (%p1804) target = $region28
      $region27: #{ikd_forward.10} parent=23 // pred_region
        _
      $region28: #{ikd_forward.10} parent=23 // pred_fallthru
        _
    $region24: #{ikd_forward.10} parent=5 // pred_fallthru
      _
    %p1807 = scmp.le.s32.totalorder 2, %s7
    // Predicated region
    $region29: #{ikd_forward.10} parent=5 // pred_check
      %p1808 = pneg %p1807
    $region30: #{ikd_forward.10} parent=5 // pred_check_branch
      %1810 = sbr.rel (%p1808) target = $region32
    $region31: #{ikd_forward.10} parent=5 // pred_region
      %s1811 = ssub.s32 %s7, 2
      // Predicated region
      $region33: #{ikd_forward.10} parent=31 // pred_check
        %p1812 = pneg %p62
      $region34: #{ikd_forward.10} parent=31 // pred_check_branch
        %1814 = sbr.rel (%p1812) target = $region36
      $region35: #{ikd_forward.10} parent=31 // pred_region
        %p1815 = scmp.lt.s32.totalorder %s13, 1
        %s1816 = scalar_select %p1815, %s13, 1
        %s1817 = smul.addr %s1816, 2
        %s1818 = smul.addr %s1817, 8
        %s1819 = scalar_lea.vmem %s1, %s1818
      $region36: #{ikd_forward.10} parent=31 // pred_fallthru
        _
    $region32: #{ikd_forward.10} parent=5 // pred_fallthru
      _
  $region6: #{ikd_forward.10} parent=0 // loop_footer
    %s11 = sadd.s32 1, %s7
  $region7: #{ikd_forward.10} parent=0 // loop_footer_branch
    %6 = sbr.rel target = $region3
  $region8: #{ikd_forward.10} parent=0 // loop_exit
    _

// kernel: ikd_forward.8
$region0: #{ikd_forward.8}
  #allocation0 [shape = 'u32[]', space=smem, size = 0x4, offset = 0x4, fixed_abs, tag = 'smem constant byte address 0x4 - core index']
  #allocation1 [shape = 'u32[144,128]{1,0:T(1,128)}', space=vmem, size = 0x12000, scoped, tag = 'internal scratch']
  %s0 = inlined_call_operand.vmem [shape: f32[2,32,32,128], index: 0, kind: input, shape index: {}]
  %s1 = inlined_call_operand.vmem [shape: f32[2,32,32], index: 1, kind: output, shape index: {}]
  %s2 = sld [smem:[#allocation0]]
  $region37: #{ikd_forward.8} parent=0
    _
  %s4 = ssub.s32 1, %s2
  %s5 = scalar_select 0, %s4, %s2
  loop: start=0, step=1, limit=4
  $region2: #{ikd_forward.8} parent=0 // loop_pre_header
    _
  $region3: #{ikd_forward.8} parent=0 // loop_header
    %s7 = sphi 0, %s11
    %p8 = scmp.ge.s32.totalorder %s7, 4
    %s17 = sphi 0, %s19
    %s20 = sphi 0, %s17
    %s21 = sphi 0, %s20
    %s37 = sphi 0, %s21
    %s43 = sphi 0, %s45
    %s46 = sphi 0, %s43
    %s47 = sphi 0, %s46
    %s63 = sphi 0, %s47
  $region4: #{ikd_forward.8} parent=0 // loop_header_branch
    %10 = sbr.rel (%p8) target = $region8
  $region5: #{ikd_forward.8} parent=0 // loop_body
    %s12 = ssub.s32 %s7, 1
    %s13 = ssub.s32 %s7, 2
    %s14 = sadd.s32 %s7, 1
    %s15 = ssub.s32 %s7, %s14
    %p16 = scmp.eq.s32.totalorder %s15, 0
    %s18 = sadd.s32 %s17, 1
    %s19 = scalar_select %p16, %s17, %s18
    %p22 = pneg %p16
    %p23 = scmp.eq.s32.totalorder %s7, 1
    %p24 = por %p22, %p23
    %p25 = scmp.ne.s32.totalorder %s17, %s20
    %p26 = scmp.eq.s32.totalorder %s7, 0
    %p27 = por %p25, %p26
    %p28 = scmp.ne.s32.totalorder %s17, %s20
    %p29 = scmp.eq.s32.totalorder %s12, 1
    %p30 = por %p28, %p29
    %p31 = scmp.ne.s32.totalorder %s20, %s21
    %p32 = scmp.eq.s32.totalorder %s12, 0
    %p33 = por %p31, %p32
    %p34 = scmp.ne.s32.totalorder %s20, %s21
    %p35 = scmp.eq.s32.totalorder %s13, 1
    %p36 = por %p34, %p35
    %p38 = scmp.ne.s32.totalorder %s21, %s37
    %p39 = scmp.eq.s32.totalorder %s13, 0
    %p40 = por %p38, %p39
    %s41 = ssub.s32 %s7, %s14
    %p42 = scmp.eq.s32.totalorder %s41, 0
    %s44 = sadd.s32 %s43, 1
    %s45 = scalar_select %p42, %s43, %s44
    %p48 = pneg %p42
    %p49 = scmp.eq.s32.totalorder %s7, 1
    %p50 = por %p48, %p49
    %p51 = scmp.ne.s32.totalorder %s43, %s46
    %p52 = scmp.eq.s32.totalorder %s7, 0
    %p53 = por %p51, %p52
    %p54 = scmp.ne.s32.totalorder %s43, %s46
    %p55 = scmp.eq.s32.totalorder %s12, 1
    %p56 = por %p54, %p55
    %p57 = scmp.ne.s32.totalorder %s46, %s47
    %p58 = scmp.eq.s32.totalorder %s12, 0
    %p59 = por %p57, %p58
    %p60 = scmp.ne.s32.totalorder %s46, %s47
    %p61 = scmp.eq.s32.totalorder %s13, 1
    %p62 = por %p60, %p61
    %p64 = scmp.ne.s32.totalorder %s47, %s63
    %p65 = scmp.eq.s32.totalorder %s13, 0
    %p66 = por %p64, %p65
    %p67 = scmp.le.s32.totalorder 1, %s7
    %p68 = scmp.lt.s32.totalorder %s7, 3
    %p69 = pnand %p67, %p68
    %p70 = pneg %p69
    // Predicated region
    $region9: #{ikd_forward.8} parent=5 // pred_check
      _
    $region10: #{ikd_forward.8} parent=5 // pred_check_branch
      %72 = sbr.rel (%p69) target = $region12
    $region11: #{ikd_forward.8} parent=5 // pred_region
      %s73 = ssub.s32 %s7, 1
    $region12: #{ikd_forward.8} parent=5 // pred_fallthru
      _
    %p74 = scmp.lt.s32.totalorder %s7, 2
    // Predicated region
    $region13: #{ikd_forward.8} parent=5 // pred_check
      %p75 = pneg %p74
    $region14: #{ikd_forward.8} parent=5 // pred_check_branch
      %77 = sbr.rel (%p75) target = $region16
    $region15: #{ikd_forward.8} parent=5 // pred_region
      // Predicated region
      $region17: #{ikd_forward.8} parent=15 // pred_check
        %p78 = pneg %p27
      $region18: #{ikd_forward.8} parent=15 // pred_check_branch
        %80 = sbr.rel (%p78) target = $region20
      $region19: #{ikd_forward.8} parent=15 // pred_region
        %p81 = scmp.lt.s32.totalorder %s7, 1
        %s82 = scalar_select %p81, %s7, 1
        %s83 = smul.addr %s82, 128
        %s84 = smul.addr %s83, 8
        %s85 = scalar_lea.vmem %s0, %s84
      $region20: #{ikd_forward.8} parent=15 // pred_fallthru
        _
    $region16: #{ikd_forward.8} parent=5 // pred_fallthru
      _
    %p86 = scmp.le.s32.totalorder 1, %s7
    %p87 = scmp.lt.s32.totalorder %s7, 3
    %p88 = pnand %p86, %p87
    %p89 = pneg %p88
    // Predicated region
    $region21: #{ikd_forward.8} parent=5 // pred_check
      _
    $region22: #{ikd_forward.8} parent=5 // pred_check_branch
      %91 = sbr.rel (%p88) target = $region24
    $region23: #{ikd_forward.8} parent=5 // pred_region
      %s92 = ssub.s32 %s7, 1
      %p93 = scmp.lt.s32.totalorder %s12, 1
      %s94 = scalar_select %p93, %s12, 1
      %s95 = smul.addr %s94, 128
      %s96 = smul.addr %s95, 8
      %s97 = scalar_lea.vmem %s0, %s96
      %p98 = pneg %p33
      %p99 = pneg %p30
      %p100 = pneg %p59
      %p101 = pneg %p56
      %p102 = scmp.lt.s32.totalorder %s12, 1
      %s103 = scalar_select %p102, %s12, 1
      %s104 = smul.addr %s103, 4
      %s105 = smul.addr %s104, 8
      %s106 = scalar_lea.vmem %s1, %s105
      %p107 = scmp.lt.s32.totalorder %s12, 1
      %s108 = scalar_select %p107, %s12, 1
      %s109 = smul.addr %s108, 128
      %s110 = smul.addr %s109, 8
      %s111 = scalar_lea.vmem %s0, %s110
      %p112 = scmp.lt.s32.totalorder %s12, 1
      %s113 = scalar_select %p112, %s12, 1
      %s114 = smul.addr %s113, 4
      %s115 = smul.addr %s114, 8
      %s116 = scalar_lea.vmem %s1, %s115
      %v117 = vld [vmem:[%s111] sm:$0xff]
      %v118 = vld [vmem:[%s111 + $0x8] sm:$0xff]
      %v119 = vld [vmem:[%s111 + $0x10] sm:$0xff]
      %v120 = vld [vmem:[%s111 + $0x18] sm:$0xff]
      %v121 = vld [vmem:[%s111 + $0x20] sm:$0xff]
      %v122 = vld [vmem:[%s111 + $0x28] sm:$0xff]
      %v123 = vld [vmem:[%s111 + $0x30] sm:$0xff]
      %v124 = vld [vmem:[%s111 + $0x38] sm:$0xff]
      %v125 = vld [vmem:[%s111 + $0x40] sm:$0xff]
      %v126 = vld [vmem:[%s111 + $0x48] sm:$0xff]
      %v127 = vld [vmem:[%s111 + $0x50] sm:$0xff]
      %v128 = vld [vmem:[%s111 + $0x58] sm:$0xff]
      %v129 = vld [vmem:[%s111 + $0x60] sm:$0xff]
      %v130 = vld [vmem:[%s111 + $0x68] sm:$0xff]
      %v131 = vld [vmem:[%s111 + $0x70] sm:$0xff]
      %v132 = vld [vmem:[%s111 + $0x78] sm:$0xff]
      %v133 = vld [vmem:[%s111 + $0x80] sm:$0xff]
      %v134 = vld [vmem:[%s111 + $0x88] sm:$0xff]
      %v135 = vld [vmem:[%s111 + $0x90] sm:$0xff]
      %v136 = vld [vmem:[%s111 + $0x98] sm:$0xff]
      %v137 = vld [vmem:[%s111 + $0xa0] sm:$0xff]
      %v138 = vld [vmem:[%s111 + $0xa8] sm:$0xff]
      %v139 = vld [vmem:[%s111 + $0xb0] sm:$0xff]
      %v140 = vld [vmem:[%s111 + $0xb8] sm:$0xff]
      %v141 = vld [vmem:[%s111 + $0xc0] sm:$0xff]
      %v142 = vld [vmem:[%s111 + $0xc8] sm:$0xff]
      %v143 = vld [vmem:[%s111 + $0xd0] sm:$0xff]
      %v144 = vld [vmem:[%s111 + $0xd8] sm:$0xff]
      %v145 = vld [vmem:[%s111 + $0xe0] sm:$0xff]
      %v146 = vld [vmem:[%s111 + $0xe8] sm:$0xff]
      %v147 = vld [vmem:[%s111 + $0xf0] sm:$0xff]
      %v148 = vld [vmem:[%s111 + $0xf8] sm:$0xff]
      %v149 = vld [vmem:[%s111 + $0x100] sm:$0xff]
      %v150 = vld [vmem:[%s111 + $0x108] sm:$0xff]
      %v151 = vld [vmem:[%s111 + $0x110] sm:$0xff]
      %v152 = vld [vmem:[%s111 + $0x118] sm:$0xff]
      %v153 = vld [vmem:[%s111 + $0x120] sm:$0xff]
      %v154 = vld [vmem:[%s111 + $0x128] sm:$0xff]
      %v155 = vld [vmem:[%s111 + $0x130] sm:$0xff]
      %v156 = vld [vmem:[%s111 + $0x138] sm:$0xff]
      %v157 = vld [vmem:[%s111 + $0x140] sm:$0xff]
      %v158 = vld [vmem:[%s111 + $0x148] sm:$0xff]
      %v159 = vld [vmem:[%s111 + $0x150] sm:$0xff]
      %v160 = vld [vmem:[%s111 + $0x158] sm:$0xff]
      %v161 = vld [vmem:[%s111 + $0x160] sm:$0xff]
      %v162 = vld [vmem:[%s111 + $0x168] sm:$0xff]
      %v163 = vld [vmem:[%s111 + $0x170] sm:$0xff]
      %v164 = vld [vmem:[%s111 + $0x178] sm:$0xff]
      %v165 = vld [vmem:[%s111 + $0x180] sm:$0xff]
      %v166 = vld [vmem:[%s111 + $0x188] sm:$0xff]
      %v167 = vld [vmem:[%s111 + $0x190] sm:$0xff]
      %v168 = vld [vmem:[%s111 + $0x198] sm:$0xff]
      %v169 = vld [vmem:[%s111 + $0x1a0] sm:$0xff]
      %v170 = vld [vmem:[%s111 + $0x1a8] sm:$0xff]
      %v171 = vld [vmem:[%s111 + $0x1b0] sm:$0xff]
      %v172 = vld [vmem:[%s111 + $0x1b8] sm:$0xff]
      %v173 = vld [vmem:[%s111 + $0x1c0] sm:$0xff]
      %v174 = vld [vmem:[%s111 + $0x1c8] sm:$0xff]
      %v175 = vld [vmem:[%s111 + $0x1d0] sm:$0xff]
      %v176 = vld [vmem:[%s111 + $0x1d8] sm:$0xff]
      %v177 = vld [vmem:[%s111 + $0x1e0] sm:$0xff]
      %v178 = vld [vmem:[%s111 + $0x1e8] sm:$0xff]
      %v179 = vld [vmem:[%s111 + $0x1f0] sm:$0xff]
      %v180 = vld [vmem:[%s111 + $0x1f8] sm:$0xff]
      %v181 = vld [vmem:[%s111 + $0x200] sm:$0xff]
      %v182 = vld [vmem:[%s111 + $0x208] sm:$0xff]
      %v183 = vld [vmem:[%s111 + $0x210] sm:$0xff]
      %v184 = vld [vmem:[%s111 + $0x218] sm:$0xff]
      %v185 = vld [vmem:[%s111 + $0x220] sm:$0xff]
      %v186 = vld [vmem:[%s111 + $0x228] sm:$0xff]
      %v187 = vld [vmem:[%s111 + $0x230] sm:$0xff]
      %v188 = vld [vmem:[%s111 + $0x238] sm:$0xff]
      %v189 = vld [vmem:[%s111 + $0x240] sm:$0xff]
      %v190 = vld [vmem:[%s111 + $0x248] sm:$0xff]
      %v191 = vld [vmem:[%s111 + $0x250] sm:$0xff]
      %v192 = vld [vmem:[%s111 + $0x258] sm:$0xff]
      %v193 = vld [vmem:[%s111 + $0x260] sm:$0xff]
      %v194 = vld [vmem:[%s111 + $0x268] sm:$0xff]
      %v195 = vld [vmem:[%s111 + $0x270] sm:$0xff]
      %v196 = vld [vmem:[%s111 + $0x278] sm:$0xff]
      %v197 = vld [vmem:[%s111 + $0x280] sm:$0xff]
      %v198 = vld [vmem:[%s111 + $0x288] sm:$0xff]
      %v199 = vld [vmem:[%s111 + $0x290] sm:$0xff]
      %v200 = vld [vmem:[%s111 + $0x298] sm:$0xff]
      %v201 = vld [vmem:[%s111 + $0x2a0] sm:$0xff]
      %v202 = vld [vmem:[%s111 + $0x2a8] sm:$0xff]
      %v203 = vld [vmem:[%s111 + $0x2b0] sm:$0xff]
      %v204 = vld [vmem:[%s111 + $0x2b8] sm:$0xff]
      %v205 = vld [vmem:[%s111 + $0x2c0] sm:$0xff]
      %v206 = vld [vmem:[%s111 + $0x2c8] sm:$0xff]
      %v207 = vld [vmem:[%s111 + $0x2d0] sm:$0xff]
      %v208 = vld [vmem:[%s111 + $0x2d8] sm:$0xff]
      %v209 = vld [vmem:[%s111 + $0x2e0] sm:$0xff]
      %v210 = vld [vmem:[%s111 + $0x2e8] sm:$0xff]
      %v211 = vld [vmem:[%s111 + $0x2f0] sm:$0xff]
      %v212 = vld [vmem:[%s111 + $0x2f8] sm:$0xff]
      %v213 = vld [vmem:[%s111 + $0x300] sm:$0xff]
      %v214 = vld [vmem:[%s111 + $0x308] sm:$0xff]
      %v215 = vld [vmem:[%s111 + $0x310] sm:$0xff]
      %v216 = vld [vmem:[%s111 + $0x318] sm:$0xff]
      %v217 = vld [vmem:[%s111 + $0x320] sm:$0xff]
      %v218 = vld [vmem:[%s111 + $0x328] sm:$0xff]
      %v219 = vld [vmem:[%s111 + $0x330] sm:$0xff]
      %v220 = vld [vmem:[%s111 + $0x338] sm:$0xff]
      %v221 = vld [vmem:[%s111 + $0x340] sm:$0xff]
      %v222 = vld [vmem:[%s111 + $0x348] sm:$0xff]
      %v223 = vld [vmem:[%s111 + $0x350] sm:$0xff]
      %v224 = vld [vmem:[%s111 + $0x358] sm:$0xff]
      %v225 = vld [vmem:[%s111 + $0x360] sm:$0xff]
      %v226 = vld [vmem:[%s111 + $0x368] sm:$0xff]
      %v227 = vld [vmem:[%s111 + $0x370] sm:$0xff]
      %v228 = vld [vmem:[%s111 + $0x378] sm:$0xff]
      %v229 = vld [vmem:[%s111 + $0x380] sm:$0xff]
      %v230 = vld [vmem:[%s111 + $0x388] sm:$0xff]
      %v231 = vld [vmem:[%s111 + $0x390] sm:$0xff]
      %v232 = vld [vmem:[%s111 + $0x398] sm:$0xff]
      %v233 = vld [vmem:[%s111 + $0x3a0] sm:$0xff]
      %v234 = vld [vmem:[%s111 + $0x3a8] sm:$0xff]
      %v235 = vld [vmem:[%s111 + $0x3b0] sm:$0xff]
      %v236 = vld [vmem:[%s111 + $0x3b8] sm:$0xff]
      %v237 = vld [vmem:[%s111 + $0x3c0] sm:$0xff]
      %v238 = vld [vmem:[%s111 + $0x3c8] sm:$0xff]
      %v239 = vld [vmem:[%s111 + $0x3d0] sm:$0xff]
      %v240 = vld [vmem:[%s111 + $0x3d8] sm:$0xff]
      %v241 = vld [vmem:[%s111 + $0x3e0] sm:$0xff]
      %v242 = vld [vmem:[%s111 + $0x3e8] sm:$0xff]
      %v243 = vld [vmem:[%s111 + $0x3f0] sm:$0xff]
      %v244 = vld [vmem:[%s111 + $0x3f8] sm:$0xff]
      %v245 = vadd.f32 %v117, 0.0
      %v246 = vadd.f32 %v118, 0.0
      %v247 = vadd.f32 %v119, 0.0
      %v248 = vadd.f32 %v120, 0.0
      %v249 = vadd.f32 %v117, %v121
      %v250 = vadd.f32 %v118, %v122
      %v251 = vadd.f32 %v119, %v123
      %v252 = vadd.f32 %v120, %v124
      %v253 = vadd.f32 %v121, %v125
      %v254 = vadd.f32 %v122, %v126
      %v255 = vadd.f32 %v123, %v127
      %v256 = vadd.f32 %v124, %v128
      %v257 = vadd.f32 %v125, %v129
      %v258 = vadd.f32 %v126, %v130
      %v259 = vadd.f32 %v127, %v131
      %v260 = vadd.f32 %v128, %v132
      %v261 = vadd.f32 %v129, %v133
      %v262 = vadd.f32 %v130, %v134
      %v263 = vadd.f32 %v131, %v135
      %v264 = vadd.f32 %v132, %v136
      %v265 = vadd.f32 %v133, %v137
      %v266 = vadd.f32 %v134, %v138
      %v267 = vadd.f32 %v135, %v139
      %v268 = vadd.f32 %v136, %v140
      %v269 = vadd.f32 %v137, %v141
      %v270 = vadd.f32 %v138, %v142
      %v271 = vadd.f32 %v139, %v143
      %v272 = vadd.f32 %v140, %v144
      %v273 = vadd.f32 %v141, %v145
      %v274 = vadd.f32 %v142, %v146
      %v275 = vadd.f32 %v143, %v147
      %v276 = vadd.f32 %v144, %v148
      %v277 = vadd.f32 %v145, %v149
      %v278 = vadd.f32 %v146, %v150
      %v279 = vadd.f32 %v147, %v151
      %v280 = vadd.f32 %v148, %v152
      %v281 = vadd.f32 %v149, %v153
      %v282 = vadd.f32 %v150, %v154
      %v283 = vadd.f32 %v151, %v155
      %v284 = vadd.f32 %v152, %v156
      %v285 = vadd.f32 %v153, %v157
      %v286 = vadd.f32 %v154, %v158
      %v287 = vadd.f32 %v155, %v159
      %v288 = vadd.f32 %v156, %v160
      %v289 = vadd.f32 %v157, %v161
      %v290 = vadd.f32 %v158, %v162
      %v291 = vadd.f32 %v159, %v163
      %v292 = vadd.f32 %v160, %v164
      %v293 = vadd.f32 %v161, %v165
      %v294 = vadd.f32 %v162, %v166
      %v295 = vadd.f32 %v163, %v167
      %v296 = vadd.f32 %v164, %v168
      %v297 = vadd.f32 %v165, %v169
      %v298 = vadd.f32 %v166, %v170
      %v299 = vadd.f32 %v167, %v171
      %v300 = vadd.f32 %v168, %v172
      %v301 = vadd.f32 %v169, %v173
      %v302 = vadd.f32 %v170, %v174
      %v303 = vadd.f32 %v171, %v175
      %v304 = vadd.f32 %v172, %v176
      %v305 = vadd.f32 %v173, %v177
      %v306 = vadd.f32 %v174, %v178
      %v307 = vadd.f32 %v175, %v179
      %v308 = vadd.f32 %v176, %v180
      %v309 = vadd.f32 %v177, %v181
      %v310 = vadd.f32 %v178, %v182
      %v311 = vadd.f32 %v179, %v183
      %v312 = vadd.f32 %v180, %v184
      %v313 = vadd.f32 %v181, %v185
      %v314 = vadd.f32 %v182, %v186
      %v315 = vadd.f32 %v183, %v187
      %v316 = vadd.f32 %v184, %v188
      %v317 = vadd.f32 %v185, %v189
      %v318 = vadd.f32 %v186, %v190
      %v319 = vadd.f32 %v187, %v191
      %v320 = vadd.f32 %v188, %v192
      %v321 = vadd.f32 %v189, %v193
      %v322 = vadd.f32 %v190, %v194
      %v323 = vadd.f32 %v191, %v195
      %v324 = vadd.f32 %v192, %v196
      %v325 = vadd.f32 %v193, %v197
      %v326 = vadd.f32 %v194, %v198
      %v327 = vadd.f32 %v195, %v199
      %v328 = vadd.f32 %v196, %v200
      %v329 = vadd.f32 %v197, %v201
      %v330 = vadd.f32 %v198, %v202
      %v331 = vadd.f32 %v199, %v203
      %v332 = vadd.f32 %v200, %v204
      %v333 = vadd.f32 %v201, %v205
      %v334 = vadd.f32 %v202, %v206
      %v335 = vadd.f32 %v203, %v207
      %v336 = vadd.f32 %v204, %v208
      %v337 = vadd.f32 %v205, %v209
      %v338 = vadd.f32 %v206, %v210
      %v339 = vadd.f32 %v207, %v211
      %v340 = vadd.f32 %v208, %v212
      %v341 = vadd.f32 %v209, %v213
      %v342 = vadd.f32 %v210, %v214
      %v343 = vadd.f32 %v211, %v215
      %v344 = vadd.f32 %v212, %v216
      %v345 = vadd.f32 %v213, %v217
      %v346 = vadd.f32 %v214, %v218
      %v347 = vadd.f32 %v215, %v219
      %v348 = vadd.f32 %v216, %v220
      %v349 = vadd.f32 %v217, %v221
      %v350 = vadd.f32 %v218, %v222
      %v351 = vadd.f32 %v219, %v223
      %v352 = vadd.f32 %v220, %v224
      %v353 = vadd.f32 %v221, %v225
      %v354 = vadd.f32 %v222, %v226
      %v355 = vadd.f32 %v223, %v227
      %v356 = vadd.f32 %v224, %v228
      %v357 = vadd.f32 %v225, %v229
      %v358 = vadd.f32 %v226, %v230
      %v359 = vadd.f32 %v227, %v231
      %v360 = vadd.f32 %v228, %v232
      %v361 = vadd.f32 %v229, %v233
      %v362 = vadd.f32 %v230, %v234
      %v363 = vadd.f32 %v231, %v235
      %v364 = vadd.f32 %v232, %v236
      %v365 = vadd.f32 %v233, %v237
      %v366 = vadd.f32 %v234, %v238
      %v367 = vadd.f32 %v235, %v239
      %v368 = vadd.f32 %v236, %v240
      %v369 = vadd.f32 %v237, %v241
      %v370 = vadd.f32 %v238, %v242
      %v371 = vadd.f32 %v239, %v243
      %v372 = vadd.f32 %v240, %v244
      %v373 = vadd.f32 %v245, %v121
      %v374 = vadd.f32 %v246, %v122
      %v375 = vadd.f32 %v247, %v123
      %v376 = vadd.f32 %v248, %v124
      %v377 = vadd.f32 %v249, %v125
      %v378 = vadd.f32 %v250, %v126
      %v379 = vadd.f32 %v251, %v127
      %v380 = vadd.f32 %v252, %v128
      %v381 = vadd.f32 %v253, %v129
      %v382 = vadd.f32 %v254, %v130
      %v383 = vadd.f32 %v255, %v131
      %v384 = vadd.f32 %v256, %v132
      %v385 = vadd.f32 %v257, %v133
      %v386 = vadd.f32 %v258, %v134
      %v387 = vadd.f32 %v259, %v135
      %v388 = vadd.f32 %v260, %v136
      %v389 = vadd.f32 %v261, %v137
      %v390 = vadd.f32 %v262, %v138
      %v391 = vadd.f32 %v263, %v139
      %v392 = vadd.f32 %v264, %v140
      %v393 = vadd.f32 %v265, %v141
      %v394 = vadd.f32 %v266, %v142
      %v395 = vadd.f32 %v267, %v143
      %v396 = vadd.f32 %v268, %v144
      %v397 = vadd.f32 %v269, %v145
      %v398 = vadd.f32 %v270, %v146
      %v399 = vadd.f32 %v271, %v147
      %v400 = vadd.f32 %v272, %v148
      %v401 = vadd.f32 %v273, %v149
      %v402 = vadd.f32 %v274, %v150
      %v403 = vadd.f32 %v275, %v151
      %v404 = vadd.f32 %v276, %v152
      %v405 = vadd.f32 %v277, %v153
      %v406 = vadd.f32 %v278, %v154
      %v407 = vadd.f32 %v279, %v155
      %v408 = vadd.f32 %v280, %v156
      %v409 = vadd.f32 %v281, %v157
      %v410 = vadd.f32 %v282, %v158
      %v411 = vadd.f32 %v283, %v159
      %v412 = vadd.f32 %v284, %v160
      %v413 = vadd.f32 %v285, %v161
      %v414 = vadd.f32 %v286, %v162
      %v415 = vadd.f32 %v287, %v163
      %v416 = vadd.f32 %v288, %v164
      %v417 = vadd.f32 %v289, %v165
      %v418 = vadd.f32 %v290, %v166
      %v419 = vadd.f32 %v291, %v167
      %v420 = vadd.f32 %v292, %v168
      %v421 = vadd.f32 %v293, %v169
      %v422 = vadd.f32 %v294, %v170
      %v423 = vadd.f32 %v295, %v171
      %v424 = vadd.f32 %v296, %v172
      %v425 = vadd.f32 %v297, %v173
      %v426 = vadd.f32 %v298, %v174
      %v427 = vadd.f32 %v299, %v175
      %v428 = vadd.f32 %v300, %v176
      %v429 = vadd.f32 %v301, %v177
      %v430 = vadd.f32 %v302, %v178
      %v431 = vadd.f32 %v303, %v179
      %v432 = vadd.f32 %v304, %v180
      %v433 = vadd.f32 %v305, %v181
      %v434 = vadd.f32 %v306, %v182
      %v435 = vadd.f32 %v307, %v183
      %v436 = vadd.f32 %v308, %v184
      %v437 = vadd.f32 %v309, %v185
      %v438 = vadd.f32 %v310, %v186
      %v439 = vadd.f32 %v311, %v187
      %v440 = vadd.f32 %v312, %v188
      %v441 = vadd.f32 %v313, %v189
      %v442 = vadd.f32 %v314, %v190
      %v443 = vadd.f32 %v315, %v191
      %v444 = vadd.f32 %v316, %v192
      %v445 = vadd.f32 %v317, %v193
      %v446 = vadd.f32 %v318, %v194
      %v447 = vadd.f32 %v319, %v195
      %v448 = vadd.f32 %v320, %v196
      %v449 = vadd.f32 %v321, %v197
      %v450 = vadd.f32 %v322, %v198
      %v451 = vadd.f32 %v323, %v199
      %v452 = vadd.f32 %v324, %v200
      %v453 = vadd.f32 %v325, %v201
      %v454 = vadd.f32 %v326, %v202
      %v455 = vadd.f32 %v327, %v203
      %v456 = vadd.f32 %v328, %v204
      %v457 = vadd.f32 %v329, %v205
      %v458 = vadd.f32 %v330, %v206
      %v459 = vadd.f32 %v331, %v207
      %v460 = vadd.f32 %v332, %v208
      %v461 = vadd.f32 %v333, %v209
      %v462 = vadd.f32 %v334, %v210
      %v463 = vadd.f32 %v335, %v211
      %v464 = vadd.f32 %v336, %v212
      %v465 = vadd.f32 %v337, %v213
      %v466 = vadd.f32 %v338, %v214
      %v467 = vadd.f32 %v339, %v215
      %v468 = vadd.f32 %v340, %v216
      %v469 = vadd.f32 %v341, %v217
      %v470 = vadd.f32 %v342, %v218
      %v471 = vadd.f32 %v343, %v219
      %v472 = vadd.f32 %v344, %v220
      %v473 = vadd.f32 %v345, %v221
      %v474 = vadd.f32 %v346, %v222
      %v475 = vadd.f32 %v347, %v223
      %v476 = vadd.f32 %v348, %v224
      %v477 = vadd.f32 %v349, %v225
      %v478 = vadd.f32 %v350, %v226
      %v479 = vadd.f32 %v351, %v227
      %v480 = vadd.f32 %v352, %v228
      %v481 = vadd.f32 %v353, %v229
      %v482 = vadd.f32 %v354, %v230
      %v483 = vadd.f32 %v355, %v231
      %v484 = vadd.f32 %v356, %v232
      %v485 = vadd.f32 %v357, %v233
      %v486 = vadd.f32 %v358, %v234
      %v487 = vadd.f32 %v359, %v235
      %v488 = vadd.f32 %v360, %v236
      %v489 = vadd.f32 %v361, %v237
      %v490 = vadd.f32 %v362, %v238
      %v491 = vadd.f32 %v363, %v239
      %v492 = vadd.f32 %v364, %v240
      %v493 = vadd.f32 %v365, %v241
      %v494 = vadd.f32 %v366, %v242
      %v495 = vadd.f32 %v367, %v243
      %v496 = vadd.f32 %v368, %v244
      %v497 = vadd.f32 %v369, 0.0
      %v498 = vadd.f32 %v370, 0.0
      %v499 = vadd.f32 %v371, 0.0
      %v500 = vadd.f32 %v372, 0.0
      %vm629 = vcmask 1040384
      %v630 = vrot.slane %v373, 7
      %v631 = vrot.slane %v374, 7
      %v632 = vsel %vm629, %v630, %v631
      %v633 = vrot.slane %v375, 7
      %v634 = vsel %vm629, %v631, %v633
      %v635 = vrot.slane %v376, 7
      %v636 = vsel %vm629, %v633, %v635
      %v637 = vrot.slane %v377, 7
      %v638 = vrot.slane %v378, 7
      %v639 = vsel %vm629, %v637, %v638
      %v640 = vrot.slane %v379, 7
      %v641 = vsel %vm629, %v638, %v640
      %v642 = vrot.slane %v380, 7
      %v643 = vsel %vm629, %v640, %v642
      %v644 = vrot.slane %v381, 7
      %v645 = vrot.slane %v382, 7
      %v646 = vsel %vm629, %v644, %v645
      %v647 = vrot.slane %v383, 7
      %v648 = vsel %vm629, %v645, %v647
      %v649 = vrot.slane %v384, 7
      %v650 = vsel %vm629, %v647, %v649
      %v651 = vrot.slane %v385, 7
      %v652 = vrot.slane %v386, 7
      %v653 = vsel %vm629, %v651, %v652
      %v654 = vrot.slane %v387, 7
      %v655 = vsel %vm629, %v652, %v654
      %v656 = vrot.slane %v388, 7
      %v657 = vsel %vm629, %v654, %v656
      %v658 = vrot.slane %v389, 7
      %v659 = vrot.slane %v390, 7
      %v660 = vsel %vm629, %v658, %v659
      %v661 = vrot.slane %v391, 7
      %v662 = vsel %vm629, %v659, %v661
      %v663 = vrot.slane %v392, 7
      %v664 = vsel %vm629, %v661, %v663
      %v665 = vrot.slane %v393, 7
      %v666 = vrot.slane %v394, 7
      %v667 = vsel %vm629, %v665, %v666
      %v668 = vrot.slane %v395, 7
      %v669 = vsel %vm629, %v666, %v668
      %v670 = vrot.slane %v396, 7
      %v671 = vsel %vm629, %v668, %v670
      %v672 = vrot.slane %v397, 7
      %v673 = vrot.slane %v398, 7
      %v674 = vsel %vm629, %v672, %v673
      %v675 = vrot.slane %v399, 7
      %v676 = vsel %vm629, %v673, %v675
      %v677 = vrot.slane %v400, 7
      %v678 = vsel %vm629, %v675, %v677
      %v679 = vrot.slane %v401, 7
      %v680 = vrot.slane %v402, 7
      %v681 = vsel %vm629, %v679, %v680
      %v682 = vrot.slane %v403, 7
      %v683 = vsel %vm629, %v680, %v682
      %v684 = vrot.slane %v404, 7
      %v685 = vsel %vm629, %v682, %v684
      %v686 = vrot.slane %v405, 7
      %v687 = vrot.slane %v406, 7
      %v688 = vsel %vm629, %v686, %v687
      %v689 = vrot.slane %v407, 7
      %v690 = vsel %vm629, %v687, %v689
      %v691 = vrot.slane %v408, 7
      %v692 = vsel %vm629, %v689, %v691
      %v693 = vrot.slane %v409, 7
      %v694 = vrot.slane %v410, 7
      %v695 = vsel %vm629, %v693, %v694
      %v696 = vrot.slane %v411, 7
      %v697 = vsel %vm629, %v694, %v696
      %v698 = vrot.slane %v412, 7
      %v699 = vsel %vm629, %v696, %v698
      %v700 = vrot.slane %v413, 7
      %v701 = vrot.slane %v414, 7
      %v702 = vsel %vm629, %v700, %v701
      %v703 = vrot.slane %v415, 7
      %v704 = vsel %vm629, %v701, %v703
      %v705 = vrot.slane %v416, 7
      %v706 = vsel %vm629, %v703, %v705
      %v707 = vrot.slane %v417, 7
      %v708 = vrot.slane %v418, 7
      %v709 = vsel %vm629, %v707, %v708
      %v710 = vrot.slane %v419, 7
      %v711 = vsel %vm629, %v708, %v710
      %v712 = vrot.slane %v420, 7
      %v713 = vsel %vm629, %v710, %v712
      %v714 = vrot.slane %v421, 7
      %v715 = vrot.slane %v422, 7
      %v716 = vsel %vm629, %v714, %v715
      %v717 = vrot.slane %v423, 7
      %v718 = vsel %vm629, %v715, %v717
      %v719 = vrot.slane %v424, 7
      %v720 = vsel %vm629, %v717, %v719
      %v721 = vrot.slane %v425, 7
      %v722 = vrot.slane %v426, 7
      %v723 = vsel %vm629, %v721, %v722
      %v724 = vrot.slane %v427, 7
      %v725 = vsel %vm629, %v722, %v724
      %v726 = vrot.slane %v428, 7
      %v727 = vsel %vm629, %v724, %v726
      %v728 = vrot.slane %v429, 7
      %v729 = vrot.slane %v430, 7
      %v730 = vsel %vm629, %v728, %v729
      %v731 = vrot.slane %v431, 7
      %v732 = vsel %vm629, %v729, %v731
      %v733 = vrot.slane %v432, 7
      %v734 = vsel %vm629, %v731, %v733
      %v735 = vrot.slane %v433, 7
      %v736 = vrot.slane %v434, 7
      %v737 = vsel %vm629, %v735, %v736
      %v738 = vrot.slane %v435, 7
      %v739 = vsel %vm629, %v736, %v738
      %v740 = vrot.slane %v436, 7
      %v741 = vsel %vm629, %v738, %v740
      %v742 = vrot.slane %v437, 7
      %v743 = vrot.slane %v438, 7
      %v744 = vsel %vm629, %v742, %v743
      %v745 = vrot.slane %v439, 7
      %v746 = vsel %vm629, %v743, %v745
      %v747 = vrot.slane %v440, 7
      %v748 = vsel %vm629, %v745, %v747
      %v749 = vrot.slane %v441, 7
      %v750 = vrot.slane %v442, 7
      %v751 = vsel %vm629, %v749, %v750
      %v752 = vrot.slane %v443, 7
      %v753 = vsel %vm629, %v750, %v752
      %v754 = vrot.slane %v444, 7
      %v755 = vsel %vm629, %v752, %v754
      %v756 = vrot.slane %v445, 7
      %v757 = vrot.slane %v446, 7
      %v758 = vsel %vm629, %v756, %v757
      %v759 = vrot.slane %v447, 7
      %v760 = vsel %vm629, %v757, %v759
      %v761 = vrot.slane %v448, 7
      %v762 = vsel %vm629, %v759, %v761
      %v763 = vrot.slane %v449, 7
      %v764 = vrot.slane %v450, 7
      %v765 = vsel %vm629, %v763, %v764
      %v766 = vrot.slane %v451, 7
      %v767 = vsel %vm629, %v764, %v766
      %v768 = vrot.slane %v452, 7
      %v769 = vsel %vm629, %v766, %v768
      %v770 = vrot.slane %v453, 7
      %v771 = vrot.slane %v454, 7
      %v772 = vsel %vm629, %v770, %v771
      %v773 = vrot.slane %v455, 7
      %v774 = vsel %vm629, %v771, %v773
      %v775 = vrot.slane %v456, 7
      %v776 = vsel %vm629, %v773, %v775
      %v777 = vrot.slane %v457, 7
      %v778 = vrot.slane %v458, 7
      %v779 = vsel %vm629, %v777, %v778
      %v780 = vrot.slane %v459, 7
      %v781 = vsel %vm629, %v778, %v780
      %v782 = vrot.slane %v460, 7
      %v783 = vsel %vm629, %v780, %v782
      %v784 = vrot.slane %v461, 7
      %v785 = vrot.slane %v462, 7
      %v786 = vsel %vm629, %v784, %v785
      %v787 = vrot.slane %v463, 7
      %v788 = vsel %vm629, %v785, %v787
      %v789 = vrot.slane %v464, 7
      %v790 = vsel %vm629, %v787, %v789
      %v791 = vrot.slane %v465, 7
      %v792 = vrot.slane %v466, 7
      %v793 = vsel %vm629, %v791, %v792
      %v794 = vrot.slane %v467, 7
      %v795 = vsel %vm629, %v792, %v794
      %v796 = vrot.slane %v468, 7
      %v797 = vsel %vm629, %v794, %v796
      %v798 = vrot.slane %v469, 7
      %v799 = vrot.slane %v470, 7
      %v800 = vsel %vm629, %v798, %v799
      %v801 = vrot.slane %v471, 7
      %v802 = vsel %vm629, %v799, %v801
      %v803 = vrot.slane %v472, 7
      %v804 = vsel %vm629, %v801, %v803
      %v805 = vrot.slane %v473, 7
      %v806 = vrot.slane %v474, 7
      %v807 = vsel %vm629, %v805, %v806
      %v808 = vrot.slane %v475, 7
      %v809 = vsel %vm629, %v806, %v808
      %v810 = vrot.slane %v476, 7
      %v811 = vsel %vm629, %v808, %v810
      %v812 = vrot.slane %v477, 7
      %v813 = vrot.slane %v478, 7
      %v814 = vsel %vm629, %v812, %v813
      %v815 = vrot.slane %v479, 7
      %v816 = vsel %vm629, %v813, %v815
      %v817 = vrot.slane %v480, 7
      %v818 = vsel %vm629, %v815, %v817
      %v819 = vrot.slane %v481, 7
      %v820 = vrot.slane %v482, 7
      %v821 = vsel %vm629, %v819, %v820
      %v822 = vrot.slane %v483, 7
      %v823 = vsel %vm629, %v820, %v822
      %v824 = vrot.slane %v484, 7
      %v825 = vsel %vm629, %v822, %v824
      %v826 = vrot.slane %v485, 7
      %v827 = vrot.slane %v486, 7
      %v828 = vsel %vm629, %v826, %v827
      %v829 = vrot.slane %v487, 7
      %v830 = vsel %vm629, %v827, %v829
      %v831 = vrot.slane %v488, 7
      %v832 = vsel %vm629, %v829, %v831
      %v833 = vrot.slane %v489, 7
      %v834 = vrot.slane %v490, 7
      %v835 = vsel %vm629, %v833, %v834
      %v836 = vrot.slane %v491, 7
      %v837 = vsel %vm629, %v834, %v836
      %v838 = vrot.slane %v492, 7
      %v839 = vsel %vm629, %v836, %v838
      %v840 = vrot.slane %v493, 7
      %v841 = vrot.slane %v494, 7
      %v842 = vsel %vm629, %v840, %v841
      %v843 = vrot.slane %v495, 7
      %v844 = vsel %vm629, %v841, %v843
      %v845 = vrot.slane %v496, 7
      %v846 = vsel %vm629, %v843, %v845
      %v847 = vrot.slane %v497, 7
      %v848 = vrot.slane %v498, 7
      %v849 = vsel %vm629, %v847, %v848
      %v850 = vrot.slane %v499, 7
      %v851 = vsel %vm629, %v848, %v850
      %v852 = vrot.slane %v500, 7
      %v853 = vsel %vm629, %v850, %v852
      %v1014 = vsel %vm629, 0.0, %v630
      %v1015 = vsel %vm629, 0.0, %v637
      %v1016 = vsel %vm629, 0.0, %v644
      %v1017 = vsel %vm629, 0.0, %v651
      %v1018 = vsel %vm629, 0.0, %v658
      %v1019 = vsel %vm629, 0.0, %v665
      %v1020 = vsel %vm629, 0.0, %v672
      %v1021 = vsel %vm629, 0.0, %v679
      %v1022 = vsel %vm629, 0.0, %v686
      %v1023 = vsel %vm629, 0.0, %v693
      %v1024 = vsel %vm629, 0.0, %v700
      %v1025 = vsel %vm629, 0.0, %v707
      %v1026 = vsel %vm629, 0.0, %v714
      %v1027 = vsel %vm629, 0.0, %v721
      %v1028 = vsel %vm629, 0.0, %v728
      %v1029 = vsel %vm629, 0.0, %v735
      %v1030 = vsel %vm629, 0.0, %v742
      %v1031 = vsel %vm629, 0.0, %v749
      %v1032 = vsel %vm629, 0.0, %v756
      %v1033 = vsel %vm629, 0.0, %v763
      %v1034 = vsel %vm629, 0.0, %v770
      %v1035 = vsel %vm629, 0.0, %v777
      %v1036 = vsel %vm629, 0.0, %v784
      %v1037 = vsel %vm629, 0.0, %v791
      %v1038 = vsel %vm629, 0.0, %v798
      %v1039 = vsel %vm629, 0.0, %v805
      %v1040 = vsel %vm629, 0.0, %v812
      %v1041 = vsel %vm629, 0.0, %v819
      %v1042 = vsel %vm629, 0.0, %v826
      %v1043 = vsel %vm629, 0.0, %v833
      %v1044 = vsel %vm629, 0.0, %v840
      %v1045 = vsel %vm629, 0.0, %v847
      %v1046 = vsel %vm629, %v635, 0.0
      %v1047 = vsel %vm629, %v642, 0.0
      %v1048 = vsel %vm629, %v649, 0.0
      %v1049 = vsel %vm629, %v656, 0.0
      %v1050 = vsel %vm629, %v663, 0.0
      %v1051 = vsel %vm629, %v670, 0.0
      %v1052 = vsel %vm629, %v677, 0.0
      %v1053 = vsel %vm629, %v684, 0.0
      %v1054 = vsel %vm629, %v691, 0.0
      %v1055 = vsel %vm629, %v698, 0.0
      %v1056 = vsel %vm629, %v705, 0.0
      %v1057 = vsel %vm629, %v712, 0.0
      %v1058 = vsel %vm629, %v719, 0.0
      %v1059 = vsel %vm629, %v726, 0.0
      %v1060 = vsel %vm629, %v733, 0.0
      %v1061 = vsel %vm629, %v740, 0.0
      %v1062 = vsel %vm629, %v747, 0.0
      %v1063 = vsel %vm629, %v754, 0.0
      %v1064 = vsel %vm629, %v761, 0.0
      %v1065 = vsel %vm629, %v768, 0.0
      %v1066 = vsel %vm629, %v775, 0.0
      %v1067 = vsel %vm629, %v782, 0.0
      %v1068 = vsel %vm629, %v789, 0.0
      %v1069 = vsel %vm629, %v796, 0.0
      %v1070 = vsel %vm629, %v803, 0.0
      %v1071 = vsel %vm629, %v810, 0.0
      %v1072 = vsel %vm629, %v817, 0.0
      %v1073 = vsel %vm629, %v824, 0.0
      %v1074 = vsel %vm629, %v831, 0.0
      %v1075 = vsel %vm629, %v838, 0.0
      %v1076 = vsel %vm629, %v845, 0.0
      %v1077 = vsel %vm629, %v852, 0.0
      %vm1142 = vcmask 1046528
      %v1143 = vrot.slane %v1014, 1
      %v1144 = vrot.slane %v632, 1
      %v1145 = vsel %vm1142, %v1143, %v1144
      %v1146 = vrot.slane %v634, 1
      %v1147 = vsel %vm1142, %v1144, %v1146
      %v1148 = vrot.slane %v636, 1
      %v1149 = vsel %vm1142, %v1146, %v1148
      %v1150 = vrot.slane %v1046, 1
      %v1151 = vsel %vm1142, %v1148, %v1150
      %v1152 = vrot.slane %v1015, 1
      %v1153 = vrot.slane %v639, 1
      %v1154 = vsel %vm1142, %v1152, %v1153
      %v1155 = vrot.slane %v641, 1
      %v1156 = vsel %vm1142, %v1153, %v1155
      %v1157 = vrot.slane %v643, 1
      %v1158 = vsel %vm1142, %v1155, %v1157
      %v1159 = vrot.slane %v1047, 1
      %v1160 = vsel %vm1142, %v1157, %v1159
      %v1161 = vrot.slane %v1016, 1
      %v1162 = vrot.slane %v646, 1
      %v1163 = vsel %vm1142, %v1161, %v1162
      %v1164 = vrot.slane %v648, 1
      %v1165 = vsel %vm1142, %v1162, %v1164
      %v1166 = vrot.slane %v650, 1
      %v1167 = vsel %vm1142, %v1164, %v1166
      %v1168 = vrot.slane %v1048, 1
      %v1169 = vsel %vm1142, %v1166, %v1168
      %v1170 = vrot.slane %v1017, 1
      %v1171 = vrot.slane %v653, 1
      %v1172 = vsel %vm1142, %v1170, %v1171
      %v1173 = vrot.slane %v655, 1
      %v1174 = vsel %vm1142, %v1171, %v1173
      %v1175 = vrot.slane %v657, 1
      %v1176 = vsel %vm1142, %v1173, %v1175
      %v1177 = vrot.slane %v1049, 1
      %v1178 = vsel %vm1142, %v1175, %v1177
      %v1179 = vrot.slane %v1018, 1
      %v1180 = vrot.slane %v660, 1
      %v1181 = vsel %vm1142, %v1179, %v1180
      %v1182 = vrot.slane %v662, 1
      %v1183 = vsel %vm1142, %v1180, %v1182
      %v1184 = vrot.slane %v664, 1
      %v1185 = vsel %vm1142, %v1182, %v1184
      %v1186 = vrot.slane %v1050, 1
      %v1187 = vsel %vm1142, %v1184, %v1186
      %v1188 = vrot.slane %v1019, 1
      %v1189 = vrot.slane %v667, 1
      %v1190 = vsel %vm1142, %v1188, %v1189
      %v1191 = vrot.slane %v669, 1
      %v1192 = vsel %vm1142, %v1189, %v1191
      %v1193 = vrot.slane %v671, 1
      %v1194 = vsel %vm1142, %v1191, %v1193
      %v1195 = vrot.slane %v1051, 1
      %v1196 = vsel %vm1142, %v1193, %v1195
      %v1197 = vrot.slane %v1020, 1
      %v1198 = vrot.slane %v674, 1
      %v1199 = vsel %vm1142, %v1197, %v1198
      %v1200 = vrot.slane %v676, 1
      %v1201 = vsel %vm1142, %v1198, %v1200
      %v1202 = vrot.slane %v678, 1
      %v1203 = vsel %vm1142, %v1200, %v1202
      %v1204 = vrot.slane %v1052, 1
      %v1205 = vsel %vm1142, %v1202, %v1204
      %v1206 = vrot.slane %v1021, 1
      %v1207 = vrot.slane %v681, 1
      %v1208 = vsel %vm1142, %v1206, %v1207
      %v1209 = vrot.slane %v683, 1
      %v1210 = vsel %vm1142, %v1207, %v1209
      %v1211 = vrot.slane %v685, 1
      %v1212 = vsel %vm1142, %v1209, %v1211
      %v1213 = vrot.slane %v1053, 1
      %v1214 = vsel %vm1142, %v1211, %v1213
      %v1215 = vrot.slane %v1022, 1
      %v1216 = vrot.slane %v688, 1
      %v1217 = vsel %vm1142, %v1215, %v1216
      %v1218 = vrot.slane %v690, 1
      %v1219 = vsel %vm1142, %v1216, %v1218
      %v1220 = vrot.slane %v692, 1
      %v1221 = vsel %vm1142, %v1218, %v1220
      %v1222 = vrot.slane %v1054, 1
      %v1223 = vsel %vm1142, %v1220, %v1222
      %v1224 = vrot.slane %v1023, 1
      %v1225 = vrot.slane %v695, 1
      %v1226 = vsel %vm1142, %v1224, %v1225
      %v1227 = vrot.slane %v697, 1
      %v1228 = vsel %vm1142, %v1225, %v1227
      %v1229 = vrot.slane %v699, 1
      %v1230 = vsel %vm1142, %v1227, %v1229
      %v1231 = vrot.slane %v1055, 1
      %v1232 = vsel %vm1142, %v1229, %v1231
      %v1233 = vrot.slane %v1024, 1
      %v1234 = vrot.slane %v702, 1
      %v1235 = vsel %vm1142, %v1233, %v1234
      %v1236 = vrot.slane %v704, 1
      %v1237 = vsel %vm1142, %v1234, %v1236
      %v1238 = vrot.slane %v706, 1
      %v1239 = vsel %vm1142, %v1236, %v1238
      %v1240 = vrot.slane %v1056, 1
      %v1241 = vsel %vm1142, %v1238, %v1240
      %v1242 = vrot.slane %v1025, 1
      %v1243 = vrot.slane %v709, 1
      %v1244 = vsel %vm1142, %v1242, %v1243
      %v1245 = vrot.slane %v711, 1
      %v1246 = vsel %vm1142, %v1243, %v1245
      %v1247 = vrot.slane %v713, 1
      %v1248 = vsel %vm1142, %v1245, %v1247
      %v1249 = vrot.slane %v1057, 1
      %v1250 = vsel %vm1142, %v1247, %v1249
      %v1251 = vrot.slane %v1026, 1
      %v1252 = vrot.slane %v716, 1
      %v1253 = vsel %vm1142, %v1251, %v1252
      %v1254 = vrot.slane %v718, 1
      %v1255 = vsel %vm1142, %v1252, %v1254
      %v1256 = vrot.slane %v720, 1
      %v1257 = vsel %vm1142, %v1254, %v1256
      %v1258 = vrot.slane %v1058, 1
      %v1259 = vsel %vm1142, %v1256, %v1258
      %v1260 = vrot.slane %v1027, 1
      %v1261 = vrot.slane %v723, 1
      %v1262 = vsel %vm1142, %v1260, %v1261
      %v1263 = vrot.slane %v725, 1
      %v1264 = vsel %vm1142, %v1261, %v1263
      %v1265 = vrot.slane %v727, 1
      %v1266 = vsel %vm1142, %v1263, %v1265
      %v1267 = vrot.slane %v1059, 1
      %v1268 = vsel %vm1142, %v1265, %v1267
      %v1269 = vrot.slane %v1028, 1
      %v1270 = vrot.slane %v730, 1
      %v1271 = vsel %vm1142, %v1269, %v1270
      %v1272 = vrot.slane %v732, 1
      %v1273 = vsel %vm1142, %v1270, %v1272
      %v1274 = vrot.slane %v734, 1
      %v1275 = vsel %vm1142, %v1272, %v1274
      %v1276 = vrot.slane %v1060, 1
      %v1277 = vsel %vm1142, %v1274, %v1276
      %v1278 = vrot.slane %v1029, 1
      %v1279 = vrot.slane %v737, 1
      %v1280 = vsel %vm1142, %v1278, %v1279
      %v1281 = vrot.slane %v739, 1
      %v1282 = vsel %vm1142, %v1279, %v1281
      %v1283 = vrot.slane %v741, 1
      %v1284 = vsel %vm1142, %v1281, %v1283
      %v1285 = vrot.slane %v1061, 1
      %v1286 = vsel %vm1142, %v1283, %v1285
      %v1287 = vrot.slane %v1030, 1
      %v1288 = vrot.slane %v744, 1
      %v1289 = vsel %vm1142, %v1287, %v1288
      %v1290 = vrot.slane %v746, 1
      %v1291 = vsel %vm1142, %v1288, %v1290
      %v1292 = vrot.slane %v748, 1
      %v1293 = vsel %vm1142, %v1290, %v1292
      %v1294 = vrot.slane %v1062, 1
      %v1295 = vsel %vm1142, %v1292, %v1294
      %v1296 = vrot.slane %v1031, 1
      %v1297 = vrot.slane %v751, 1
      %v1298 = vsel %vm1142, %v1296, %v1297
      %v1299 = vrot.slane %v753, 1
      %v1300 = vsel %vm1142, %v1297, %v1299
      %v1301 = vrot.slane %v755, 1
      %v1302 = vsel %vm1142, %v1299, %v1301
      %v1303 = vrot.slane %v1063, 1
      %v1304 = vsel %vm1142, %v1301, %v1303
      %v1305 = vrot.slane %v1032, 1
      %v1306 = vrot.slane %v758, 1
      %v1307 = vsel %vm1142, %v1305, %v1306
      %v1308 = vrot.slane %v760, 1
      %v1309 = vsel %vm1142, %v1306, %v1308
      %v1310 = vrot.slane %v762, 1
      %v1311 = vsel %vm1142, %v1308, %v1310
      %v1312 = vrot.slane %v1064, 1
      %v1313 = vsel %vm1142, %v1310, %v1312
      %v1314 = vrot.slane %v1033, 1
      %v1315 = vrot.slane %v765, 1
      %v1316 = vsel %vm1142, %v1314, %v1315
      %v1317 = vrot.slane %v767, 1
      %v1318 = vsel %vm1142, %v1315, %v1317
      %v1319 = vrot.slane %v769, 1
      %v1320 = vsel %vm1142, %v1317, %v1319
      %v1321 = vrot.slane %v1065, 1
      %v1322 = vsel %vm1142, %v1319, %v1321
      %v1323 = vrot.slane %v1034, 1
      %v1324 = vrot.slane %v772, 1
      %v1325 = vsel %vm1142, %v1323, %v1324
      %v1326 = vrot.slane %v774, 1
      %v1327 = vsel %vm1142, %v1324, %v1326
      %v1328 = vrot.slane %v776, 1
      %v1329 = vsel %vm1142, %v1326, %v1328
      %v1330 = vrot.slane %v1066, 1
      %v1331 = vsel %vm1142, %v1328, %v1330
      %v1332 = vrot.slane %v1035, 1
      %v1333 = vrot.slane %v779, 1
      %v1334 = vsel %vm1142, %v1332, %v1333
      %v1335 = vrot.slane %v781, 1
      %v1336 = vsel %vm1142, %v1333, %v1335
      %v1337 = vrot.slane %v783, 1
      %v1338 = vsel %vm1142, %v1335, %v1337
      %v1339 = vrot.slane %v1067, 1
      %v1340 = vsel %vm1142, %v1337, %v1339
      %v1341 = vrot.slane %v1036, 1
      %v1342 = vrot.slane %v786, 1
      %v1343 = vsel %vm1142, %v1341, %v1342
      %v1344 = vrot.slane %v788, 1
      %v1345 = vsel %vm1142, %v1342, %v1344
      %v1346 = vrot.slane %v790, 1
      %v1347 = vsel %vm1142, %v1344, %v1346
      %v1348 = vrot.slane %v1068, 1
      %v1349 = vsel %vm1142, %v1346, %v1348
      %v1350 = vrot.slane %v1037, 1
      %v1351 = vrot.slane %v793, 1
      %v1352 = vsel %vm1142, %v1350, %v1351
      %v1353 = vrot.slane %v795, 1
      %v1354 = vsel %vm1142, %v1351, %v1353
      %v1355 = vrot.slane %v797, 1
      %v1356 = vsel %vm1142, %v1353, %v1355
      %v1357 = vrot.slane %v1069, 1
      %v1358 = vsel %vm1142, %v1355, %v1357
      %v1359 = vrot.slane %v1038, 1
      %v1360 = vrot.slane %v800, 1
      %v1361 = vsel %vm1142, %v1359, %v1360
      %v1362 = vrot.slane %v802, 1
      %v1363 = vsel %vm1142, %v1360, %v1362
      %v1364 = vrot.slane %v804, 1
      %v1365 = vsel %vm1142, %v1362, %v1364
      %v1366 = vrot.slane %v1070, 1
      %v1367 = vsel %vm1142, %v1364, %v1366
      %v1368 = vrot.slane %v1039, 1
      %v1369 = vrot.slane %v807, 1
      %v1370 = vsel %vm1142, %v1368, %v1369
      %v1371 = vrot.slane %v809, 1
      %v1372 = vsel %vm1142, %v1369, %v1371
      %v1373 = vrot.slane %v811, 1
      %v1374 = vsel %vm1142, %v1371, %v1373
      %v1375 = vrot.slane %v1071, 1
      %v1376 = vsel %vm1142, %v1373, %v1375
      %v1377 = vrot.slane %v1040, 1
      %v1378 = vrot.slane %v814, 1
      %v1379 = vsel %vm1142, %v1377, %v1378
      %v1380 = vrot.slane %v816, 1
      %v1381 = vsel %vm1142, %v1378, %v1380
      %v1382 = vrot.slane %v818, 1
      %v1383 = vsel %vm1142, %v1380, %v1382
      %v1384 = vrot.slane %v1072, 1
      %v1385 = vsel %vm1142, %v1382, %v1384
      %v1386 = vrot.slane %v1041, 1
      %v1387 = vrot.slane %v821, 1
      %v1388 = vsel %vm1142, %v1386, %v1387
      %v1389 = vrot.slane %v823, 1
      %v1390 = vsel %vm1142, %v1387, %v1389
      %v1391 = vrot.slane %v825, 1
      %v1392 = vsel %vm1142, %v1389, %v1391
      %v1393 = vrot.slane %v1073, 1
      %v1394 = vsel %vm1142, %v1391, %v1393
      %v1395 = vrot.slane %v1042, 1
      %v1396 = vrot.slane %v828, 1
      %v1397 = vsel %vm1142, %v1395, %v1396
      %v1398 = vrot.slane %v830, 1
      %v1399 = vsel %vm1142, %v1396, %v1398
      %v1400 = vrot.slane %v832, 1
      %v1401 = vsel %vm1142, %v1398, %v1400
      %v1402 = vrot.slane %v1074, 1
      %v1403 = vsel %vm1142, %v1400, %v1402
      %v1404 = vrot.slane %v1043, 1
      %v1405 = vrot.slane %v835, 1
      %v1406 = vsel %vm1142, %v1404, %v1405
      %v1407 = vrot.slane %v837, 1
      %v1408 = vsel %vm1142, %v1405, %v1407
      %v1409 = vrot.slane %v839, 1
      %v1410 = vsel %vm1142, %v1407, %v1409
      %v1411 = vrot.slane %v1075, 1
      %v1412 = vsel %vm1142, %v1409, %v1411
      %v1413 = vrot.slane %v1044, 1
      %v1414 = vrot.slane %v842, 1
      %v1415 = vsel %vm1142, %v1413, %v1414
      %v1416 = vrot.slane %v844, 1
      %v1417 = vsel %vm1142, %v1414, %v1416
      %v1418 = vrot.slane %v846, 1
      %v1419 = vsel %vm1142, %v1416, %v1418
      %v1420 = vrot.slane %v1076, 1
      %v1421 = vsel %vm1142, %v1418, %v1420
      %v1422 = vrot.slane %v1045, 1
      %v1423 = vrot.slane %v849, 1
      %v1424 = vsel %vm1142, %v1422, %v1423
      %v1425 = vrot.slane %v851, 1
      %v1426 = vsel %vm1142, %v1423, %v1425
      %v1427 = vrot.slane %v853, 1
      %v1428 = vsel %vm1142, %v1425, %v1427
      %v1429 = vrot.slane %v1077, 1
      %v1430 = vsel %vm1142, %v1427, %v1429
      %v1559 = vadd.f32 %v1014, %v1145
      %v1560 = vadd.f32 %v632, %v1147
      %v1561 = vadd.f32 %v634, %v1149
      %v1562 = vadd.f32 %v636, %v1151
      %v1563 = vadd.f32 %v1015, %v1154
      %v1564 = vadd.f32 %v639, %v1156
      %v1565 = vadd.f32 %v641, %v1158
      %v1566 = vadd.f32 %v643, %v1160
      %v1567 = vadd.f32 %v1016, %v1163
      %v1568 = vadd.f32 %v646, %v1165
      %v1569 = vadd.f32 %v648, %v1167
      %v1570 = vadd.f32 %v650, %v1169
      %v1571 = vadd.f32 %v1017, %v1172
      %v1572 = vadd.f32 %v653, %v1174
      %v1573 = vadd.f32 %v655, %v1176
      %v1574 = vadd.f32 %v657, %v1178
      %v1575 = vadd.f32 %v1018, %v1181
      %v1576 = vadd.f32 %v660, %v1183
      %v1577 = vadd.f32 %v662, %v1185
      %v1578 = vadd.f32 %v664, %v1187
      %v1579 = vadd.f32 %v1019, %v1190
      %v1580 = vadd.f32 %v667, %v1192
      %v1581 = vadd.f32 %v669, %v1194
      %v1582 = vadd.f32 %v671, %v1196
      %v1583 = vadd.f32 %v1020, %v1199
      %v1584 = vadd.f32 %v674, %v1201
      %v1585 = vadd.f32 %v676, %v1203
      %v1586 = vadd.f32 %v678, %v1205
      %v1587 = vadd.f32 %v1021, %v1208
      %v1588 = vadd.f32 %v681, %v1210
      %v1589 = vadd.f32 %v683, %v1212
      %v1590 = vadd.f32 %v685, %v1214
      %v1591 = vadd.f32 %v1022, %v1217
      %v1592 = vadd.f32 %v688, %v1219
      %v1593 = vadd.f32 %v690, %v1221
      %v1594 = vadd.f32 %v692, %v1223
      %v1595 = vadd.f32 %v1023, %v1226
      %v1596 = vadd.f32 %v695, %v1228
      %v1597 = vadd.f32 %v697, %v1230
      %v1598 = vadd.f32 %v699, %v1232
      %v1599 = vadd.f32 %v1024, %v1235
      %v1600 = vadd.f32 %v702, %v1237
      %v1601 = vadd.f32 %v704, %v1239
      %v1602 = vadd.f32 %v706, %v1241
      %v1603 = vadd.f32 %v1025, %v1244
      %v1604 = vadd.f32 %v709, %v1246
      %v1605 = vadd.f32 %v711, %v1248
      %v1606 = vadd.f32 %v713, %v1250
      %v1607 = vadd.f32 %v1026, %v1253
      %v1608 = vadd.f32 %v716, %v1255
      %v1609 = vadd.f32 %v718, %v1257
      %v1610 = vadd.f32 %v720, %v1259
      %v1611 = vadd.f32 %v1027, %v1262
      %v1612 = vadd.f32 %v723, %v1264
      %v1613 = vadd.f32 %v725, %v1266
      %v1614 = vadd.f32 %v727, %v1268
      %v1615 = vadd.f32 %v1028, %v1271
      %v1616 = vadd.f32 %v730, %v1273
      %v1617 = vadd.f32 %v732, %v1275
      %v1618 = vadd.f32 %v734, %v1277
      %v1619 = vadd.f32 %v1029, %v1280
      %v1620 = vadd.f32 %v737, %v1282
      %v1621 = vadd.f32 %v739, %v1284
      %v1622 = vadd.f32 %v741, %v1286
      %v1623 = vadd.f32 %v1030, %v1289
      %v1624 = vadd.f32 %v744, %v1291
      %v1625 = vadd.f32 %v746, %v1293
      %v1626 = vadd.f32 %v748, %v1295
      %v1627 = vadd.f32 %v1031, %v1298
      %v1628 = vadd.f32 %v751, %v1300
      %v1629 = vadd.f32 %v753, %v1302
      %v1630 = vadd.f32 %v755, %v1304
      %v1631 = vadd.f32 %v1032, %v1307
      %v1632 = vadd.f32 %v758, %v1309
      %v1633 = vadd.f32 %v760, %v1311
      %v1634 = vadd.f32 %v762, %v1313
      %v1635 = vadd.f32 %v1033, %v1316
      %v1636 = vadd.f32 %v765, %v1318
      %v1637 = vadd.f32 %v767, %v1320
      %v1638 = vadd.f32 %v769, %v1322
      %v1639 = vadd.f32 %v1034, %v1325
      %v1640 = vadd.f32 %v772, %v1327
      %v1641 = vadd.f32 %v774, %v1329
      %v1642 = vadd.f32 %v776, %v1331
      %v1643 = vadd.f32 %v1035, %v1334
      %v1644 = vadd.f32 %v779, %v1336
      %v1645 = vadd.f32 %v781, %v1338
      %v1646 = vadd.f32 %v783, %v1340
      %v1647 = vadd.f32 %v1036, %v1343
      %v1648 = vadd.f32 %v786, %v1345
      %v1649 = vadd.f32 %v788, %v1347
      %v1650 = vadd.f32 %v790, %v1349
      %v1651 = vadd.f32 %v1037, %v1352
      %v1652 = vadd.f32 %v793, %v1354
      %v1653 = vadd.f32 %v795, %v1356
      %v1654 = vadd.f32 %v797, %v1358
      %v1655 = vadd.f32 %v1038, %v1361
      %v1656 = vadd.f32 %v800, %v1363
      %v1657 = vadd.f32 %v802, %v1365
      %v1658 = vadd.f32 %v804, %v1367
      %v1659 = vadd.f32 %v1039, %v1370
      %v1660 = vadd.f32 %v807, %v1372
      %v1661 = vadd.f32 %v809, %v1374
      %v1662 = vadd.f32 %v811, %v1376
      %v1663 = vadd.f32 %v1040, %v1379
      %v1664 = vadd.f32 %v814, %v1381
      %v1665 = vadd.f32 %v816, %v1383
      %v1666 = vadd.f32 %v818, %v1385
      %v1667 = vadd.f32 %v1041, %v1388
      %v1668 = vadd.f32 %v821, %v1390
      %v1669 = vadd.f32 %v823, %v1392
      %v1670 = vadd.f32 %v825, %v1394
      %v1671 = vadd.f32 %v1042, %v1397
      %v1672 = vadd.f32 %v828, %v1399
      %v1673 = vadd.f32 %v830, %v1401
      %v1674 = vadd.f32 %v832, %v1403
      %v1675 = vadd.f32 %v1043, %v1406
      %v1676 = vadd.f32 %v835, %v1408
      %v1677 = vadd.f32 %v837, %v1410
      %v1678 = vadd.f32 %v839, %v1412
      %v1679 = vadd.f32 %v1044, %v1415
      %v1680 = vadd.f32 %v842, %v1417
      %v1681 = vadd.f32 %v844, %v1419
      %v1682 = vadd.f32 %v846, %v1421
      %v1683 = vadd.f32 %v1045, %v1424
      %v1684 = vadd.f32 %v849, %v1426
      %v1685 = vadd.f32 %v851, %v1428
      %v1686 = vadd.f32 %v853, %v1430
      %vm1687 = vcmask 1045504
      %v1688 = vrot.slane %v1014, 2
      %v1689 = vrot.slane %v632, 2
      %v1690 = vsel %vm1687, %v1688, %v1689
      %v1691 = vrot.slane %v634, 2
      %v1692 = vsel %vm1687, %v1689, %v1691
      %v1693 = vrot.slane %v636, 2
      %v1694 = vsel %vm1687, %v1691, %v1693
      %v1695 = vrot.slane %v1046, 2
      %v1696 = vsel %vm1687, %v1693, %v1695
      %v1697 = vrot.slane %v1015, 2
      %v1698 = vrot.slane %v639, 2
      %v1699 = vsel %vm1687, %v1697, %v1698
      %v1700 = vrot.slane %v641, 2
      %v1701 = vsel %vm1687, %v1698, %v1700
      %v1702 = vrot.slane %v643, 2
      %v1703 = vsel %vm1687, %v1700, %v1702
      %v1704 = vrot.slane %v1047, 2
      %v1705 = vsel %vm1687, %v1702, %v1704
      %v1706 = vrot.slane %v1016, 2
      %v1707 = vrot.slane %v646, 2
      %v1708 = vsel %vm1687, %v1706, %v1707
      %v1709 = vrot.slane %v648, 2
      %v1710 = vsel %vm1687, %v1707, %v1709
      %v1711 = vrot.slane %v650, 2
      %v1712 = vsel %vm1687, %v1709, %v1711
      %v1713 = vrot.slane %v1048, 2
      %v1714 = vsel %vm1687, %v1711, %v1713
      %v1715 = vrot.slane %v1017, 2
      %v1716 = vrot.slane %v653, 2
      %v1717 = vsel %vm1687, %v1715, %v1716
      %v1718 = vrot.slane %v655, 2
      %v1719 = vsel %vm1687, %v1716, %v1718
      %v1720 = vrot.slane %v657, 2
      %v1721 = vsel %vm1687, %v1718, %v1720
      %v1722 = vrot.slane %v1049, 2
      %v1723 = vsel %vm1687, %v1720, %v1722
      %v1724 = vrot.slane %v1018, 2
      %v1725 = vrot.slane %v660, 2
      %v1726 = vsel %vm1687, %v1724, %v1725
      %v1727 = vrot.slane %v662, 2
      %v1728 = vsel %vm1687, %v1725, %v1727
      %v1729 = vrot.slane %v664, 2
      %v1730 = vsel %vm1687, %v1727, %v1729
      %v1731 = vrot.slane %v1050, 2
      %v1732 = vsel %vm1687, %v1729, %v1731
      %v1733 = vrot.slane %v1019, 2
      %v1734 = vrot.slane %v667, 2
      %v1735 = vsel %vm1687, %v1733, %v1734
      %v1736 = vrot.slane %v669, 2
      %v1737 = vsel %vm1687, %v1734, %v1736
      %v1738 = vrot.slane %v671, 2
      %v1739 = vsel %vm1687, %v1736, %v1738
      %v1740 = vrot.slane %v1051, 2
      %v1741 = vsel %vm1687, %v1738, %v1740
      %v1742 = vrot.slane %v1020, 2
      %v1743 = vrot.slane %v674, 2
      %v1744 = vsel %vm1687, %v1742, %v1743
      %v1745 = vrot.slane %v676, 2
      %v1746 = vsel %vm1687, %v1743, %v1745
      %v1747 = vrot.slane %v678, 2
      %v1748 = vsel %vm1687, %v1745, %v1747
      %v1749 = vrot.slane %v1052, 2
      %v1750 = vsel %vm1687, %v1747, %v1749
      %v1751 = vrot.slane %v1021, 2
      %v1752 = vrot.slane %v681, 2
      %v1753 = vsel %vm1687, %v1751, %v1752
      %v1754 = vrot.slane %v683, 2
      %v1755 = vsel %vm1687, %v1752, %v1754
      %v1756 = vrot.slane %v685, 2
      %v1757 = vsel %vm1687, %v1754, %v1756
      %v1758 = vrot.slane %v1053, 2
      %v1759 = vsel %vm1687, %v1756, %v1758
      %v1760 = vrot.slane %v1022, 2
      %v1761 = vrot.slane %v688, 2
      %v1762 = vsel %vm1687, %v1760, %v1761
      %v1763 = vrot.slane %v690, 2
      %v1764 = vsel %vm1687, %v1761, %v1763
      %v1765 = vrot.slane %v692, 2
      %v1766 = vsel %vm1687, %v1763, %v1765
      %v1767 = vrot.slane %v1054, 2
      %v1768 = vsel %vm1687, %v1765, %v1767
      %v1769 = vrot.slane %v1023, 2
      %v1770 = vrot.slane %v695, 2
      %v1771 = vsel %vm1687, %v1769, %v1770
      %v1772 = vrot.slane %v697, 2
      %v1773 = vsel %vm1687, %v1770, %v1772
      %v1774 = vrot.slane %v699, 2
      %v1775 = vsel %vm1687, %v1772, %v1774
      %v1776 = vrot.slane %v1055, 2
      %v1777 = vsel %vm1687, %v1774, %v1776
      %v1778 = vrot.slane %v1024, 2
      %v1779 = vrot.slane %v702, 2
      %v1780 = vsel %vm1687, %v1778, %v1779
      %v1781 = vrot.slane %v704, 2
      %v1782 = vsel %vm1687, %v1779, %v1781
      %v1783 = vrot.slane %v706, 2
      %v1784 = vsel %vm1687, %v1781, %v1783
      %v1785 = vrot.slane %v1056, 2
      %v1786 = vsel %vm1687, %v1783, %v1785
      %v1787 = vrot.slane %v1025, 2
      %v1788 = vrot.slane %v709, 2
      %v1789 = vsel %vm1687, %v1787, %v1788
      %v1790 = vrot.slane %v711, 2
      %v1791 = vsel %vm1687, %v1788, %v1790
      %v1792 = vrot.slane %v713, 2
      %v1793 = vsel %vm1687, %v1790, %v1792
      %v1794 = vrot.slane %v1057, 2
      %v1795 = vsel %vm1687, %v1792, %v1794
      %v1796 = vrot.slane %v1026, 2
      %v1797 = vrot.slane %v716, 2
      %v1798 = vsel %vm1687, %v1796, %v1797
      %v1799 = vrot.slane %v718, 2
      %v1800 = vsel %vm1687, %v1797, %v1799
      %v1801 = vrot.slane %v720, 2
      %v1802 = vsel %vm1687, %v1799, %v1801
      %v1803 = vrot.slane %v1058, 2
      %v1804 = vsel %vm1687, %v1801, %v1803
      %v1805 = vrot.slane %v1027, 2
      %v1806 = vrot.slane %v723, 2
      %v1807 = vsel %vm1687, %v1805, %v1806
      %v1808 = vrot.slane %v725, 2
      %v1809 = vsel %vm1687, %v1806, %v1808
      %v1810 = vrot.slane %v727, 2
      %v1811 = vsel %vm1687, %v1808, %v1810
      %v1812 = vrot.slane %v1059, 2
      %v1813 = vsel %vm1687, %v1810, %v1812
      %v1814 = vrot.slane %v1028, 2
      %v1815 = vrot.slane %v730, 2
      %v1816 = vsel %vm1687, %v1814, %v1815
      %v1817 = vrot.slane %v732, 2
      %v1818 = vsel %vm1687, %v1815, %v1817
      %v1819 = vrot.slane %v734, 2
      %v1820 = vsel %vm1687, %v1817, %v1819
      %v1821 = vrot.slane %v1060, 2
      %v1822 = vsel %vm1687, %v1819, %v1821
      %v1823 = vrot.slane %v1029, 2
      %v1824 = vrot.slane %v737, 2
      %v1825 = vsel %vm1687, %v1823, %v1824
      %v1826 = vrot.slane %v739, 2
      %v1827 = vsel %vm1687, %v1824, %v1826
      %v1828 = vrot.slane %v741, 2
      %v1829 = vsel %vm1687, %v1826, %v1828
      %v1830 = vrot.slane %v1061, 2
      %v1831 = vsel %vm1687, %v1828, %v1830
      %v1832 = vrot.slane %v1030, 2
      %v1833 = vrot.slane %v744, 2
      %v1834 = vsel %vm1687, %v1832, %v1833
      %v1835 = vrot.slane %v746, 2
      %v1836 = vsel %vm1687, %v1833, %v1835
      %v1837 = vrot.slane %v748, 2
      %v1838 = vsel %vm1687, %v1835, %v1837
      %v1839 = vrot.slane %v1062, 2
      %v1840 = vsel %vm1687, %v1837, %v1839
      %v1841 = vrot.slane %v1031, 2
      %v1842 = vrot.slane %v751, 2
      %v1843 = vsel %vm1687, %v1841, %v1842
      %v1844 = vrot.slane %v753, 2
      %v1845 = vsel %vm1687, %v1842, %v1844
      %v1846 = vrot.slane %v755, 2
      %v1847 = vsel %vm1687, %v1844, %v1846
      %v1848 = vrot.slane %v1063, 2
      %v1849 = vsel %vm1687, %v1846, %v1848
      %v1850 = vrot.slane %v1032, 2
      %v1851 = vrot.slane %v758, 2
      %v1852 = vsel %vm1687, %v1850, %v1851
      %v1853 = vrot.slane %v760, 2
      %v1854 = vsel %vm1687, %v1851, %v1853
      %v1855 = vrot.slane %v762, 2
      %v1856 = vsel %vm1687, %v1853, %v1855
      %v1857 = vrot.slane %v1064, 2
      %v1858 = vsel %vm1687, %v1855, %v1857
      %v1859 = vrot.slane %v1033, 2
      %v1860 = vrot.slane %v765, 2
      %v1861 = vsel %vm1687, %v1859, %v1860
      %v1862 = vrot.slane %v767, 2
      %v1863 = vsel %vm1687, %v1860, %v1862
      %v1864 = vrot.slane %v769, 2
      %v1865 = vsel %vm1687, %v1862, %v1864
      %v1866 = vrot.slane %v1065, 2
      %v1867 = vsel %vm1687, %v1864, %v1866
      %v1868 = vrot.slane %v1034, 2
      %v1869 = vrot.slane %v772, 2
      %v1870 = vsel %vm1687, %v1868, %v1869
      %v1871 = vrot.slane %v774, 2
      %v1872 = vsel %vm1687, %v1869, %v1871
      %v1873 = vrot.slane %v776, 2
      %v1874 = vsel %vm1687, %v1871, %v1873
      %v1875 = vrot.slane %v1066, 2
      %v1876 = vsel %vm1687, %v1873, %v1875
      %v1877 = vrot.slane %v1035, 2
      %v1878 = vrot.slane %v779, 2
      %v1879 = vsel %vm1687, %v1877, %v1878
      %v1880 = vrot.slane %v781, 2
      %v1881 = vsel %vm1687, %v1878, %v1880
      %v1882 = vrot.slane %v783, 2
      %v1883 = vsel %vm1687, %v1880, %v1882
      %v1884 = vrot.slane %v1067, 2
      %v1885 = vsel %vm1687, %v1882, %v1884
      %v1886 = vrot.slane %v1036, 2
      %v1887 = vrot.slane %v786, 2
      %v1888 = vsel %vm1687, %v1886, %v1887
      %v1889 = vrot.slane %v788, 2
      %v1890 = vsel %vm1687, %v1887, %v1889
      %v1891 = vrot.slane %v790, 2
      %v1892 = vsel %vm1687, %v1889, %v1891
      %v1893 = vrot.slane %v1068, 2
      %v1894 = vsel %vm1687, %v1891, %v1893
      %v1895 = vrot.slane %v1037, 2
      %v1896 = vrot.slane %v793, 2
      %v1897 = vsel %vm1687, %v1895, %v1896
      %v1898 = vrot.slane %v795, 2
      %v1899 = vsel %vm1687, %v1896, %v1898
      %v1900 = vrot.slane %v797, 2
      %v1901 = vsel %vm1687, %v1898, %v1900
      %v1902 = vrot.slane %v1069, 2
      %v1903 = vsel %vm1687, %v1900, %v1902
      %v1904 = vrot.slane %v1038, 2
      %v1905 = vrot.slane %v800, 2
      %v1906 = vsel %vm1687, %v1904, %v1905
      %v1907 = vrot.slane %v802, 2
      %v1908 = vsel %vm1687, %v1905, %v1907
      %v1909 = vrot.slane %v804, 2
      %v1910 = vsel %vm1687, %v1907, %v1909
      %v1911 = vrot.slane %v1070, 2
      %v1912 = vsel %vm1687, %v1909, %v1911
      %v1913 = vrot.slane %v1039, 2
      %v1914 = vrot.slane %v807, 2
      %v1915 = vsel %vm1687, %v1913, %v1914
      %v1916 = vrot.slane %v809, 2
      %v1917 = vsel %vm1687, %v1914, %v1916
      %v1918 = vrot.slane %v811, 2
      %v1919 = vsel %vm1687, %v1916, %v1918
      %v1920 = vrot.slane %v1071, 2
      %v1921 = vsel %vm1687, %v1918, %v1920
      %v1922 = vrot.slane %v1040, 2
      %v1923 = vrot.slane %v814, 2
      %v1924 = vsel %vm1687, %v1922, %v1923
      %v1925 = vrot.slane %v816, 2
      %v1926 = vsel %vm1687, %v1923, %v1925
      %v1927 = vrot.slane %v818, 2
      %v1928 = vsel %vm1687, %v1925, %v1927
      %v1929 = vrot.slane %v1072, 2
      %v1930 = vsel %vm1687, %v1927, %v1929
      %v1931 = vrot.slane %v1041, 2
      %v1932 = vrot.slane %v821, 2
      %v1933 = vsel %vm1687, %v1931, %v1932
      %v1934 = vrot.slane %v823, 2
      %v1935 = vsel %vm1687, %v1932, %v1934
      %v1936 = vrot.slane %v825, 2
      %v1937 = vsel %vm1687, %v1934, %v1936
      %v1938 = vrot.slane %v1073, 2
      %v1939 = vsel %vm1687, %v1936, %v1938
      %v1940 = vrot.slane %v1042, 2
      %v1941 = vrot.slane %v828, 2
      %v1942 = vsel %vm1687, %v1940, %v1941
      %v1943 = vrot.slane %v830, 2
      %v1944 = vsel %vm1687, %v1941, %v1943
      %v1945 = vrot.slane %v832, 2
      %v1946 = vsel %vm1687, %v1943, %v1945
      %v1947 = vrot.slane %v1074, 2
      %v1948 = vsel %vm1687, %v1945, %v1947
      %v1949 = vrot.slane %v1043, 2
      %v1950 = vrot.slane %v835, 2
      %v1951 = vsel %vm1687, %v1949, %v1950
      %v1952 = vrot.slane %v837, 2
      %v1953 = vsel %vm1687, %v1950, %v1952
      %v1954 = vrot.slane %v839, 2
      %v1955 = vsel %vm1687, %v1952, %v1954
      %v1956 = vrot.slane %v1075, 2
      %v1957 = vsel %vm1687, %v1954, %v1956
      %v1958 = vrot.slane %v1044, 2
      %v1959 = vrot.slane %v842, 2
      %v1960 = vsel %vm1687, %v1958, %v1959
      %v1961 = vrot.slane %v844, 2
      %v1962 = vsel %vm1687, %v1959, %v1961
      %v1963 = vrot.slane %v846, 2
      %v1964 = vsel %vm1687, %v1961, %v1963
      %v1965 = vrot.slane %v1076, 2
      %v1966 = vsel %vm1687, %v1963, %v1965
      %v1967 = vrot.slane %v1045, 2
      %v1968 = vrot.slane %v849, 2
      %v1969 = vsel %vm1687, %v1967, %v1968
      %v1970 = vrot.slane %v851, 2
      %v1971 = vsel %vm1687, %v1968, %v1970
      %v1972 = vrot.slane %v853, 2
      %v1973 = vsel %vm1687, %v1970, %v1972
      %v1974 = vrot.slane %v1077, 2
      %v1975 = vsel %vm1687, %v1972, %v1974
      %v2104 = vadd.f32 %v1559, %v1690
      %v2105 = vadd.f32 %v1560, %v1692
      %v2106 = vadd.f32 %v1561, %v1694
      %v2107 = vadd.f32 %v1562, %v1696
      %v2108 = vadd.f32 %v1563, %v1699
      %v2109 = vadd.f32 %v1564, %v1701
      %v2110 = vadd.f32 %v1565, %v1703
      %v2111 = vadd.f32 %v1566, %v1705
      %v2112 = vadd.f32 %v1567, %v1708
      %v2113 = vadd.f32 %v1568, %v1710
      %v2114 = vadd.f32 %v1569, %v1712
      %v2115 = vadd.f32 %v1570, %v1714
      %v2116 = vadd.f32 %v1571, %v1717
      %v2117 = vadd.f32 %v1572, %v1719
      %v2118 = vadd.f32 %v1573, %v1721
      %v2119 = vadd.f32 %v1574, %v1723
      %v2120 = vadd.f32 %v1575, %v1726
      %v2121 = vadd.f32 %v1576, %v1728
      %v2122 = vadd.f32 %v1577, %v1730
      %v2123 = vadd.f32 %v1578, %v1732
      %v2124 = vadd.f32 %v1579, %v1735
      %v2125 = vadd.f32 %v1580, %v1737
      %v2126 = vadd.f32 %v1581, %v1739
      %v2127 = vadd.f32 %v1582, %v1741
      %v2128 = vadd.f32 %v1583, %v1744
      %v2129 = vadd.f32 %v1584, %v1746
      %v2130 = vadd.f32 %v1585, %v1748
      %v2131 = vadd.f32 %v1586, %v1750
      %v2132 = vadd.f32 %v1587, %v1753
      %v2133 = vadd.f32 %v1588, %v1755
      %v2134 = vadd.f32 %v1589, %v1757
      %v2135 = vadd.f32 %v1590, %v1759
      %v2136 = vadd.f32 %v1591, %v1762
      %v2137 = vadd.f32 %v1592, %v1764
      %v2138 = vadd.f32 %v1593, %v1766
      %v2139 = vadd.f32 %v1594, %v1768
      %v2140 = vadd.f32 %v1595, %v1771
      %v2141 = vadd.f32 %v1596, %v1773
      %v2142 = vadd.f32 %v1597, %v1775
      %v2143 = vadd.f32 %v1598, %v1777
      %v2144 = vadd.f32 %v1599, %v1780
      %v2145 = vadd.f32 %v1600, %v1782
      %v2146 = vadd.f32 %v1601, %v1784
      %v2147 = vadd.f32 %v1602, %v1786
      %v2148 = vadd.f32 %v1603, %v1789
      %v2149 = vadd.f32 %v1604, %v1791
      %v2150 = vadd.f32 %v1605, %v1793
      %v2151 = vadd.f32 %v1606, %v1795
      %v2152 = vadd.f32 %v1607, %v1798
      %v2153 = vadd.f32 %v1608, %v1800
      %v2154 = vadd.f32 %v1609, %v1802
      %v2155 = vadd.f32 %v1610, %v1804
      %v2156 = vadd.f32 %v1611, %v1807
      %v2157 = vadd.f32 %v1612, %v1809
      %v2158 = vadd.f32 %v1613, %v1811
      %v2159 = vadd.f32 %v1614, %v1813
      %v2160 = vadd.f32 %v1615, %v1816
      %v2161 = vadd.f32 %v1616, %v1818
      %v2162 = vadd.f32 %v1617, %v1820
      %v2163 = vadd.f32 %v1618, %v1822
      %v2164 = vadd.f32 %v1619, %v1825
      %v2165 = vadd.f32 %v1620, %v1827
      %v2166 = vadd.f32 %v1621, %v1829
      %v2167 = vadd.f32 %v1622, %v1831
      %v2168 = vadd.f32 %v1623, %v1834
      %v2169 = vadd.f32 %v1624, %v1836
      %v2170 = vadd.f32 %v1625, %v1838
      %v2171 = vadd.f32 %v1626, %v1840
      %v2172 = vadd.f32 %v1627, %v1843
      %v2173 = vadd.f32 %v1628, %v1845
      %v2174 = vadd.f32 %v1629, %v1847
      %v2175 = vadd.f32 %v1630, %v1849
      %v2176 = vadd.f32 %v1631, %v1852
      %v2177 = vadd.f32 %v1632, %v1854
      %v2178 = vadd.f32 %v1633, %v1856
      %v2179 = vadd.f32 %v1634, %v1858
      %v2180 = vadd.f32 %v1635, %v1861
      %v2181 = vadd.f32 %v1636, %v1863
      %v2182 = vadd.f32 %v1637, %v1865
      %v2183 = vadd.f32 %v1638, %v1867
      %v2184 = vadd.f32 %v1639, %v1870
      %v2185 = vadd.f32 %v1640, %v1872
      %v2186 = vadd.f32 %v1641, %v1874
      %v2187 = vadd.f32 %v1642, %v1876
      %v2188 = vadd.f32 %v1643, %v1879
      %v2189 = vadd.f32 %v1644, %v1881
      %v2190 = vadd.f32 %v1645, %v1883
      %v2191 = vadd.f32 %v1646, %v1885
      %v2192 = vadd.f32 %v1647, %v1888
      %v2193 = vadd.f32 %v1648, %v1890
      %v2194 = vadd.f32 %v1649, %v1892
      %v2195 = vadd.f32 %v1650, %v1894
      %v2196 = vadd.f32 %v1651, %v1897
      %v2197 = vadd.f32 %v1652, %v1899
      %v2198 = vadd.f32 %v1653, %v1901
      %v2199 = vadd.f32 %v1654, %v1903
      %v2200 = vadd.f32 %v1655, %v1906
      %v2201 = vadd.f32 %v1656, %v1908
      %v2202 = vadd.f32 %v1657, %v1910
      %v2203 = vadd.f32 %v1658, %v1912
      %v2204 = vadd.f32 %v1659, %v1915
      %v2205 = vadd.f32 %v1660, %v1917
      %v2206 = vadd.f32 %v1661, %v1919
      %v2207 = vadd.f32 %v1662, %v1921
      %v2208 = vadd.f32 %v1663, %v1924
      %v2209 = vadd.f32 %v1664, %v1926
      %v2210 = vadd.f32 %v1665, %v1928
      %v2211 = vadd.f32 %v1666, %v1930
      %v2212 = vadd.f32 %v1667, %v1933
      %v2213 = vadd.f32 %v1668, %v1935
      %v2214 = vadd.f32 %v1669, %v1937
      %v2215 = vadd.f32 %v1670, %v1939
      %v2216 = vadd.f32 %v1671, %v1942
      %v2217 = vadd.f32 %v1672, %v1944
      %v2218 = vadd.f32 %v1673, %v1946
      %v2219 = vadd.f32 %v1674, %v1948
      %v2220 = vadd.f32 %v1675, %v1951
      %v2221 = vadd.f32 %v1676, %v1953
      %v2222 = vadd.f32 %v1677, %v1955
      %v2223 = vadd.f32 %v1678, %v1957
      %v2224 = vadd.f32 %v1679, %v1960
      %v2225 = vadd.f32 %v1680, %v1962
      %v2226 = vadd.f32 %v1681, %v1964
      %v2227 = vadd.f32 %v1682, %v1966
      %v2228 = vadd.f32 %v1683, %v1969
      %v2229 = vadd.f32 %v1684, %v1971
      %v2230 = vadd.f32 %v1685, %v1973
      %v2231 = vadd.f32 %v1686, %v1975
      %v2232 = vmul.f32 %v2104, 0.11111111
      %v2233 = vmul.f32 %v2105, 0.11111111
      %v2234 = vmul.f32 %v2106, 0.11111111
      %v2235 = vmul.f32 %v2107, 0.11111111
      %v2236 = vmul.f32 %v2108, 0.11111111
      %v2237 = vmul.f32 %v2109, 0.11111111
      %v2238 = vmul.f32 %v2110, 0.11111111
      %v2239 = vmul.f32 %v2111, 0.11111111
      %v2240 = vmul.f32 %v2112, 0.11111111
      %v2241 = vmul.f32 %v2113, 0.11111111
      %v2242 = vmul.f32 %v2114, 0.11111111
      %v2243 = vmul.f32 %v2115, 0.11111111
      %v2244 = vmul.f32 %v2116, 0.11111111
      %v2245 = vmul.f32 %v2117, 0.11111111
      %v2246 = vmul.f32 %v2118, 0.11111111
      %v2247 = vmul.f32 %v2119, 0.11111111
      %v2248 = vmul.f32 %v2120, 0.11111111
      %v2249 = vmul.f32 %v2121, 0.11111111
      %v2250 = vmul.f32 %v2122, 0.11111111
      %v2251 = vmul.f32 %v2123, 0.11111111
      %v2252 = vmul.f32 %v2124, 0.11111111
      %v2253 = vmul.f32 %v2125, 0.11111111
      %v2254 = vmul.f32 %v2126, 0.11111111
      %v2255 = vmul.f32 %v2127, 0.11111111
      %v2256 = vmul.f32 %v2128, 0.11111111
      %v2257 = vmul.f32 %v2129, 0.11111111
      %v2258 = vmul.f32 %v2130, 0.11111111
      %v2259 = vmul.f32 %v2131, 0.11111111
      %v2260 = vmul.f32 %v2132, 0.11111111
      %v2261 = vmul.f32 %v2133, 0.11111111
      %v2262 = vmul.f32 %v2134, 0.11111111
      %v2263 = vmul.f32 %v2135, 0.11111111
      %v2264 = vmul.f32 %v2136, 0.11111111
      %v2265 = vmul.f32 %v2137, 0.11111111
      %v2266 = vmul.f32 %v2138, 0.11111111
      %v2267 = vmul.f32 %v2139, 0.11111111
      %v2268 = vmul.f32 %v2140, 0.11111111
      %v2269 = vmul.f32 %v2141, 0.11111111
      %v2270 = vmul.f32 %v2142, 0.11111111
      %v2271 = vmul.f32 %v2143, 0.11111111
      %v2272 = vmul.f32 %v2144, 0.11111111
      %v2273 = vmul.f32 %v2145, 0.11111111
      %v2274 = vmul.f32 %v2146, 0.11111111
      %v2275 = vmul.f32 %v2147, 0.11111111
      %v2276 = vmul.f32 %v2148, 0.11111111
      %v2277 = vmul.f32 %v2149, 0.11111111
      %v2278 = vmul.f32 %v2150, 0.11111111
      %v2279 = vmul.f32 %v2151, 0.11111111
      %v2280 = vmul.f32 %v2152, 0.11111111
      %v2281 = vmul.f32 %v2153, 0.11111111
      %v2282 = vmul.f32 %v2154, 0.11111111
      %v2283 = vmul.f32 %v2155, 0.11111111
      %v2284 = vmul.f32 %v2156, 0.11111111
      %v2285 = vmul.f32 %v2157, 0.11111111
      %v2286 = vmul.f32 %v2158, 0.11111111
      %v2287 = vmul.f32 %v2159, 0.11111111
      %v2288 = vmul.f32 %v2160, 0.11111111
      %v2289 = vmul.f32 %v2161, 0.11111111
      %v2290 = vmul.f32 %v2162, 0.11111111
      %v2291 = vmul.f32 %v2163, 0.11111111
      %v2292 = vmul.f32 %v2164, 0.11111111
      %v2293 = vmul.f32 %v2165, 0.11111111
      %v2294 = vmul.f32 %v2166, 0.11111111
      %v2295 = vmul.f32 %v2167, 0.11111111
      %v2296 = vmul.f32 %v2168, 0.11111111
      %v2297 = vmul.f32 %v2169, 0.11111111
      %v2298 = vmul.f32 %v2170, 0.11111111
      %v2299 = vmul.f32 %v2171, 0.11111111
      %v2300 = vmul.f32 %v2172, 0.11111111
      %v2301 = vmul.f32 %v2173, 0.11111111
      %v2302 = vmul.f32 %v2174, 0.11111111
      %v2303 = vmul.f32 %v2175, 0.11111111
      %v2304 = vmul.f32 %v2176, 0.11111111
      %v2305 = vmul.f32 %v2177, 0.11111111
      %v2306 = vmul.f32 %v2178, 0.11111111
      %v2307 = vmul.f32 %v2179, 0.11111111
      %v2308 = vmul.f32 %v2180, 0.11111111
      %v2309 = vmul.f32 %v2181, 0.11111111
      %v2310 = vmul.f32 %v2182, 0.11111111
      %v2311 = vmul.f32 %v2183, 0.11111111
      %v2312 = vmul.f32 %v2184, 0.11111111
      %v2313 = vmul.f32 %v2185, 0.11111111
      %v2314 = vmul.f32 %v2186, 0.11111111
      %v2315 = vmul.f32 %v2187, 0.11111111
      %v2316 = vmul.f32 %v2188, 0.11111111
      %v2317 = vmul.f32 %v2189, 0.11111111
      %v2318 = vmul.f32 %v2190, 0.11111111
      %v2319 = vmul.f32 %v2191, 0.11111111
      %v2320 = vmul.f32 %v2192, 0.11111111
      %v2321 = vmul.f32 %v2193, 0.11111111
      %v2322 = vmul.f32 %v2194, 0.11111111
      %v2323 = vmul.f32 %v2195, 0.11111111
      %v2324 = vmul.f32 %v2196, 0.11111111
      %v2325 = vmul.f32 %v2197, 0.11111111
      %v2326 = vmul.f32 %v2198, 0.11111111
      %v2327 = vmul.f32 %v2199, 0.11111111
      %v2328 = vmul.f32 %v2200, 0.11111111
      %v2329 = vmul.f32 %v2201, 0.11111111
      %v2330 = vmul.f32 %v2202, 0.11111111
      %v2331 = vmul.f32 %v2203, 0.11111111
      %v2332 = vmul.f32 %v2204, 0.11111111
      %v2333 = vmul.f32 %v2205, 0.11111111
      %v2334 = vmul.f32 %v2206, 0.11111111
      %v2335 = vmul.f32 %v2207, 0.11111111
      %v2336 = vmul.f32 %v2208, 0.11111111
      %v2337 = vmul.f32 %v2209, 0.11111111
      %v2338 = vmul.f32 %v2210, 0.11111111
      %v2339 = vmul.f32 %v2211, 0.11111111
      %v2340 = vmul.f32 %v2212, 0.11111111
      %v2341 = vmul.f32 %v2213, 0.11111111
      %v2342 = vmul.f32 %v2214, 0.11111111
      %v2343 = vmul.f32 %v2215, 0.11111111
      %v2344 = vmul.f32 %v2216, 0.11111111
      %v2345 = vmul.f32 %v2217, 0.11111111
      %v2346 = vmul.f32 %v2218, 0.11111111
      %v2347 = vmul.f32 %v2219, 0.11111111
      %v2348 = vmul.f32 %v2220, 0.11111111
      %v2349 = vmul.f32 %v2221, 0.11111111
      %v2350 = vmul.f32 %v2222, 0.11111111
      %v2351 = vmul.f32 %v2223, 0.11111111
      %v2352 = vmul.f32 %v2224, 0.11111111
      %v2353 = vmul.f32 %v2225, 0.11111111
      %v2354 = vmul.f32 %v2226, 0.11111111
      %v2355 = vmul.f32 %v2227, 0.11111111
      %v2356 = vmul.f32 %v2228, 0.11111111
      %v2357 = vmul.f32 %v2229, 0.11111111
      %v2358 = vmul.f32 %v2230, 0.11111111
      %v2359 = vmul.f32 %v2231, 0.11111111
      %v2360 = vmul.f32 %v2232, %v2232
      %v2361 = vmul.f32 %v2233, %v2233
      %v2362 = vmul.f32 %v2234, %v2234
      %v2363 = vmul.f32 %v2235, %v2235
      %v2364 = vmul.f32 %v2236, %v2236
      %v2365 = vmul.f32 %v2237, %v2237
      %v2366 = vmul.f32 %v2238, %v2238
      %v2367 = vmul.f32 %v2239, %v2239
      %v2368 = vmul.f32 %v2240, %v2240
      %v2369 = vmul.f32 %v2241, %v2241
      %v2370 = vmul.f32 %v2242, %v2242
      %v2371 = vmul.f32 %v2243, %v2243
      %v2372 = vmul.f32 %v2244, %v2244
      %v2373 = vmul.f32 %v2245, %v2245
      %v2374 = vmul.f32 %v2246, %v2246
      %v2375 = vmul.f32 %v2247, %v2247
      %v2376 = vmul.f32 %v2248, %v2248
      %v2377 = vmul.f32 %v2249, %v2249
      %v2378 = vmul.f32 %v2250, %v2250
      %v2379 = vmul.f32 %v2251, %v2251
      %v2380 = vmul.f32 %v2252, %v2252
      %v2381 = vmul.f32 %v2253, %v2253
      %v2382 = vmul.f32 %v2254, %v2254
      %v2383 = vmul.f32 %v2255, %v2255
      %v2384 = vmul.f32 %v2256, %v2256
      %v2385 = vmul.f32 %v2257, %v2257
      %v2386 = vmul.f32 %v2258, %v2258
      %v2387 = vmul.f32 %v2259, %v2259
      %v2388 = vmul.f32 %v2260, %v2260
      %v2389 = vmul.f32 %v2261, %v2261
      %v2390 = vmul.f32 %v2262, %v2262
      %v2391 = vmul.f32 %v2263, %v2263
      %v2392 = vmul.f32 %v2264, %v2264
      %v2393 = vmul.f32 %v2265, %v2265
      %v2394 = vmul.f32 %v2266, %v2266
      %v2395 = vmul.f32 %v2267, %v2267
      %v2396 = vmul.f32 %v2268, %v2268
      %v2397 = vmul.f32 %v2269, %v2269
      %v2398 = vmul.f32 %v2270, %v2270
      %v2399 = vmul.f32 %v2271, %v2271
      %v2400 = vmul.f32 %v2272, %v2272
      %v2401 = vmul.f32 %v2273, %v2273
      %v2402 = vmul.f32 %v2274, %v2274
      %v2403 = vmul.f32 %v2275, %v2275
      %v2404 = vmul.f32 %v2276, %v2276
      %v2405 = vmul.f32 %v2277, %v2277
      %v2406 = vmul.f32 %v2278, %v2278
      %v2407 = vmul.f32 %v2279, %v2279
      %v2408 = vmul.f32 %v2280, %v2280
      %v2409 = vmul.f32 %v2281, %v2281
      %v2410 = vmul.f32 %v2282, %v2282
      %v2411 = vmul.f32 %v2283, %v2283
      %v2412 = vmul.f32 %v2284, %v2284
      %v2413 = vmul.f32 %v2285, %v2285
      %v2414 = vmul.f32 %v2286, %v2286
      %v2415 = vmul.f32 %v2287, %v2287
      %v2416 = vmul.f32 %v2288, %v2288
      %v2417 = vmul.f32 %v2289, %v2289
      %v2418 = vmul.f32 %v2290, %v2290
      %v2419 = vmul.f32 %v2291, %v2291
      %v2420 = vmul.f32 %v2292, %v2292
      %v2421 = vmul.f32 %v2293, %v2293
      %v2422 = vmul.f32 %v2294, %v2294
      %v2423 = vmul.f32 %v2295, %v2295
      %v2424 = vmul.f32 %v2296, %v2296
      %v2425 = vmul.f32 %v2297, %v2297
      %v2426 = vmul.f32 %v2298, %v2298
      %v2427 = vmul.f32 %v2299, %v2299
      %v2428 = vmul.f32 %v2300, %v2300
      %v2429 = vmul.f32 %v2301, %v2301
      %v2430 = vmul.f32 %v2302, %v2302
      %v2431 = vmul.f32 %v2303, %v2303
      %v2432 = vmul.f32 %v2304, %v2304
      %v2433 = vmul.f32 %v2305, %v2305
      %v2434 = vmul.f32 %v2306, %v2306
      %v2435 = vmul.f32 %v2307, %v2307
      %v2436 = vmul.f32 %v2308, %v2308
      %v2437 = vmul.f32 %v2309, %v2309
      %v2438 = vmul.f32 %v2310, %v2310
      %v2439 = vmul.f32 %v2311, %v2311
      %v2440 = vmul.f32 %v2312, %v2312
      %v2441 = vmul.f32 %v2313, %v2313
      %v2442 = vmul.f32 %v2314, %v2314
      %v2443 = vmul.f32 %v2315, %v2315
      %v2444 = vmul.f32 %v2316, %v2316
      %v2445 = vmul.f32 %v2317, %v2317
      %v2446 = vmul.f32 %v2318, %v2318
      %v2447 = vmul.f32 %v2319, %v2319
      %v2448 = vmul.f32 %v2320, %v2320
      %v2449 = vmul.f32 %v2321, %v2321
      %v2450 = vmul.f32 %v2322, %v2322
      %v2451 = vmul.f32 %v2323, %v2323
      %v2452 = vmul.f32 %v2324, %v2324
      %v2453 = vmul.f32 %v2325, %v2325
      %v2454 = vmul.f32 %v2326, %v2326
      %v2455 = vmul.f32 %v2327, %v2327
      %v2456 = vmul.f32 %v2328, %v2328
      %v2457 = vmul.f32 %v2329, %v2329
      %v2458 = vmul.f32 %v2330, %v2330
      %v2459 = vmul.f32 %v2331, %v2331
      %v2460 = vmul.f32 %v2332, %v2332
      %v2461 = vmul.f32 %v2333, %v2333
      %v2462 = vmul.f32 %v2334, %v2334
      %v2463 = vmul.f32 %v2335, %v2335
      %v2464 = vmul.f32 %v2336, %v2336
      %v2465 = vmul.f32 %v2337, %v2337
      %v2466 = vmul.f32 %v2338, %v2338
      %v2467 = vmul.f32 %v2339, %v2339
      %v2468 = vmul.f32 %v2340, %v2340
      %v2469 = vmul.f32 %v2341, %v2341
      %v2470 = vmul.f32 %v2342, %v2342
      %v2471 = vmul.f32 %v2343, %v2343
      %v2472 = vmul.f32 %v2344, %v2344
      %v2473 = vmul.f32 %v2345, %v2345
      %v2474 = vmul.f32 %v2346, %v2346
      %v2475 = vmul.f32 %v2347, %v2347
      %v2476 = vmul.f32 %v2348, %v2348
      %v2477 = vmul.f32 %v2349, %v2349
      %v2478 = vmul.f32 %v2350, %v2350
      %v2479 = vmul.f32 %v2351, %v2351
      %v2480 = vmul.f32 %v2352, %v2352
      %v2481 = vmul.f32 %v2353, %v2353
      %v2482 = vmul.f32 %v2354, %v2354
      %v2483 = vmul.f32 %v2355, %v2355
      %v2484 = vmul.f32 %v2356, %v2356
      %v2485 = vmul.f32 %v2357, %v2357
      %v2486 = vmul.f32 %v2358, %v2358
      %v2487 = vmul.f32 %v2359, %v2359
      %vm2488 = vcmask 523264
      %v2489 = vsel %vm2488, %v2360, 0.0
      %2490 = vadd.xlane.f32.xlu0 %v2489
      %v2491 = vpop.xlane.xlu0 %2490
      %v2492 = vsel %vm2488, %v2361, 0.0
      %2493 = vadd.xlane.f32.xlu0 %v2492
      %v2494 = vpop.xlane.xlu0 %2493
      %v2495 = vsel %vm2488, %v2362, 0.0
      %2496 = vadd.xlane.f32.xlu0 %v2495
      %v2497 = vpop.xlane.xlu0 %2496
      %v2498 = vsel %vm2488, %v2363, 0.0
      %2499 = vadd.xlane.f32.xlu0 %v2498
      %v2500 = vpop.xlane.xlu0 %2499
      %v2501 = vsel %vm2488, %v2364, 0.0
      %2502 = vadd.xlane.f32.xlu0 %v2501
      %v2503 = vpop.xlane.xlu0 %2502
      %v2504 = vsel %vm2488, %v2365, 0.0
      %2505 = vadd.xlane.f32.xlu0 %v2504
      %v2506 = vpop.xlane.xlu0 %2505
      %v2507 = vsel %vm2488, %v2366, 0.0
      %2508 = vadd.xlane.f32.xlu0 %v2507
      %v2509 = vpop.xlane.xlu0 %2508
      %v2510 = vsel %vm2488, %v2367, 0.0
      %2511 = vadd.xlane.f32.xlu0 %v2510
      %v2512 = vpop.xlane.xlu0 %2511
      %v2513 = vsel %vm2488, %v2368, 0.0
      %2514 = vadd.xlane.f32.xlu0 %v2513
      %v2515 = vpop.xlane.xlu0 %2514
      %v2516 = vsel %vm2488, %v2369, 0.0
      %2517 = vadd.xlane.f32.xlu0 %v2516
      %v2518 = vpop.xlane.xlu0 %2517
      %v2519 = vsel %vm2488, %v2370, 0.0
      %2520 = vadd.xlane.f32.xlu0 %v2519
      %v2521 = vpop.xlane.xlu0 %2520
      %v2522 = vsel %vm2488, %v2371, 0.0
      %2523 = vadd.xlane.f32.xlu0 %v2522
      %v2524 = vpop.xlane.xlu0 %2523
      %v2525 = vsel %vm2488, %v2372, 0.0
      %2526 = vadd.xlane.f32.xlu0 %v2525
      %v2527 = vpop.xlane.xlu0 %2526
      %v2528 = vsel %vm2488, %v2373, 0.0
      %2529 = vadd.xlane.f32.xlu0 %v2528
      %v2530 = vpop.xlane.xlu0 %2529
      %v2531 = vsel %vm2488, %v2374, 0.0
      %2532 = vadd.xlane.f32.xlu0 %v2531
      %v2533 = vpop.xlane.xlu0 %2532
      %v2534 = vsel %vm2488, %v2375, 0.0
      %2535 = vadd.xlane.f32.xlu0 %v2534
      %v2536 = vpop.xlane.xlu0 %2535
      %v2537 = vsel %vm2488, %v2376, 0.0
      %2538 = vadd.xlane.f32.xlu0 %v2537
      %v2539 = vpop.xlane.xlu0 %2538
      %v2540 = vsel %vm2488, %v2377, 0.0
      %2541 = vadd.xlane.f32.xlu0 %v2540
      %v2542 = vpop.xlane.xlu0 %2541
      %v2543 = vsel %vm2488, %v2378, 0.0
      %2544 = vadd.xlane.f32.xlu0 %v2543
      %v2545 = vpop.xlane.xlu0 %2544
      %v2546 = vsel %vm2488, %v2379, 0.0
      %2547 = vadd.xlane.f32.xlu0 %v2546
      %v2548 = vpop.xlane.xlu0 %2547
      %v2549 = vsel %vm2488, %v2380, 0.0
      %2550 = vadd.xlane.f32.xlu0 %v2549
      %v2551 = vpop.xlane.xlu0 %2550
      %v2552 = vsel %vm2488, %v2381, 0.0
      %2553 = vadd.xlane.f32.xlu0 %v2552
      %v2554 = vpop.xlane.xlu0 %2553
      %v2555 = vsel %vm2488, %v2382, 0.0
      %2556 = vadd.xlane.f32.xlu0 %v2555
      %v2557 = vpop.xlane.xlu0 %2556
      %v2558 = vsel %vm2488, %v2383, 0.0
      %2559 = vadd.xlane.f32.xlu0 %v2558
      %v2560 = vpop.xlane.xlu0 %2559
      %v2561 = vsel %vm2488, %v2384, 0.0
      %2562 = vadd.xlane.f32.xlu0 %v2561
      %v2563 = vpop.xlane.xlu0 %2562
      %v2564 = vsel %vm2488, %v2385, 0.0
      %2565 = vadd.xlane.f32.xlu0 %v2564
      %v2566 = vpop.xlane.xlu0 %2565
      %v2567 = vsel %vm2488, %v2386, 0.0
      %2568 = vadd.xlane.f32.xlu0 %v2567
      %v2569 = vpop.xlane.xlu0 %2568
      %v2570 = vsel %vm2488, %v2387, 0.0
      %2571 = vadd.xlane.f32.xlu0 %v2570
      %v2572 = vpop.xlane.xlu0 %2571
      %v2573 = vsel %vm2488, %v2388, 0.0
      %2574 = vadd.xlane.f32.xlu0 %v2573
      %v2575 = vpop.xlane.xlu0 %2574
      %v2576 = vsel %vm2488, %v2389, 0.0
      %2577 = vadd.xlane.f32.xlu0 %v2576
      %v2578 = vpop.xlane.xlu0 %2577
      %v2579 = vsel %vm2488, %v2390, 0.0
      %2580 = vadd.xlane.f32.xlu0 %v2579
      %v2581 = vpop.xlane.xlu0 %2580
      %v2582 = vsel %vm2488, %v2391, 0.0
      %2583 = vadd.xlane.f32.xlu0 %v2582
      %v2584 = vpop.xlane.xlu0 %2583
      %v2585 = vsel %vm2488, %v2392, 0.0
      %2586 = vadd.xlane.f32.xlu0 %v2585
      %v2587 = vpop.xlane.xlu0 %2586
      %v2588 = vsel %vm2488, %v2393, 0.0
      %2589 = vadd.xlane.f32.xlu0 %v2588
      %v2590 = vpop.xlane.xlu0 %2589
      %v2591 = vsel %vm2488, %v2394, 0.0
      %2592 = vadd.xlane.f32.xlu0 %v2591
      %v2593 = vpop.xlane.xlu0 %2592
      %v2594 = vsel %vm2488, %v2395, 0.0
      %2595 = vadd.xlane.f32.xlu0 %v2594
      %v2596 = vpop.xlane.xlu0 %2595
      %v2597 = vsel %vm2488, %v2396, 0.0
      %2598 = vadd.xlane.f32.xlu0 %v2597
      %v2599 = vpop.xlane.xlu0 %2598
      %v2600 = vsel %vm2488, %v2397, 0.0
      %2601 = vadd.xlane.f32.xlu0 %v2600
      %v2602 = vpop.xlane.xlu0 %2601
      %v2603 = vsel %vm2488, %v2398, 0.0
      %2604 = vadd.xlane.f32.xlu0 %v2603
      %v2605 = vpop.xlane.xlu0 %2604
      %v2606 = vsel %vm2488, %v2399, 0.0
      %2607 = vadd.xlane.f32.xlu0 %v2606
      %v2608 = vpop.xlane.xlu0 %2607
      %v2609 = vsel %vm2488, %v2400, 0.0
      %2610 = vadd.xlane.f32.xlu0 %v2609
      %v2611 = vpop.xlane.xlu0 %2610
      %v2612 = vsel %vm2488, %v2401, 0.0
      %2613 = vadd.xlane.f32.xlu0 %v2612
      %v2614 = vpop.xlane.xlu0 %2613
      %v2615 = vsel %vm2488, %v2402, 0.0
      %2616 = vadd.xlane.f32.xlu0 %v2615
      %v2617 = vpop.xlane.xlu0 %2616
      %v2618 = vsel %vm2488, %v2403, 0.0
      %2619 = vadd.xlane.f32.xlu0 %v2618
      %v2620 = vpop.xlane.xlu0 %2619
      %v2621 = vsel %vm2488, %v2404, 0.0
      %2622 = vadd.xlane.f32.xlu0 %v2621
      %v2623 = vpop.xlane.xlu0 %2622
      %v2624 = vsel %vm2488, %v2405, 0.0
      %2625 = vadd.xlane.f32.xlu0 %v2624
      %v2626 = vpop.xlane.xlu0 %2625
      %v2627 = vsel %vm2488, %v2406, 0.0
      %2628 = vadd.xlane.f32.xlu0 %v2627
      %v2629 = vpop.xlane.xlu0 %2628
      %v2630 = vsel %vm2488, %v2407, 0.0
      %2631 = vadd.xlane.f32.xlu0 %v2630
      %v2632 = vpop.xlane.xlu0 %2631
      %v2633 = vsel %vm2488, %v2408, 0.0
      %2634 = vadd.xlane.f32.xlu0 %v2633
      %v2635 = vpop.xlane.xlu0 %2634
      %v2636 = vsel %vm2488, %v2409, 0.0
      %2637 = vadd.xlane.f32.xlu0 %v2636
      %v2638 = vpop.xlane.xlu0 %2637
      %v2639 = vsel %vm2488, %v2410, 0.0
      %2640 = vadd.xlane.f32.xlu0 %v2639
      %v2641 = vpop.xlane.xlu0 %2640
      %v2642 = vsel %vm2488, %v2411, 0.0
      %2643 = vadd.xlane.f32.xlu0 %v2642
      %v2644 = vpop.xlane.xlu0 %2643
      %v2645 = vsel %vm2488, %v2412, 0.0
      %2646 = vadd.xlane.f32.xlu0 %v2645
      %v2647 = vpop.xlane.xlu0 %2646
      %v2648 = vsel %vm2488, %v2413, 0.0
      %2649 = vadd.xlane.f32.xlu0 %v2648
      %v2650 = vpop.xlane.xlu0 %2649
      %v2651 = vsel %vm2488, %v2414, 0.0
      %2652 = vadd.xlane.f32.xlu0 %v2651
      %v2653 = vpop.xlane.xlu0 %2652
      %v2654 = vsel %vm2488, %v2415, 0.0
      %2655 = vadd.xlane.f32.xlu0 %v2654
      %v2656 = vpop.xlane.xlu0 %2655
      %v2657 = vsel %vm2488, %v2416, 0.0
      %2658 = vadd.xlane.f32.xlu0 %v2657
      %v2659 = vpop.xlane.xlu0 %2658
      %v2660 = vsel %vm2488, %v2417, 0.0
      %2661 = vadd.xlane.f32.xlu0 %v2660
      %v2662 = vpop.xlane.xlu0 %2661
      %v2663 = vsel %vm2488, %v2418, 0.0
      %2664 = vadd.xlane.f32.xlu0 %v2663
      %v2665 = vpop.xlane.xlu0 %2664
      %v2666 = vsel %vm2488, %v2419, 0.0
      %2667 = vadd.xlane.f32.xlu0 %v2666
      %v2668 = vpop.xlane.xlu0 %2667
      %v2669 = vsel %vm2488, %v2420, 0.0
      %2670 = vadd.xlane.f32.xlu0 %v2669
      %v2671 = vpop.xlane.xlu0 %2670
      %v2672 = vsel %vm2488, %v2421, 0.0
      %2673 = vadd.xlane.f32.xlu0 %v2672
      %v2674 = vpop.xlane.xlu0 %2673
      %v2675 = vsel %vm2488, %v2422, 0.0
      %2676 = vadd.xlane.f32.xlu0 %v2675
      %v2677 = vpop.xlane.xlu0 %2676
      %v2678 = vsel %vm2488, %v2423, 0.0
      %2679 = vadd.xlane.f32.xlu0 %v2678
      %v2680 = vpop.xlane.xlu0 %2679
      %v2681 = vsel %vm2488, %v2424, 0.0
      %2682 = vadd.xlane.f32.xlu0 %v2681
      %v2683 = vpop.xlane.xlu0 %2682
      %v2684 = vsel %vm2488, %v2425, 0.0
      %2685 = vadd.xlane.f32.xlu0 %v2684
      %v2686 = vpop.xlane.xlu0 %2685
      %v2687 = vsel %vm2488, %v2426, 0.0
      %2688 = vadd.xlane.f32.xlu0 %v2687
      %v2689 = vpop.xlane.xlu0 %2688
      %v2690 = vsel %vm2488, %v2427, 0.0
      %2691 = vadd.xlane.f32.xlu0 %v2690
      %v2692 = vpop.xlane.xlu0 %2691
      %v2693 = vsel %vm2488, %v2428, 0.0
      %2694 = vadd.xlane.f32.xlu0 %v2693
      %v2695 = vpop.xlane.xlu0 %2694
      %v2696 = vsel %vm2488, %v2429, 0.0
      %2697 = vadd.xlane.f32.xlu0 %v2696
      %v2698 = vpop.xlane.xlu0 %2697
      %v2699 = vsel %vm2488, %v2430, 0.0
      %2700 = vadd.xlane.f32.xlu0 %v2699
      %v2701 = vpop.xlane.xlu0 %2700
      %v2702 = vsel %vm2488, %v2431, 0.0
      %2703 = vadd.xlane.f32.xlu0 %v2702
      %v2704 = vpop.xlane.xlu0 %2703
      %v2705 = vsel %vm2488, %v2432, 0.0
      %2706 = vadd.xlane.f32.xlu0 %v2705
      %v2707 = vpop.xlane.xlu0 %2706
      %v2708 = vsel %vm2488, %v2433, 0.0
      %2709 = vadd.xlane.f32.xlu0 %v2708
      %v2710 = vpop.xlane.xlu0 %2709
      %v2711 = vsel %vm2488, %v2434, 0.0
      %2712 = vadd.xlane.f32.xlu0 %v2711
      %v2713 = vpop.xlane.xlu0 %2712
      %v2714 = vsel %vm2488, %v2435, 0.0
      %2715 = vadd.xlane.f32.xlu0 %v2714
      %v2716 = vpop.xlane.xlu0 %2715
      %v2717 = vsel %vm2488, %v2436, 0.0
      %2718 = vadd.xlane.f32.xlu0 %v2717
      %v2719 = vpop.xlane.xlu0 %2718
      %v2720 = vsel %vm2488, %v2437, 0.0
      %2721 = vadd.xlane.f32.xlu0 %v2720
      %v2722 = vpop.xlane.xlu0 %2721
      %v2723 = vsel %vm2488, %v2438, 0.0
      %2724 = vadd.xlane.f32.xlu0 %v2723
      %v2725 = vpop.xlane.xlu0 %2724
      %v2726 = vsel %vm2488, %v2439, 0.0
      %2727 = vadd.xlane.f32.xlu0 %v2726
      %v2728 = vpop.xlane.xlu0 %2727
      %v2729 = vsel %vm2488, %v2440, 0.0
      %2730 = vadd.xlane.f32.xlu0 %v2729
      %v2731 = vpop.xlane.xlu0 %2730
      %v2732 = vsel %vm2488, %v2441, 0.0
      %2733 = vadd.xlane.f32.xlu0 %v2732
      %v2734 = vpop.xlane.xlu0 %2733
      %v2735 = vsel %vm2488, %v2442, 0.0
      %2736 = vadd.xlane.f32.xlu0 %v2735
      %v2737 = vpop.xlane.xlu0 %2736
      %v2738 = vsel %vm2488, %v2443, 0.0
      %2739 = vadd.xlane.f32.xlu0 %v2738
      %v2740 = vpop.xlane.xlu0 %2739
      %v2741 = vsel %vm2488, %v2444, 0.0
      %2742 = vadd.xlane.f32.xlu0 %v2741
      %v2743 = vpop.xlane.xlu0 %2742
      %v2744 = vsel %vm2488, %v2445, 0.0
      %2745 = vadd.xlane.f32.xlu0 %v2744
      %v2746 = vpop.xlane.xlu0 %2745
      %v2747 = vsel %vm2488, %v2446, 0.0
      %2748 = vadd.xlane.f32.xlu0 %v2747
      %v2749 = vpop.xlane.xlu0 %2748
      %v2750 = vsel %vm2488, %v2447, 0.0
      %2751 = vadd.xlane.f32.xlu0 %v2750
      %v2752 = vpop.xlane.xlu0 %2751
      %v2753 = vsel %vm2488, %v2448, 0.0
      %2754 = vadd.xlane.f32.xlu0 %v2753
      %v2755 = vpop.xlane.xlu0 %2754
      %v2756 = vsel %vm2488, %v2449, 0.0
      %2757 = vadd.xlane.f32.xlu0 %v2756
      %v2758 = vpop.xlane.xlu0 %2757
      %v2759 = vsel %vm2488, %v2450, 0.0
      %2760 = vadd.xlane.f32.xlu0 %v2759
      %v2761 = vpop.xlane.xlu0 %2760
      %v2762 = vsel %vm2488, %v2451, 0.0
      %2763 = vadd.xlane.f32.xlu0 %v2762
      %v2764 = vpop.xlane.xlu0 %2763
      %v2765 = vsel %vm2488, %v2452, 0.0
      %2766 = vadd.xlane.f32.xlu0 %v2765
      %v2767 = vpop.xlane.xlu0 %2766
      %v2768 = vsel %vm2488, %v2453, 0.0
      %2769 = vadd.xlane.f32.xlu0 %v2768
      %v2770 = vpop.xlane.xlu0 %2769
      %v2771 = vsel %vm2488, %v2454, 0.0
      %2772 = vadd.xlane.f32.xlu0 %v2771
      %v2773 = vpop.xlane.xlu0 %2772
      %v2774 = vsel %vm2488, %v2455, 0.0
      %2775 = vadd.xlane.f32.xlu0 %v2774
      %v2776 = vpop.xlane.xlu0 %2775
      %v2777 = vsel %vm2488, %v2456, 0.0
      %2778 = vadd.xlane.f32.xlu0 %v2777
      %v2779 = vpop.xlane.xlu0 %2778
      %v2780 = vsel %vm2488, %v2457, 0.0
      %2781 = vadd.xlane.f32.xlu0 %v2780
      %v2782 = vpop.xlane.xlu0 %2781
      %v2783 = vsel %vm2488, %v2458, 0.0
      %2784 = vadd.xlane.f32.xlu0 %v2783
      %v2785 = vpop.xlane.xlu0 %2784
      %v2786 = vsel %vm2488, %v2459, 0.0
      %2787 = vadd.xlane.f32.xlu0 %v2786
      %v2788 = vpop.xlane.xlu0 %2787
      %v2789 = vsel %vm2488, %v2460, 0.0
      %2790 = vadd.xlane.f32.xlu0 %v2789
      %v2791 = vpop.xlane.xlu0 %2790
      %v2792 = vsel %vm2488, %v2461, 0.0
      %2793 = vadd.xlane.f32.xlu0 %v2792
      %v2794 = vpop.xlane.xlu0 %2793
      %v2795 = vsel %vm2488, %v2462, 0.0
      %2796 = vadd.xlane.f32.xlu0 %v2795
      %v2797 = vpop.xlane.xlu0 %2796
      %v2798 = vsel %vm2488, %v2463, 0.0
      %2799 = vadd.xlane.f32.xlu0 %v2798
      %v2800 = vpop.xlane.xlu0 %2799
      %v2801 = vsel %vm2488, %v2464, 0.0
      %2802 = vadd.xlane.f32.xlu0 %v2801
      %v2803 = vpop.xlane.xlu0 %2802
      %v2804 = vsel %vm2488, %v2465, 0.0
      %2805 = vadd.xlane.f32.xlu0 %v2804
      %v2806 = vpop.xlane.xlu0 %2805
      %v2807 = vsel %vm2488, %v2466, 0.0
      %2808 = vadd.xlane.f32.xlu0 %v2807
      %v2809 = vpop.xlane.xlu0 %2808
      %v2810 = vsel %vm2488, %v2467, 0.0
      %2811 = vadd.xlane.f32.xlu0 %v2810
      %v2812 = vpop.xlane.xlu0 %2811
      %v2813 = vsel %vm2488, %v2468, 0.0
      %2814 = vadd.xlane.f32.xlu0 %v2813
      %v2815 = vpop.xlane.xlu0 %2814
      %v2816 = vsel %vm2488, %v2469, 0.0
      %2817 = vadd.xlane.f32.xlu0 %v2816
      %v2818 = vpop.xlane.xlu0 %2817
      %v2819 = vsel %vm2488, %v2470, 0.0
      %2820 = vadd.xlane.f32.xlu0 %v2819
      %v2821 = vpop.xlane.xlu0 %2820
      %v2822 = vsel %vm2488, %v2471, 0.0
      %2823 = vadd.xlane.f32.xlu0 %v2822
      %v2824 = vpop.xlane.xlu0 %2823
      %v2825 = vsel %vm2488, %v2472, 0.0
      %2826 = vadd.xlane.f32.xlu0 %v2825
      %v2827 = vpop.xlane.xlu0 %2826
      %v2828 = vsel %vm2488, %v2473, 0.0
      %2829 = vadd.xlane.f32.xlu0 %v2828
      %v2830 = vpop.xlane.xlu0 %2829
      %v2831 = vsel %vm2488, %v2474, 0.0
      %2832 = vadd.xlane.f32.xlu0 %v2831
      %v2833 = vpop.xlane.xlu0 %2832
      %v2834 = vsel %vm2488, %v2475, 0.0
      %2835 = vadd.xlane.f32.xlu0 %v2834
      %v2836 = vpop.xlane.xlu0 %2835
      %v2837 = vsel %vm2488, %v2476, 0.0
      %2838 = vadd.xlane.f32.xlu0 %v2837
      %v2839 = vpop.xlane.xlu0 %2838
      %v2840 = vsel %vm2488, %v2477, 0.0
      %2841 = vadd.xlane.f32.xlu0 %v2840
      %v2842 = vpop.xlane.xlu0 %2841
      %v2843 = vsel %vm2488, %v2478, 0.0
      %2844 = vadd.xlane.f32.xlu0 %v2843
      %v2845 = vpop.xlane.xlu0 %2844
      %v2846 = vsel %vm2488, %v2479, 0.0
      %2847 = vadd.xlane.f32.xlu0 %v2846
      %v2848 = vpop.xlane.xlu0 %2847
      %v2849 = vsel %vm2488, %v2480, 0.0
      %2850 = vadd.xlane.f32.xlu0 %v2849
      %v2851 = vpop.xlane.xlu0 %2850
      %v2852 = vsel %vm2488, %v2481, 0.0
      %2853 = vadd.xlane.f32.xlu0 %v2852
      %v2854 = vpop.xlane.xlu0 %2853
      %v2855 = vsel %vm2488, %v2482, 0.0
      %2856 = vadd.xlane.f32.xlu0 %v2855
      %v2857 = vpop.xlane.xlu0 %2856
      %v2858 = vsel %vm2488, %v2483, 0.0
      %2859 = vadd.xlane.f32.xlu0 %v2858
      %v2860 = vpop.xlane.xlu0 %2859
      %v2861 = vsel %vm2488, %v2484, 0.0
      %2862 = vadd.xlane.f32.xlu0 %v2861
      %v2863 = vpop.xlane.xlu0 %2862
      %v2864 = vsel %vm2488, %v2485, 0.0
      %2865 = vadd.xlane.f32.xlu0 %v2864
      %v2866 = vpop.xlane.xlu0 %2865
      %v2867 = vsel %vm2488, %v2486, 0.0
      %2868 = vadd.xlane.f32.xlu0 %v2867
      %v2869 = vpop.xlane.xlu0 %2868
      %v2870 = vsel %vm2488, %v2487, 0.0
      %2871 = vadd.xlane.f32.xlu0 %v2870
      %v2872 = vpop.xlane.xlu0 %2871
      %v2873 = vmax.f32 %v2491, 1e-24
      %v2874 = vmax.f32 %v2494, 1e-24
      %v2875 = vmax.f32 %v2497, 1e-24
      %v2876 = vmax.f32 %v2500, 1e-24
      %v2877 = vmax.f32 %v2503, 1e-24
      %v2878 = vmax.f32 %v2506, 1e-24
      %v2879 = vmax.f32 %v2509, 1e-24
      %v2880 = vmax.f32 %v2512, 1e-24
      %v2881 = vmax.f32 %v2515, 1e-24
      %v2882 = vmax.f32 %v2518, 1e-24
      %v2883 = vmax.f32 %v2521, 1e-24
      %v2884 = vmax.f32 %v2524, 1e-24
      %v2885 = vmax.f32 %v2527, 1e-24
      %v2886 = vmax.f32 %v2530, 1e-24
      %v2887 = vmax.f32 %v2533, 1e-24
      %v2888 = vmax.f32 %v2536, 1e-24
      %v2889 = vmax.f32 %v2539, 1e-24
      %v2890 = vmax.f32 %v2542, 1e-24
      %v2891 = vmax.f32 %v2545, 1e-24
      %v2892 = vmax.f32 %v2548, 1e-24
      %v2893 = vmax.f32 %v2551, 1e-24
      %v2894 = vmax.f32 %v2554, 1e-24
      %v2895 = vmax.f32 %v2557, 1e-24
      %v2896 = vmax.f32 %v2560, 1e-24
      %v2897 = vmax.f32 %v2563, 1e-24
      %v2898 = vmax.f32 %v2566, 1e-24
      %v2899 = vmax.f32 %v2569, 1e-24
      %v2900 = vmax.f32 %v2572, 1e-24
      %v2901 = vmax.f32 %v2575, 1e-24
      %v2902 = vmax.f32 %v2578, 1e-24
      %v2903 = vmax.f32 %v2581, 1e-24
      %v2904 = vmax.f32 %v2584, 1e-24
      %v2905 = vmax.f32 %v2587, 1e-24
      %v2906 = vmax.f32 %v2590, 1e-24
      %v2907 = vmax.f32 %v2593, 1e-24
      %v2908 = vmax.f32 %v2596, 1e-24
      %v2909 = vmax.f32 %v2599, 1e-24
      %v2910 = vmax.f32 %v2602, 1e-24
      %v2911 = vmax.f32 %v2605, 1e-24
      %v2912 = vmax.f32 %v2608, 1e-24
      %v2913 = vmax.f32 %v2611, 1e-24
      %v2914 = vmax.f32 %v2614, 1e-24
      %v2915 = vmax.f32 %v2617, 1e-24
      %v2916 = vmax.f32 %v2620, 1e-24
      %v2917 = vmax.f32 %v2623, 1e-24
      %v2918 = vmax.f32 %v2626, 1e-24
      %v2919 = vmax.f32 %v2629, 1e-24
      %v2920 = vmax.f32 %v2632, 1e-24
      %v2921 = vmax.f32 %v2635, 1e-24
      %v2922 = vmax.f32 %v2638, 1e-24
      %v2923 = vmax.f32 %v2641, 1e-24
      %v2924 = vmax.f32 %v2644, 1e-24
      %v2925 = vmax.f32 %v2647, 1e-24
      %v2926 = vmax.f32 %v2650, 1e-24
      %v2927 = vmax.f32 %v2653, 1e-24
      %v2928 = vmax.f32 %v2656, 1e-24
      %v2929 = vmax.f32 %v2659, 1e-24
      %v2930 = vmax.f32 %v2662, 1e-24
      %v2931 = vmax.f32 %v2665, 1e-24
      %v2932 = vmax.f32 %v2668, 1e-24
      %v2933 = vmax.f32 %v2671, 1e-24
      %v2934 = vmax.f32 %v2674, 1e-24
      %v2935 = vmax.f32 %v2677, 1e-24
      %v2936 = vmax.f32 %v2680, 1e-24
      %v2937 = vmax.f32 %v2683, 1e-24
      %v2938 = vmax.f32 %v2686, 1e-24
      %v2939 = vmax.f32 %v2689, 1e-24
      %v2940 = vmax.f32 %v2692, 1e-24
      %v2941 = vmax.f32 %v2695, 1e-24
      %v2942 = vmax.f32 %v2698, 1e-24
      %v2943 = vmax.f32 %v2701, 1e-24
      %v2944 = vmax.f32 %v2704, 1e-24
      %v2945 = vmax.f32 %v2707, 1e-24
      %v2946 = vmax.f32 %v2710, 1e-24
      %v2947 = vmax.f32 %v2713, 1e-24
      %v2948 = vmax.f32 %v2716, 1e-24
      %v2949 = vmax.f32 %v2719, 1e-24
      %v2950 = vmax.f32 %v2722, 1e-24
      %v2951 = vmax.f32 %v2725, 1e-24
      %v2952 = vmax.f32 %v2728, 1e-24
      %v2953 = vmax.f32 %v2731, 1e-24
      %v2954 = vmax.f32 %v2734, 1e-24
      %v2955 = vmax.f32 %v2737, 1e-24
      %v2956 = vmax.f32 %v2740, 1e-24
      %v2957 = vmax.f32 %v2743, 1e-24
      %v2958 = vmax.f32 %v2746, 1e-24
      %v2959 = vmax.f32 %v2749, 1e-24
      %v2960 = vmax.f32 %v2752, 1e-24
      %v2961 = vmax.f32 %v2755, 1e-24
      %v2962 = vmax.f32 %v2758, 1e-24
      %v2963 = vmax.f32 %v2761, 1e-24
      %v2964 = vmax.f32 %v2764, 1e-24
      %v2965 = vmax.f32 %v2767, 1e-24
      %v2966 = vmax.f32 %v2770, 1e-24
      %v2967 = vmax.f32 %v2773, 1e-24
      %v2968 = vmax.f32 %v2776, 1e-24
      %v2969 = vmax.f32 %v2779, 1e-24
      %v2970 = vmax.f32 %v2782, 1e-24
      %v2971 = vmax.f32 %v2785, 1e-24
      %v2972 = vmax.f32 %v2788, 1e-24
      %v2973 = vmax.f32 %v2791, 1e-24
      %v2974 = vmax.f32 %v2794, 1e-24
      %v2975 = vmax.f32 %v2797, 1e-24
      %v2976 = vmax.f32 %v2800, 1e-24
      %v2977 = vmax.f32 %v2803, 1e-24
      %v2978 = vmax.f32 %v2806, 1e-24
      %v2979 = vmax.f32 %v2809, 1e-24
      %v2980 = vmax.f32 %v2812, 1e-24
      %v2981 = vmax.f32 %v2815, 1e-24
      %v2982 = vmax.f32 %v2818, 1e-24
      %v2983 = vmax.f32 %v2821, 1e-24
      %v2984 = vmax.f32 %v2824, 1e-24
      %v2985 = vmax.f32 %v2827, 1e-24
      %v2986 = vmax.f32 %v2830, 1e-24
      %v2987 = vmax.f32 %v2833, 1e-24
      %v2988 = vmax.f32 %v2836, 1e-24
      %v2989 = vmax.f32 %v2839, 1e-24
      %v2990 = vmax.f32 %v2842, 1e-24
      %v2991 = vmax.f32 %v2845, 1e-24
      %v2992 = vmax.f32 %v2848, 1e-24
      %v2993 = vmax.f32 %v2851, 1e-24
      %v2994 = vmax.f32 %v2854, 1e-24
      %v2995 = vmax.f32 %v2857, 1e-24
      %v2996 = vmax.f32 %v2860, 1e-24
      %v2997 = vmax.f32 %v2863, 1e-24
      %v2998 = vmax.f32 %v2866, 1e-24
      %v2999 = vmax.f32 %v2869, 1e-24
      %v3000 = vmax.f32 %v2872, 1e-24
      %v3001 = vrsqrt.pop %v2873
      %v3002 = vrsqrt.pop %v2874
      %v3003 = vrsqrt.pop %v2875
      %v3004 = vrsqrt.pop %v2876
      %v3005 = vrsqrt.pop %v2877
      %v3006 = vrsqrt.pop %v2878
      %v3007 = vrsqrt.pop %v2879
      %v3008 = vrsqrt.pop %v2880
      %v3009 = vrsqrt.pop %v2881
      %v3010 = vrsqrt.pop %v2882
      %v3011 = vrsqrt.pop %v2883
      %v3012 = vrsqrt.pop %v2884
      %v3013 = vrsqrt.pop %v2885
      %v3014 = vrsqrt.pop %v2886
      %v3015 = vrsqrt.pop %v2887
      %v3016 = vrsqrt.pop %v2888
      %v3017 = vrsqrt.pop %v2889
      %v3018 = vrsqrt.pop %v2890
      %v3019 = vrsqrt.pop %v2891
      %v3020 = vrsqrt.pop %v2892
      %v3021 = vrsqrt.pop %v2893
      %v3022 = vrsqrt.pop %v2894
      %v3023 = vrsqrt.pop %v2895
      %v3024 = vrsqrt.pop %v2896
      %v3025 = vrsqrt.pop %v2897
      %v3026 = vrsqrt.pop %v2898
      %v3027 = vrsqrt.pop %v2899
      %v3028 = vrsqrt.pop %v2900
      %v3029 = vrsqrt.pop %v2901
      %v3030 = vrsqrt.pop %v2902
      %v3031 = vrsqrt.pop %v2903
      %v3032 = vrsqrt.pop %v2904
      %v3033 = vrsqrt.pop %v2905
      %v3034 = vrsqrt.pop %v2906
      %v3035 = vrsqrt.pop %v2907
      %v3036 = vrsqrt.pop %v2908
      %v3037 = vrsqrt.pop %v2909
      %v3038 = vrsqrt.pop %v2910
      %v3039 = vrsqrt.pop %v2911
      %v3040 = vrsqrt.pop %v2912
      %v3041 = vrsqrt.pop %v2913
      %v3042 = vrsqrt.pop %v2914
      %v3043 = vrsqrt.pop %v2915
      %v3044 = vrsqrt.pop %v2916
      %v3045 = vrsqrt.pop %v2917
      %v3046 = vrsqrt.pop %v2918
      %v3047 = vrsqrt.pop %v2919
      %v3048 = vrsqrt.pop %v2920
      %v3049 = vrsqrt.pop %v2921
      %v3050 = vrsqrt.pop %v2922
      %v3051 = vrsqrt.pop %v2923
      %v3052 = vrsqrt.pop %v2924
      %v3053 = vrsqrt.pop %v2925
      %v3054 = vrsqrt.pop %v2926
      %v3055 = vrsqrt.pop %v2927
      %v3056 = vrsqrt.pop %v2928
      %v3057 = vrsqrt.pop %v2929
      %v3058 = vrsqrt.pop %v2930
      %v3059 = vrsqrt.pop %v2931
      %v3060 = vrsqrt.pop %v2932
      %v3061 = vrsqrt.pop %v2933
      %v3062 = vrsqrt.pop %v2934
      %v3063 = vrsqrt.pop %v2935
      %v3064 = vrsqrt.pop %v2936
      %v3065 = vrsqrt.pop %v2937
      %v3066 = vrsqrt.pop %v2938
      %v3067 = vrsqrt.pop %v2939
      %v3068 = vrsqrt.pop %v2940
      %v3069 = vrsqrt.pop %v2941
      %v3070 = vrsqrt.pop %v2942
      %v3071 = vrsqrt.pop %v2943
      %v3072 = vrsqrt.pop %v2944
      %v3073 = vrsqrt.pop %v2945
      %v3074 = vrsqrt.pop %v2946
      %v3075 = vrsqrt.pop %v2947
      %v3076 = vrsqrt.pop %v2948
      %v3077 = vrsqrt.pop %v2949
      %v3078 = vrsqrt.pop %v2950
      %v3079 = vrsqrt.pop %v2951
      %v3080 = vrsqrt.pop %v2952
      %v3081 = vrsqrt.pop %v2953
      %v3082 = vrsqrt.pop %v2954
      %v3083 = vrsqrt.pop %v2955
      %v3084 = vrsqrt.pop %v2956
      %v3085 = vrsqrt.pop %v2957
      %v3086 = vrsqrt.pop %v2958
      %v3087 = vrsqrt.pop %v2959
      %v3088 = vrsqrt.pop %v2960
      %v3089 = vrsqrt.pop %v2961
      %v3090 = vrsqrt.pop %v2962
      %v3091 = vrsqrt.pop %v2963
      %v3092 = vrsqrt.pop %v2964
      %v3093 = vrsqrt.pop %v2965
      %v3094 = vrsqrt.pop %v2966
      %v3095 = vrsqrt.pop %v2967
      %v3096 = vrsqrt.pop %v2968
      %v3097 = vrsqrt.pop %v2969
      %v3098 = vrsqrt.pop %v2970
      %v3099 = vrsqrt.pop %v2971
      %v3100 = vrsqrt.pop %v2972
      %v3101 = vrsqrt.pop %v2973
      %v3102 = vrsqrt.pop %v2974
      %v3103 = vrsqrt.pop %v2975
      %v3104 = vrsqrt.pop %v2976
      %v3105 = vrsqrt.pop %v2977
      %v3106 = vrsqrt.pop %v2978
      %v3107 = vrsqrt.pop %v2979
      %v3108 = vrsqrt.pop %v2980
      %v3109 = vrsqrt.pop %v2981
      %v3110 = vrsqrt.pop %v2982
      %v3111 = vrsqrt.pop %v2983
      %v3112 = vrsqrt.pop %v2984
      %v3113 = vrsqrt.pop %v2985
      %v3114 = vrsqrt.pop %v2986
      %v3115 = vrsqrt.pop %v2987
      %v3116 = vrsqrt.pop %v2988
      %v3117 = vrsqrt.pop %v2989
      %v3118 = vrsqrt.pop %v2990
      %v3119 = vrsqrt.pop %v2991
      %v3120 = vrsqrt.pop %v2992
      %v3121 = vrsqrt.pop %v2993
      %v3122 = vrsqrt.pop %v2994
      %v3123 = vrsqrt.pop %v2995
      %v3124 = vrsqrt.pop %v2996
      %v3125 = vrsqrt.pop %v2997
      %v3126 = vrsqrt.pop %v2998
      %v3127 = vrsqrt.pop %v2999
      %v3128 = vrsqrt.pop %v3000
      %v3129 = vmul.f32 %v2232, %v3001
      %v3130 = vmul.f32 %v2233, %v3002
      %v3131 = vmul.f32 %v2234, %v3003
      %v3132 = vmul.f32 %v2235, %v3004
      %v3133 = vmul.f32 %v2236, %v3005
      %v3134 = vmul.f32 %v2237, %v3006
      %v3135 = vmul.f32 %v2238, %v3007
      %v3136 = vmul.f32 %v2239, %v3008
      %v3137 = vmul.f32 %v2240, %v3009
      %v3138 = vmul.f32 %v2241, %v3010
      %v3139 = vmul.f32 %v2242, %v3011
      %v3140 = vmul.f32 %v2243, %v3012
      %v3141 = vmul.f32 %v2244, %v3013
      %v3142 = vmul.f32 %v2245, %v3014
      %v3143 = vmul.f32 %v2246, %v3015
      %v3144 = vmul.f32 %v2247, %v3016
      %v3145 = vmul.f32 %v2248, %v3017
      %v3146 = vmul.f32 %v2249, %v3018
      %v3147 = vmul.f32 %v2250, %v3019
      %v3148 = vmul.f32 %v2251, %v3020
      %v3149 = vmul.f32 %v2252, %v3021
      %v3150 = vmul.f32 %v2253, %v3022
      %v3151 = vmul.f32 %v2254, %v3023
      %v3152 = vmul.f32 %v2255, %v3024
      %v3153 = vmul.f32 %v2256, %v3025
      %v3154 = vmul.f32 %v2257, %v3026
      %v3155 = vmul.f32 %v2258, %v3027
      %v3156 = vmul.f32 %v2259, %v3028
      %v3157 = vmul.f32 %v2260, %v3029
      %v3158 = vmul.f32 %v2261, %v3030
      %v3159 = vmul.f32 %v2262, %v3031
      %v3160 = vmul.f32 %v2263, %v3032
      %v3161 = vmul.f32 %v2264, %v3033
      %v3162 = vmul.f32 %v2265, %v3034
      %v3163 = vmul.f32 %v2266, %v3035
      %v3164 = vmul.f32 %v2267, %v3036
      %v3165 = vmul.f32 %v2268, %v3037
      %v3166 = vmul.f32 %v2269, %v3038
      %v3167 = vmul.f32 %v2270, %v3039
      %v3168 = vmul.f32 %v2271, %v3040
      %v3169 = vmul.f32 %v2272, %v3041
      %v3170 = vmul.f32 %v2273, %v3042
      %v3171 = vmul.f32 %v2274, %v3043
      %v3172 = vmul.f32 %v2275, %v3044
      %v3173 = vmul.f32 %v2276, %v3045
      %v3174 = vmul.f32 %v2277, %v3046
      %v3175 = vmul.f32 %v2278, %v3047
      %v3176 = vmul.f32 %v2279, %v3048
      %v3177 = vmul.f32 %v2280, %v3049
      %v3178 = vmul.f32 %v2281, %v3050
      %v3179 = vmul.f32 %v2282, %v3051
      %v3180 = vmul.f32 %v2283, %v3052
      %v3181 = vmul.f32 %v2284, %v3053
      %v3182 = vmul.f32 %v2285, %v3054
      %v3183 = vmul.f32 %v2286, %v3055
      %v3184 = vmul.f32 %v2287, %v3056
      %v3185 = vmul.f32 %v2288, %v3057
      %v3186 = vmul.f32 %v2289, %v3058
      %v3187 = vmul.f32 %v2290, %v3059
      %v3188 = vmul.f32 %v2291, %v3060
      %v3189 = vmul.f32 %v2292, %v3061
      %v3190 = vmul.f32 %v2293, %v3062
      %v3191 = vmul.f32 %v2294, %v3063
      %v3192 = vmul.f32 %v2295, %v3064
      %v3193 = vmul.f32 %v2296, %v3065
      %v3194 = vmul.f32 %v2297, %v3066
      %v3195 = vmul.f32 %v2298, %v3067
      %v3196 = vmul.f32 %v2299, %v3068
      %v3197 = vmul.f32 %v2300, %v3069
      %v3198 = vmul.f32 %v2301, %v3070
      %v3199 = vmul.f32 %v2302, %v3071
      %v3200 = vmul.f32 %v2303, %v3072
      %v3201 = vmul.f32 %v2304, %v3073
      %v3202 = vmul.f32 %v2305, %v3074
      %v3203 = vmul.f32 %v2306, %v3075
      %v3204 = vmul.f32 %v2307, %v3076
      %v3205 = vmul.f32 %v2308, %v3077
      %v3206 = vmul.f32 %v2309, %v3078
      %v3207 = vmul.f32 %v2310, %v3079
      %v3208 = vmul.f32 %v2311, %v3080
      %v3209 = vmul.f32 %v2312, %v3081
      %v3210 = vmul.f32 %v2313, %v3082
      %v3211 = vmul.f32 %v2314, %v3083
      %v3212 = vmul.f32 %v2315, %v3084
      %v3213 = vmul.f32 %v2316, %v3085
      %v3214 = vmul.f32 %v2317, %v3086
      %v3215 = vmul.f32 %v2318, %v3087
      %v3216 = vmul.f32 %v2319, %v3088
      %v3217 = vmul.f32 %v2320, %v3089
      %v3218 = vmul.f32 %v2321, %v3090
      %v3219 = vmul.f32 %v2322, %v3091
      %v3220 = vmul.f32 %v2323, %v3092
      %v3221 = vmul.f32 %v2324, %v3093
      %v3222 = vmul.f32 %v2325, %v3094
      %v3223 = vmul.f32 %v2326, %v3095
      %v3224 = vmul.f32 %v2327, %v3096
      %v3225 = vmul.f32 %v2328, %v3097
      %v3226 = vmul.f32 %v2329, %v3098
      %v3227 = vmul.f32 %v2330, %v3099
      %v3228 = vmul.f32 %v2331, %v3100
      %v3229 = vmul.f32 %v2332, %v3101
      %v3230 = vmul.f32 %v2333, %v3102
      %v3231 = vmul.f32 %v2334, %v3103
      %v3232 = vmul.f32 %v2335, %v3104
      %v3233 = vmul.f32 %v2336, %v3105
      %v3234 = vmul.f32 %v2337, %v3106
      %v3235 = vmul.f32 %v2338, %v3107
      %v3236 = vmul.f32 %v2339, %v3108
      %v3237 = vmul.f32 %v2340, %v3109
      %v3238 = vmul.f32 %v2341, %v3110
      %v3239 = vmul.f32 %v2342, %v3111
      %v3240 = vmul.f32 %v2343, %v3112
      %v3241 = vmul.f32 %v2344, %v3113
      %v3242 = vmul.f32 %v2345, %v3114
      %v3243 = vmul.f32 %v2346, %v3115
      %v3244 = vmul.f32 %v2347, %v3116
      %v3245 = vmul.f32 %v2348, %v3117
      %v3246 = vmul.f32 %v2349, %v3118
      %v3247 = vmul.f32 %v2350, %v3119
      %v3248 = vmul.f32 %v2351, %v3120
      %v3249 = vmul.f32 %v2352, %v3121
      %v3250 = vmul.f32 %v2353, %v3122
      %v3251 = vmul.f32 %v2354, %v3123
      %v3252 = vmul.f32 %v2355, %v3124
      %v3253 = vmul.f32 %v2356, %v3125
      %v3254 = vmul.f32 %v2357, %v3126
      %v3255 = vmul.f32 %v2358, %v3127
      %v3256 = vmul.f32 %v2359, %v3128
      %3385 = vrot.lane.b32.xlu0 %v2360, 64
      %v3386 = vpop.permute.xlu0 %3385
      %3387 = vrot.lane.b32.xlu0 %v2361, 64
      %v3388 = vpop.permute.xlu0 %3387
      %3389 = vrot.lane.b32.xlu0 %v2362, 64
      %v3390 = vpop.permute.xlu0 %3389
      %3391 = vrot.lane.b32.xlu0 %v2363, 64
      %v3392 = vpop.permute.xlu0 %3391
      %3393 = vrot.lane.b32.xlu0 %v2364, 64
      %v3394 = vpop.permute.xlu0 %3393
      %3395 = vrot.lane.b32.xlu0 %v2365, 64
      %v3396 = vpop.permute.xlu0 %3395
      %3397 = vrot.lane.b32.xlu0 %v2366, 64
      %v3398 = vpop.permute.xlu0 %3397
      %3399 = vrot.lane.b32.xlu0 %v2367, 64
      %v3400 = vpop.permute.xlu0 %3399
      %3401 = vrot.lane.b32.xlu0 %v2368, 64
      %v3402 = vpop.permute.xlu0 %3401
      %3403 = vrot.lane.b32.xlu0 %v2369, 64
      %v3404 = vpop.permute.xlu0 %3403
      %3405 = vrot.lane.b32.xlu0 %v2370, 64
      %v3406 = vpop.permute.xlu0 %3405
      %3407 = vrot.lane.b32.xlu0 %v2371, 64
      %v3408 = vpop.permute.xlu0 %3407
      %3409 = vrot.lane.b32.xlu0 %v2372, 64
      %v3410 = vpop.permute.xlu0 %3409
      %3411 = vrot.lane.b32.xlu0 %v2373, 64
      %v3412 = vpop.permute.xlu0 %3411
      %3413 = vrot.lane.b32.xlu0 %v2374, 64
      %v3414 = vpop.permute.xlu0 %3413
      %3415 = vrot.lane.b32.xlu0 %v2375, 64
      %v3416 = vpop.permute.xlu0 %3415
      %3417 = vrot.lane.b32.xlu0 %v2376, 64
      %v3418 = vpop.permute.xlu0 %3417
      %3419 = vrot.lane.b32.xlu0 %v2377, 64
      %v3420 = vpop.permute.xlu0 %3419
      %3421 = vrot.lane.b32.xlu0 %v2378, 64
      %v3422 = vpop.permute.xlu0 %3421
      %3423 = vrot.lane.b32.xlu0 %v2379, 64
      %v3424 = vpop.permute.xlu0 %3423
      %3425 = vrot.lane.b32.xlu0 %v2380, 64
      %v3426 = vpop.permute.xlu0 %3425
      %3427 = vrot.lane.b32.xlu0 %v2381, 64
      %v3428 = vpop.permute.xlu0 %3427
      %3429 = vrot.lane.b32.xlu0 %v2382, 64
      %v3430 = vpop.permute.xlu0 %3429
      %3431 = vrot.lane.b32.xlu0 %v2383, 64
      %v3432 = vpop.permute.xlu0 %3431
      %3433 = vrot.lane.b32.xlu0 %v2384, 64
      %v3434 = vpop.permute.xlu0 %3433
      %3435 = vrot.lane.b32.xlu0 %v2385, 64
      %v3436 = vpop.permute.xlu0 %3435
      %3437 = vrot.lane.b32.xlu0 %v2386, 64
      %v3438 = vpop.permute.xlu0 %3437
      %3439 = vrot.lane.b32.xlu0 %v2387, 64
      %v3440 = vpop.permute.xlu0 %3439
      %3441 = vrot.lane.b32.xlu0 %v2388, 64
      %v3442 = vpop.permute.xlu0 %3441
      %3443 = vrot.lane.b32.xlu0 %v2389, 64
      %v3444 = vpop.permute.xlu0 %3443
      %3445 = vrot.lane.b32.xlu0 %v2390, 64
      %v3446 = vpop.permute.xlu0 %3445
      %3447 = vrot.lane.b32.xlu0 %v2391, 64
      %v3448 = vpop.permute.xlu0 %3447
      %3449 = vrot.lane.b32.xlu0 %v2392, 64
      %v3450 = vpop.permute.xlu0 %3449
      %3451 = vrot.lane.b32.xlu0 %v2393, 64
      %v3452 = vpop.permute.xlu0 %3451
      %3453 = vrot.lane.b32.xlu0 %v2394, 64
      %v3454 = vpop.permute.xlu0 %3453
      %3455 = vrot.lane.b32.xlu0 %v2395, 64
      %v3456 = vpop.permute.xlu0 %3455
      %3457 = vrot.lane.b32.xlu0 %v2396, 64
      %v3458 = vpop.permute.xlu0 %3457
      %3459 = vrot.lane.b32.xlu0 %v2397, 64
      %v3460 = vpop.permute.xlu0 %3459
      %3461 = vrot.lane.b32.xlu0 %v2398, 64
      %v3462 = vpop.permute.xlu0 %3461
      %3463 = vrot.lane.b32.xlu0 %v2399, 64
      %v3464 = vpop.permute.xlu0 %3463
      %3465 = vrot.lane.b32.xlu0 %v2400, 64
      %v3466 = vpop.permute.xlu0 %3465
      %3467 = vrot.lane.b32.xlu0 %v2401, 64
      %v3468 = vpop.permute.xlu0 %3467
      %3469 = vrot.lane.b32.xlu0 %v2402, 64
      %v3470 = vpop.permute.xlu0 %3469
      %3471 = vrot.lane.b32.xlu0 %v2403, 64
      %v3472 = vpop.permute.xlu0 %3471
      %3473 = vrot.lane.b32.xlu0 %v2404, 64
      %v3474 = vpop.permute.xlu0 %3473
      %3475 = vrot.lane.b32.xlu0 %v2405, 64
      %v3476 = vpop.permute.xlu0 %3475
      %3477 = vrot.lane.b32.xlu0 %v2406, 64
      %v3478 = vpop.permute.xlu0 %3477
      %3479 = vrot.lane.b32.xlu0 %v2407, 64
      %v3480 = vpop.permute.xlu0 %3479
      %3481 = vrot.lane.b32.xlu0 %v2408, 64
      %v3482 = vpop.permute.xlu0 %3481
      %3483 = vrot.lane.b32.xlu0 %v2409, 64
      %v3484 = vpop.permute.xlu0 %3483
      %3485 = vrot.lane.b32.xlu0 %v2410, 64
      %v3486 = vpop.permute.xlu0 %3485
      %3487 = vrot.lane.b32.xlu0 %v2411, 64
      %v3488 = vpop.permute.xlu0 %3487
      %3489 = vrot.lane.b32.xlu0 %v2412, 64
      %v3490 = vpop.permute.xlu0 %3489
      %3491 = vrot.lane.b32.xlu0 %v2413, 64
      %v3492 = vpop.permute.xlu0 %3491
      %3493 = vrot.lane.b32.xlu0 %v2414, 64
      %v3494 = vpop.permute.xlu0 %3493
      %3495 = vrot.lane.b32.xlu0 %v2415, 64
      %v3496 = vpop.permute.xlu0 %3495
      %3497 = vrot.lane.b32.xlu0 %v2416, 64
      %v3498 = vpop.permute.xlu0 %3497
      %3499 = vrot.lane.b32.xlu0 %v2417, 64
      %v3500 = vpop.permute.xlu0 %3499
      %3501 = vrot.lane.b32.xlu0 %v2418, 64
      %v3502 = vpop.permute.xlu0 %3501
      %3503 = vrot.lane.b32.xlu0 %v2419, 64
      %v3504 = vpop.permute.xlu0 %3503
      %3505 = vrot.lane.b32.xlu0 %v2420, 64
      %v3506 = vpop.permute.xlu0 %3505
      %3507 = vrot.lane.b32.xlu0 %v2421, 64
      %v3508 = vpop.permute.xlu0 %3507
      %3509 = vrot.lane.b32.xlu0 %v2422, 64
      %v3510 = vpop.permute.xlu0 %3509
      %3511 = vrot.lane.b32.xlu0 %v2423, 64
      %v3512 = vpop.permute.xlu0 %3511
      %3513 = vrot.lane.b32.xlu0 %v2424, 64
      %v3514 = vpop.permute.xlu0 %3513
      %3515 = vrot.lane.b32.xlu0 %v2425, 64
      %v3516 = vpop.permute.xlu0 %3515
      %3517 = vrot.lane.b32.xlu0 %v2426, 64
      %v3518 = vpop.permute.xlu0 %3517
      %3519 = vrot.lane.b32.xlu0 %v2427, 64
      %v3520 = vpop.permute.xlu0 %3519
      %3521 = vrot.lane.b32.xlu0 %v2428, 64
      %v3522 = vpop.permute.xlu0 %3521
      %3523 = vrot.lane.b32.xlu0 %v2429, 64
      %v3524 = vpop.permute.xlu0 %3523
      %3525 = vrot.lane.b32.xlu0 %v2430, 64
      %v3526 = vpop.permute.xlu0 %3525
      %3527 = vrot.lane.b32.xlu0 %v2431, 64
      %v3528 = vpop.permute.xlu0 %3527
      %3529 = vrot.lane.b32.xlu0 %v2432, 64
      %v3530 = vpop.permute.xlu0 %3529
      %3531 = vrot.lane.b32.xlu0 %v2433, 64
      %v3532 = vpop.permute.xlu0 %3531
      %3533 = vrot.lane.b32.xlu0 %v2434, 64
      %v3534 = vpop.permute.xlu0 %3533
      %3535 = vrot.lane.b32.xlu0 %v2435, 64
      %v3536 = vpop.permute.xlu0 %3535
      %3537 = vrot.lane.b32.xlu0 %v2436, 64
      %v3538 = vpop.permute.xlu0 %3537
      %3539 = vrot.lane.b32.xlu0 %v2437, 64
      %v3540 = vpop.permute.xlu0 %3539
      %3541 = vrot.lane.b32.xlu0 %v2438, 64
      %v3542 = vpop.permute.xlu0 %3541
      %3543 = vrot.lane.b32.xlu0 %v2439, 64
      %v3544 = vpop.permute.xlu0 %3543
      %3545 = vrot.lane.b32.xlu0 %v2440, 64
      %v3546 = vpop.permute.xlu0 %3545
      %3547 = vrot.lane.b32.xlu0 %v2441, 64
      %v3548 = vpop.permute.xlu0 %3547
      %3549 = vrot.lane.b32.xlu0 %v2442, 64
      %v3550 = vpop.permute.xlu0 %3549
      %3551 = vrot.lane.b32.xlu0 %v2443, 64
      %v3552 = vpop.permute.xlu0 %3551
      %3553 = vrot.lane.b32.xlu0 %v2444, 64
      %v3554 = vpop.permute.xlu0 %3553
      %3555 = vrot.lane.b32.xlu0 %v2445, 64
      %v3556 = vpop.permute.xlu0 %3555
      %3557 = vrot.lane.b32.xlu0 %v2446, 64
      %v3558 = vpop.permute.xlu0 %3557
      %3559 = vrot.lane.b32.xlu0 %v2447, 64
      %v3560 = vpop.permute.xlu0 %3559
      %3561 = vrot.lane.b32.xlu0 %v2448, 64
      %v3562 = vpop.permute.xlu0 %3561
      %3563 = vrot.lane.b32.xlu0 %v2449, 64
      %v3564 = vpop.permute.xlu0 %3563
      %3565 = vrot.lane.b32.xlu0 %v2450, 64
      %v3566 = vpop.permute.xlu0 %3565
      %3567 = vrot.lane.b32.xlu0 %v2451, 64
      %v3568 = vpop.permute.xlu0 %3567
      %3569 = vrot.lane.b32.xlu0 %v2452, 64
      %v3570 = vpop.permute.xlu0 %3569
      %3571 = vrot.lane.b32.xlu0 %v2453, 64
      %v3572 = vpop.permute.xlu0 %3571
      %3573 = vrot.lane.b32.xlu0 %v2454, 64
      %v3574 = vpop.permute.xlu0 %3573
      %3575 = vrot.lane.b32.xlu0 %v2455, 64
      %v3576 = vpop.permute.xlu0 %3575
      %3577 = vrot.lane.b32.xlu0 %v2456, 64
      %v3578 = vpop.permute.xlu0 %3577
      %3579 = vrot.lane.b32.xlu0 %v2457, 64
      %v3580 = vpop.permute.xlu0 %3579
      %3581 = vrot.lane.b32.xlu0 %v2458, 64
      %v3582 = vpop.permute.xlu0 %3581
      %3583 = vrot.lane.b32.xlu0 %v2459, 64
      %v3584 = vpop.permute.xlu0 %3583
      %3585 = vrot.lane.b32.xlu0 %v2460, 64
      %v3586 = vpop.permute.xlu0 %3585
      %3587 = vrot.lane.b32.xlu0 %v2461, 64
      %v3588 = vpop.permute.xlu0 %3587
      %3589 = vrot.lane.b32.xlu0 %v2462, 64
      %v3590 = vpop.permute.xlu0 %3589
      %3591 = vrot.lane.b32.xlu0 %v2463, 64
      %v3592 = vpop.permute.xlu0 %3591
      %3593 = vrot.lane.b32.xlu0 %v2464, 64
      %v3594 = vpop.permute.xlu0 %3593
      %3595 = vrot.lane.b32.xlu0 %v2465, 64
      %v3596 = vpop.permute.xlu0 %3595
      %3597 = vrot.lane.b32.xlu0 %v2466, 64
      %v3598 = vpop.permute.xlu0 %3597
      %3599 = vrot.lane.b32.xlu0 %v2467, 64
      %v3600 = vpop.permute.xlu0 %3599
      %3601 = vrot.lane.b32.xlu0 %v2468, 64
      %v3602 = vpop.permute.xlu0 %3601
      %3603 = vrot.lane.b32.xlu0 %v2469, 64
      %v3604 = vpop.permute.xlu0 %3603
      %3605 = vrot.lane.b32.xlu0 %v2470, 64
      %v3606 = vpop.permute.xlu0 %3605
      %3607 = vrot.lane.b32.xlu0 %v2471, 64
      %v3608 = vpop.permute.xlu0 %3607
      %3609 = vrot.lane.b32.xlu0 %v2472, 64
      %v3610 = vpop.permute.xlu0 %3609
      %3611 = vrot.lane.b32.xlu0 %v2473, 64
      %v3612 = vpop.permute.xlu0 %3611
      %3613 = vrot.lane.b32.xlu0 %v2474, 64
      %v3614 = vpop.permute.xlu0 %3613
      %3615 = vrot.lane.b32.xlu0 %v2475, 64
      %v3616 = vpop.permute.xlu0 %3615
      %3617 = vrot.lane.b32.xlu0 %v2476, 64
      %v3618 = vpop.permute.xlu0 %3617
      %3619 = vrot.lane.b32.xlu0 %v2477, 64
      %v3620 = vpop.permute.xlu0 %3619
      %3621 = vrot.lane.b32.xlu0 %v2478, 64
      %v3622 = vpop.permute.xlu0 %3621
      %3623 = vrot.lane.b32.xlu0 %v2479, 64
      %v3624 = vpop.permute.xlu0 %3623
      %3625 = vrot.lane.b32.xlu0 %v2480, 64
      %v3626 = vpop.permute.xlu0 %3625
      %3627 = vrot.lane.b32.xlu0 %v2481, 64
      %v3628 = vpop.permute.xlu0 %3627
      %3629 = vrot.lane.b32.xlu0 %v2482, 64
      %v3630 = vpop.permute.xlu0 %3629
      %3631 = vrot.lane.b32.xlu0 %v2483, 64
      %v3632 = vpop.permute.xlu0 %3631
      %3633 = vrot.lane.b32.xlu0 %v2484, 64
      %v3634 = vpop.permute.xlu0 %3633
      %3635 = vrot.lane.b32.xlu0 %v2485, 64
      %v3636 = vpop.permute.xlu0 %3635
      %3637 = vrot.lane.b32.xlu0 %v2486, 64
      %v3638 = vpop.permute.xlu0 %3637
      %3639 = vrot.lane.b32.xlu0 %v2487, 64
      %v3640 = vpop.permute.xlu0 %3639
      %v3769 = vsel %vm2488, %v3386, 0.0
      %3770 = vadd.xlane.f32.xlu0 %v3769
      %v3771 = vpop.xlane.xlu0 %3770
      %v3772 = vsel %vm2488, %v3388, 0.0
      %3773 = vadd.xlane.f32.xlu0 %v3772
      %v3774 = vpop.xlane.xlu0 %3773
      %v3775 = vsel %vm2488, %v3390, 0.0
      %3776 = vadd.xlane.f32.xlu0 %v3775
      %v3777 = vpop.xlane.xlu0 %3776
      %v3778 = vsel %vm2488, %v3392, 0.0
      %3779 = vadd.xlane.f32.xlu0 %v3778
      %v3780 = vpop.xlane.xlu0 %3779
      %v3781 = vsel %vm2488, %v3394, 0.0
      %3782 = vadd.xlane.f32.xlu0 %v3781
      %v3783 = vpop.xlane.xlu0 %3782
      %v3784 = vsel %vm2488, %v3396, 0.0
      %3785 = vadd.xlane.f32.xlu0 %v3784
      %v3786 = vpop.xlane.xlu0 %3785
      %v3787 = vsel %vm2488, %v3398, 0.0
      %3788 = vadd.xlane.f32.xlu0 %v3787
      %v3789 = vpop.xlane.xlu0 %3788
      %v3790 = vsel %vm2488, %v3400, 0.0
      %3791 = vadd.xlane.f32.xlu0 %v3790
      %v3792 = vpop.xlane.xlu0 %3791
      %v3793 = vsel %vm2488, %v3402, 0.0
      %3794 = vadd.xlane.f32.xlu0 %v3793
      %v3795 = vpop.xlane.xlu0 %3794
      %v3796 = vsel %vm2488, %v3404, 0.0
      %3797 = vadd.xlane.f32.xlu0 %v3796
      %v3798 = vpop.xlane.xlu0 %3797
      %v3799 = vsel %vm2488, %v3406, 0.0
      %3800 = vadd.xlane.f32.xlu0 %v3799
      %v3801 = vpop.xlane.xlu0 %3800
      %v3802 = vsel %vm2488, %v3408, 0.0
      %3803 = vadd.xlane.f32.xlu0 %v3802
      %v3804 = vpop.xlane.xlu0 %3803
      %v3805 = vsel %vm2488, %v3410, 0.0
      %3806 = vadd.xlane.f32.xlu0 %v3805
      %v3807 = vpop.xlane.xlu0 %3806
      %v3808 = vsel %vm2488, %v3412, 0.0
      %3809 = vadd.xlane.f32.xlu0 %v3808
      %v3810 = vpop.xlane.xlu0 %3809
      %v3811 = vsel %vm2488, %v3414, 0.0
      %3812 = vadd.xlane.f32.xlu0 %v3811
      %v3813 = vpop.xlane.xlu0 %3812
      %v3814 = vsel %vm2488, %v3416, 0.0
      %3815 = vadd.xlane.f32.xlu0 %v3814
      %v3816 = vpop.xlane.xlu0 %3815
      %v3817 = vsel %vm2488, %v3418, 0.0
      %3818 = vadd.xlane.f32.xlu0 %v3817
      %v3819 = vpop.xlane.xlu0 %3818
      %v3820 = vsel %vm2488, %v3420, 0.0
      %3821 = vadd.xlane.f32.xlu0 %v3820
      %v3822 = vpop.xlane.xlu0 %3821
      %v3823 = vsel %vm2488, %v3422, 0.0
      %3824 = vadd.xlane.f32.xlu0 %v3823
      %v3825 = vpop.xlane.xlu0 %3824
      %v3826 = vsel %vm2488, %v3424, 0.0
      %3827 = vadd.xlane.f32.xlu0 %v3826
      %v3828 = vpop.xlane.xlu0 %3827
      %v3829 = vsel %vm2488, %v3426, 0.0
      %3830 = vadd.xlane.f32.xlu0 %v3829
      %v3831 = vpop.xlane.xlu0 %3830
      %v3832 = vsel %vm2488, %v3428, 0.0
      %3833 = vadd.xlane.f32.xlu0 %v3832
      %v3834 = vpop.xlane.xlu0 %3833
      %v3835 = vsel %vm2488, %v3430, 0.0
      %3836 = vadd.xlane.f32.xlu0 %v3835
      %v3837 = vpop.xlane.xlu0 %3836
      %v3838 = vsel %vm2488, %v3432, 0.0
      %3839 = vadd.xlane.f32.xlu0 %v3838
      %v3840 = vpop.xlane.xlu0 %3839
      %v3841 = vsel %vm2488, %v3434, 0.0
      %3842 = vadd.xlane.f32.xlu0 %v3841
      %v3843 = vpop.xlane.xlu0 %3842
      %v3844 = vsel %vm2488, %v3436, 0.0
      %3845 = vadd.xlane.f32.xlu0 %v3844
      %v3846 = vpop.xlane.xlu0 %3845
      %v3847 = vsel %vm2488, %v3438, 0.0
      %3848 = vadd.xlane.f32.xlu0 %v3847
      %v3849 = vpop.xlane.xlu0 %3848
      %v3850 = vsel %vm2488, %v3440, 0.0
      %3851 = vadd.xlane.f32.xlu0 %v3850
      %v3852 = vpop.xlane.xlu0 %3851
      %v3853 = vsel %vm2488, %v3442, 0.0
      %3854 = vadd.xlane.f32.xlu0 %v3853
      %v3855 = vpop.xlane.xlu0 %3854
      %v3856 = vsel %vm2488, %v3444, 0.0
      %3857 = vadd.xlane.f32.xlu0 %v3856
      %v3858 = vpop.xlane.xlu0 %3857
      %v3859 = vsel %vm2488, %v3446, 0.0
      %3860 = vadd.xlane.f32.xlu0 %v3859
      %v3861 = vpop.xlane.xlu0 %3860
      %v3862 = vsel %vm2488, %v3448, 0.0
      %3863 = vadd.xlane.f32.xlu0 %v3862
      %v3864 = vpop.xlane.xlu0 %3863
      %v3865 = vsel %vm2488, %v3450, 0.0
      %3866 = vadd.xlane.f32.xlu0 %v3865
      %v3867 = vpop.xlane.xlu0 %3866
      %v3868 = vsel %vm2488, %v3452, 0.0
      %3869 = vadd.xlane.f32.xlu0 %v3868
      %v3870 = vpop.xlane.xlu0 %3869
      %v3871 = vsel %vm2488, %v3454, 0.0
      %3872 = vadd.xlane.f32.xlu0 %v3871
      %v3873 = vpop.xlane.xlu0 %3872
      %v3874 = vsel %vm2488, %v3456, 0.0
      %3875 = vadd.xlane.f32.xlu0 %v3874
      %v3876 = vpop.xlane.xlu0 %3875
      %v3877 = vsel %vm2488, %v3458, 0.0
      %3878 = vadd.xlane.f32.xlu0 %v3877
      %v3879 = vpop.xlane.xlu0 %3878
      %v3880 = vsel %vm2488, %v3460, 0.0
      %3881 = vadd.xlane.f32.xlu0 %v3880
      %v3882 = vpop.xlane.xlu0 %3881
      %v3883 = vsel %vm2488, %v3462, 0.0
      %3884 = vadd.xlane.f32.xlu0 %v3883
      %v3885 = vpop.xlane.xlu0 %3884
      %v3886 = vsel %vm2488, %v3464, 0.0
      %3887 = vadd.xlane.f32.xlu0 %v3886
      %v3888 = vpop.xlane.xlu0 %3887
      %v3889 = vsel %vm2488, %v3466, 0.0
      %3890 = vadd.xlane.f32.xlu0 %v3889
      %v3891 = vpop.xlane.xlu0 %3890
      %v3892 = vsel %vm2488, %v3468, 0.0
      %3893 = vadd.xlane.f32.xlu0 %v3892
      %v3894 = vpop.xlane.xlu0 %3893
      %v3895 = vsel %vm2488, %v3470, 0.0
      %3896 = vadd.xlane.f32.xlu0 %v3895
      %v3897 = vpop.xlane.xlu0 %3896
      %v3898 = vsel %vm2488, %v3472, 0.0
      %3899 = vadd.xlane.f32.xlu0 %v3898
      %v3900 = vpop.xlane.xlu0 %3899
      %v3901 = vsel %vm2488, %v3474, 0.0
      %3902 = vadd.xlane.f32.xlu0 %v3901
      %v3903 = vpop.xlane.xlu0 %3902
      %v3904 = vsel %vm2488, %v3476, 0.0
      %3905 = vadd.xlane.f32.xlu0 %v3904
      %v3906 = vpop.xlane.xlu0 %3905
      %v3907 = vsel %vm2488, %v3478, 0.0
      %3908 = vadd.xlane.f32.xlu0 %v3907
      %v3909 = vpop.xlane.xlu0 %3908
      %v3910 = vsel %vm2488, %v3480, 0.0
      %3911 = vadd.xlane.f32.xlu0 %v3910
      %v3912 = vpop.xlane.xlu0 %3911
      %v3913 = vsel %vm2488, %v3482, 0.0
      %3914 = vadd.xlane.f32.xlu0 %v3913
      %v3915 = vpop.xlane.xlu0 %3914
      %v3916 = vsel %vm2488, %v3484, 0.0
      %3917 = vadd.xlane.f32.xlu0 %v3916
      %v3918 = vpop.xlane.xlu0 %3917
      %v3919 = vsel %vm2488, %v3486, 0.0
      %3920 = vadd.xlane.f32.xlu0 %v3919
      %v3921 = vpop.xlane.xlu0 %3920
      %v3922 = vsel %vm2488, %v3488, 0.0
      %3923 = vadd.xlane.f32.xlu0 %v3922
      %v3924 = vpop.xlane.xlu0 %3923
      %v3925 = vsel %vm2488, %v3490, 0.0
      %3926 = vadd.xlane.f32.xlu0 %v3925
      %v3927 = vpop.xlane.xlu0 %3926
      %v3928 = vsel %vm2488, %v3492, 0.0
      %3929 = vadd.xlane.f32.xlu0 %v3928
      %v3930 = vpop.xlane.xlu0 %3929
      %v3931 = vsel %vm2488, %v3494, 0.0
      %3932 = vadd.xlane.f32.xlu0 %v3931
      %v3933 = vpop.xlane.xlu0 %3932
      %v3934 = vsel %vm2488, %v3496, 0.0
      %3935 = vadd.xlane.f32.xlu0 %v3934
      %v3936 = vpop.xlane.xlu0 %3935
      %v3937 = vsel %vm2488, %v3498, 0.0
      %3938 = vadd.xlane.f32.xlu0 %v3937
      %v3939 = vpop.xlane.xlu0 %3938
      %v3940 = vsel %vm2488, %v3500, 0.0
      %3941 = vadd.xlane.f32.xlu0 %v3940
      %v3942 = vpop.xlane.xlu0 %3941
      %v3943 = vsel %vm2488, %v3502, 0.0
      %3944 = vadd.xlane.f32.xlu0 %v3943
      %v3945 = vpop.xlane.xlu0 %3944
      %v3946 = vsel %vm2488, %v3504, 0.0
      %3947 = vadd.xlane.f32.xlu0 %v3946
      %v3948 = vpop.xlane.xlu0 %3947
      %v3949 = vsel %vm2488, %v3506, 0.0
      %3950 = vadd.xlane.f32.xlu0 %v3949
      %v3951 = vpop.xlane.xlu0 %3950
      %v3952 = vsel %vm2488, %v3508, 0.0
      %3953 = vadd.xlane.f32.xlu0 %v3952
      %v3954 = vpop.xlane.xlu0 %3953
      %v3955 = vsel %vm2488, %v3510, 0.0
      %3956 = vadd.xlane.f32.xlu0 %v3955
      %v3957 = vpop.xlane.xlu0 %3956
      %v3958 = vsel %vm2488, %v3512, 0.0
      %3959 = vadd.xlane.f32.xlu0 %v3958
      %v3960 = vpop.xlane.xlu0 %3959
      %v3961 = vsel %vm2488, %v3514, 0.0
      %3962 = vadd.xlane.f32.xlu0 %v3961
      %v3963 = vpop.xlane.xlu0 %3962
      %v3964 = vsel %vm2488, %v3516, 0.0
      %3965 = vadd.xlane.f32.xlu0 %v3964
      %v3966 = vpop.xlane.xlu0 %3965
      %v3967 = vsel %vm2488, %v3518, 0.0
      %3968 = vadd.xlane.f32.xlu0 %v3967
      %v3969 = vpop.xlane.xlu0 %3968
      %v3970 = vsel %vm2488, %v3520, 0.0
      %3971 = vadd.xlane.f32.xlu0 %v3970
      %v3972 = vpop.xlane.xlu0 %3971
      %v3973 = vsel %vm2488, %v3522, 0.0
      %3974 = vadd.xlane.f32.xlu0 %v3973
      %v3975 = vpop.xlane.xlu0 %3974
      %v3976 = vsel %vm2488, %v3524, 0.0
      %3977 = vadd.xlane.f32.xlu0 %v3976
      %v3978 = vpop.xlane.xlu0 %3977
      %v3979 = vsel %vm2488, %v3526, 0.0
      %3980 = vadd.xlane.f32.xlu0 %v3979
      %v3981 = vpop.xlane.xlu0 %3980
      %v3982 = vsel %vm2488, %v3528, 0.0
      %3983 = vadd.xlane.f32.xlu0 %v3982
      %v3984 = vpop.xlane.xlu0 %3983
      %v3985 = vsel %vm2488, %v3530, 0.0
      %3986 = vadd.xlane.f32.xlu0 %v3985
      %v3987 = vpop.xlane.xlu0 %3986
      %v3988 = vsel %vm2488, %v3532, 0.0
      %3989 = vadd.xlane.f32.xlu0 %v3988
      %v3990 = vpop.xlane.xlu0 %3989
      %v3991 = vsel %vm2488, %v3534, 0.0
      %3992 = vadd.xlane.f32.xlu0 %v3991
      %v3993 = vpop.xlane.xlu0 %3992
      %v3994 = vsel %vm2488, %v3536, 0.0
      %3995 = vadd.xlane.f32.xlu0 %v3994
      %v3996 = vpop.xlane.xlu0 %3995
      %v3997 = vsel %vm2488, %v3538, 0.0
      %3998 = vadd.xlane.f32.xlu0 %v3997
      %v3999 = vpop.xlane.xlu0 %3998
      %v4000 = vsel %vm2488, %v3540, 0.0
      %4001 = vadd.xlane.f32.xlu0 %v4000
      %v4002 = vpop.xlane.xlu0 %4001
      %v4003 = vsel %vm2488, %v3542, 0.0
      %4004 = vadd.xlane.f32.xlu0 %v4003
      %v4005 = vpop.xlane.xlu0 %4004
      %v4006 = vsel %vm2488, %v3544, 0.0
      %4007 = vadd.xlane.f32.xlu0 %v4006
      %v4008 = vpop.xlane.xlu0 %4007
      %v4009 = vsel %vm2488, %v3546, 0.0
      %4010 = vadd.xlane.f32.xlu0 %v4009
      %v4011 = vpop.xlane.xlu0 %4010
      %v4012 = vsel %vm2488, %v3548, 0.0
      %4013 = vadd.xlane.f32.xlu0 %v4012
      %v4014 = vpop.xlane.xlu0 %4013
      %v4015 = vsel %vm2488, %v3550, 0.0
      %4016 = vadd.xlane.f32.xlu0 %v4015
      %v4017 = vpop.xlane.xlu0 %4016
      %v4018 = vsel %vm2488, %v3552, 0.0
      %4019 = vadd.xlane.f32.xlu0 %v4018
      %v4020 = vpop.xlane.xlu0 %4019
      %v4021 = vsel %vm2488, %v3554, 0.0
      %4022 = vadd.xlane.f32.xlu0 %v4021
      %v4023 = vpop.xlane.xlu0 %4022
      %v4024 = vsel %vm2488, %v3556, 0.0
      %4025 = vadd.xlane.f32.xlu0 %v4024
      %v4026 = vpop.xlane.xlu0 %4025
      %v4027 = vsel %vm2488, %v3558, 0.0
      %4028 = vadd.xlane.f32.xlu0 %v4027
      %v4029 = vpop.xlane.xlu0 %4028
      %v4030 = vsel %vm2488, %v3560, 0.0
      %4031 = vadd.xlane.f32.xlu0 %v4030
      %v4032 = vpop.xlane.xlu0 %4031
      %v4033 = vsel %vm2488, %v3562, 0.0
      %4034 = vadd.xlane.f32.xlu0 %v4033
      %v4035 = vpop.xlane.xlu0 %4034
      %v4036 = vsel %vm2488, %v3564, 0.0
      %4037 = vadd.xlane.f32.xlu0 %v4036
      %v4038 = vpop.xlane.xlu0 %4037
      %v4039 = vsel %vm2488, %v3566, 0.0
      %4040 = vadd.xlane.f32.xlu0 %v4039
      %v4041 = vpop.xlane.xlu0 %4040
      %v4042 = vsel %vm2488, %v3568, 0.0
      %4043 = vadd.xlane.f32.xlu0 %v4042
      %v4044 = vpop.xlane.xlu0 %4043
      %v4045 = vsel %vm2488, %v3570, 0.0
      %4046 = vadd.xlane.f32.xlu0 %v4045
      %v4047 = vpop.xlane.xlu0 %4046
      %v4048 = vsel %vm2488, %v3572, 0.0
      %4049 = vadd.xlane.f32.xlu0 %v4048
      %v4050 = vpop.xlane.xlu0 %4049
      %v4051 = vsel %vm2488, %v3574, 0.0
      %4052 = vadd.xlane.f32.xlu0 %v4051
      %v4053 = vpop.xlane.xlu0 %4052
      %v4054 = vsel %vm2488, %v3576, 0.0
      %4055 = vadd.xlane.f32.xlu0 %v4054
      %v4056 = vpop.xlane.xlu0 %4055
      %v4057 = vsel %vm2488, %v3578, 0.0
      %4058 = vadd.xlane.f32.xlu0 %v4057
      %v4059 = vpop.xlane.xlu0 %4058
      %v4060 = vsel %vm2488, %v3580, 0.0
      %4061 = vadd.xlane.f32.xlu0 %v4060
      %v4062 = vpop.xlane.xlu0 %4061
      %v4063 = vsel %vm2488, %v3582, 0.0
      %4064 = vadd.xlane.f32.xlu0 %v4063
      %v4065 = vpop.xlane.xlu0 %4064
      %v4066 = vsel %vm2488, %v3584, 0.0
      %4067 = vadd.xlane.f32.xlu0 %v4066
      %v4068 = vpop.xlane.xlu0 %4067
      %v4069 = vsel %vm2488, %v3586, 0.0
      %4070 = vadd.xlane.f32.xlu0 %v4069
      %v4071 = vpop.xlane.xlu0 %4070
      %v4072 = vsel %vm2488, %v3588, 0.0
      %4073 = vadd.xlane.f32.xlu0 %v4072
      %v4074 = vpop.xlane.xlu0 %4073
      %v4075 = vsel %vm2488, %v3590, 0.0
      %4076 = vadd.xlane.f32.xlu0 %v4075
      %v4077 = vpop.xlane.xlu0 %4076
      %v4078 = vsel %vm2488, %v3592, 0.0
      %4079 = vadd.xlane.f32.xlu0 %v4078
      %v4080 = vpop.xlane.xlu0 %4079
      %v4081 = vsel %vm2488, %v3594, 0.0
      %4082 = vadd.xlane.f32.xlu0 %v4081
      %v4083 = vpop.xlane.xlu0 %4082
      %v4084 = vsel %vm2488, %v3596, 0.0
      %4085 = vadd.xlane.f32.xlu0 %v4084
      %v4086 = vpop.xlane.xlu0 %4085
      %v4087 = vsel %vm2488, %v3598, 0.0
      %4088 = vadd.xlane.f32.xlu0 %v4087
      %v4089 = vpop.xlane.xlu0 %4088
      %v4090 = vsel %vm2488, %v3600, 0.0
      %4091 = vadd.xlane.f32.xlu0 %v4090
      %v4092 = vpop.xlane.xlu0 %4091
      %v4093 = vsel %vm2488, %v3602, 0.0
      %4094 = vadd.xlane.f32.xlu0 %v4093
      %v4095 = vpop.xlane.xlu0 %4094
      %v4096 = vsel %vm2488, %v3604, 0.0
      %4097 = vadd.xlane.f32.xlu0 %v4096
      %v4098 = vpop.xlane.xlu0 %4097
      %v4099 = vsel %vm2488, %v3606, 0.0
      %4100 = vadd.xlane.f32.xlu0 %v4099
      %v4101 = vpop.xlane.xlu0 %4100
      %v4102 = vsel %vm2488, %v3608, 0.0
      %4103 = vadd.xlane.f32.xlu0 %v4102
      %v4104 = vpop.xlane.xlu0 %4103
      %v4105 = vsel %vm2488, %v3610, 0.0
      %4106 = vadd.xlane.f32.xlu0 %v4105
      %v4107 = vpop.xlane.xlu0 %4106
      %v4108 = vsel %vm2488, %v3612, 0.0
      %4109 = vadd.xlane.f32.xlu0 %v4108
      %v4110 = vpop.xlane.xlu0 %4109
      %v4111 = vsel %vm2488, %v3614, 0.0
      %4112 = vadd.xlane.f32.xlu0 %v4111
      %v4113 = vpop.xlane.xlu0 %4112
      %v4114 = vsel %vm2488, %v3616, 0.0
      %4115 = vadd.xlane.f32.xlu0 %v4114
      %v4116 = vpop.xlane.xlu0 %4115
      %v4117 = vsel %vm2488, %v3618, 0.0
      %4118 = vadd.xlane.f32.xlu0 %v4117
      %v4119 = vpop.xlane.xlu0 %4118
      %v4120 = vsel %vm2488, %v3620, 0.0
      %4121 = vadd.xlane.f32.xlu0 %v4120
      %v4122 = vpop.xlane.xlu0 %4121
      %v4123 = vsel %vm2488, %v3622, 0.0
      %4124 = vadd.xlane.f32.xlu0 %v4123
      %v4125 = vpop.xlane.xlu0 %4124
      %v4126 = vsel %vm2488, %v3624, 0.0
      %4127 = vadd.xlane.f32.xlu0 %v4126
      %v4128 = vpop.xlane.xlu0 %4127
      %v4129 = vsel %vm2488, %v3626, 0.0
      %4130 = vadd.xlane.f32.xlu0 %v4129
      %v4131 = vpop.xlane.xlu0 %4130
      %v4132 = vsel %vm2488, %v3628, 0.0
      %4133 = vadd.xlane.f32.xlu0 %v4132
      %v4134 = vpop.xlane.xlu0 %4133
      %v4135 = vsel %vm2488, %v3630, 0.0
      %4136 = vadd.xlane.f32.xlu0 %v4135
      %v4137 = vpop.xlane.xlu0 %4136
      %v4138 = vsel %vm2488, %v3632, 0.0
      %4139 = vadd.xlane.f32.xlu0 %v4138
      %v4140 = vpop.xlane.xlu0 %4139
      %v4141 = vsel %vm2488, %v3634, 0.0
      %4142 = vadd.xlane.f32.xlu0 %v4141
      %v4143 = vpop.xlane.xlu0 %4142
      %v4144 = vsel %vm2488, %v3636, 0.0
      %4145 = vadd.xlane.f32.xlu0 %v4144
      %v4146 = vpop.xlane.xlu0 %4145
      %v4147 = vsel %vm2488, %v3638, 0.0
      %4148 = vadd.xlane.f32.xlu0 %v4147
      %v4149 = vpop.xlane.xlu0 %4148
      %v4150 = vsel %vm2488, %v3640, 0.0
      %4151 = vadd.xlane.f32.xlu0 %v4150
      %v4152 = vpop.xlane.xlu0 %4151
      %v4153 = vmax.f32 %v3771, 1e-24
      %v4154 = vmax.f32 %v3774, 1e-24
      %v4155 = vmax.f32 %v3777, 1e-24
      %v4156 = vmax.f32 %v3780, 1e-24
      %v4157 = vmax.f32 %v3783, 1e-24
      %v4158 = vmax.f32 %v3786, 1e-24
      %v4159 = vmax.f32 %v3789, 1e-24
      %v4160 = vmax.f32 %v3792, 1e-24
      %v4161 = vmax.f32 %v3795, 1e-24
      %v4162 = vmax.f32 %v3798, 1e-24
      %v4163 = vmax.f32 %v3801, 1e-24
      %v4164 = vmax.f32 %v3804, 1e-24
      %v4165 = vmax.f32 %v3807, 1e-24
      %v4166 = vmax.f32 %v3810, 1e-24
      %v4167 = vmax.f32 %v3813, 1e-24
      %v4168 = vmax.f32 %v3816, 1e-24
      %v4169 = vmax.f32 %v3819, 1e-24
      %v4170 = vmax.f32 %v3822, 1e-24
      %v4171 = vmax.f32 %v3825, 1e-24
      %v4172 = vmax.f32 %v3828, 1e-24
      %v4173 = vmax.f32 %v3831, 1e-24
      %v4174 = vmax.f32 %v3834, 1e-24
      %v4175 = vmax.f32 %v3837, 1e-24
      %v4176 = vmax.f32 %v3840, 1e-24
      %v4177 = vmax.f32 %v3843, 1e-24
      %v4178 = vmax.f32 %v3846, 1e-24
      %v4179 = vmax.f32 %v3849, 1e-24
      %v4180 = vmax.f32 %v3852, 1e-24
      %v4181 = vmax.f32 %v3855, 1e-24
      %v4182 = vmax.f32 %v3858, 1e-24
      %v4183 = vmax.f32 %v3861, 1e-24
      %v4184 = vmax.f32 %v3864, 1e-24
      %v4185 = vmax.f32 %v3867, 1e-24
      %v4186 = vmax.f32 %v3870, 1e-24
      %v4187 = vmax.f32 %v3873, 1e-24
      %v4188 = vmax.f32 %v3876, 1e-24
      %v4189 = vmax.f32 %v3879, 1e-24
      %v4190 = vmax.f32 %v3882, 1e-24
      %v4191 = vmax.f32 %v3885, 1e-24
      %v4192 = vmax.f32 %v3888, 1e-24
      %v4193 = vmax.f32 %v3891, 1e-24
      %v4194 = vmax.f32 %v3894, 1e-24
      %v4195 = vmax.f32 %v3897, 1e-24
      %v4196 = vmax.f32 %v3900, 1e-24
      %v4197 = vmax.f32 %v3903, 1e-24
      %v4198 = vmax.f32 %v3906, 1e-24
      %v4199 = vmax.f32 %v3909, 1e-24
      %v4200 = vmax.f32 %v3912, 1e-24
      %v4201 = vmax.f32 %v3915, 1e-24
      %v4202 = vmax.f32 %v3918, 1e-24
      %v4203 = vmax.f32 %v3921, 1e-24
      %v4204 = vmax.f32 %v3924, 1e-24
      %v4205 = vmax.f32 %v3927, 1e-24
      %v4206 = vmax.f32 %v3930, 1e-24
      %v4207 = vmax.f32 %v3933, 1e-24
      %v4208 = vmax.f32 %v3936, 1e-24
      %v4209 = vmax.f32 %v3939, 1e-24
      %v4210 = vmax.f32 %v3942, 1e-24
      %v4211 = vmax.f32 %v3945, 1e-24
      %v4212 = vmax.f32 %v3948, 1e-24
      %v4213 = vmax.f32 %v3951, 1e-24
      %v4214 = vmax.f32 %v3954, 1e-24
      %v4215 = vmax.f32 %v3957, 1e-24
      %v4216 = vmax.f32 %v3960, 1e-24
      %v4217 = vmax.f32 %v3963, 1e-24
      %v4218 = vmax.f32 %v3966, 1e-24
      %v4219 = vmax.f32 %v3969, 1e-24
      %v4220 = vmax.f32 %v3972, 1e-24
      %v4221 = vmax.f32 %v3975, 1e-24
      %v4222 = vmax.f32 %v3978, 1e-24
      %v4223 = vmax.f32 %v3981, 1e-24
      %v4224 = vmax.f32 %v3984, 1e-24
      %v4225 = vmax.f32 %v3987, 1e-24
      %v4226 = vmax.f32 %v3990, 1e-24
      %v4227 = vmax.f32 %v3993, 1e-24
      %v4228 = vmax.f32 %v3996, 1e-24
      %v4229 = vmax.f32 %v3999, 1e-24
      %v4230 = vmax.f32 %v4002, 1e-24
      %v4231 = vmax.f32 %v4005, 1e-24
      %v4232 = vmax.f32 %v4008, 1e-24
      %v4233 = vmax.f32 %v4011, 1e-24
      %v4234 = vmax.f32 %v4014, 1e-24
      %v4235 = vmax.f32 %v4017, 1e-24
      %v4236 = vmax.f32 %v4020, 1e-24
      %v4237 = vmax.f32 %v4023, 1e-24
      %v4238 = vmax.f32 %v4026, 1e-24
      %v4239 = vmax.f32 %v4029, 1e-24
      %v4240 = vmax.f32 %v4032, 1e-24
      %v4241 = vmax.f32 %v4035, 1e-24
      %v4242 = vmax.f32 %v4038, 1e-24
      %v4243 = vmax.f32 %v4041, 1e-24
      %v4244 = vmax.f32 %v4044, 1e-24
      %v4245 = vmax.f32 %v4047, 1e-24
      %v4246 = vmax.f32 %v4050, 1e-24
      %v4247 = vmax.f32 %v4053, 1e-24
      %v4248 = vmax.f32 %v4056, 1e-24
      %v4249 = vmax.f32 %v4059, 1e-24
      %v4250 = vmax.f32 %v4062, 1e-24
      %v4251 = vmax.f32 %v4065, 1e-24
      %v4252 = vmax.f32 %v4068, 1e-24
      %v4253 = vmax.f32 %v4071, 1e-24
      %v4254 = vmax.f32 %v4074, 1e-24
      %v4255 = vmax.f32 %v4077, 1e-24
      %v4256 = vmax.f32 %v4080, 1e-24
      %v4257 = vmax.f32 %v4083, 1e-24
      %v4258 = vmax.f32 %v4086, 1e-24
      %v4259 = vmax.f32 %v4089, 1e-24
      %v4260 = vmax.f32 %v4092, 1e-24
      %v4261 = vmax.f32 %v4095, 1e-24
      %v4262 = vmax.f32 %v4098, 1e-24
      %v4263 = vmax.f32 %v4101, 1e-24
      %v4264 = vmax.f32 %v4104, 1e-24
      %v4265 = vmax.f32 %v4107, 1e-24
      %v4266 = vmax.f32 %v4110, 1e-24
      %v4267 = vmax.f32 %v4113, 1e-24
      %v4268 = vmax.f32 %v4116, 1e-24
      %v4269 = vmax.f32 %v4119, 1e-24
      %v4270 = vmax.f32 %v4122, 1e-24
      %v4271 = vmax.f32 %v4125, 1e-24
      %v4272 = vmax.f32 %v4128, 1e-24
      %v4273 = vmax.f32 %v4131, 1e-24
      %v4274 = vmax.f32 %v4134, 1e-24
      %v4275 = vmax.f32 %v4137, 1e-24
      %v4276 = vmax.f32 %v4140, 1e-24
      %v4277 = vmax.f32 %v4143, 1e-24
      %v4278 = vmax.f32 %v4146, 1e-24
      %v4279 = vmax.f32 %v4149, 1e-24
      %v4280 = vmax.f32 %v4152, 1e-24
      %v4281 = vrsqrt.pop %v4153
      %v4282 = vrsqrt.pop %v4154
      %v4283 = vrsqrt.pop %v4155
      %v4284 = vrsqrt.pop %v4156
      %v4285 = vrsqrt.pop %v4157
      %v4286 = vrsqrt.pop %v4158
      %v4287 = vrsqrt.pop %v4159
      %v4288 = vrsqrt.pop %v4160
      %v4289 = vrsqrt.pop %v4161
      %v4290 = vrsqrt.pop %v4162
      %v4291 = vrsqrt.pop %v4163
      %v4292 = vrsqrt.pop %v4164
      %v4293 = vrsqrt.pop %v4165
      %v4294 = vrsqrt.pop %v4166
      %v4295 = vrsqrt.pop %v4167
      %v4296 = vrsqrt.pop %v4168
      %v4297 = vrsqrt.pop %v4169
      %v4298 = vrsqrt.pop %v4170
      %v4299 = vrsqrt.pop %v4171
      %v4300 = vrsqrt.pop %v4172
      %v4301 = vrsqrt.pop %v4173
      %v4302 = vrsqrt.pop %v4174
      %v4303 = vrsqrt.pop %v4175
      %v4304 = vrsqrt.pop %v4176
      %v4305 = vrsqrt.pop %v4177
      %v4306 = vrsqrt.pop %v4178
      %v4307 = vrsqrt.pop %v4179
      %v4308 = vrsqrt.pop %v4180
      %v4309 = vrsqrt.pop %v4181
      %v4310 = vrsqrt.pop %v4182
      %v4311 = vrsqrt.pop %v4183
      %v4312 = vrsqrt.pop %v4184
      %v4313 = vrsqrt.pop %v4185
      %v4314 = vrsqrt.pop %v4186
      %v4315 = vrsqrt.pop %v4187
      %v4316 = vrsqrt.pop %v4188
      %v4317 = vrsqrt.pop %v4189
      %v4318 = vrsqrt.pop %v4190
      %v4319 = vrsqrt.pop %v4191
      %v4320 = vrsqrt.pop %v4192
      %v4321 = vrsqrt.pop %v4193
      %v4322 = vrsqrt.pop %v4194
      %v4323 = vrsqrt.pop %v4195
      %v4324 = vrsqrt.pop %v4196
      %v4325 = vrsqrt.pop %v4197
      %v4326 = vrsqrt.pop %v4198
      %v4327 = vrsqrt.pop %v4199
      %v4328 = vrsqrt.pop %v4200
      %v4329 = vrsqrt.pop %v4201
      %v4330 = vrsqrt.pop %v4202
      %v4331 = vrsqrt.pop %v4203
      %v4332 = vrsqrt.pop %v4204
      %v4333 = vrsqrt.pop %v4205
      %v4334 = vrsqrt.pop %v4206
      %v4335 = vrsqrt.pop %v4207
      %v4336 = vrsqrt.pop %v4208
      %v4337 = vrsqrt.pop %v4209
      %v4338 = vrsqrt.pop %v4210
      %v4339 = vrsqrt.pop %v4211
      %v4340 = vrsqrt.pop %v4212
      %v4341 = vrsqrt.pop %v4213
      %v4342 = vrsqrt.pop %v4214
      %v4343 = vrsqrt.pop %v4215
      %v4344 = vrsqrt.pop %v4216
      %v4345 = vrsqrt.pop %v4217
      %v4346 = vrsqrt.pop %v4218
      %v4347 = vrsqrt.pop %v4219
      %v4348 = vrsqrt.pop %v4220
      %v4349 = vrsqrt.pop %v4221
      %v4350 = vrsqrt.pop %v4222
      %v4351 = vrsqrt.pop %v4223
      %v4352 = vrsqrt.pop %v4224
      %v4353 = vrsqrt.pop %v4225
      %v4354 = vrsqrt.pop %v4226
      %v4355 = vrsqrt.pop %v4227
      %v4356 = vrsqrt.pop %v4228
      %v4357 = vrsqrt.pop %v4229
      %v4358 = vrsqrt.pop %v4230
      %v4359 = vrsqrt.pop %v4231
      %v4360 = vrsqrt.pop %v4232
      %v4361 = vrsqrt.pop %v4233
      %v4362 = vrsqrt.pop %v4234
      %v4363 = vrsqrt.pop %v4235
      %v4364 = vrsqrt.pop %v4236
      %v4365 = vrsqrt.pop %v4237
      %v4366 = vrsqrt.pop %v4238
      %v4367 = vrsqrt.pop %v4239
      %v4368 = vrsqrt.pop %v4240
      %v4369 = vrsqrt.pop %v4241
      %v4370 = vrsqrt.pop %v4242
      %v4371 = vrsqrt.pop %v4243
      %v4372 = vrsqrt.pop %v4244
      %v4373 = vrsqrt.pop %v4245
      %v4374 = vrsqrt.pop %v4246
      %v4375 = vrsqrt.pop %v4247
      %v4376 = vrsqrt.pop %v4248
      %v4377 = vrsqrt.pop %v4249
      %v4378 = vrsqrt.pop %v4250
      %v4379 = vrsqrt.pop %v4251
      %v4380 = vrsqrt.pop %v4252
      %v4381 = vrsqrt.pop %v4253
      %v4382 = vrsqrt.pop %v4254
      %v4383 = vrsqrt.pop %v4255
      %v4384 = vrsqrt.pop %v4256
      %v4385 = vrsqrt.pop %v4257
      %v4386 = vrsqrt.pop %v4258
      %v4387 = vrsqrt.pop %v4259
      %v4388 = vrsqrt.pop %v4260
      %v4389 = vrsqrt.pop %v4261
      %v4390 = vrsqrt.pop %v4262
      %v4391 = vrsqrt.pop %v4263
      %v4392 = vrsqrt.pop %v4264
      %v4393 = vrsqrt.pop %v4265
      %v4394 = vrsqrt.pop %v4266
      %v4395 = vrsqrt.pop %v4267
      %v4396 = vrsqrt.pop %v4268
      %v4397 = vrsqrt.pop %v4269
      %v4398 = vrsqrt.pop %v4270
      %v4399 = vrsqrt.pop %v4271
      %v4400 = vrsqrt.pop %v4272
      %v4401 = vrsqrt.pop %v4273
      %v4402 = vrsqrt.pop %v4274
      %v4403 = vrsqrt.pop %v4275
      %v4404 = vrsqrt.pop %v4276
      %v4405 = vrsqrt.pop %v4277
      %v4406 = vrsqrt.pop %v4278
      %v4407 = vrsqrt.pop %v4279
      %v4408 = vrsqrt.pop %v4280
      %v4409 = vmul.f32 %v2232, %v4281
      %v4410 = vmul.f32 %v2233, %v4282
      %v4411 = vmul.f32 %v2234, %v4283
      %v4412 = vmul.f32 %v2235, %v4284
      %v4413 = vmul.f32 %v2236, %v4285
      %v4414 = vmul.f32 %v2237, %v4286
      %v4415 = vmul.f32 %v2238, %v4287
      %v4416 = vmul.f32 %v2239, %v4288
      %v4417 = vmul.f32 %v2240, %v4289
      %v4418 = vmul.f32 %v2241, %v4290
      %v4419 = vmul.f32 %v2242, %v4291
      %v4420 = vmul.f32 %v2243, %v4292
      %v4421 = vmul.f32 %v2244, %v4293
      %v4422 = vmul.f32 %v2245, %v4294
      %v4423 = vmul.f32 %v2246, %v4295
      %v4424 = vmul.f32 %v2247, %v4296
      %v4425 = vmul.f32 %v2248, %v4297
      %v4426 = vmul.f32 %v2249, %v4298
      %v4427 = vmul.f32 %v2250, %v4299
      %v4428 = vmul.f32 %v2251, %v4300
      %v4429 = vmul.f32 %v2252, %v4301
      %v4430 = vmul.f32 %v2253, %v4302
      %v4431 = vmul.f32 %v2254, %v4303
      %v4432 = vmul.f32 %v2255, %v4304
      %v4433 = vmul.f32 %v2256, %v4305
      %v4434 = vmul.f32 %v2257, %v4306
      %v4435 = vmul.f32 %v2258, %v4307
      %v4436 = vmul.f32 %v2259, %v4308
      %v4437 = vmul.f32 %v2260, %v4309
      %v4438 = vmul.f32 %v2261, %v4310
      %v4439 = vmul.f32 %v2262, %v4311
      %v4440 = vmul.f32 %v2263, %v4312
      %v4441 = vmul.f32 %v2264, %v4313
      %v4442 = vmul.f32 %v2265, %v4314
      %v4443 = vmul.f32 %v2266, %v4315
      %v4444 = vmul.f32 %v2267, %v4316
      %v4445 = vmul.f32 %v2268, %v4317
      %v4446 = vmul.f32 %v2269, %v4318
      %v4447 = vmul.f32 %v2270, %v4319
      %v4448 = vmul.f32 %v2271, %v4320
      %v4449 = vmul.f32 %v2272, %v4321
      %v4450 = vmul.f32 %v2273, %v4322
      %v4451 = vmul.f32 %v2274, %v4323
      %v4452 = vmul.f32 %v2275, %v4324
      %v4453 = vmul.f32 %v2276, %v4325
      %v4454 = vmul.f32 %v2277, %v4326
      %v4455 = vmul.f32 %v2278, %v4327
      %v4456 = vmul.f32 %v2279, %v4328
      %v4457 = vmul.f32 %v2280, %v4329
      %v4458 = vmul.f32 %v2281, %v4330
      %v4459 = vmul.f32 %v2282, %v4331
      %v4460 = vmul.f32 %v2283, %v4332
      %v4461 = vmul.f32 %v2284, %v4333
      %v4462 = vmul.f32 %v2285, %v4334
      %v4463 = vmul.f32 %v2286, %v4335
      %v4464 = vmul.f32 %v2287, %v4336
      %v4465 = vmul.f32 %v2288, %v4337
      %v4466 = vmul.f32 %v2289, %v4338
      %v4467 = vmul.f32 %v2290, %v4339
      %v4468 = vmul.f32 %v2291, %v4340
      %v4469 = vmul.f32 %v2292, %v4341
      %v4470 = vmul.f32 %v2293, %v4342
      %v4471 = vmul.f32 %v2294, %v4343
      %v4472 = vmul.f32 %v2295, %v4344
      %v4473 = vmul.f32 %v2296, %v4345
      %v4474 = vmul.f32 %v2297, %v4346
      %v4475 = vmul.f32 %v2298, %v4347
      %v4476 = vmul.f32 %v2299, %v4348
      %v4477 = vmul.f32 %v2300, %v4349
      %v4478 = vmul.f32 %v2301, %v4350
      %v4479 = vmul.f32 %v2302, %v4351
      %v4480 = vmul.f32 %v2303, %v4352
      %v4481 = vmul.f32 %v2304, %v4353
      %v4482 = vmul.f32 %v2305, %v4354
      %v4483 = vmul.f32 %v2306, %v4355
      %v4484 = vmul.f32 %v2307, %v4356
      %v4485 = vmul.f32 %v2308, %v4357
      %v4486 = vmul.f32 %v2309, %v4358
      %v4487 = vmul.f32 %v2310, %v4359
      %v4488 = vmul.f32 %v2311, %v4360
      %v4489 = vmul.f32 %v2312, %v4361
      %v4490 = vmul.f32 %v2313, %v4362
      %v4491 = vmul.f32 %v2314, %v4363
      %v4492 = vmul.f32 %v2315, %v4364
      %v4493 = vmul.f32 %v2316, %v4365
      %v4494 = vmul.f32 %v2317, %v4366
      %v4495 = vmul.f32 %v2318, %v4367
      %v4496 = vmul.f32 %v2319, %v4368
      %v4497 = vmul.f32 %v2320, %v4369
      %v4498 = vmul.f32 %v2321, %v4370
      %v4499 = vmul.f32 %v2322, %v4371
      %v4500 = vmul.f32 %v2323, %v4372
      %v4501 = vmul.f32 %v2324, %v4373
      %v4502 = vmul.f32 %v2325, %v4374
      %v4503 = vmul.f32 %v2326, %v4375
      %v4504 = vmul.f32 %v2327, %v4376
      %v4505 = vmul.f32 %v2328, %v4377
      %v4506 = vmul.f32 %v2329, %v4378
      %v4507 = vmul.f32 %v2330, %v4379
      %v4508 = vmul.f32 %v2331, %v4380
      %v4509 = vmul.f32 %v2332, %v4381
      %v4510 = vmul.f32 %v2333, %v4382
      %v4511 = vmul.f32 %v2334, %v4383
      %v4512 = vmul.f32 %v2335, %v4384
      %v4513 = vmul.f32 %v2336, %v4385
      %v4514 = vmul.f32 %v2337, %v4386
      %v4515 = vmul.f32 %v2338, %v4387
      %v4516 = vmul.f32 %v2339, %v4388
      %v4517 = vmul.f32 %v2340, %v4389
      %v4518 = vmul.f32 %v2341, %v4390
      %v4519 = vmul.f32 %v2342, %v4391
      %v4520 = vmul.f32 %v2343, %v4392
      %v4521 = vmul.f32 %v2344, %v4393
      %v4522 = vmul.f32 %v2345, %v4394
      %v4523 = vmul.f32 %v2346, %v4395
      %v4524 = vmul.f32 %v2347, %v4396
      %v4525 = vmul.f32 %v2348, %v4397
      %v4526 = vmul.f32 %v2349, %v4398
      %v4527 = vmul.f32 %v2350, %v4399
      %v4528 = vmul.f32 %v2351, %v4400
      %v4529 = vmul.f32 %v2352, %v4401
      %v4530 = vmul.f32 %v2353, %v4402
      %v4531 = vmul.f32 %v2354, %v4403
      %v4532 = vmul.f32 %v2355, %v4404
      %v4533 = vmul.f32 %v2356, %v4405
      %v4534 = vmul.f32 %v2357, %v4406
      %v4535 = vmul.f32 %v2358, %v4407
      %v4536 = vmul.f32 %v2359, %v4408
      %4665 = vrot.lane.b32.xlu0 %v4409, 64
      %v4666 = vpop.permute.xlu0 %4665
      %4667 = vrot.lane.b32.xlu0 %v4410, 64
      %v4668 = vpop.permute.xlu0 %4667
      %4669 = vrot.lane.b32.xlu0 %v4411, 64
      %v4670 = vpop.permute.xlu0 %4669
      %4671 = vrot.lane.b32.xlu0 %v4412, 64
      %v4672 = vpop.permute.xlu0 %4671
      %4673 = vrot.lane.b32.xlu0 %v4413, 64
      %v4674 = vpop.permute.xlu0 %4673
      %4675 = vrot.lane.b32.xlu0 %v4414, 64
      %v4676 = vpop.permute.xlu0 %4675
      %4677 = vrot.lane.b32.xlu0 %v4415, 64
      %v4678 = vpop.permute.xlu0 %4677
      %4679 = vrot.lane.b32.xlu0 %v4416, 64
      %v4680 = vpop.permute.xlu0 %4679
      %4681 = vrot.lane.b32.xlu0 %v4417, 64
      %v4682 = vpop.permute.xlu0 %4681
      %4683 = vrot.lane.b32.xlu0 %v4418, 64
      %v4684 = vpop.permute.xlu0 %4683
      %4685 = vrot.lane.b32.xlu0 %v4419, 64
      %v4686 = vpop.permute.xlu0 %4685
      %4687 = vrot.lane.b32.xlu0 %v4420, 64
      %v4688 = vpop.permute.xlu0 %4687
      %4689 = vrot.lane.b32.xlu0 %v4421, 64
      %v4690 = vpop.permute.xlu0 %4689
      %4691 = vrot.lane.b32.xlu0 %v4422, 64
      %v4692 = vpop.permute.xlu0 %4691
      %4693 = vrot.lane.b32.xlu0 %v4423, 64
      %v4694 = vpop.permute.xlu0 %4693
      %4695 = vrot.lane.b32.xlu0 %v4424, 64
      %v4696 = vpop.permute.xlu0 %4695
      %4697 = vrot.lane.b32.xlu0 %v4425, 64
      %v4698 = vpop.permute.xlu0 %4697
      %4699 = vrot.lane.b32.xlu0 %v4426, 64
      %v4700 = vpop.permute.xlu0 %4699
      %4701 = vrot.lane.b32.xlu0 %v4427, 64
      %v4702 = vpop.permute.xlu0 %4701
      %4703 = vrot.lane.b32.xlu0 %v4428, 64
      %v4704 = vpop.permute.xlu0 %4703
      %4705 = vrot.lane.b32.xlu0 %v4429, 64
      %v4706 = vpop.permute.xlu0 %4705
      %4707 = vrot.lane.b32.xlu0 %v4430, 64
      %v4708 = vpop.permute.xlu0 %4707
      %4709 = vrot.lane.b32.xlu0 %v4431, 64
      %v4710 = vpop.permute.xlu0 %4709
      %4711 = vrot.lane.b32.xlu0 %v4432, 64
      %v4712 = vpop.permute.xlu0 %4711
      %4713 = vrot.lane.b32.xlu0 %v4433, 64
      %v4714 = vpop.permute.xlu0 %4713
      %4715 = vrot.lane.b32.xlu0 %v4434, 64
      %v4716 = vpop.permute.xlu0 %4715
      %4717 = vrot.lane.b32.xlu0 %v4435, 64
      %v4718 = vpop.permute.xlu0 %4717
      %4719 = vrot.lane.b32.xlu0 %v4436, 64
      %v4720 = vpop.permute.xlu0 %4719
      %4721 = vrot.lane.b32.xlu0 %v4437, 64
      %v4722 = vpop.permute.xlu0 %4721
      %4723 = vrot.lane.b32.xlu0 %v4438, 64
      %v4724 = vpop.permute.xlu0 %4723
      %4725 = vrot.lane.b32.xlu0 %v4439, 64
      %v4726 = vpop.permute.xlu0 %4725
      %4727 = vrot.lane.b32.xlu0 %v4440, 64
      %v4728 = vpop.permute.xlu0 %4727
      %4729 = vrot.lane.b32.xlu0 %v4441, 64
      %v4730 = vpop.permute.xlu0 %4729
      %4731 = vrot.lane.b32.xlu0 %v4442, 64
      %v4732 = vpop.permute.xlu0 %4731
      %4733 = vrot.lane.b32.xlu0 %v4443, 64
      %v4734 = vpop.permute.xlu0 %4733
      %4735 = vrot.lane.b32.xlu0 %v4444, 64
      %v4736 = vpop.permute.xlu0 %4735
      %4737 = vrot.lane.b32.xlu0 %v4445, 64
      %v4738 = vpop.permute.xlu0 %4737
      %4739 = vrot.lane.b32.xlu0 %v4446, 64
      %v4740 = vpop.permute.xlu0 %4739
      %4741 = vrot.lane.b32.xlu0 %v4447, 64
      %v4742 = vpop.permute.xlu0 %4741
      %4743 = vrot.lane.b32.xlu0 %v4448, 64
      %v4744 = vpop.permute.xlu0 %4743
      %4745 = vrot.lane.b32.xlu0 %v4449, 64
      %v4746 = vpop.permute.xlu0 %4745
      %4747 = vrot.lane.b32.xlu0 %v4450, 64
      %v4748 = vpop.permute.xlu0 %4747
      %4749 = vrot.lane.b32.xlu0 %v4451, 64
      %v4750 = vpop.permute.xlu0 %4749
      %4751 = vrot.lane.b32.xlu0 %v4452, 64
      %v4752 = vpop.permute.xlu0 %4751
      %4753 = vrot.lane.b32.xlu0 %v4453, 64
      %v4754 = vpop.permute.xlu0 %4753
      %4755 = vrot.lane.b32.xlu0 %v4454, 64
      %v4756 = vpop.permute.xlu0 %4755
      %4757 = vrot.lane.b32.xlu0 %v4455, 64
      %v4758 = vpop.permute.xlu0 %4757
      %4759 = vrot.lane.b32.xlu0 %v4456, 64
      %v4760 = vpop.permute.xlu0 %4759
      %4761 = vrot.lane.b32.xlu0 %v4457, 64
      %v4762 = vpop.permute.xlu0 %4761
      %4763 = vrot.lane.b32.xlu0 %v4458, 64
      %v4764 = vpop.permute.xlu0 %4763
      %4765 = vrot.lane.b32.xlu0 %v4459, 64
      %v4766 = vpop.permute.xlu0 %4765
      %4767 = vrot.lane.b32.xlu0 %v4460, 64
      %v4768 = vpop.permute.xlu0 %4767
      %4769 = vrot.lane.b32.xlu0 %v4461, 64
      %v4770 = vpop.permute.xlu0 %4769
      %4771 = vrot.lane.b32.xlu0 %v4462, 64
      %v4772 = vpop.permute.xlu0 %4771
      %4773 = vrot.lane.b32.xlu0 %v4463, 64
      %v4774 = vpop.permute.xlu0 %4773
      %4775 = vrot.lane.b32.xlu0 %v4464, 64
      %v4776 = vpop.permute.xlu0 %4775
      %4777 = vrot.lane.b32.xlu0 %v4465, 64
      %v4778 = vpop.permute.xlu0 %4777
      %4779 = vrot.lane.b32.xlu0 %v4466, 64
      %v4780 = vpop.permute.xlu0 %4779
      %4781 = vrot.lane.b32.xlu0 %v4467, 64
      %v4782 = vpop.permute.xlu0 %4781
      %4783 = vrot.lane.b32.xlu0 %v4468, 64
      %v4784 = vpop.permute.xlu0 %4783
      %4785 = vrot.lane.b32.xlu0 %v4469, 64
      %v4786 = vpop.permute.xlu0 %4785
      %4787 = vrot.lane.b32.xlu0 %v4470, 64
      %v4788 = vpop.permute.xlu0 %4787
      %4789 = vrot.lane.b32.xlu0 %v4471, 64
      %v4790 = vpop.permute.xlu0 %4789
      %4791 = vrot.lane.b32.xlu0 %v4472, 64
      %v4792 = vpop.permute.xlu0 %4791
      %4793 = vrot.lane.b32.xlu0 %v4473, 64
      %v4794 = vpop.permute.xlu0 %4793
      %4795 = vrot.lane.b32.xlu0 %v4474, 64
      %v4796 = vpop.permute.xlu0 %4795
      %4797 = vrot.lane.b32.xlu0 %v4475, 64
      %v4798 = vpop.permute.xlu0 %4797
      %4799 = vrot.lane.b32.xlu0 %v4476, 64
      %v4800 = vpop.permute.xlu0 %4799
      %4801 = vrot.lane.b32.xlu0 %v4477, 64
      %v4802 = vpop.permute.xlu0 %4801
      %4803 = vrot.lane.b32.xlu0 %v4478, 64
      %v4804 = vpop.permute.xlu0 %4803
      %4805 = vrot.lane.b32.xlu0 %v4479, 64
      %v4806 = vpop.permute.xlu0 %4805
      %4807 = vrot.lane.b32.xlu0 %v4480, 64
      %v4808 = vpop.permute.xlu0 %4807
      %4809 = vrot.lane.b32.xlu0 %v4481, 64
      %v4810 = vpop.permute.xlu0 %4809
      %4811 = vrot.lane.b32.xlu0 %v4482, 64
      %v4812 = vpop.permute.xlu0 %4811
      %4813 = vrot.lane.b32.xlu0 %v4483, 64
      %v4814 = vpop.permute.xlu0 %4813
      %4815 = vrot.lane.b32.xlu0 %v4484, 64
      %v4816 = vpop.permute.xlu0 %4815
      %4817 = vrot.lane.b32.xlu0 %v4485, 64
      %v4818 = vpop.permute.xlu0 %4817
      %4819 = vrot.lane.b32.xlu0 %v4486, 64
      %v4820 = vpop.permute.xlu0 %4819
      %4821 = vrot.lane.b32.xlu0 %v4487, 64
      %v4822 = vpop.permute.xlu0 %4821
      %4823 = vrot.lane.b32.xlu0 %v4488, 64
      %v4824 = vpop.permute.xlu0 %4823
      %4825 = vrot.lane.b32.xlu0 %v4489, 64
      %v4826 = vpop.permute.xlu0 %4825
      %4827 = vrot.lane.b32.xlu0 %v4490, 64
      %v4828 = vpop.permute.xlu0 %4827
      %4829 = vrot.lane.b32.xlu0 %v4491, 64
      %v4830 = vpop.permute.xlu0 %4829
      %4831 = vrot.lane.b32.xlu0 %v4492, 64
      %v4832 = vpop.permute.xlu0 %4831
      %4833 = vrot.lane.b32.xlu0 %v4493, 64
      %v4834 = vpop.permute.xlu0 %4833
      %4835 = vrot.lane.b32.xlu0 %v4494, 64
      %v4836 = vpop.permute.xlu0 %4835
      %4837 = vrot.lane.b32.xlu0 %v4495, 64
      %v4838 = vpop.permute.xlu0 %4837
      %4839 = vrot.lane.b32.xlu0 %v4496, 64
      %v4840 = vpop.permute.xlu0 %4839
      %4841 = vrot.lane.b32.xlu0 %v4497, 64
      %v4842 = vpop.permute.xlu0 %4841
      %4843 = vrot.lane.b32.xlu0 %v4498, 64
      %v4844 = vpop.permute.xlu0 %4843
      %4845 = vrot.lane.b32.xlu0 %v4499, 64
      %v4846 = vpop.permute.xlu0 %4845
      %4847 = vrot.lane.b32.xlu0 %v4500, 64
      %v4848 = vpop.permute.xlu0 %4847
      %4849 = vrot.lane.b32.xlu0 %v4501, 64
      %v4850 = vpop.permute.xlu0 %4849
      %4851 = vrot.lane.b32.xlu0 %v4502, 64
      %v4852 = vpop.permute.xlu0 %4851
      %4853 = vrot.lane.b32.xlu0 %v4503, 64
      %v4854 = vpop.permute.xlu0 %4853
      %4855 = vrot.lane.b32.xlu0 %v4504, 64
      %v4856 = vpop.permute.xlu0 %4855
      %4857 = vrot.lane.b32.xlu0 %v4505, 64
      %v4858 = vpop.permute.xlu0 %4857
      %4859 = vrot.lane.b32.xlu0 %v4506, 64
      %v4860 = vpop.permute.xlu0 %4859
      %4861 = vrot.lane.b32.xlu0 %v4507, 64
      %v4862 = vpop.permute.xlu0 %4861
      %4863 = vrot.lane.b32.xlu0 %v4508, 64
      %v4864 = vpop.permute.xlu0 %4863
      %4865 = vrot.lane.b32.xlu0 %v4509, 64
      %v4866 = vpop.permute.xlu0 %4865
      %4867 = vrot.lane.b32.xlu0 %v4510, 64
      %v4868 = vpop.permute.xlu0 %4867
      %4869 = vrot.lane.b32.xlu0 %v4511, 64
      %v4870 = vpop.permute.xlu0 %4869
      %4871 = vrot.lane.b32.xlu0 %v4512, 64
      %v4872 = vpop.permute.xlu0 %4871
      %4873 = vrot.lane.b32.xlu0 %v4513, 64
      %v4874 = vpop.permute.xlu0 %4873
      %4875 = vrot.lane.b32.xlu0 %v4514, 64
      %v4876 = vpop.permute.xlu0 %4875
      %4877 = vrot.lane.b32.xlu0 %v4515, 64
      %v4878 = vpop.permute.xlu0 %4877
      %4879 = vrot.lane.b32.xlu0 %v4516, 64
      %v4880 = vpop.permute.xlu0 %4879
      %4881 = vrot.lane.b32.xlu0 %v4517, 64
      %v4882 = vpop.permute.xlu0 %4881
      %4883 = vrot.lane.b32.xlu0 %v4518, 64
      %v4884 = vpop.permute.xlu0 %4883
      %4885 = vrot.lane.b32.xlu0 %v4519, 64
      %v4886 = vpop.permute.xlu0 %4885
      %4887 = vrot.lane.b32.xlu0 %v4520, 64
      %v4888 = vpop.permute.xlu0 %4887
      %4889 = vrot.lane.b32.xlu0 %v4521, 64
      %v4890 = vpop.permute.xlu0 %4889
      %4891 = vrot.lane.b32.xlu0 %v4522, 64
      %v4892 = vpop.permute.xlu0 %4891
      %4893 = vrot.lane.b32.xlu0 %v4523, 64
      %v4894 = vpop.permute.xlu0 %4893
      %4895 = vrot.lane.b32.xlu0 %v4524, 64
      %v4896 = vpop.permute.xlu0 %4895
      %4897 = vrot.lane.b32.xlu0 %v4525, 64
      %v4898 = vpop.permute.xlu0 %4897
      %4899 = vrot.lane.b32.xlu0 %v4526, 64
      %v4900 = vpop.permute.xlu0 %4899
      %4901 = vrot.lane.b32.xlu0 %v4527, 64
      %v4902 = vpop.permute.xlu0 %4901
      %4903 = vrot.lane.b32.xlu0 %v4528, 64
      %v4904 = vpop.permute.xlu0 %4903
      %4905 = vrot.lane.b32.xlu0 %v4529, 64
      %v4906 = vpop.permute.xlu0 %4905
      %4907 = vrot.lane.b32.xlu0 %v4530, 64
      %v4908 = vpop.permute.xlu0 %4907
      %4909 = vrot.lane.b32.xlu0 %v4531, 64
      %v4910 = vpop.permute.xlu0 %4909
      %4911 = vrot.lane.b32.xlu0 %v4532, 64
      %v4912 = vpop.permute.xlu0 %4911
      %4913 = vrot.lane.b32.xlu0 %v4533, 64
      %v4914 = vpop.permute.xlu0 %4913
      %4915 = vrot.lane.b32.xlu0 %v4534, 64
      %v4916 = vpop.permute.xlu0 %4915
      %4917 = vrot.lane.b32.xlu0 %v4535, 64
      %v4918 = vpop.permute.xlu0 %4917
      %4919 = vrot.lane.b32.xlu0 %v4536, 64
      %v4920 = vpop.permute.xlu0 %4919
      %v5049 = vsub.f32 %v3129, %v4666
      %v5050 = vsub.f32 %v3130, %v4668
      %v5051 = vsub.f32 %v3131, %v4670
      %v5052 = vsub.f32 %v3132, %v4672
      %v5053 = vsub.f32 %v3133, %v4674
      %v5054 = vsub.f32 %v3134, %v4676
      %v5055 = vsub.f32 %v3135, %v4678
      %v5056 = vsub.f32 %v3136, %v4680
      %v5057 = vsub.f32 %v3137, %v4682
      %v5058 = vsub.f32 %v3138, %v4684
      %v5059 = vsub.f32 %v3139, %v4686
      %v5060 = vsub.f32 %v3140, %v4688
      %v5061 = vsub.f32 %v3141, %v4690
      %v5062 = vsub.f32 %v3142, %v4692
      %v5063 = vsub.f32 %v3143, %v4694
      %v5064 = vsub.f32 %v3144, %v4696
      %v5065 = vsub.f32 %v3145, %v4698
      %v5066 = vsub.f32 %v3146, %v4700
      %v5067 = vsub.f32 %v3147, %v4702
      %v5068 = vsub.f32 %v3148, %v4704
      %v5069 = vsub.f32 %v3149, %v4706
      %v5070 = vsub.f32 %v3150, %v4708
      %v5071 = vsub.f32 %v3151, %v4710
      %v5072 = vsub.f32 %v3152, %v4712
      %v5073 = vsub.f32 %v3153, %v4714
      %v5074 = vsub.f32 %v3154, %v4716
      %v5075 = vsub.f32 %v3155, %v4718
      %v5076 = vsub.f32 %v3156, %v4720
      %v5077 = vsub.f32 %v3157, %v4722
      %v5078 = vsub.f32 %v3158, %v4724
      %v5079 = vsub.f32 %v3159, %v4726
      %v5080 = vsub.f32 %v3160, %v4728
      %v5081 = vsub.f32 %v3161, %v4730
      %v5082 = vsub.f32 %v3162, %v4732
      %v5083 = vsub.f32 %v3163, %v4734
      %v5084 = vsub.f32 %v3164, %v4736
      %v5085 = vsub.f32 %v3165, %v4738
      %v5086 = vsub.f32 %v3166, %v4740
      %v5087 = vsub.f32 %v3167, %v4742
      %v5088 = vsub.f32 %v3168, %v4744
      %v5089 = vsub.f32 %v3169, %v4746
      %v5090 = vsub.f32 %v3170, %v4748
      %v5091 = vsub.f32 %v3171, %v4750
      %v5092 = vsub.f32 %v3172, %v4752
      %v5093 = vsub.f32 %v3173, %v4754
      %v5094 = vsub.f32 %v3174, %v4756
      %v5095 = vsub.f32 %v3175, %v4758
      %v5096 = vsub.f32 %v3176, %v4760
      %v5097 = vsub.f32 %v3177, %v4762
      %v5098 = vsub.f32 %v3178, %v4764
      %v5099 = vsub.f32 %v3179, %v4766
      %v5100 = vsub.f32 %v3180, %v4768
      %v5101 = vsub.f32 %v3181, %v4770
      %v5102 = vsub.f32 %v3182, %v4772
      %v5103 = vsub.f32 %v3183, %v4774
      %v5104 = vsub.f32 %v3184, %v4776
      %v5105 = vsub.f32 %v3185, %v4778
      %v5106 = vsub.f32 %v3186, %v4780
      %v5107 = vsub.f32 %v3187, %v4782
      %v5108 = vsub.f32 %v3188, %v4784
      %v5109 = vsub.f32 %v3189, %v4786
      %v5110 = vsub.f32 %v3190, %v4788
      %v5111 = vsub.f32 %v3191, %v4790
      %v5112 = vsub.f32 %v3192, %v4792
      %v5113 = vsub.f32 %v3193, %v4794
      %v5114 = vsub.f32 %v3194, %v4796
      %v5115 = vsub.f32 %v3195, %v4798
      %v5116 = vsub.f32 %v3196, %v4800
      %v5117 = vsub.f32 %v3197, %v4802
      %v5118 = vsub.f32 %v3198, %v4804
      %v5119 = vsub.f32 %v3199, %v4806
      %v5120 = vsub.f32 %v3200, %v4808
      %v5121 = vsub.f32 %v3201, %v4810
      %v5122 = vsub.f32 %v3202, %v4812
      %v5123 = vsub.f32 %v3203, %v4814
      %v5124 = vsub.f32 %v3204, %v4816
      %v5125 = vsub.f32 %v3205, %v4818
      %v5126 = vsub.f32 %v3206, %v4820
      %v5127 = vsub.f32 %v3207, %v4822
      %v5128 = vsub.f32 %v3208, %v4824
      %v5129 = vsub.f32 %v3209, %v4826
      %v5130 = vsub.f32 %v3210, %v4828
      %v5131 = vsub.f32 %v3211, %v4830
      %v5132 = vsub.f32 %v3212, %v4832
      %v5133 = vsub.f32 %v3213, %v4834
      %v5134 = vsub.f32 %v3214, %v4836
      %v5135 = vsub.f32 %v3215, %v4838
      %v5136 = vsub.f32 %v3216, %v4840
      %v5137 = vsub.f32 %v3217, %v4842
      %v5138 = vsub.f32 %v3218, %v4844
      %v5139 = vsub.f32 %v3219, %v4846
      %v5140 = vsub.f32 %v3220, %v4848
      %v5141 = vsub.f32 %v3221, %v4850
      %v5142 = vsub.f32 %v3222, %v4852
      %v5143 = vsub.f32 %v3223, %v4854
      %v5144 = vsub.f32 %v3224, %v4856
      %v5145 = vsub.f32 %v3225, %v4858
      %v5146 = vsub.f32 %v3226, %v4860
      %v5147 = vsub.f32 %v3227, %v4862
      %v5148 = vsub.f32 %v3228, %v4864
      %v5149 = vsub.f32 %v3229, %v4866
      %v5150 = vsub.f32 %v3230, %v4868
      %v5151 = vsub.f32 %v3231, %v4870
      %v5152 = vsub.f32 %v3232, %v4872
      %v5153 = vsub.f32 %v3233, %v4874
      %v5154 = vsub.f32 %v3234, %v4876
      %v5155 = vsub.f32 %v3235, %v4878
      %v5156 = vsub.f32 %v3236, %v4880
      %v5157 = vsub.f32 %v3237, %v4882
      %v5158 = vsub.f32 %v3238, %v4884
      %v5159 = vsub.f32 %v3239, %v4886
      %v5160 = vsub.f32 %v3240, %v4888
      %v5161 = vsub.f32 %v3241, %v4890
      %v5162 = vsub.f32 %v3242, %v4892
      %v5163 = vsub.f32 %v3243, %v4894
      %v5164 = vsub.f32 %v3244, %v4896
      %v5165 = vsub.f32 %v3245, %v4898
      %v5166 = vsub.f32 %v3246, %v4900
      %v5167 = vsub.f32 %v3247, %v4902
      %v5168 = vsub.f32 %v3248, %v4904
      %v5169 = vsub.f32 %v3249, %v4906
      %v5170 = vsub.f32 %v3250, %v4908
      %v5171 = vsub.f32 %v3251, %v4910
      %v5172 = vsub.f32 %v3252, %v4912
      %v5173 = vsub.f32 %v3253, %v4914
      %v5174 = vsub.f32 %v3254, %v4916
      %v5175 = vsub.f32 %v3255, %v4918
      %v5176 = vsub.f32 %v3256, %v4920
      %v5177 = vmul.f32 %v5049, %v5049
      %v5178 = vmul.f32 %v5050, %v5050
      %v5179 = vmul.f32 %v5051, %v5051
      %v5180 = vmul.f32 %v5052, %v5052
      %v5181 = vmul.f32 %v5053, %v5053
      %v5182 = vmul.f32 %v5054, %v5054
      %v5183 = vmul.f32 %v5055, %v5055
      %v5184 = vmul.f32 %v5056, %v5056
      %v5185 = vmul.f32 %v5057, %v5057
      %v5186 = vmul.f32 %v5058, %v5058
      %v5187 = vmul.f32 %v5059, %v5059
      %v5188 = vmul.f32 %v5060, %v5060
      %v5189 = vmul.f32 %v5061, %v5061
      %v5190 = vmul.f32 %v5062, %v5062
      %v5191 = vmul.f32 %v5063, %v5063
      %v5192 = vmul.f32 %v5064, %v5064
      %v5193 = vmul.f32 %v5065, %v5065
      %v5194 = vmul.f32 %v5066, %v5066
      %v5195 = vmul.f32 %v5067, %v5067
      %v5196 = vmul.f32 %v5068, %v5068
      %v5197 = vmul.f32 %v5069, %v5069
      %v5198 = vmul.f32 %v5070, %v5070
      %v5199 = vmul.f32 %v5071, %v5071
      %v5200 = vmul.f32 %v5072, %v5072
      %v5201 = vmul.f32 %v5073, %v5073
      %v5202 = vmul.f32 %v5074, %v5074
      %v5203 = vmul.f32 %v5075, %v5075
      %v5204 = vmul.f32 %v5076, %v5076
      %v5205 = vmul.f32 %v5077, %v5077
      %v5206 = vmul.f32 %v5078, %v5078
      %v5207 = vmul.f32 %v5079, %v5079
      %v5208 = vmul.f32 %v5080, %v5080
      %v5209 = vmul.f32 %v5081, %v5081
      %v5210 = vmul.f32 %v5082, %v5082
      %v5211 = vmul.f32 %v5083, %v5083
      %v5212 = vmul.f32 %v5084, %v5084
      %v5213 = vmul.f32 %v5085, %v5085
      %v5214 = vmul.f32 %v5086, %v5086
      %v5215 = vmul.f32 %v5087, %v5087
      %v5216 = vmul.f32 %v5088, %v5088
      %v5217 = vmul.f32 %v5089, %v5089
      %v5218 = vmul.f32 %v5090, %v5090
      %v5219 = vmul.f32 %v5091, %v5091
      %v5220 = vmul.f32 %v5092, %v5092
      %v5221 = vmul.f32 %v5093, %v5093
      %v5222 = vmul.f32 %v5094, %v5094
      %v5223 = vmul.f32 %v5095, %v5095
      %v5224 = vmul.f32 %v5096, %v5096
      %v5225 = vmul.f32 %v5097, %v5097
      %v5226 = vmul.f32 %v5098, %v5098
      %v5227 = vmul.f32 %v5099, %v5099
      %v5228 = vmul.f32 %v5100, %v5100
      %v5229 = vmul.f32 %v5101, %v5101
      %v5230 = vmul.f32 %v5102, %v5102
      %v5231 = vmul.f32 %v5103, %v5103
      %v5232 = vmul.f32 %v5104, %v5104
      %v5233 = vmul.f32 %v5105, %v5105
      %v5234 = vmul.f32 %v5106, %v5106
      %v5235 = vmul.f32 %v5107, %v5107
      %v5236 = vmul.f32 %v5108, %v5108
      %v5237 = vmul.f32 %v5109, %v5109
      %v5238 = vmul.f32 %v5110, %v5110
      %v5239 = vmul.f32 %v5111, %v5111
      %v5240 = vmul.f32 %v5112, %v5112
      %v5241 = vmul.f32 %v5113, %v5113
      %v5242 = vmul.f32 %v5114, %v5114
      %v5243 = vmul.f32 %v5115, %v5115
      %v5244 = vmul.f32 %v5116, %v5116
      %v5245 = vmul.f32 %v5117, %v5117
      %v5246 = vmul.f32 %v5118, %v5118
      %v5247 = vmul.f32 %v5119, %v5119
      %v5248 = vmul.f32 %v5120, %v5120
      %v5249 = vmul.f32 %v5121, %v5121
      %v5250 = vmul.f32 %v5122, %v5122
      %v5251 = vmul.f32 %v5123, %v5123
      %v5252 = vmul.f32 %v5124, %v5124
      %v5253 = vmul.f32 %v5125, %v5125
      %v5254 = vmul.f32 %v5126, %v5126
      %v5255 = vmul.f32 %v5127, %v5127
      %v5256 = vmul.f32 %v5128, %v5128
      %v5257 = vmul.f32 %v5129, %v5129
      %v5258 = vmul.f32 %v5130, %v5130
      %v5259 = vmul.f32 %v5131, %v5131
      %v5260 = vmul.f32 %v5132, %v5132
      %v5261 = vmul.f32 %v5133, %v5133
      %v5262 = vmul.f32 %v5134, %v5134
      %v5263 = vmul.f32 %v5135, %v5135
      %v5264 = vmul.f32 %v5136, %v5136
      %v5265 = vmul.f32 %v5137, %v5137
      %v5266 = vmul.f32 %v5138, %v5138
      %v5267 = vmul.f32 %v5139, %v5139
      %v5268 = vmul.f32 %v5140, %v5140
      %v5269 = vmul.f32 %v5141, %v5141
      %v5270 = vmul.f32 %v5142, %v5142
      %v5271 = vmul.f32 %v5143, %v5143
      %v5272 = vmul.f32 %v5144, %v5144
      %v5273 = vmul.f32 %v5145, %v5145
      %v5274 = vmul.f32 %v5146, %v5146
      %v5275 = vmul.f32 %v5147, %v5147
      %v5276 = vmul.f32 %v5148, %v5148
      %v5277 = vmul.f32 %v5149, %v5149
      %v5278 = vmul.f32 %v5150, %v5150
      %v5279 = vmul.f32 %v5151, %v5151
      %v5280 = vmul.f32 %v5152, %v5152
      %v5281 = vmul.f32 %v5153, %v5153
      %v5282 = vmul.f32 %v5154, %v5154
      %v5283 = vmul.f32 %v5155, %v5155
      %v5284 = vmul.f32 %v5156, %v5156
      %v5285 = vmul.f32 %v5157, %v5157
      %v5286 = vmul.f32 %v5158, %v5158
      %v5287 = vmul.f32 %v5159, %v5159
      %v5288 = vmul.f32 %v5160, %v5160
      %v5289 = vmul.f32 %v5161, %v5161
      %v5290 = vmul.f32 %v5162, %v5162
      %v5291 = vmul.f32 %v5163, %v5163
      %v5292 = vmul.f32 %v5164, %v5164
      %v5293 = vmul.f32 %v5165, %v5165
      %v5294 = vmul.f32 %v5166, %v5166
      %v5295 = vmul.f32 %v5167, %v5167
      %v5296 = vmul.f32 %v5168, %v5168
      %v5297 = vmul.f32 %v5169, %v5169
      %v5298 = vmul.f32 %v5170, %v5170
      %v5299 = vmul.f32 %v5171, %v5171
      %v5300 = vmul.f32 %v5172, %v5172
      %v5301 = vmul.f32 %v5173, %v5173
      %v5302 = vmul.f32 %v5174, %v5174
      %v5303 = vmul.f32 %v5175, %v5175
      %v5304 = vmul.f32 %v5176, %v5176
      %v5305 = vsel %vm2488, %v5177, 0.0
      %5306 = vadd.xlane.f32.xlu0 %v5305
      %v5307 = vpop.xlane.xlu0 %5306
      %v5308 = vsel %vm2488, %v5178, 0.0
      %5309 = vadd.xlane.f32.xlu0 %v5308
      %v5310 = vpop.xlane.xlu0 %5309
      %v5311 = vsel %vm2488, %v5179, 0.0
      %5312 = vadd.xlane.f32.xlu0 %v5311
      %v5313 = vpop.xlane.xlu0 %5312
      %v5314 = vsel %vm2488, %v5180, 0.0
      %5315 = vadd.xlane.f32.xlu0 %v5314
      %v5316 = vpop.xlane.xlu0 %5315
      %v5317 = vsel %vm2488, %v5181, 0.0
      %5318 = vadd.xlane.f32.xlu0 %v5317
      %v5319 = vpop.xlane.xlu0 %5318
      %v5320 = vsel %vm2488, %v5182, 0.0
      %5321 = vadd.xlane.f32.xlu0 %v5320
      %v5322 = vpop.xlane.xlu0 %5321
      %v5323 = vsel %vm2488, %v5183, 0.0
      %5324 = vadd.xlane.f32.xlu0 %v5323
      %v5325 = vpop.xlane.xlu0 %5324
      %v5326 = vsel %vm2488, %v5184, 0.0
      %5327 = vadd.xlane.f32.xlu0 %v5326
      %v5328 = vpop.xlane.xlu0 %5327
      %v5329 = vsel %vm2488, %v5185, 0.0
      %5330 = vadd.xlane.f32.xlu0 %v5329
      %v5331 = vpop.xlane.xlu0 %5330
      %v5332 = vsel %vm2488, %v5186, 0.0
      %5333 = vadd.xlane.f32.xlu0 %v5332
      %v5334 = vpop.xlane.xlu0 %5333
      %v5335 = vsel %vm2488, %v5187, 0.0
      %5336 = vadd.xlane.f32.xlu0 %v5335
      %v5337 = vpop.xlane.xlu0 %5336
      %v5338 = vsel %vm2488, %v5188, 0.0
      %5339 = vadd.xlane.f32.xlu0 %v5338
      %v5340 = vpop.xlane.xlu0 %5339
      %v5341 = vsel %vm2488, %v5189, 0.0
      %5342 = vadd.xlane.f32.xlu0 %v5341
      %v5343 = vpop.xlane.xlu0 %5342
      %v5344 = vsel %vm2488, %v5190, 0.0
      %5345 = vadd.xlane.f32.xlu0 %v5344
      %v5346 = vpop.xlane.xlu0 %5345
      %v5347 = vsel %vm2488, %v5191, 0.0
      %5348 = vadd.xlane.f32.xlu0 %v5347
      %v5349 = vpop.xlane.xlu0 %5348
      %v5350 = vsel %vm2488, %v5192, 0.0
      %5351 = vadd.xlane.f32.xlu0 %v5350
      %v5352 = vpop.xlane.xlu0 %5351
      %v5353 = vsel %vm2488, %v5193, 0.0
      %5354 = vadd.xlane.f32.xlu0 %v5353
      %v5355 = vpop.xlane.xlu0 %5354
      %v5356 = vsel %vm2488, %v5194, 0.0
      %5357 = vadd.xlane.f32.xlu0 %v5356
      %v5358 = vpop.xlane.xlu0 %5357
      %v5359 = vsel %vm2488, %v5195, 0.0
      %5360 = vadd.xlane.f32.xlu0 %v5359
      %v5361 = vpop.xlane.xlu0 %5360
      %v5362 = vsel %vm2488, %v5196, 0.0
      %5363 = vadd.xlane.f32.xlu0 %v5362
      %v5364 = vpop.xlane.xlu0 %5363
      %v5365 = vsel %vm2488, %v5197, 0.0
      %5366 = vadd.xlane.f32.xlu0 %v5365
      %v5367 = vpop.xlane.xlu0 %5366
      %v5368 = vsel %vm2488, %v5198, 0.0
      %5369 = vadd.xlane.f32.xlu0 %v5368
      %v5370 = vpop.xlane.xlu0 %5369
      %v5371 = vsel %vm2488, %v5199, 0.0
      %5372 = vadd.xlane.f32.xlu0 %v5371
      %v5373 = vpop.xlane.xlu0 %5372
      %v5374 = vsel %vm2488, %v5200, 0.0
      %5375 = vadd.xlane.f32.xlu0 %v5374
      %v5376 = vpop.xlane.xlu0 %5375
      %v5377 = vsel %vm2488, %v5201, 0.0
      %5378 = vadd.xlane.f32.xlu0 %v5377
      %v5379 = vpop.xlane.xlu0 %5378
      %v5380 = vsel %vm2488, %v5202, 0.0
      %5381 = vadd.xlane.f32.xlu0 %v5380
      %v5382 = vpop.xlane.xlu0 %5381
      %v5383 = vsel %vm2488, %v5203, 0.0
      %5384 = vadd.xlane.f32.xlu0 %v5383
      %v5385 = vpop.xlane.xlu0 %5384
      %v5386 = vsel %vm2488, %v5204, 0.0
      %5387 = vadd.xlane.f32.xlu0 %v5386
      %v5388 = vpop.xlane.xlu0 %5387
      %v5389 = vsel %vm2488, %v5205, 0.0
      %5390 = vadd.xlane.f32.xlu0 %v5389
      %v5391 = vpop.xlane.xlu0 %5390
      %v5392 = vsel %vm2488, %v5206, 0.0
      %5393 = vadd.xlane.f32.xlu0 %v5392
      %v5394 = vpop.xlane.xlu0 %5393
      %v5395 = vsel %vm2488, %v5207, 0.0
      %5396 = vadd.xlane.f32.xlu0 %v5395
      %v5397 = vpop.xlane.xlu0 %5396
      %v5398 = vsel %vm2488, %v5208, 0.0
      %5399 = vadd.xlane.f32.xlu0 %v5398
      %v5400 = vpop.xlane.xlu0 %5399
      %v5401 = vsel %vm2488, %v5209, 0.0
      %5402 = vadd.xlane.f32.xlu0 %v5401
      %v5403 = vpop.xlane.xlu0 %5402
      %v5404 = vsel %vm2488, %v5210, 0.0
      %5405 = vadd.xlane.f32.xlu0 %v5404
      %v5406 = vpop.xlane.xlu0 %5405
      %v5407 = vsel %vm2488, %v5211, 0.0
      %5408 = vadd.xlane.f32.xlu0 %v5407
      %v5409 = vpop.xlane.xlu0 %5408
      %v5410 = vsel %vm2488, %v5212, 0.0
      %5411 = vadd.xlane.f32.xlu0 %v5410
      %v5412 = vpop.xlane.xlu0 %5411
      %v5413 = vsel %vm2488, %v5213, 0.0
      %5414 = vadd.xlane.f32.xlu0 %v5413
      %v5415 = vpop.xlane.xlu0 %5414
      %v5416 = vsel %vm2488, %v5214, 0.0
      %5417 = vadd.xlane.f32.xlu0 %v5416
      %v5418 = vpop.xlane.xlu0 %5417
      %v5419 = vsel %vm2488, %v5215, 0.0
      %5420 = vadd.xlane.f32.xlu0 %v5419
      %v5421 = vpop.xlane.xlu0 %5420
      %v5422 = vsel %vm2488, %v5216, 0.0
      %5423 = vadd.xlane.f32.xlu0 %v5422
      %v5424 = vpop.xlane.xlu0 %5423
      %v5425 = vsel %vm2488, %v5217, 0.0
      %5426 = vadd.xlane.f32.xlu0 %v5425
      %v5427 = vpop.xlane.xlu0 %5426
      %v5428 = vsel %vm2488, %v5218, 0.0
      %5429 = vadd.xlane.f32.xlu0 %v5428
      %v5430 = vpop.xlane.xlu0 %5429
      %v5431 = vsel %vm2488, %v5219, 0.0
      %5432 = vadd.xlane.f32.xlu0 %v5431
      %v5433 = vpop.xlane.xlu0 %5432
      %v5434 = vsel %vm2488, %v5220, 0.0
      %5435 = vadd.xlane.f32.xlu0 %v5434
      %v5436 = vpop.xlane.xlu0 %5435
      %v5437 = vsel %vm2488, %v5221, 0.0
      %5438 = vadd.xlane.f32.xlu0 %v5437
      %v5439 = vpop.xlane.xlu0 %5438
      %v5440 = vsel %vm2488, %v5222, 0.0
      %5441 = vadd.xlane.f32.xlu0 %v5440
      %v5442 = vpop.xlane.xlu0 %5441
      %v5443 = vsel %vm2488, %v5223, 0.0
      %5444 = vadd.xlane.f32.xlu0 %v5443
      %v5445 = vpop.xlane.xlu0 %5444
      %v5446 = vsel %vm2488, %v5224, 0.0
      %5447 = vadd.xlane.f32.xlu0 %v5446
      %v5448 = vpop.xlane.xlu0 %5447
      %v5449 = vsel %vm2488, %v5225, 0.0
      %5450 = vadd.xlane.f32.xlu0 %v5449
      %v5451 = vpop.xlane.xlu0 %5450
      %v5452 = vsel %vm2488, %v5226, 0.0
      %5453 = vadd.xlane.f32.xlu0 %v5452
      %v5454 = vpop.xlane.xlu0 %5453
      %v5455 = vsel %vm2488, %v5227, 0.0
      %5456 = vadd.xlane.f32.xlu0 %v5455
      %v5457 = vpop.xlane.xlu0 %5456
      %v5458 = vsel %vm2488, %v5228, 0.0
      %5459 = vadd.xlane.f32.xlu0 %v5458
      %v5460 = vpop.xlane.xlu0 %5459
      %v5461 = vsel %vm2488, %v5229, 0.0
      %5462 = vadd.xlane.f32.xlu0 %v5461
      %v5463 = vpop.xlane.xlu0 %5462
      %v5464 = vsel %vm2488, %v5230, 0.0
      %5465 = vadd.xlane.f32.xlu0 %v5464
      %v5466 = vpop.xlane.xlu0 %5465
      %v5467 = vsel %vm2488, %v5231, 0.0
      %5468 = vadd.xlane.f32.xlu0 %v5467
      %v5469 = vpop.xlane.xlu0 %5468
      %v5470 = vsel %vm2488, %v5232, 0.0
      %5471 = vadd.xlane.f32.xlu0 %v5470
      %v5472 = vpop.xlane.xlu0 %5471
      %v5473 = vsel %vm2488, %v5233, 0.0
      %5474 = vadd.xlane.f32.xlu0 %v5473
      %v5475 = vpop.xlane.xlu0 %5474
      %v5476 = vsel %vm2488, %v5234, 0.0
      %5477 = vadd.xlane.f32.xlu0 %v5476
      %v5478 = vpop.xlane.xlu0 %5477
      %v5479 = vsel %vm2488, %v5235, 0.0
      %5480 = vadd.xlane.f32.xlu0 %v5479
      %v5481 = vpop.xlane.xlu0 %5480
      %v5482 = vsel %vm2488, %v5236, 0.0
      %5483 = vadd.xlane.f32.xlu0 %v5482
      %v5484 = vpop.xlane.xlu0 %5483
      %v5485 = vsel %vm2488, %v5237, 0.0
      %5486 = vadd.xlane.f32.xlu0 %v5485
      %v5487 = vpop.xlane.xlu0 %5486
      %v5488 = vsel %vm2488, %v5238, 0.0
      %5489 = vadd.xlane.f32.xlu0 %v5488
      %v5490 = vpop.xlane.xlu0 %5489
      %v5491 = vsel %vm2488, %v5239, 0.0
      %5492 = vadd.xlane.f32.xlu0 %v5491
      %v5493 = vpop.xlane.xlu0 %5492
      %v5494 = vsel %vm2488, %v5240, 0.0
      %5495 = vadd.xlane.f32.xlu0 %v5494
      %v5496 = vpop.xlane.xlu0 %5495
      %v5497 = vsel %vm2488, %v5241, 0.0
      %5498 = vadd.xlane.f32.xlu0 %v5497
      %v5499 = vpop.xlane.xlu0 %5498
      %v5500 = vsel %vm2488, %v5242, 0.0
      %5501 = vadd.xlane.f32.xlu0 %v5500
      %v5502 = vpop.xlane.xlu0 %5501
      %v5503 = vsel %vm2488, %v5243, 0.0
      %5504 = vadd.xlane.f32.xlu0 %v5503
      %v5505 = vpop.xlane.xlu0 %5504
      %v5506 = vsel %vm2488, %v5244, 0.0
      %5507 = vadd.xlane.f32.xlu0 %v5506
      %v5508 = vpop.xlane.xlu0 %5507
      %v5509 = vsel %vm2488, %v5245, 0.0
      %5510 = vadd.xlane.f32.xlu0 %v5509
      %v5511 = vpop.xlane.xlu0 %5510
      %v5512 = vsel %vm2488, %v5246, 0.0
      %5513 = vadd.xlane.f32.xlu0 %v5512
      %v5514 = vpop.xlane.xlu0 %5513
      %v5515 = vsel %vm2488, %v5247, 0.0
      %5516 = vadd.xlane.f32.xlu0 %v5515
      %v5517 = vpop.xlane.xlu0 %5516
      %v5518 = vsel %vm2488, %v5248, 0.0
      %5519 = vadd.xlane.f32.xlu0 %v5518
      %v5520 = vpop.xlane.xlu0 %5519
      %v5521 = vsel %vm2488, %v5249, 0.0
      %5522 = vadd.xlane.f32.xlu0 %v5521
      %v5523 = vpop.xlane.xlu0 %5522
      %v5524 = vsel %vm2488, %v5250, 0.0
      %5525 = vadd.xlane.f32.xlu0 %v5524
      %v5526 = vpop.xlane.xlu0 %5525
      %v5527 = vsel %vm2488, %v5251, 0.0
      %5528 = vadd.xlane.f32.xlu0 %v5527
      %v5529 = vpop.xlane.xlu0 %5528
      %v5530 = vsel %vm2488, %v5252, 0.0
      %5531 = vadd.xlane.f32.xlu0 %v5530
      %v5532 = vpop.xlane.xlu0 %5531
      %v5533 = vsel %vm2488, %v5253, 0.0
      %5534 = vadd.xlane.f32.xlu0 %v5533
      %v5535 = vpop.xlane.xlu0 %5534
      %v5536 = vsel %vm2488, %v5254, 0.0
      %5537 = vadd.xlane.f32.xlu0 %v5536
      %v5538 = vpop.xlane.xlu0 %5537
      %v5539 = vsel %vm2488, %v5255, 0.0
      %5540 = vadd.xlane.f32.xlu0 %v5539
      %v5541 = vpop.xlane.xlu0 %5540
      %v5542 = vsel %vm2488, %v5256, 0.0
      %5543 = vadd.xlane.f32.xlu0 %v5542
      %v5544 = vpop.xlane.xlu0 %5543
      %v5545 = vsel %vm2488, %v5257, 0.0
      %5546 = vadd.xlane.f32.xlu0 %v5545
      %v5547 = vpop.xlane.xlu0 %5546
      %v5548 = vsel %vm2488, %v5258, 0.0
      %5549 = vadd.xlane.f32.xlu0 %v5548
      %v5550 = vpop.xlane.xlu0 %5549
      %v5551 = vsel %vm2488, %v5259, 0.0
      %5552 = vadd.xlane.f32.xlu0 %v5551
      %v5553 = vpop.xlane.xlu0 %5552
      %v5554 = vsel %vm2488, %v5260, 0.0
      %5555 = vadd.xlane.f32.xlu0 %v5554
      %v5556 = vpop.xlane.xlu0 %5555
      %v5557 = vsel %vm2488, %v5261, 0.0
      %5558 = vadd.xlane.f32.xlu0 %v5557
      %v5559 = vpop.xlane.xlu0 %5558
      %v5560 = vsel %vm2488, %v5262, 0.0
      %5561 = vadd.xlane.f32.xlu0 %v5560
      %v5562 = vpop.xlane.xlu0 %5561
      %v5563 = vsel %vm2488, %v5263, 0.0
      %5564 = vadd.xlane.f32.xlu0 %v5563
      %v5565 = vpop.xlane.xlu0 %5564
      %v5566 = vsel %vm2488, %v5264, 0.0
      %5567 = vadd.xlane.f32.xlu0 %v5566
      %v5568 = vpop.xlane.xlu0 %5567
      %v5569 = vsel %vm2488, %v5265, 0.0
      %5570 = vadd.xlane.f32.xlu0 %v5569
      %v5571 = vpop.xlane.xlu0 %5570
      %v5572 = vsel %vm2488, %v5266, 0.0
      %5573 = vadd.xlane.f32.xlu0 %v5572
      %v5574 = vpop.xlane.xlu0 %5573
      %v5575 = vsel %vm2488, %v5267, 0.0
      %5576 = vadd.xlane.f32.xlu0 %v5575
      %v5577 = vpop.xlane.xlu0 %5576
      %v5578 = vsel %vm2488, %v5268, 0.0
      %5579 = vadd.xlane.f32.xlu0 %v5578
      %v5580 = vpop.xlane.xlu0 %5579
      %v5581 = vsel %vm2488, %v5269, 0.0
      %5582 = vadd.xlane.f32.xlu0 %v5581
      %v5583 = vpop.xlane.xlu0 %5582
      %v5584 = vsel %vm2488, %v5270, 0.0
      %5585 = vadd.xlane.f32.xlu0 %v5584
      %v5586 = vpop.xlane.xlu0 %5585
      %v5587 = vsel %vm2488, %v5271, 0.0
      %5588 = vadd.xlane.f32.xlu0 %v5587
      %v5589 = vpop.xlane.xlu0 %5588
      %v5590 = vsel %vm2488, %v5272, 0.0
      %5591 = vadd.xlane.f32.xlu0 %v5590
      %v5592 = vpop.xlane.xlu0 %5591
      %v5593 = vsel %vm2488, %v5273, 0.0
      %5594 = vadd.xlane.f32.xlu0 %v5593
      %v5595 = vpop.xlane.xlu0 %5594
      %v5596 = vsel %vm2488, %v5274, 0.0
      %5597 = vadd.xlane.f32.xlu0 %v5596
      %v5598 = vpop.xlane.xlu0 %5597
      %v5599 = vsel %vm2488, %v5275, 0.0
      %5600 = vadd.xlane.f32.xlu0 %v5599
      %v5601 = vpop.xlane.xlu0 %5600
      %v5602 = vsel %vm2488, %v5276, 0.0
      %5603 = vadd.xlane.f32.xlu0 %v5602
      %v5604 = vpop.xlane.xlu0 %5603
      %v5605 = vsel %vm2488, %v5277, 0.0
      %5606 = vadd.xlane.f32.xlu0 %v5605
      %v5607 = vpop.xlane.xlu0 %5606
      %v5608 = vsel %vm2488, %v5278, 0.0
      %5609 = vadd.xlane.f32.xlu0 %v5608
      %v5610 = vpop.xlane.xlu0 %5609
      %v5611 = vsel %vm2488, %v5279, 0.0
      %5612 = vadd.xlane.f32.xlu0 %v5611
      %v5613 = vpop.xlane.xlu0 %5612
      %v5614 = vsel %vm2488, %v5280, 0.0
      %5615 = vadd.xlane.f32.xlu0 %v5614
      %v5616 = vpop.xlane.xlu0 %5615
      %v5617 = vsel %vm2488, %v5281, 0.0
      %5618 = vadd.xlane.f32.xlu0 %v5617
      %v5619 = vpop.xlane.xlu0 %5618
      %v5620 = vsel %vm2488, %v5282, 0.0
      %5621 = vadd.xlane.f32.xlu0 %v5620
      %v5622 = vpop.xlane.xlu0 %5621
      %v5623 = vsel %vm2488, %v5283, 0.0
      %5624 = vadd.xlane.f32.xlu0 %v5623
      %v5625 = vpop.xlane.xlu0 %5624
      %v5626 = vsel %vm2488, %v5284, 0.0
      %5627 = vadd.xlane.f32.xlu0 %v5626
      %v5628 = vpop.xlane.xlu0 %5627
      %v5629 = vsel %vm2488, %v5285, 0.0
      %5630 = vadd.xlane.f32.xlu0 %v5629
      %v5631 = vpop.xlane.xlu0 %5630
      %v5632 = vsel %vm2488, %v5286, 0.0
      %5633 = vadd.xlane.f32.xlu0 %v5632
      %v5634 = vpop.xlane.xlu0 %5633
      %v5635 = vsel %vm2488, %v5287, 0.0
      %5636 = vadd.xlane.f32.xlu0 %v5635
      %v5637 = vpop.xlane.xlu0 %5636
      %v5638 = vsel %vm2488, %v5288, 0.0
      %5639 = vadd.xlane.f32.xlu0 %v5638
      %v5640 = vpop.xlane.xlu0 %5639
      %v5641 = vsel %vm2488, %v5289, 0.0
      %5642 = vadd.xlane.f32.xlu0 %v5641
      %v5643 = vpop.xlane.xlu0 %5642
      %v5644 = vsel %vm2488, %v5290, 0.0
      %5645 = vadd.xlane.f32.xlu0 %v5644
      %v5646 = vpop.xlane.xlu0 %5645
      %v5647 = vsel %vm2488, %v5291, 0.0
      %5648 = vadd.xlane.f32.xlu0 %v5647
      %v5649 = vpop.xlane.xlu0 %5648
      %v5650 = vsel %vm2488, %v5292, 0.0
      %5651 = vadd.xlane.f32.xlu0 %v5650
      %v5652 = vpop.xlane.xlu0 %5651
      %v5653 = vsel %vm2488, %v5293, 0.0
      %5654 = vadd.xlane.f32.xlu0 %v5653
      %v5655 = vpop.xlane.xlu0 %5654
      %v5656 = vsel %vm2488, %v5294, 0.0
      %5657 = vadd.xlane.f32.xlu0 %v5656
      %v5658 = vpop.xlane.xlu0 %5657
      %v5659 = vsel %vm2488, %v5295, 0.0
      %5660 = vadd.xlane.f32.xlu0 %v5659
      %v5661 = vpop.xlane.xlu0 %5660
      %v5662 = vsel %vm2488, %v5296, 0.0
      %5663 = vadd.xlane.f32.xlu0 %v5662
      %v5664 = vpop.xlane.xlu0 %5663
      %v5665 = vsel %vm2488, %v5297, 0.0
      %5666 = vadd.xlane.f32.xlu0 %v5665
      %v5667 = vpop.xlane.xlu0 %5666
      %v5668 = vsel %vm2488, %v5298, 0.0
      %5669 = vadd.xlane.f32.xlu0 %v5668
      %v5670 = vpop.xlane.xlu0 %5669
      %v5671 = vsel %vm2488, %v5299, 0.0
      %5672 = vadd.xlane.f32.xlu0 %v5671
      %v5673 = vpop.xlane.xlu0 %5672
      %v5674 = vsel %vm2488, %v5300, 0.0
      %5675 = vadd.xlane.f32.xlu0 %v5674
      %v5676 = vpop.xlane.xlu0 %5675
      %v5677 = vsel %vm2488, %v5301, 0.0
      %5678 = vadd.xlane.f32.xlu0 %v5677
      %v5679 = vpop.xlane.xlu0 %5678
      %v5680 = vsel %vm2488, %v5302, 0.0
      %5681 = vadd.xlane.f32.xlu0 %v5680
      %v5682 = vpop.xlane.xlu0 %5681
      %v5683 = vsel %vm2488, %v5303, 0.0
      %5684 = vadd.xlane.f32.xlu0 %v5683
      %v5685 = vpop.xlane.xlu0 %5684
      %v5686 = vsel %vm2488, %v5304, 0.0
      %5687 = vadd.xlane.f32.xlu0 %v5686
      %v5688 = vpop.xlane.xlu0 %5687
      %v5689 = vmul.f32 %v5307, 0.5
      %v5690 = vmul.f32 %v5310, 0.5
      %v5691 = vmul.f32 %v5313, 0.5
      %v5692 = vmul.f32 %v5316, 0.5
      %v5693 = vmul.f32 %v5319, 0.5
      %v5694 = vmul.f32 %v5322, 0.5
      %v5695 = vmul.f32 %v5325, 0.5
      %v5696 = vmul.f32 %v5328, 0.5
      %v5697 = vmul.f32 %v5331, 0.5
      %v5698 = vmul.f32 %v5334, 0.5
      %v5699 = vmul.f32 %v5337, 0.5
      %v5700 = vmul.f32 %v5340, 0.5
      %v5701 = vmul.f32 %v5343, 0.5
      %v5702 = vmul.f32 %v5346, 0.5
      %v5703 = vmul.f32 %v5349, 0.5
      %v5704 = vmul.f32 %v5352, 0.5
      %v5705 = vmul.f32 %v5355, 0.5
      %v5706 = vmul.f32 %v5358, 0.5
      %v5707 = vmul.f32 %v5361, 0.5
      %v5708 = vmul.f32 %v5364, 0.5
      %v5709 = vmul.f32 %v5367, 0.5
      %v5710 = vmul.f32 %v5370, 0.5
      %v5711 = vmul.f32 %v5373, 0.5
      %v5712 = vmul.f32 %v5376, 0.5
      %v5713 = vmul.f32 %v5379, 0.5
      %v5714 = vmul.f32 %v5382, 0.5
      %v5715 = vmul.f32 %v5385, 0.5
      %v5716 = vmul.f32 %v5388, 0.5
      %v5717 = vmul.f32 %v5391, 0.5
      %v5718 = vmul.f32 %v5394, 0.5
      %v5719 = vmul.f32 %v5397, 0.5
      %v5720 = vmul.f32 %v5400, 0.5
      %v5721 = vmul.f32 %v5403, 0.5
      %v5722 = vmul.f32 %v5406, 0.5
      %v5723 = vmul.f32 %v5409, 0.5
      %v5724 = vmul.f32 %v5412, 0.5
      %v5725 = vmul.f32 %v5415, 0.5
      %v5726 = vmul.f32 %v5418, 0.5
      %v5727 = vmul.f32 %v5421, 0.5
      %v5728 = vmul.f32 %v5424, 0.5
      %v5729 = vmul.f32 %v5427, 0.5
      %v5730 = vmul.f32 %v5430, 0.5
      %v5731 = vmul.f32 %v5433, 0.5
      %v5732 = vmul.f32 %v5436, 0.5
      %v5733 = vmul.f32 %v5439, 0.5
      %v5734 = vmul.f32 %v5442, 0.5
      %v5735 = vmul.f32 %v5445, 0.5
      %v5736 = vmul.f32 %v5448, 0.5
      %v5737 = vmul.f32 %v5451, 0.5
      %v5738 = vmul.f32 %v5454, 0.5
      %v5739 = vmul.f32 %v5457, 0.5
      %v5740 = vmul.f32 %v5460, 0.5
      %v5741 = vmul.f32 %v5463, 0.5
      %v5742 = vmul.f32 %v5466, 0.5
      %v5743 = vmul.f32 %v5469, 0.5
      %v5744 = vmul.f32 %v5472, 0.5
      %v5745 = vmul.f32 %v5475, 0.5
      %v5746 = vmul.f32 %v5478, 0.5
      %v5747 = vmul.f32 %v5481, 0.5
      %v5748 = vmul.f32 %v5484, 0.5
      %v5749 = vmul.f32 %v5487, 0.5
      %v5750 = vmul.f32 %v5490, 0.5
      %v5751 = vmul.f32 %v5493, 0.5
      %v5752 = vmul.f32 %v5496, 0.5
      %v5753 = vmul.f32 %v5499, 0.5
      %v5754 = vmul.f32 %v5502, 0.5
      %v5755 = vmul.f32 %v5505, 0.5
      %v5756 = vmul.f32 %v5508, 0.5
      %v5757 = vmul.f32 %v5511, 0.5
      %v5758 = vmul.f32 %v5514, 0.5
      %v5759 = vmul.f32 %v5517, 0.5
      %v5760 = vmul.f32 %v5520, 0.5
      %v5761 = vmul.f32 %v5523, 0.5
      %v5762 = vmul.f32 %v5526, 0.5
      %v5763 = vmul.f32 %v5529, 0.5
      %v5764 = vmul.f32 %v5532, 0.5
      %v5765 = vmul.f32 %v5535, 0.5
      %v5766 = vmul.f32 %v5538, 0.5
      %v5767 = vmul.f32 %v5541, 0.5
      %v5768 = vmul.f32 %v5544, 0.5
      %v5769 = vmul.f32 %v5547, 0.5
      %v5770 = vmul.f32 %v5550, 0.5
      %v5771 = vmul.f32 %v5553, 0.5
      %v5772 = vmul.f32 %v5556, 0.5
      %v5773 = vmul.f32 %v5559, 0.5
      %v5774 = vmul.f32 %v5562, 0.5
      %v5775 = vmul.f32 %v5565, 0.5
      %v5776 = vmul.f32 %v5568, 0.5
      %v5777 = vmul.f32 %v5571, 0.5
      %v5778 = vmul.f32 %v5574, 0.5
      %v5779 = vmul.f32 %v5577, 0.5
      %v5780 = vmul.f32 %v5580, 0.5
      %v5781 = vmul.f32 %v5583, 0.5
      %v5782 = vmul.f32 %v5586, 0.5
      %v5783 = vmul.f32 %v5589, 0.5
      %v5784 = vmul.f32 %v5592, 0.5
      %v5785 = vmul.f32 %v5595, 0.5
      %v5786 = vmul.f32 %v5598, 0.5
      %v5787 = vmul.f32 %v5601, 0.5
      %v5788 = vmul.f32 %v5604, 0.5
      %v5789 = vmul.f32 %v5607, 0.5
      %v5790 = vmul.f32 %v5610, 0.5
      %v5791 = vmul.f32 %v5613, 0.5
      %v5792 = vmul.f32 %v5616, 0.5
      %v5793 = vmul.f32 %v5619, 0.5
      %v5794 = vmul.f32 %v5622, 0.5
      %v5795 = vmul.f32 %v5625, 0.5
      %v5796 = vmul.f32 %v5628, 0.5
      %v5797 = vmul.f32 %v5631, 0.5
      %v5798 = vmul.f32 %v5634, 0.5
      %v5799 = vmul.f32 %v5637, 0.5
      %v5800 = vmul.f32 %v5640, 0.5
      %v5801 = vmul.f32 %v5643, 0.5
      %v5802 = vmul.f32 %v5646, 0.5
      %v5803 = vmul.f32 %v5649, 0.5
      %v5804 = vmul.f32 %v5652, 0.5
      %v5805 = vmul.f32 %v5655, 0.5
      %v5806 = vmul.f32 %v5658, 0.5
      %v5807 = vmul.f32 %v5661, 0.5
      %v5808 = vmul.f32 %v5664, 0.5
      %v5809 = vmul.f32 %v5667, 0.5
      %v5810 = vmul.f32 %v5670, 0.5
      %v5811 = vmul.f32 %v5673, 0.5
      %v5812 = vmul.f32 %v5676, 0.5
      %v5813 = vmul.f32 %v5679, 0.5
      %v5814 = vmul.f32 %v5682, 0.5
      %v5815 = vmul.f32 %v5685, 0.5
      %v5816 = vmul.f32 %v5688, 0.5
      %v5945 = vlaneseq
      %v5946 = vand.u32 %v5945, 127
      %v5947 = vlaneseq
      %v5948 = vshrl.u32 %v5947, 7
      %v5949 = vsub.s32 %v5946, %v5948
      %v5950 = vrot.slane %v5689, %v5949
      %v5951 = vadd.s32 %v5946, 4294967288
      %v5952 = vlaneseq
      %v5953 = vshrl.u32 %v5952, 7
      %v5954 = vsub.s32 %v5951, %v5953
      %v5955 = vrot.slane %v5690, %v5954
      %vm5956 = vcmask 130112
      %v5957 = vsel %vm5956, %v5955, %v5950
      %v5958 = vadd.s32 %v5946, 4294967280
      %v5959 = vlaneseq
      %v5960 = vshrl.u32 %v5959, 7
      %v5961 = vsub.s32 %v5958, %v5960
      %v5962 = vrot.slane %v5691, %v5961
      %vm5963 = vcmask 195712
      %v5964 = vsel %vm5963, %v5962, %v5957
      %v5965 = vadd.s32 %v5946, 4294967272
      %v5966 = vlaneseq
      %v5967 = vshrl.u32 %v5966, 7
      %v5968 = vsub.s32 %v5965, %v5967
      %v5969 = vrot.slane %v5692, %v5968
      %vm5970 = vcmask 261312
      %v5971 = vsel %vm5970, %v5969, %v5964
      %v5972 = vlaneseq
      %v5973 = vshrl.u32 %v5972, 7
      %v5974 = vsub.s32 %v5946, %v5973
      %v5975 = vrot.slane %v5693, %v5974
      %v5976 = vlaneseq
      %v5977 = vshrl.u32 %v5976, 7
      %v5978 = vsub.s32 %v5951, %v5977
      %v5979 = vrot.slane %v5694, %v5978
      %v5980 = vsel %vm5956, %v5979, %v5975
      %v5981 = vlaneseq
      %v5982 = vshrl.u32 %v5981, 7
      %v5983 = vsub.s32 %v5958, %v5982
      %v5984 = vrot.slane %v5695, %v5983
      %v5985 = vsel %vm5963, %v5984, %v5980
      %v5986 = vlaneseq
      %v5987 = vshrl.u32 %v5986, 7
      %v5988 = vsub.s32 %v5965, %v5987
      %v5989 = vrot.slane %v5696, %v5988
      %v5990 = vsel %vm5970, %v5989, %v5985
      %v5991 = vlaneseq
      %v5992 = vshrl.u32 %v5991, 7
      %v5993 = vsub.s32 %v5946, %v5992
      %v5994 = vrot.slane %v5697, %v5993
      %v5995 = vlaneseq
      %v5996 = vshrl.u32 %v5995, 7
      %v5997 = vsub.s32 %v5951, %v5996
      %v5998 = vrot.slane %v5698, %v5997
      %v5999 = vsel %vm5956, %v5998, %v5994
      %v6000 = vlaneseq
      %v6001 = vshrl.u32 %v6000, 7
      %v6002 = vsub.s32 %v5958, %v6001
      %v6003 = vrot.slane %v5699, %v6002
      %v6004 = vsel %vm5963, %v6003, %v5999
      %v6005 = vlaneseq
      %v6006 = vshrl.u32 %v6005, 7
      %v6007 = vsub.s32 %v5965, %v6006
      %v6008 = vrot.slane %v5700, %v6007
      %v6009 = vsel %vm5970, %v6008, %v6004
      %v6010 = vlaneseq
      %v6011 = vshrl.u32 %v6010, 7
      %v6012 = vsub.s32 %v5946, %v6011
      %v6013 = vrot.slane %v5701, %v6012
      %v6014 = vlaneseq
      %v6015 = vshrl.u32 %v6014, 7
      %v6016 = vsub.s32 %v5951, %v6015
      %v6017 = vrot.slane %v5702, %v6016
      %v6018 = vsel %vm5956, %v6017, %v6013
      %v6019 = vlaneseq
      %v6020 = vshrl.u32 %v6019, 7
      %v6021 = vsub.s32 %v5958, %v6020
      %v6022 = vrot.slane %v5703, %v6021
      %v6023 = vsel %vm5963, %v6022, %v6018
      %v6024 = vlaneseq
      %v6025 = vshrl.u32 %v6024, 7
      %v6026 = vsub.s32 %v5965, %v6025
      %v6027 = vrot.slane %v5704, %v6026
      %v6028 = vsel %vm5970, %v6027, %v6023
      %v6029 = vlaneseq
      %v6030 = vshrl.u32 %v6029, 7
      %v6031 = vsub.s32 %v5946, %v6030
      %v6032 = vrot.slane %v5705, %v6031
      %v6033 = vlaneseq
      %v6034 = vshrl.u32 %v6033, 7
      %v6035 = vsub.s32 %v5951, %v6034
      %v6036 = vrot.slane %v5706, %v6035
      %v6037 = vsel %vm5956, %v6036, %v6032
      %v6038 = vlaneseq
      %v6039 = vshrl.u32 %v6038, 7
      %v6040 = vsub.s32 %v5958, %v6039
      %v6041 = vrot.slane %v5707, %v6040
      %v6042 = vsel %vm5963, %v6041, %v6037
      %v6043 = vlaneseq
      %v6044 = vshrl.u32 %v6043, 7
      %v6045 = vsub.s32 %v5965, %v6044
      %v6046 = vrot.slane %v5708, %v6045
      %v6047 = vsel %vm5970, %v6046, %v6042
      %v6048 = vlaneseq
      %v6049 = vshrl.u32 %v6048, 7
      %v6050 = vsub.s32 %v5946, %v6049
      %v6051 = vrot.slane %v5709, %v6050
      %v6052 = vlaneseq
      %v6053 = vshrl.u32 %v6052, 7
      %v6054 = vsub.s32 %v5951, %v6053
      %v6055 = vrot.slane %v5710, %v6054
      %v6056 = vsel %vm5956, %v6055, %v6051
      %v6057 = vlaneseq
      %v6058 = vshrl.u32 %v6057, 7
      %v6059 = vsub.s32 %v5958, %v6058
      %v6060 = vrot.slane %v5711, %v6059
      %v6061 = vsel %vm5963, %v6060, %v6056
      %v6062 = vlaneseq
      %v6063 = vshrl.u32 %v6062, 7
      %v6064 = vsub.s32 %v5965, %v6063
      %v6065 = vrot.slane %v5712, %v6064
      %v6066 = vsel %vm5970, %v6065, %v6061
      %v6067 = vlaneseq
      %v6068 = vshrl.u32 %v6067, 7
      %v6069 = vsub.s32 %v5946, %v6068
      %v6070 = vrot.slane %v5713, %v6069
      %v6071 = vlaneseq
      %v6072 = vshrl.u32 %v6071, 7
      %v6073 = vsub.s32 %v5951, %v6072
      %v6074 = vrot.slane %v5714, %v6073
      %v6075 = vsel %vm5956, %v6074, %v6070
      %v6076 = vlaneseq
      %v6077 = vshrl.u32 %v6076, 7
      %v6078 = vsub.s32 %v5958, %v6077
      %v6079 = vrot.slane %v5715, %v6078
      %v6080 = vsel %vm5963, %v6079, %v6075
      %v6081 = vlaneseq
      %v6082 = vshrl.u32 %v6081, 7
      %v6083 = vsub.s32 %v5965, %v6082
      %v6084 = vrot.slane %v5716, %v6083
      %v6085 = vsel %vm5970, %v6084, %v6080
      %v6086 = vlaneseq
      %v6087 = vshrl.u32 %v6086, 7
      %v6088 = vsub.s32 %v5946, %v6087
      %v6089 = vrot.slane %v5717, %v6088
      %v6090 = vlaneseq
      %v6091 = vshrl.u32 %v6090, 7
      %v6092 = vsub.s32 %v5951, %v6091
      %v6093 = vrot.slane %v5718, %v6092
      %v6094 = vsel %vm5956, %v6093, %v6089
      %v6095 = vlaneseq
      %v6096 = vshrl.u32 %v6095, 7
      %v6097 = vsub.s32 %v5958, %v6096
      %v6098 = vrot.slane %v5719, %v6097
      %v6099 = vsel %vm5963, %v6098, %v6094
      %v6100 = vlaneseq
      %v6101 = vshrl.u32 %v6100, 7
      %v6102 = vsub.s32 %v5965, %v6101
      %v6103 = vrot.slane %v5720, %v6102
      %v6104 = vsel %vm5970, %v6103, %v6099
      %v6105 = vlaneseq
      %v6106 = vshrl.u32 %v6105, 7
      %v6107 = vsub.s32 %v5946, %v6106
      %v6108 = vrot.slane %v5721, %v6107
      %v6109 = vlaneseq
      %v6110 = vshrl.u32 %v6109, 7
      %v6111 = vsub.s32 %v5951, %v6110
      %v6112 = vrot.slane %v5722, %v6111
      %v6113 = vsel %vm5956, %v6112, %v6108
      %v6114 = vlaneseq
      %v6115 = vshrl.u32 %v6114, 7
      %v6116 = vsub.s32 %v5958, %v6115
      %v6117 = vrot.slane %v5723, %v6116
      %v6118 = vsel %vm5963, %v6117, %v6113
      %v6119 = vlaneseq
      %v6120 = vshrl.u32 %v6119, 7
      %v6121 = vsub.s32 %v5965, %v6120
      %v6122 = vrot.slane %v5724, %v6121
      %v6123 = vsel %vm5970, %v6122, %v6118
      %v6124 = vlaneseq
      %v6125 = vshrl.u32 %v6124, 7
      %v6126 = vsub.s32 %v5946, %v6125
      %v6127 = vrot.slane %v5725, %v6126
      %v6128 = vlaneseq
      %v6129 = vshrl.u32 %v6128, 7
      %v6130 = vsub.s32 %v5951, %v6129
      %v6131 = vrot.slane %v5726, %v6130
      %v6132 = vsel %vm5956, %v6131, %v6127
      %v6133 = vlaneseq
      %v6134 = vshrl.u32 %v6133, 7
      %v6135 = vsub.s32 %v5958, %v6134
      %v6136 = vrot.slane %v5727, %v6135
      %v6137 = vsel %vm5963, %v6136, %v6132
      %v6138 = vlaneseq
      %v6139 = vshrl.u32 %v6138, 7
      %v6140 = vsub.s32 %v5965, %v6139
      %v6141 = vrot.slane %v5728, %v6140
      %v6142 = vsel %vm5970, %v6141, %v6137
      %v6143 = vlaneseq
      %v6144 = vshrl.u32 %v6143, 7
      %v6145 = vsub.s32 %v5946, %v6144
      %v6146 = vrot.slane %v5729, %v6145
      %v6147 = vlaneseq
      %v6148 = vshrl.u32 %v6147, 7
      %v6149 = vsub.s32 %v5951, %v6148
      %v6150 = vrot.slane %v5730, %v6149
      %v6151 = vsel %vm5956, %v6150, %v6146
      %v6152 = vlaneseq
      %v6153 = vshrl.u32 %v6152, 7
      %v6154 = vsub.s32 %v5958, %v6153
      %v6155 = vrot.slane %v5731, %v6154
      %v6156 = vsel %vm5963, %v6155, %v6151
      %v6157 = vlaneseq
      %v6158 = vshrl.u32 %v6157, 7
      %v6159 = vsub.s32 %v5965, %v6158
      %v6160 = vrot.slane %v5732, %v6159
      %v6161 = vsel %vm5970, %v6160, %v6156
      %v6162 = vlaneseq
      %v6163 = vshrl.u32 %v6162, 7
      %v6164 = vsub.s32 %v5946, %v6163
      %v6165 = vrot.slane %v5733, %v6164
      %v6166 = vlaneseq
      %v6167 = vshrl.u32 %v6166, 7
      %v6168 = vsub.s32 %v5951, %v6167
      %v6169 = vrot.slane %v5734, %v6168
      %v6170 = vsel %vm5956, %v6169, %v6165
      %v6171 = vlaneseq
      %v6172 = vshrl.u32 %v6171, 7
      %v6173 = vsub.s32 %v5958, %v6172
      %v6174 = vrot.slane %v5735, %v6173
      %v6175 = vsel %vm5963, %v6174, %v6170
      %v6176 = vlaneseq
      %v6177 = vshrl.u32 %v6176, 7
      %v6178 = vsub.s32 %v5965, %v6177
      %v6179 = vrot.slane %v5736, %v6178
      %v6180 = vsel %vm5970, %v6179, %v6175
      %v6181 = vlaneseq
      %v6182 = vshrl.u32 %v6181, 7
      %v6183 = vsub.s32 %v5946, %v6182
      %v6184 = vrot.slane %v5737, %v6183
      %v6185 = vlaneseq
      %v6186 = vshrl.u32 %v6185, 7
      %v6187 = vsub.s32 %v5951, %v6186
      %v6188 = vrot.slane %v5738, %v6187
      %v6189 = vsel %vm5956, %v6188, %v6184
      %v6190 = vlaneseq
      %v6191 = vshrl.u32 %v6190, 7
      %v6192 = vsub.s32 %v5958, %v6191
      %v6193 = vrot.slane %v5739, %v6192
      %v6194 = vsel %vm5963, %v6193, %v6189
      %v6195 = vlaneseq
      %v6196 = vshrl.u32 %v6195, 7
      %v6197 = vsub.s32 %v5965, %v6196
      %v6198 = vrot.slane %v5740, %v6197
      %v6199 = vsel %vm5970, %v6198, %v6194
      %v6200 = vlaneseq
      %v6201 = vshrl.u32 %v6200, 7
      %v6202 = vsub.s32 %v5946, %v6201
      %v6203 = vrot.slane %v5741, %v6202
      %v6204 = vlaneseq
      %v6205 = vshrl.u32 %v6204, 7
      %v6206 = vsub.s32 %v5951, %v6205
      %v6207 = vrot.slane %v5742, %v6206
      %v6208 = vsel %vm5956, %v6207, %v6203
      %v6209 = vlaneseq
      %v6210 = vshrl.u32 %v6209, 7
      %v6211 = vsub.s32 %v5958, %v6210
      %v6212 = vrot.slane %v5743, %v6211
      %v6213 = vsel %vm5963, %v6212, %v6208
      %v6214 = vlaneseq
      %v6215 = vshrl.u32 %v6214, 7
      %v6216 = vsub.s32 %v5965, %v6215
      %v6217 = vrot.slane %v5744, %v6216
      %v6218 = vsel %vm5970, %v6217, %v6213
      %v6219 = vlaneseq
      %v6220 = vshrl.u32 %v6219, 7
      %v6221 = vsub.s32 %v5946, %v6220
      %v6222 = vrot.slane %v5745, %v6221
      %v6223 = vlaneseq
      %v6224 = vshrl.u32 %v6223, 7
      %v6225 = vsub.s32 %v5951, %v6224
      %v6226 = vrot.slane %v5746, %v6225
      %v6227 = vsel %vm5956, %v6226, %v6222
      %v6228 = vlaneseq
      %v6229 = vshrl.u32 %v6228, 7
      %v6230 = vsub.s32 %v5958, %v6229
      %v6231 = vrot.slane %v5747, %v6230
      %v6232 = vsel %vm5963, %v6231, %v6227
      %v6233 = vlaneseq
      %v6234 = vshrl.u32 %v6233, 7
      %v6235 = vsub.s32 %v5965, %v6234
      %v6236 = vrot.slane %v5748, %v6235
      %v6237 = vsel %vm5970, %v6236, %v6232
      %v6238 = vlaneseq
      %v6239 = vshrl.u32 %v6238, 7
      %v6240 = vsub.s32 %v5946, %v6239
      %v6241 = vrot.slane %v5749, %v6240
      %v6242 = vlaneseq
      %v6243 = vshrl.u32 %v6242, 7
      %v6244 = vsub.s32 %v5951, %v6243
      %v6245 = vrot.slane %v5750, %v6244
      %v6246 = vsel %vm5956, %v6245, %v6241
      %v6247 = vlaneseq
      %v6248 = vshrl.u32 %v6247, 7
      %v6249 = vsub.s32 %v5958, %v6248
      %v6250 = vrot.slane %v5751, %v6249
      %v6251 = vsel %vm5963, %v6250, %v6246
      %v6252 = vlaneseq
      %v6253 = vshrl.u32 %v6252, 7
      %v6254 = vsub.s32 %v5965, %v6253
      %v6255 = vrot.slane %v5752, %v6254
      %v6256 = vsel %vm5970, %v6255, %v6251
      %v6257 = vlaneseq
      %v6258 = vshrl.u32 %v6257, 7
      %v6259 = vsub.s32 %v5946, %v6258
      %v6260 = vrot.slane %v5753, %v6259
      %v6261 = vlaneseq
      %v6262 = vshrl.u32 %v6261, 7
      %v6263 = vsub.s32 %v5951, %v6262
      %v6264 = vrot.slane %v5754, %v6263
      %v6265 = vsel %vm5956, %v6264, %v6260
      %v6266 = vlaneseq
      %v6267 = vshrl.u32 %v6266, 7
      %v6268 = vsub.s32 %v5958, %v6267
      %v6269 = vrot.slane %v5755, %v6268
      %v6270 = vsel %vm5963, %v6269, %v6265
      %v6271 = vlaneseq
      %v6272 = vshrl.u32 %v6271, 7
      %v6273 = vsub.s32 %v5965, %v6272
      %v6274 = vrot.slane %v5756, %v6273
      %v6275 = vsel %vm5970, %v6274, %v6270
      %v6276 = vlaneseq
      %v6277 = vshrl.u32 %v6276, 7
      %v6278 = vsub.s32 %v5946, %v6277
      %v6279 = vrot.slane %v5757, %v6278
      %v6280 = vlaneseq
      %v6281 = vshrl.u32 %v6280, 7
      %v6282 = vsub.s32 %v5951, %v6281
      %v6283 = vrot.slane %v5758, %v6282
      %v6284 = vsel %vm5956, %v6283, %v6279
      %v6285 = vlaneseq
      %v6286 = vshrl.u32 %v6285, 7
      %v6287 = vsub.s32 %v5958, %v6286
      %v6288 = vrot.slane %v5759, %v6287
      %v6289 = vsel %vm5963, %v6288, %v6284
      %v6290 = vlaneseq
      %v6291 = vshrl.u32 %v6290, 7
      %v6292 = vsub.s32 %v5965, %v6291
      %v6293 = vrot.slane %v5760, %v6292
      %v6294 = vsel %vm5970, %v6293, %v6289
      %v6295 = vlaneseq
      %v6296 = vshrl.u32 %v6295, 7
      %v6297 = vsub.s32 %v5946, %v6296
      %v6298 = vrot.slane %v5761, %v6297
      %v6299 = vlaneseq
      %v6300 = vshrl.u32 %v6299, 7
      %v6301 = vsub.s32 %v5951, %v6300
      %v6302 = vrot.slane %v5762, %v6301
      %v6303 = vsel %vm5956, %v6302, %v6298
      %v6304 = vlaneseq
      %v6305 = vshrl.u32 %v6304, 7
      %v6306 = vsub.s32 %v5958, %v6305
      %v6307 = vrot.slane %v5763, %v6306
      %v6308 = vsel %vm5963, %v6307, %v6303
      %v6309 = vlaneseq
      %v6310 = vshrl.u32 %v6309, 7
      %v6311 = vsub.s32 %v5965, %v6310
      %v6312 = vrot.slane %v5764, %v6311
      %v6313 = vsel %vm5970, %v6312, %v6308
      %v6314 = vlaneseq
      %v6315 = vshrl.u32 %v6314, 7
      %v6316 = vsub.s32 %v5946, %v6315
      %v6317 = vrot.slane %v5765, %v6316
      %v6318 = vlaneseq
      %v6319 = vshrl.u32 %v6318, 7
      %v6320 = vsub.s32 %v5951, %v6319
      %v6321 = vrot.slane %v5766, %v6320
      %v6322 = vsel %vm5956, %v6321, %v6317
      %v6323 = vlaneseq
      %v6324 = vshrl.u32 %v6323, 7
      %v6325 = vsub.s32 %v5958, %v6324
      %v6326 = vrot.slane %v5767, %v6325
      %v6327 = vsel %vm5963, %v6326, %v6322
      %v6328 = vlaneseq
      %v6329 = vshrl.u32 %v6328, 7
      %v6330 = vsub.s32 %v5965, %v6329
      %v6331 = vrot.slane %v5768, %v6330
      %v6332 = vsel %vm5970, %v6331, %v6327
      %v6333 = vlaneseq
      %v6334 = vshrl.u32 %v6333, 7
      %v6335 = vsub.s32 %v5946, %v6334
      %v6336 = vrot.slane %v5769, %v6335
      %v6337 = vlaneseq
      %v6338 = vshrl.u32 %v6337, 7
      %v6339 = vsub.s32 %v5951, %v6338
      %v6340 = vrot.slane %v5770, %v6339
      %v6341 = vsel %vm5956, %v6340, %v6336
      %v6342 = vlaneseq
      %v6343 = vshrl.u32 %v6342, 7
      %v6344 = vsub.s32 %v5958, %v6343
      %v6345 = vrot.slane %v5771, %v6344
      %v6346 = vsel %vm5963, %v6345, %v6341
      %v6347 = vlaneseq
      %v6348 = vshrl.u32 %v6347, 7
      %v6349 = vsub.s32 %v5965, %v6348
      %v6350 = vrot.slane %v5772, %v6349
      %v6351 = vsel %vm5970, %v6350, %v6346
      %v6352 = vlaneseq
      %v6353 = vshrl.u32 %v6352, 7
      %v6354 = vsub.s32 %v5946, %v6353
      %v6355 = vrot.slane %v5773, %v6354
      %v6356 = vlaneseq
      %v6357 = vshrl.u32 %v6356, 7
      %v6358 = vsub.s32 %v5951, %v6357
      %v6359 = vrot.slane %v5774, %v6358
      %v6360 = vsel %vm5956, %v6359, %v6355
      %v6361 = vlaneseq
      %v6362 = vshrl.u32 %v6361, 7
      %v6363 = vsub.s32 %v5958, %v6362
      %v6364 = vrot.slane %v5775, %v6363
      %v6365 = vsel %vm5963, %v6364, %v6360
      %v6366 = vlaneseq
      %v6367 = vshrl.u32 %v6366, 7
      %v6368 = vsub.s32 %v5965, %v6367
      %v6369 = vrot.slane %v5776, %v6368
      %v6370 = vsel %vm5970, %v6369, %v6365
      %v6371 = vlaneseq
      %v6372 = vshrl.u32 %v6371, 7
      %v6373 = vsub.s32 %v5946, %v6372
      %v6374 = vrot.slane %v5777, %v6373
      %v6375 = vlaneseq
      %v6376 = vshrl.u32 %v6375, 7
      %v6377 = vsub.s32 %v5951, %v6376
      %v6378 = vrot.slane %v5778, %v6377
      %v6379 = vsel %vm5956, %v6378, %v6374
      %v6380 = vlaneseq
      %v6381 = vshrl.u32 %v6380, 7
      %v6382 = vsub.s32 %v5958, %v6381
      %v6383 = vrot.slane %v5779, %v6382
      %v6384 = vsel %vm5963, %v6383, %v6379
      %v6385 = vlaneseq
      %v6386 = vshrl.u32 %v6385, 7
      %v6387 = vsub.s32 %v5965, %v6386
      %v6388 = vrot.slane %v5780, %v6387
      %v6389 = vsel %vm5970, %v6388, %v6384
      %v6390 = vlaneseq
      %v6391 = vshrl.u32 %v6390, 7
      %v6392 = vsub.s32 %v5946, %v6391
      %v6393 = vrot.slane %v5781, %v6392
      %v6394 = vlaneseq
      %v6395 = vshrl.u32 %v6394, 7
      %v6396 = vsub.s32 %v5951, %v6395
      %v6397 = vrot.slane %v5782, %v6396
      %v6398 = vsel %vm5956, %v6397, %v6393
      %v6399 = vlaneseq
      %v6400 = vshrl.u32 %v6399, 7
      %v6401 = vsub.s32 %v5958, %v6400
      %v6402 = vrot.slane %v5783, %v6401
      %v6403 = vsel %vm5963, %v6402, %v6398
      %v6404 = vlaneseq
      %v6405 = vshrl.u32 %v6404, 7
      %v6406 = vsub.s32 %v5965, %v6405
      %v6407 = vrot.slane %v5784, %v6406
      %v6408 = vsel %vm5970, %v6407, %v6403
      %v6409 = vlaneseq
      %v6410 = vshrl.u32 %v6409, 7
      %v6411 = vsub.s32 %v5946, %v6410
      %v6412 = vrot.slane %v5785, %v6411
      %v6413 = vlaneseq
      %v6414 = vshrl.u32 %v6413, 7
      %v6415 = vsub.s32 %v5951, %v6414
      %v6416 = vrot.slane %v5786, %v6415
      %v6417 = vsel %vm5956, %v6416, %v6412
      %v6418 = vlaneseq
      %v6419 = vshrl.u32 %v6418, 7
      %v6420 = vsub.s32 %v5958, %v6419
      %v6421 = vrot.slane %v5787, %v6420
      %v6422 = vsel %vm5963, %v6421, %v6417
      %v6423 = vlaneseq
      %v6424 = vshrl.u32 %v6423, 7
      %v6425 = vsub.s32 %v5965, %v6424
      %v6426 = vrot.slane %v5788, %v6425
      %v6427 = vsel %vm5970, %v6426, %v6422
      %v6428 = vlaneseq
      %v6429 = vshrl.u32 %v6428, 7
      %v6430 = vsub.s32 %v5946, %v6429
      %v6431 = vrot.slane %v5789, %v6430
      %v6432 = vlaneseq
      %v6433 = vshrl.u32 %v6432, 7
      %v6434 = vsub.s32 %v5951, %v6433
      %v6435 = vrot.slane %v5790, %v6434
      %v6436 = vsel %vm5956, %v6435, %v6431
      %v6437 = vlaneseq
      %v6438 = vshrl.u32 %v6437, 7
      %v6439 = vsub.s32 %v5958, %v6438
      %v6440 = vrot.slane %v5791, %v6439
      %v6441 = vsel %vm5963, %v6440, %v6436
      %v6442 = vlaneseq
      %v6443 = vshrl.u32 %v6442, 7
      %v6444 = vsub.s32 %v5965, %v6443
      %v6445 = vrot.slane %v5792, %v6444
      %v6446 = vsel %vm5970, %v6445, %v6441
      %v6447 = vlaneseq
      %v6448 = vshrl.u32 %v6447, 7
      %v6449 = vsub.s32 %v5946, %v6448
      %v6450 = vrot.slane %v5793, %v6449
      %v6451 = vlaneseq
      %v6452 = vshrl.u32 %v6451, 7
      %v6453 = vsub.s32 %v5951, %v6452
      %v6454 = vrot.slane %v5794, %v6453
      %v6455 = vsel %vm5956, %v6454, %v6450
      %v6456 = vlaneseq
      %v6457 = vshrl.u32 %v6456, 7
      %v6458 = vsub.s32 %v5958, %v6457
      %v6459 = vrot.slane %v5795, %v6458
      %v6460 = vsel %vm5963, %v6459, %v6455
      %v6461 = vlaneseq
      %v6462 = vshrl.u32 %v6461, 7
      %v6463 = vsub.s32 %v5965, %v6462
      %v6464 = vrot.slane %v5796, %v6463
      %v6465 = vsel %vm5970, %v6464, %v6460
      %v6466 = vlaneseq
      %v6467 = vshrl.u32 %v6466, 7
      %v6468 = vsub.s32 %v5946, %v6467
      %v6469 = vrot.slane %v5797, %v6468
      %v6470 = vlaneseq
      %v6471 = vshrl.u32 %v6470, 7
      %v6472 = vsub.s32 %v5951, %v6471
      %v6473 = vrot.slane %v5798, %v6472
      %v6474 = vsel %vm5956, %v6473, %v6469
      %v6475 = vlaneseq
      %v6476 = vshrl.u32 %v6475, 7
      %v6477 = vsub.s32 %v5958, %v6476
      %v6478 = vrot.slane %v5799, %v6477
      %v6479 = vsel %vm5963, %v6478, %v6474
      %v6480 = vlaneseq
      %v6481 = vshrl.u32 %v6480, 7
      %v6482 = vsub.s32 %v5965, %v6481
      %v6483 = vrot.slane %v5800, %v6482
      %v6484 = vsel %vm5970, %v6483, %v6479
      %v6485 = vlaneseq
      %v6486 = vshrl.u32 %v6485, 7
      %v6487 = vsub.s32 %v5946, %v6486
      %v6488 = vrot.slane %v5801, %v6487
      %v6489 = vlaneseq
      %v6490 = vshrl.u32 %v6489, 7
      %v6491 = vsub.s32 %v5951, %v6490
      %v6492 = vrot.slane %v5802, %v6491
      %v6493 = vsel %vm5956, %v6492, %v6488
      %v6494 = vlaneseq
      %v6495 = vshrl.u32 %v6494, 7
      %v6496 = vsub.s32 %v5958, %v6495
      %v6497 = vrot.slane %v5803, %v6496
      %v6498 = vsel %vm5963, %v6497, %v6493
      %v6499 = vlaneseq
      %v6500 = vshrl.u32 %v6499, 7
      %v6501 = vsub.s32 %v5965, %v6500
      %v6502 = vrot.slane %v5804, %v6501
      %v6503 = vsel %vm5970, %v6502, %v6498
      %v6504 = vlaneseq
      %v6505 = vshrl.u32 %v6504, 7
      %v6506 = vsub.s32 %v5946, %v6505
      %v6507 = vrot.slane %v5805, %v6506
      %v6508 = vlaneseq
      %v6509 = vshrl.u32 %v6508, 7
      %v6510 = vsub.s32 %v5951, %v6509
      %v6511 = vrot.slane %v5806, %v6510
      %v6512 = vsel %vm5956, %v6511, %v6507
      %v6513 = vlaneseq
      %v6514 = vshrl.u32 %v6513, 7
      %v6515 = vsub.s32 %v5958, %v6514
      %v6516 = vrot.slane %v5807, %v6515
      %v6517 = vsel %vm5963, %v6516, %v6512
      %v6518 = vlaneseq
      %v6519 = vshrl.u32 %v6518, 7
      %v6520 = vsub.s32 %v5965, %v6519
      %v6521 = vrot.slane %v5808, %v6520
      %v6522 = vsel %vm5970, %v6521, %v6517
      %v6523 = vlaneseq
      %v6524 = vshrl.u32 %v6523, 7
      %v6525 = vsub.s32 %v5946, %v6524
      %v6526 = vrot.slane %v5809, %v6525
      %v6527 = vlaneseq
      %v6528 = vshrl.u32 %v6527, 7
      %v6529 = vsub.s32 %v5951, %v6528
      %v6530 = vrot.slane %v5810, %v6529
      %v6531 = vsel %vm5956, %v6530, %v6526
      %v6532 = vlaneseq
      %v6533 = vshrl.u32 %v6532, 7
      %v6534 = vsub.s32 %v5958, %v6533
      %v6535 = vrot.slane %v5811, %v6534
      %v6536 = vsel %vm5963, %v6535, %v6531
      %v6537 = vlaneseq
      %v6538 = vshrl.u32 %v6537, 7
      %v6539 = vsub.s32 %v5965, %v6538
      %v6540 = vrot.slane %v5812, %v6539
      %v6541 = vsel %vm5970, %v6540, %v6536
      %v6542 = vlaneseq
      %v6543 = vshrl.u32 %v6542, 7
      %v6544 = vsub.s32 %v5946, %v6543
      %v6545 = vrot.slane %v5813, %v6544
      %v6546 = vlaneseq
      %v6547 = vshrl.u32 %v6546, 7
      %v6548 = vsub.s32 %v5951, %v6547
      %v6549 = vrot.slane %v5814, %v6548
      %v6550 = vsel %vm5956, %v6549, %v6545
      %v6551 = vlaneseq
      %v6552 = vshrl.u32 %v6551, 7
      %v6553 = vsub.s32 %v5958, %v6552
      %v6554 = vrot.slane %v5815, %v6553
      %v6555 = vsel %vm5963, %v6554, %v6550
      %v6556 = vlaneseq
      %v6557 = vshrl.u32 %v6556, 7
      %v6558 = vsub.s32 %v5965, %v6557
      %v6559 = vrot.slane %v5816, %v6558
      %v6560 = vsel %vm5970, %v6559, %v6555
      %vm6561 = vcmask 1041409
      %v6562 = vsel %vm6561, %v5990, %v5971
      %vm6563 = vcmask 1042434
      %v6564 = vsel %vm6563, %v6009, %v6562
      %vm6565 = vcmask 1043459
      %v6566 = vsel %vm6565, %v6028, %v6564
      %vm6567 = vcmask 1044484
      %v6568 = vsel %vm6567, %v6047, %v6566
      %vm6569 = vcmask 1045509
      %v6570 = vsel %vm6569, %v6066, %v6568
      %vm6571 = vcmask 1046534
      %v6572 = vsel %vm6571, %v6085, %v6570
      %vm6573 = vcmask 1047559
      %v6574 = vsel %vm6573, %v6104, %v6572
      %v6575 = vsel %vm6561, %v6142, %v6123
      %v6576 = vsel %vm6563, %v6161, %v6575
      %v6577 = vsel %vm6565, %v6180, %v6576
      %v6578 = vsel %vm6567, %v6199, %v6577
      %v6579 = vsel %vm6569, %v6218, %v6578
      %v6580 = vsel %vm6571, %v6237, %v6579
      %v6581 = vsel %vm6573, %v6256, %v6580
      %v6582 = vsel %vm6561, %v6294, %v6275
      %v6583 = vsel %vm6563, %v6313, %v6582
      %v6584 = vsel %vm6565, %v6332, %v6583
      %v6585 = vsel %vm6567, %v6351, %v6584
      %v6586 = vsel %vm6569, %v6370, %v6585
      %v6587 = vsel %vm6571, %v6389, %v6586
      %v6588 = vsel %vm6573, %v6408, %v6587
      %v6589 = vsel %vm6561, %v6446, %v6427
      %v6590 = vsel %vm6563, %v6465, %v6589
      %v6591 = vsel %vm6565, %v6484, %v6590
      %v6592 = vsel %vm6567, %v6503, %v6591
      %v6593 = vsel %vm6569, %v6522, %v6592
      %v6594 = vsel %vm6571, %v6541, %v6593
      %v6595 = vsel %vm6573, %v6560, %v6594
      %vm6600 = vcmask 261120
      %6601 = vst.msk [vmem:[%s116] sm:$0xff] %vm6600, %v6574
      %6602 = vst.msk [vmem:[%s116 + $0x8] sm:$0xff] %vm6600, %v6581
      %6603 = vst.msk [vmem:[%s116 + $0x10] sm:$0xff] %vm6600, %v6588
      %6604 = vst.msk [vmem:[%s116 + $0x18] sm:$0xff] %vm6600, %v6595
      %p6605 = scmp.lt.s32.totalorder %s12, 1
      %s6606 = scalar_select %p6605, %s12, 1
      %s6607 = smul.addr %s6606, 4
      %s6608 = smul.addr %s6607, 8
      %s6609 = scalar_lea.vmem %s1, %s6608
      // Predicated region
      $region25: #{ikd_forward.8} parent=23 // pred_check
        %p6610 = pneg %p56
      $region26: #{ikd_forward.8} parent=23 // pred_check_branch
        %6612 = sbr.rel (%p6610) target = $region28
      $region27: #{ikd_forward.8} parent=23 // pred_region
        _
      $region28: #{ikd_forward.8} parent=23 // pred_fallthru
        _
    $region24: #{ikd_forward.8} parent=5 // pred_fallthru
      _
    %p6613 = scmp.le.s32.totalorder 2, %s7
    // Predicated region
    $region29: #{ikd_forward.8} parent=5 // pred_check
      %p6614 = pneg %p6613
    $region30: #{ikd_forward.8} parent=5 // pred_check_branch
      %6616 = sbr.rel (%p6614) target = $region32
    $region31: #{ikd_forward.8} parent=5 // pred_region
      %s6617 = ssub.s32 %s7, 2
      // Predicated region
      $region33: #{ikd_forward.8} parent=31 // pred_check
        %p6618 = pneg %p62
      $region34: #{ikd_forward.8} parent=31 // pred_check_branch
        %6620 = sbr.rel (%p6618) target = $region36
      $region35: #{ikd_forward.8} parent=31 // pred_region
        %p6621 = scmp.lt.s32.totalorder %s13, 1
        %s6622 = scalar_select %p6621, %s13, 1
        %s6623 = smul.addr %s6622, 4
        %s6624 = smul.addr %s6623, 8
        %s6625 = scalar_lea.vmem %s1, %s6624
      $region36: #{ikd_forward.8} parent=31 // pred_fallthru
        _
    $region32: #{ikd_forward.8} parent=5 // pred_fallthru
      _
  $region6: #{ikd_forward.8} parent=0 // loop_footer
    %s11 = sadd.s32 1, %s7
  $region7: #{ikd_forward.8} parent=0 // loop_footer_branch
    %6 = sbr.rel target = $region3
  $region8: #{ikd_forward.8} parent=0 // loop_exit
    _

// kernel: ikd_forward.11
$region0: #{ikd_forward.11}
  #allocation0 [shape = 'u32[]', space=smem, size = 0x4, offset = 0x4, fixed_abs, tag = 'smem constant byte address 0x4 - core index']
  #allocation1 [shape = 'u32[144,128]{1,0:T(1,128)}', space=vmem, size = 0x12000, scoped, tag = 'internal scratch']
  %s0 = inlined_call_operand.vmem [shape: f32[2,8,2,8,256], index: 0, kind: input, shape index: {}]
  %s1 = inlined_call_operand.vmem [shape: f32[128,128], index: 1, kind: input, shape index: {}]
  %s2 = inlined_call_operand.vmem [shape: f32[1,128], index: 2, kind: input, shape index: {}]
  %s3 = inlined_call_operand.vmem [shape: f32[2,64,128], index: 3, kind: output, shape index: {}]
  %s4 = sld [smem:[#allocation0]]
  $region68: #{ikd_forward.11} parent=0
    _
  %s6 = ssub.s32 1, %s4
  %s7 = scalar_select 0, %s6, %s4
  $region1: #{ikd_forward.11} parent=0
    #allocation2 [shape = 'u8[131072]{0}', space=vmem, size = 0x20000, scoped, tag = 'input window, operand 0']
    loop: start=0, step=1, limit=4
    $region2: #{ikd_forward.11} parent=1 // loop_pre_header
      _
    $region3: #{ikd_forward.11} parent=1 // loop_header
      %s9 = sphi 0, %s13
      %p10 = scmp.ge.s32.totalorder %s9, 4
      %s19 = sphi 0, %s21
      %s22 = sphi 0, %s19
      %s23 = sphi 0, %s22
      %s39 = sphi 0, %s23
      %s43 = sphi 0, %s43
      %s45 = sphi 0, %s43
      %s46 = sphi 0, %s45
      %s60 = sphi 0, %s46
      %s64 = sphi 0, %s64
      %s66 = sphi 0, %s64
      %s67 = sphi 0, %s66
      %s81 = sphi 0, %s67
      %s87 = sphi 0, %s89
      %s90 = sphi 0, %s87
      %s91 = sphi 0, %s90
      %s107 = sphi 0, %s91
    $region4: #{ikd_forward.11} parent=1 // loop_header_branch
      %12 = sbr.rel (%p10) target = $region8
    $region5: #{ikd_forward.11} parent=1 // loop_body
      %s14 = ssub.s32 %s9, 1
      %s15 = ssub.s32 %s9, 2
      %s16 = sadd.s32 %s9, 1
      %s17 = ssub.s32 %s9, %s16
      %p18 = scmp.eq.s32.totalorder %s17, 0
      %s20 = sadd.s32 %s19, 1
      %s21 = scalar_select %p18, %s19, %s20
      %p24 = pneg %p18
      %p25 = scmp.eq.s32.totalorder %s9, 1
      %p26 = por %p24, %p25
      %p27 = scmp.ne.s32.totalorder %s19, %s22
      %p28 = scmp.eq.s32.totalorder %s9, 0
      %p29 = por %p27, %p28
      %p30 = scmp.ne.s32.totalorder %s19, %s22
      %p31 = scmp.eq.s32.totalorder %s14, 1
      %p32 = por %p30, %p31
      %p33 = scmp.ne.s32.totalorder %s22, %s23
      %p34 = scmp.eq.s32.totalorder %s14, 0
      %p35 = por %p33, %p34
      %p36 = scmp.ne.s32.totalorder %s22, %s23
      %p37 = scmp.eq.s32.totalorder %s15, 1
      %p38 = por %p36, %p37
      %p40 = scmp.ne.s32.totalorder %s23, %s39
      %p41 = scmp.eq.s32.totalorder %s15, 0
      %p42 = por %p40, %p41
      %s44 = sadd.s32 %s43, 1
      %p47 = scmp.eq.s32.totalorder %s9, 1
      %p48 = scmp.ne.s32.totalorder %s43, %s45
      %p49 = scmp.eq.s32.totalorder %s9, 0
      %p50 = por %p48, %p49
      %p51 = scmp.ne.s32.totalorder %s43, %s45
      %p52 = scmp.eq.s32.totalorder %s14, 1
      %p53 = por %p51, %p52
      %p54 = scmp.ne.s32.totalorder %s45, %s46
      %p55 = scmp.eq.s32.totalorder %s14, 0
      %p56 = por %p54, %p55
      %p57 = scmp.ne.s32.totalorder %s45, %s46
      %p58 = scmp.eq.s32.totalorder %s15, 1
      %p59 = por %p57, %p58
      %p61 = scmp.ne.s32.totalorder %s46, %s60
      %p62 = scmp.eq.s32.totalorder %s15, 0
      %p63 = por %p61, %p62
      %s65 = sadd.s32 %s64, 1
      %p68 = scmp.eq.s32.totalorder %s9, 1
      %p69 = scmp.ne.s32.totalorder %s64, %s66
      %p70 = scmp.eq.s32.totalorder %s9, 0
      %p71 = por %p69, %p70
      %p72 = scmp.ne.s32.totalorder %s64, %s66
      %p73 = scmp.eq.s32.totalorder %s14, 1
      %p74 = por %p72, %p73
      %p75 = scmp.ne.s32.totalorder %s66, %s67
      %p76 = scmp.eq.s32.totalorder %s14, 0
      %p77 = por %p75, %p76
      %p78 = scmp.ne.s32.totalorder %s66, %s67
      %p79 = scmp.eq.s32.totalorder %s15, 1
      %p80 = por %p78, %p79
      %p82 = scmp.ne.s32.totalorder %s67, %s81
      %p83 = scmp.eq.s32.totalorder %s15, 0
      %p84 = por %p82, %p83
      %s85 = ssub.s32 %s9, %s16
      %p86 = scmp.eq.s32.totalorder %s85, 0
      %s88 = sadd.s32 %s87, 1
      %s89 = scalar_select %p86, %s87, %s88
      %p92 = pneg %p86
      %p93 = scmp.eq.s32.totalorder %s9, 1
      %p94 = por %p92, %p93
      %p95 = scmp.ne.s32.totalorder %s87, %s90
      %p96 = scmp.eq.s32.totalorder %s9, 0
      %p97 = por %p95, %p96
      %p98 = scmp.ne.s32.totalorder %s87, %s90
      %p99 = scmp.eq.s32.totalorder %s14, 1
      %p100 = por %p98, %p99
      %p101 = scmp.ne.s32.totalorder %s90, %s91
      %p102 = scmp.eq.s32.totalorder %s14, 0
      %p103 = por %p101, %p102
      %p104 = scmp.ne.s32.totalorder %s90, %s91
      %p105 = scmp.eq.s32.totalorder %s15, 1
      %p106 = por %p104, %p105
      %p108 = scmp.ne.s32.totalorder %s91, %s107
      %p109 = scmp.eq.s32.totalorder %s15, 0
      %p110 = por %p108, %p109
      %p111 = scmp.le.s32.totalorder 1, %s9
      %p112 = scmp.lt.s32.totalorder %s9, 3
      %p113 = pnand %p111, %p112
      %p114 = pneg %p113
      // Predicated region
      $region9: #{ikd_forward.11} parent=5 // pred_check
        _
      $region10: #{ikd_forward.11} parent=5 // pred_check_branch
        %116 = sbr.rel (%p113) target = $region12
      $region11: #{ikd_forward.11} parent=5 // pred_region
        %s117 = ssub.s32 %s9, 1
        // Predicated region
        $region13: #{ikd_forward.11} parent=11 // pred_check
          %p118 = pneg %p56
        $region14: #{ikd_forward.11} parent=11 // pred_check_branch
          %120 = sbr.rel (%p118) target = $region16
        $region15: #{ikd_forward.11} parent=11 // pred_region
          _
        $region16: #{ikd_forward.11} parent=11 // pred_fallthru
          _
        // Predicated region
        $region17: #{ikd_forward.11} parent=11 // pred_check
          %p121 = pneg %p77
        $region18: #{ikd_forward.11} parent=11 // pred_check_branch
          %123 = sbr.rel (%p121) target = $region20
        $region19: #{ikd_forward.11} parent=11 // pred_region
          _
        $region20: #{ikd_forward.11} parent=11 // pred_fallthru
          _
      $region12: #{ikd_forward.11} parent=5 // pred_fallthru
        _
      %p124 = scmp.lt.s32.totalorder %s9, 2
      // Predicated region
      $region21: #{ikd_forward.11} parent=5 // pred_check
        %p125 = pneg %p124
      $region22: #{ikd_forward.11} parent=5 // pred_check_branch
        %127 = sbr.rel (%p125) target = $region24
      $region23: #{ikd_forward.11} parent=5 // pred_region
        // Predicated region
        $region25: #{ikd_forward.11} parent=23 // pred_check
          %p128 = pneg %p29
        $region26: #{ikd_forward.11} parent=23 // pred_check_branch
          %130 = sbr.rel (%p128) target = $region28
        $region27: #{ikd_forward.11} parent=23 // pred_region
          %s131 = sand.u32 %s19, 1
          %s132 = sand.u32 %s19, 1
          %s133 = smul.addr %s132, 128
          %s134 = scalar_lea.vmem [#allocation2], %s133
          %s135 = smul.addr %s9, 32
          %s136 = smul.addr %s135, 8
          %s137 = scalar_lea.vmem %s0, %s136
          // Predicated region
          $region29: #{ikd_forward.11} parent=27 // pred_check
            _
          $region30: #{ikd_forward.11} parent=27 // pred_check_branch
            %139 = sbr.rel (0) target = $region32
          $region31: #{ikd_forward.11} parent=27 // pred_region
            // Predicated region
            $region33: #{ikd_forward.11} parent=31 // pred_check
              _
            $region34: #{ikd_forward.11} parent=31 // pred_check_branch
              %141 = sbr.rel (0) target = $region36
            $region35: #{ikd_forward.11} parent=31 // pred_region
              loop: start=0, step=1, limit=1
              $region37: #{ikd_forward.11} parent=35 // loop_pre_header
                _
              $region38: #{ikd_forward.11} parent=35 // loop_header
                %s143 = sphi 0, %s147
                %p144 = scmp.ge.s32.totalorder %s143, 1
                %s148 = sphi %s137, %s137
                %s149 = sphi %s134, %s134
              $region39: #{ikd_forward.11} parent=35 // loop_header_branch
                %146 = sbr.rel (%p144) target = $region43
              $region40: #{ikd_forward.11} parent=35 // loop_body
                %v150 = vld [vmem:[%s148] sm:$0xff]
                %151 = vst [vmem:[%s149] sm:$0xff] %v150
                %v152 = vld [vmem:[%s148 + $0x8] sm:$0xff]
                %153 = vst [vmem:[%s149 + $0x8] sm:$0xff] %v152
                %v154 = vld [vmem:[%s148 + $0x20] sm:$0xff]
                %155 = vst [vmem:[%s149 + $0x10] sm:$0xff] %v154
                %v156 = vld [vmem:[%s148 + $0x28] sm:$0xff]
                %157 = vst [vmem:[%s149 + $0x18] sm:$0xff] %v156
                %v158 = vld [vmem:[%s148 + $0x40] sm:$0xff]
                %159 = vst [vmem:[%s149 + $0x20] sm:$0xff] %v158
                %v160 = vld [vmem:[%s148 + $0x48] sm:$0xff]
                %161 = vst [vmem:[%s149 + $0x28] sm:$0xff] %v160
                %v162 = vld [vmem:[%s148 + $0x60] sm:$0xff]
                %163 = vst [vmem:[%s149 + $0x30] sm:$0xff] %v162
                %v164 = vld [vmem:[%s148 + $0x68] sm:$0xff]
                %165 = vst [vmem:[%s149 + $0x38] sm:$0xff] %v164
                %v166 = vld [vmem:[%s148 + $0x80] sm:$0xff]
                %167 = vst [vmem:[%s149 + $0x40] sm:$0xff] %v166
                %v168 = vld [vmem:[%s148 + $0x88] sm:$0xff]
                %169 = vst [vmem:[%s149 + $0x48] sm:$0xff] %v168
                %v170 = vld [vmem:[%s148 + $0xa0] sm:$0xff]
                %171 = vst [vmem:[%s149 + $0x50] sm:$0xff] %v170
                %v172 = vld [vmem:[%s148 + $0xa8] sm:$0xff]
                %173 = vst [vmem:[%s149 + $0x58] sm:$0xff] %v172
                %v174 = vld [vmem:[%s148 + $0xc0] sm:$0xff]
                %175 = vst [vmem:[%s149 + $0x60] sm:$0xff] %v174
                %v176 = vld [vmem:[%s148 + $0xc8] sm:$0xff]
                %177 = vst [vmem:[%s149 + $0x68] sm:$0xff] %v176
                %v178 = vld [vmem:[%s148 + $0xe0] sm:$0xff]
                %179 = vst [vmem:[%s149 + $0x70] sm:$0xff] %v178
                %v180 = vld [vmem:[%s148 + $0xe8] sm:$0xff]
                %181 = vst [vmem:[%s149 + $0x78] sm:$0xff] %v180
              $region41: #{ikd_forward.11} parent=35 // loop_footer
                %s147 = sadd.s32 1, %s143
              $region42: #{ikd_forward.11} parent=35 // loop_footer_branch
                %142 = sbr.rel target = $region38
              $region43: #{ikd_forward.11} parent=35 // loop_exit
                _
            $region36: #{ikd_forward.11} parent=31 // pred_fallthru
              _
            // Predicated region
            $region44: #{ikd_forward.11} parent=31 // pred_check
              _
            $region45: #{ikd_forward.11} parent=31 // pred_check_branch
              %183 = sbr.rel target = $region47
            $region46: #{ikd_forward.11} parent=31 // pred_region
              _
            $region47: #{ikd_forward.11} parent=31 // pred_fallthru
              _
          $region32: #{ikd_forward.11} parent=27 // pred_fallthru
            _
          %184 = vnop
        $region28: #{ikd_forward.11} parent=23 // pred_fallthru
          _
      $region24: #{ikd_forward.11} parent=5 // pred_fallthru
        _
      %p185 = scmp.le.s32.totalorder 1, %s9
      %p186 = scmp.lt.s32.totalorder %s9, 3
      %p187 = pnand %p185, %p186
      %p188 = pneg %p187
      // Predicated region
      $region48: #{ikd_forward.11} parent=5 // pred_check
        _
      $region49: #{ikd_forward.11} parent=5 // pred_check_branch
        %190 = sbr.rel (%p187) target = $region51
      $region50: #{ikd_forward.11} parent=5 // pred_region
        %s191 = ssub.s32 %s9, 1
        %s192 = sand.u32 %s22, 1
        %s193 = sand.u32 %s22, 1
        %s194 = smul.addr %s193, 128
        %s195 = scalar_lea.vmem [#allocation2], %s194
        // Predicated region
        $region52: #{ikd_forward.11} parent=50 // pred_check
          %p196 = pneg %p35
        $region53: #{ikd_forward.11} parent=50 // pred_check_branch
          %198 = sbr.rel (%p196) target = $region55
        $region54: #{ikd_forward.11} parent=50 // pred_region
          _
        $region55: #{ikd_forward.11} parent=50 // pred_fallthru
          _
        %s199 = sand.u32 %s22, 1
        %s200 = sand.u32 %s22, 1
        %s201 = smul.addr %s200, 128
        %s202 = scalar_lea.vmem [#allocation2], %s201
        %p203 = pneg %p35
        %p204 = pneg %p32
        %p205 = pneg %p56
        %p206 = pneg %p53
        %p207 = pneg %p77
        %p208 = pneg %p74
        %p209 = pneg %p103
        %p210 = pneg %p100
        %p211 = scmp.lt.s32.totalorder %s14, 1
        %s212 = scalar_select %p211, %s14, 1
        %s213 = smul.addr %s212, 8
        %s214 = smul.addr %s213, 8
        %s215 = scalar_lea.vmem %s3, %s214
        %p216 = scmp.lt.s32.totalorder %s14, 1
        %s217 = scalar_select %p216, %s14, 1
        %s218 = smul.addr %s217, 8
        %s219 = smul.addr %s218, 8
        %s220 = scalar_lea.vmem %s3, %s219
        %v222 = vld [vmem:[%s195] sm:$0xff]
        %v223 = vld [vmem:[%s195 + $0x10] sm:$0xff]
        %v224 = vld [vmem:[%s195 + $0x20] sm:$0xff]
        %v225 = vld [vmem:[%s195 + $0x30] sm:$0xff]
        %v226 = vld [vmem:[%s195 + $0x40] sm:$0xff]
        %v227 = vld [vmem:[%s195 + $0x50] sm:$0xff]
        %v228 = vld [vmem:[%s195 + $0x60] sm:$0xff]
        %v229 = vld [vmem:[%s195 + $0x70] sm:$0xff]
        %v230 = vpack.c.bf16 %v223, %v222
        %v231 = vpack.c.bf16 %v225, %v224
        %v232 = vpack.c.bf16 %v227, %v226
        %v233 = vpack.c.bf16 %v229, %v228
        %v234 = vld [vmem:[%s1] sm:$0xff]
        %v235 = vld [vmem:[%s1 + $0x8] sm:$0xff]
        %v236 = vld [vmem:[%s1 + $0x10] sm:$0xff]
        %v237 = vld [vmem:[%s1 + $0x18] sm:$0xff]
        %v238 = vld [vmem:[%s1 + $0x20] sm:$0xff]
        %v239 = vld [vmem:[%s1 + $0x28] sm:$0xff]
        %v240 = vld [vmem:[%s1 + $0x30] sm:$0xff]
        %v241 = vld [vmem:[%s1 + $0x38] sm:$0xff]
        %v242 = vld [vmem:[%s1 + $0x40] sm:$0xff]
        %v243 = vld [vmem:[%s1 + $0x48] sm:$0xff]
        %v244 = vld [vmem:[%s1 + $0x50] sm:$0xff]
        %v245 = vld [vmem:[%s1 + $0x58] sm:$0xff]
        %v246 = vld [vmem:[%s1 + $0x60] sm:$0xff]
        %v247 = vld [vmem:[%s1 + $0x68] sm:$0xff]
        %v248 = vld [vmem:[%s1 + $0x70] sm:$0xff]
        %v249 = vld [vmem:[%s1 + $0x78] sm:$0xff]
        %v250 = vpack.c.bf16 %v235, %v234
        %v251 = vpack.c.bf16 %v237, %v236
        %v252 = vpack.c.bf16 %v239, %v238
        %v253 = vpack.c.bf16 %v241, %v240
        %v254 = vpack.c.bf16 %v243, %v242
        %v255 = vpack.c.bf16 %v245, %v244
        %v256 = vpack.c.bf16 %v247, %v246
        %v257 = vpack.c.bf16 %v249, %v248
        %v258 = vld [vmem:[%s2] sm:$0x1]
        %v260 = vlaneseq
        %v261 = vshrl.u32 %v260, 7
        %v262 = vsub.s32 0, %v261
        %v263 = vrot.slane %v258, %v262
        %265 = vmatprep.subr.bf16.mxu0 0
        %266 = vmatpush1.bf16.msra.mxu0 %v257
        %267 = vmatprep.subr.bf16.mxu0 0
        %268 = vmatpush1.bf16.msra.mxu0 %v256
        %269 = vmatprep.subr.bf16.mxu0 0
        %270 = vmatpush1.bf16.msra.mxu0 %v255
        %271 = vmatprep.subr.bf16.mxu0 0
        %272 = vmatpush1.bf16.msra.mxu0 %v254
        %273 = vmatprep.subr.bf16.mxu0 0
        %274 = vmatpush1.bf16.msra.mxu0 %v253
        %275 = vmatprep.subr.bf16.mxu0 0
        %276 = vmatpush1.bf16.msra.mxu0 %v252
        %277 = vmatprep.subr.bf16.mxu0 0
        %278 = vmatpush1.bf16.msra.mxu0 %v251
        %279 = vmatprep.subr.bf16.mxu0 0
        %280 = vmatpush1.bf16.msra.mxu0 %v250
        %281 = vmatprep.subr.bf16.mxu0 0
        %282 = vmatpush2.bf16.msra.mxu0 0
        %283 = vmatprep.subr.bf16.mxu0 0
        %284 = vmatpush2.bf16.msra.mxu0 0
        %285 = vmatprep.subr.bf16.mxu0 0
        %286 = vmatpush2.bf16.msra.mxu0 0
        %287 = vmatprep.subr.bf16.mxu0 0
        %288 = vmatpush2.bf16.msra.mxu0 0
        %289 = vmatprep.subr.bf16.mxu0 0
        %290 = vmatpush2.bf16.msra.mxu0 0
        %291 = vmatprep.subr.bf16.mxu0 0
        %292 = vmatpush2.bf16.msra.mxu0 0
        %293 = vmatprep.subr.bf16.mxu0 0
        %294 = vmatpush2.bf16.msra.mxu0 0
        %295 = vmatprep.subr.bf16.mxu0 0
        %296 = vmatpush2.bf16.msra.mxu0 0
        %297 = vmatprep.mubr.bf16.mxu0 0
        %298 = vmatmul.mubr.bf16.gmra.mxu0 %v230
        %v299 = vpop.f32.mrf.mxu0
        %v300 = vadd.f32 %v263, %v299
        %v301 = vpop.f32.mrf.mxu0
        %v302 = vpop.f32.mrf.mxu0
        %v303 = vadd.f32 %v263, %v302
        %v304 = vpop.f32.mrf.mxu0
        %305 = vmatprep.mubr.bf16.mxu0 0
        %306 = vmatmul.mubr.bf16.gmra.mxu0 %v231
        %v307 = vpop.f32.mrf.mxu0
        %v308 = vadd.f32 %v263, %v307
        %v309 = vpop.f32.mrf.mxu0
        %v310 = vpop.f32.mrf.mxu0
        %v311 = vadd.f32 %v263, %v310
        %v312 = vpop.f32.mrf.mxu0
        %313 = vmatprep.mubr.bf16.mxu0 0
        %314 = vmatmul.mubr.bf16.gmra.mxu0 %v232
        %v315 = vpop.f32.mrf.mxu0
        %v316 = vadd.f32 %v263, %v315
        %v317 = vpop.f32.mrf.mxu0
        %v318 = vpop.f32.mrf.mxu0
        %v319 = vadd.f32 %v263, %v318
        %v320 = vpop.f32.mrf.mxu0
        %321 = vmatprep.mubr.bf16.mxu0 0
        %322 = vmatmul.mubr.bf16.gmra.mxu0 %v233
        %v323 = vpop.f32.mrf.mxu0
        %v324 = vadd.f32 %v263, %v323
        %v325 = vpop.f32.mrf.mxu0
        %v326 = vpop.f32.mrf.mxu0
        %v327 = vadd.f32 %v263, %v326
        %v328 = vpop.f32.mrf.mxu0
        %329 = vdwg.mxu0
        %v330 = vmax.f32 %v300, 0.0
        %v331 = vmax.f32 %v303, 0.0
        %v332 = vmax.f32 %v308, 0.0
        %v333 = vmax.f32 %v311, 0.0
        %v334 = vmax.f32 %v316, 0.0
        %v335 = vmax.f32 %v319, 0.0
        %v336 = vmax.f32 %v324, 0.0
        %v337 = vmax.f32 %v327, 0.0
        %338 = vst [vmem:[%s220] sm:$0xff] %v330
        %339 = vst [vmem:[%s220 + $0x8] sm:$0xff] %v331
        %340 = vst [vmem:[%s220 + $0x10] sm:$0xff] %v332
        %341 = vst [vmem:[%s220 + $0x18] sm:$0xff] %v333
        %342 = vst [vmem:[%s220 + $0x20] sm:$0xff] %v334
        %343 = vst [vmem:[%s220 + $0x28] sm:$0xff] %v335
        %344 = vst [vmem:[%s220 + $0x30] sm:$0xff] %v336
        %345 = vst [vmem:[%s220 + $0x38] sm:$0xff] %v337
        %p346 = scmp.lt.s32.totalorder %s14, 1
        %s347 = scalar_select %p346, %s14, 1
        %s348 = smul.addr %s347, 8
        %s349 = smul.addr %s348, 8
        %s350 = scalar_lea.vmem %s3, %s349
        // Predicated region
        $region56: #{ikd_forward.11} parent=50 // pred_check
          %p351 = pneg %p100
        $region57: #{ikd_forward.11} parent=50 // pred_check_branch
          %353 = sbr.rel (%p351) target = $region59
        $region58: #{ikd_forward.11} parent=50 // pred_region
          _
        $region59: #{ikd_forward.11} parent=50 // pred_fallthru
          _
      $region51: #{ikd_forward.11} parent=5 // pred_fallthru
        _
      %p354 = scmp.le.s32.totalorder 2, %s9
      // Predicated region
      $region60: #{ikd_forward.11} parent=5 // pred_check
        %p355 = pneg %p354
      $region61: #{ikd_forward.11} parent=5 // pred_check_branch
        %357 = sbr.rel (%p355) target = $region63
      $region62: #{ikd_forward.11} parent=5 // pred_region
        %s358 = ssub.s32 %s9, 2
        // Predicated region
        $region64: #{ikd_forward.11} parent=62 // pred_check
          %p359 = pneg %p106
        $region65: #{ikd_forward.11} parent=62 // pred_check_branch
          %361 = sbr.rel (%p359) target = $region67
        $region66: #{ikd_forward.11} parent=62 // pred_region
          %p362 = scmp.lt.s32.totalorder %s15, 1
          %s363 = scalar_select %p362, %s15, 1
          %s364 = smul.addr %s363, 8
          %s365 = smul.addr %s364, 8
          %s366 = scalar_lea.vmem %s3, %s365
        $region67: #{ikd_forward.11} parent=62 // pred_fallthru
          _
      $region63: #{ikd_forward.11} parent=5 // pred_fallthru
        _
    $region6: #{ikd_forward.11} parent=1 // loop_footer
      %s13 = sadd.s32 1, %s9
    $region7: #{ikd_forward.11} parent=1 // loop_footer_branch
      %8 = sbr.rel target = $region3
    $region8: #{ikd_forward.11} parent=1 // loop_exit
      _

// kernel: ikd_forward.12
$region0: #{ikd_forward.12}
  #allocation0 [shape = 'u32[]', space=smem, size = 0x4, offset = 0x4, fixed_abs, tag = 'smem constant byte address 0x4 - core index']
  #allocation1 [shape = 'u32[144,128]{1,0:T(1,128)}', space=vmem, size = 0x12000, scoped, tag = 'internal scratch']
  %s0 = inlined_call_operand.vmem [shape: f32[2,8,8,128], index: 0, kind: input, shape index: {}]
  %s1 = inlined_call_operand.vmem [shape: f32[2,8,8], index: 1, kind: output, shape index: {}]
  %s2 = sld [smem:[#allocation0]]
  $region37: #{ikd_forward.12} parent=0
    _
  %s4 = ssub.s32 1, %s2
  %s5 = scalar_select 0, %s4, %s2
  loop: start=0, step=1, limit=4
  $region2: #{ikd_forward.12} parent=0 // loop_pre_header
    _
  $region3: #{ikd_forward.12} parent=0 // loop_header
    %s7 = sphi 0, %s11
    %p8 = scmp.ge.s32.totalorder %s7, 4
    %s17 = sphi 0, %s19
    %s20 = sphi 0, %s17
    %s21 = sphi 0, %s20
    %s37 = sphi 0, %s21
    %s43 = sphi 0, %s45
    %s46 = sphi 0, %s43
    %s47 = sphi 0, %s46
    %s63 = sphi 0, %s47
  $region4: #{ikd_forward.12} parent=0 // loop_header_branch
    %10 = sbr.rel (%p8) target = $region8
  $region5: #{ikd_forward.12} parent=0 // loop_body
    %s12 = ssub.s32 %s7, 1
    %s13 = ssub.s32 %s7, 2
    %s14 = sadd.s32 %s7, 1
    %s15 = ssub.s32 %s7, %s14
    %p16 = scmp.eq.s32.totalorder %s15, 0
    %s18 = sadd.s32 %s17, 1
    %s19 = scalar_select %p16, %s17, %s18
    %p22 = pneg %p16
    %p23 = scmp.eq.s32.totalorder %s7, 1
    %p24 = por %p22, %p23
    %p25 = scmp.ne.s32.totalorder %s17, %s20
    %p26 = scmp.eq.s32.totalorder %s7, 0
    %p27 = por %p25, %p26
    %p28 = scmp.ne.s32.totalorder %s17, %s20
    %p29 = scmp.eq.s32.totalorder %s12, 1
    %p30 = por %p28, %p29
    %p31 = scmp.ne.s32.totalorder %s20, %s21
    %p32 = scmp.eq.s32.totalorder %s12, 0
    %p33 = por %p31, %p32
    %p34 = scmp.ne.s32.totalorder %s20, %s21
    %p35 = scmp.eq.s32.totalorder %s13, 1
    %p36 = por %p34, %p35
    %p38 = scmp.ne.s32.totalorder %s21, %s37
    %p39 = scmp.eq.s32.totalorder %s13, 0
    %p40 = por %p38, %p39
    %s41 = ssub.s32 %s7, %s14
    %p42 = scmp.eq.s32.totalorder %s41, 0
    %s44 = sadd.s32 %s43, 1
    %s45 = scalar_select %p42, %s43, %s44
    %p48 = pneg %p42
    %p49 = scmp.eq.s32.totalorder %s7, 1
    %p50 = por %p48, %p49
    %p51 = scmp.ne.s32.totalorder %s43, %s46
    %p52 = scmp.eq.s32.totalorder %s7, 0
    %p53 = por %p51, %p52
    %p54 = scmp.ne.s32.totalorder %s43, %s46
    %p55 = scmp.eq.s32.totalorder %s12, 1
    %p56 = por %p54, %p55
    %p57 = scmp.ne.s32.totalorder %s46, %s47
    %p58 = scmp.eq.s32.totalorder %s12, 0
    %p59 = por %p57, %p58
    %p60 = scmp.ne.s32.totalorder %s46, %s47
    %p61 = scmp.eq.s32.totalorder %s13, 1
    %p62 = por %p60, %p61
    %p64 = scmp.ne.s32.totalorder %s47, %s63
    %p65 = scmp.eq.s32.totalorder %s13, 0
    %p66 = por %p64, %p65
    %p67 = scmp.le.s32.totalorder 1, %s7
    %p68 = scmp.lt.s32.totalorder %s7, 3
    %p69 = pnand %p67, %p68
    %p70 = pneg %p69
    // Predicated region
    $region9: #{ikd_forward.12} parent=5 // pred_check
      _
    $region10: #{ikd_forward.12} parent=5 // pred_check_branch
      %72 = sbr.rel (%p69) target = $region12
    $region11: #{ikd_forward.12} parent=5 // pred_region
      %s73 = ssub.s32 %s7, 1
    $region12: #{ikd_forward.12} parent=5 // pred_fallthru
      _
    %p74 = scmp.lt.s32.totalorder %s7, 2
    // Predicated region
    $region13: #{ikd_forward.12} parent=5 // pred_check
      %p75 = pneg %p74
    $region14: #{ikd_forward.12} parent=5 // pred_check_branch
      %77 = sbr.rel (%p75) target = $region16
    $region15: #{ikd_forward.12} parent=5 // pred_region
      // Predicated region
      $region17: #{ikd_forward.12} parent=15 // pred_check
        %p78 = pneg %p27
      $region18: #{ikd_forward.12} parent=15 // pred_check_branch
        %80 = sbr.rel (%p78) target = $region20
      $region19: #{ikd_forward.12} parent=15 // pred_region
        %p81 = scmp.lt.s32.totalorder %s7, 1
        %s82 = scalar_select %p81, %s7, 1
        %s83 = smul.addr %s82, 8
        %s84 = smul.addr %s83, 8
        %s85 = scalar_lea.vmem %s0, %s84
      $region20: #{ikd_forward.12} parent=15 // pred_fallthru
        _
    $region16: #{ikd_forward.12} parent=5 // pred_fallthru
      _
    %p86 = scmp.le.s32.totalorder 1, %s7
    %p87 = scmp.lt.s32.totalorder %s7, 3
    %p88 = pnand %p86, %p87
    %p89 = pneg %p88
    // Predicated region
    $region21: #{ikd_forward.12} parent=5 // pred_check
      _
    $region22: #{ikd_forward.12} parent=5 // pred_check_branch
      %91 = sbr.rel (%p88) target = $region24
    $region23: #{ikd_forward.12} parent=5 // pred_region
      %s92 = ssub.s32 %s7, 1
      %p93 = scmp.lt.s32.totalorder %s12, 1
      %s94 = scalar_select %p93, %s12, 1
      %s95 = smul.addr %s94, 8
      %s96 = smul.addr %s95, 8
      %s97 = scalar_lea.vmem %s0, %s96
      %p98 = pneg %p33
      %p99 = pneg %p30
      %p100 = pneg %p59
      %p101 = pneg %p56
      %p102 = scmp.lt.s32.totalorder %s12, 1
      %s103 = scalar_select %p102, %s12, 1
      %s104 = smul.addr %s103, 8
      %s105 = scalar_lea.vmem %s1, %s104
      %p106 = scmp.lt.s32.totalorder %s12, 1
      %s107 = scalar_select %p106, %s12, 1
      %s108 = smul.addr %s107, 8
      %s109 = smul.addr %s108, 8
      %s110 = scalar_lea.vmem %s0, %s109
      %p111 = scmp.lt.s32.totalorder %s12, 1
      %s112 = scalar_select %p111, %s12, 1
      %s113 = smul.addr %s112, 8
      %s114 = scalar_lea.vmem %s1, %s113
      %v115 = vld [vmem:[%s110] sm:$0xff]
      %v116 = vld [vmem:[%s110 + $0x8] sm:$0xff]
      %v117 = vld [vmem:[%s110 + $0x10] sm:$0xff]
      %v118 = vld [vmem:[%s110 + $0x18] sm:$0xff]
      %v119 = vld [vmem:[%s110 + $0x20] sm:$0xff]
      %v120 = vld [vmem:[%s110 + $0x28] sm:$0xff]
      %v121 = vld [vmem:[%s110 + $0x30] sm:$0xff]
      %v122 = vld [vmem:[%s110 + $0x38] sm:$0xff]
      %v123 = vadd.f32 %v115, 0.0
      %v124 = vadd.f32 %v115, %v116
      %v125 = vadd.f32 %v116, %v117
      %v126 = vadd.f32 %v117, %v118
      %v127 = vadd.f32 %v118, %v119
      %v128 = vadd.f32 %v119, %v120
      %v129 = vadd.f32 %v120, %v121
      %v130 = vadd.f32 %v121, %v122
      %v131 = vadd.f32 %v123, %v116
      %v132 = vadd.f32 %v124, %v117
      %v133 = vadd.f32 %v125, %v118
      %v134 = vadd.f32 %v126, %v119
      %v135 = vadd.f32 %v127, %v120
      %v136 = vadd.f32 %v128, %v121
      %v137 = vadd.f32 %v129, %v122
      %v138 = vadd.f32 %v130, 0.0
      %v147 = vrot.slane %v131, 7
      %v148 = vrot.slane %v132, 7
      %v149 = vrot.slane %v133, 7
      %v150 = vrot.slane %v134, 7
      %v151 = vrot.slane %v135, 7
      %v152 = vrot.slane %v136, 7
      %v153 = vrot.slane %v137, 7
      %v154 = vrot.slane %v138, 7
      %vm163 = vcmask 1040384
      %v164 = vsel %vm163, 0.0, %v147
      %v165 = vsel %vm163, 0.0, %v148
      %v166 = vsel %vm163, 0.0, %v149
      %v167 = vsel %vm163, 0.0, %v150
      %v168 = vsel %vm163, 0.0, %v151
      %v169 = vsel %vm163, 0.0, %v152
      %v170 = vsel %vm163, 0.0, %v153
      %v171 = vsel %vm163, 0.0, %v154
      %v172 = vsel %vm163, %v147, 0.0
      %v173 = vsel %vm163, %v148, 0.0
      %v174 = vsel %vm163, %v149, 0.0
      %v175 = vsel %vm163, %v150, 0.0
      %v176 = vsel %vm163, %v151, 0.0
      %v177 = vsel %vm163, %v152, 0.0
      %v178 = vsel %vm163, %v153, 0.0
      %v179 = vsel %vm163, %v154, 0.0
      %vm196 = vcmask 1046528
      %v197 = vrot.slane %v164, 1
      %v198 = vrot.slane %v172, 1
      %v199 = vsel %vm196, %v197, %v198
      %v200 = vrot.slane %v165, 1
      %v201 = vrot.slane %v173, 1
      %v202 = vsel %vm196, %v200, %v201
      %v203 = vrot.slane %v166, 1
      %v204 = vrot.slane %v174, 1
      %v205 = vsel %vm196, %v203, %v204
      %v206 = vrot.slane %v167, 1
      %v207 = vrot.slane %v175, 1
      %v208 = vsel %vm196, %v206, %v207
      %v209 = vrot.slane %v168, 1
      %v210 = vrot.slane %v176, 1
      %v211 = vsel %vm196, %v209, %v210
      %v212 = vrot.slane %v169, 1
      %v213 = vrot.slane %v177, 1
      %v214 = vsel %vm196, %v212, %v213
      %v215 = vrot.slane %v170, 1
      %v216 = vrot.slane %v178, 1
      %v217 = vsel %vm196, %v215, %v216
      %v218 = vrot.slane %v171, 1
      %v219 = vrot.slane %v179, 1
      %v220 = vsel %vm196, %v218, %v219
      %v229 = vadd.f32 %v164, %v199
      %v230 = vadd.f32 %v165, %v202
      %v231 = vadd.f32 %v166, %v205
      %v232 = vadd.f32 %v167, %v208
      %v233 = vadd.f32 %v168, %v211
      %v234 = vadd.f32 %v169, %v214
      %v235 = vadd.f32 %v170, %v217
      %v236 = vadd.f32 %v171, %v220
      %vm237 = vcmask 1045504
      %v238 = vrot.slane %v164, 2
      %v239 = vrot.slane %v172, 2
      %v240 = vsel %vm237, %v238, %v239
      %v241 = vrot.slane %v165, 2
      %v242 = vrot.slane %v173, 2
      %v243 = vsel %vm237, %v241, %v242
      %v244 = vrot.slane %v166, 2
      %v245 = vrot.slane %v174, 2
      %v246 = vsel %vm237, %v244, %v245
      %v247 = vrot.slane %v167, 2
      %v248 = vrot.slane %v175, 2
      %v249 = vsel %vm237, %v247, %v248
      %v250 = vrot.slane %v168, 2
      %v251 = vrot.slane %v176, 2
      %v252 = vsel %vm237, %v250, %v251
      %v253 = vrot.slane %v169, 2
      %v254 = vrot.slane %v177, 2
      %v255 = vsel %vm237, %v253, %v254
      %v256 = vrot.slane %v170, 2
      %v257 = vrot.slane %v178, 2
      %v258 = vsel %vm237, %v256, %v257
      %v259 = vrot.slane %v171, 2
      %v260 = vrot.slane %v179, 2
      %v261 = vsel %vm237, %v259, %v260
      %v270 = vadd.f32 %v229, %v240
      %v271 = vadd.f32 %v230, %v243
      %v272 = vadd.f32 %v231, %v246
      %v273 = vadd.f32 %v232, %v249
      %v274 = vadd.f32 %v233, %v252
      %v275 = vadd.f32 %v234, %v255
      %v276 = vadd.f32 %v235, %v258
      %v277 = vadd.f32 %v236, %v261
      %v278 = vmul.f32 %v270, 0.11111111
      %v279 = vmul.f32 %v271, 0.11111111
      %v280 = vmul.f32 %v272, 0.11111111
      %v281 = vmul.f32 %v273, 0.11111111
      %v282 = vmul.f32 %v274, 0.11111111
      %v283 = vmul.f32 %v275, 0.11111111
      %v284 = vmul.f32 %v276, 0.11111111
      %v285 = vmul.f32 %v277, 0.11111111
      %v286 = vmul.f32 %v278, %v278
      %v287 = vmul.f32 %v279, %v279
      %v288 = vmul.f32 %v280, %v280
      %v289 = vmul.f32 %v281, %v281
      %v290 = vmul.f32 %v282, %v282
      %v291 = vmul.f32 %v283, %v283
      %v292 = vmul.f32 %v284, %v284
      %v293 = vmul.f32 %v285, %v285
      %vm294 = vcmask 523264
      %v295 = vsel %vm294, %v286, 0.0
      %296 = vadd.xlane.f32.xlu0 %v295
      %v297 = vpop.xlane.xlu0 %296
      %v298 = vsel %vm294, %v287, 0.0
      %299 = vadd.xlane.f32.xlu0 %v298
      %v300 = vpop.xlane.xlu0 %299
      %v301 = vsel %vm294, %v288, 0.0
      %302 = vadd.xlane.f32.xlu0 %v301
      %v303 = vpop.xlane.xlu0 %302
      %v304 = vsel %vm294, %v289, 0.0
      %305 = vadd.xlane.f32.xlu0 %v304
      %v306 = vpop.xlane.xlu0 %305
      %v307 = vsel %vm294, %v290, 0.0
      %308 = vadd.xlane.f32.xlu0 %v307
      %v309 = vpop.xlane.xlu0 %308
      %v310 = vsel %vm294, %v291, 0.0
      %311 = vadd.xlane.f32.xlu0 %v310
      %v312 = vpop.xlane.xlu0 %311
      %v313 = vsel %vm294, %v292, 0.0
      %314 = vadd.xlane.f32.xlu0 %v313
      %v315 = vpop.xlane.xlu0 %314
      %v316 = vsel %vm294, %v293, 0.0
      %317 = vadd.xlane.f32.xlu0 %v316
      %v318 = vpop.xlane.xlu0 %317
      %v319 = vmax.f32 %v297, 1e-24
      %v320 = vmax.f32 %v300, 1e-24
      %v321 = vmax.f32 %v303, 1e-24
      %v322 = vmax.f32 %v306, 1e-24
      %v323 = vmax.f32 %v309, 1e-24
      %v324 = vmax.f32 %v312, 1e-24
      %v325 = vmax.f32 %v315, 1e-24
      %v326 = vmax.f32 %v318, 1e-24
      %v327 = vrsqrt.pop %v319
      %v328 = vrsqrt.pop %v320
      %v329 = vrsqrt.pop %v321
      %v330 = vrsqrt.pop %v322
      %v331 = vrsqrt.pop %v323
      %v332 = vrsqrt.pop %v324
      %v333 = vrsqrt.pop %v325
      %v334 = vrsqrt.pop %v326
      %v335 = vmul.f32 %v278, %v327
      %v336 = vmul.f32 %v279, %v328
      %v337 = vmul.f32 %v280, %v329
      %v338 = vmul.f32 %v281, %v330
      %v339 = vmul.f32 %v282, %v331
      %v340 = vmul.f32 %v283, %v332
      %v341 = vmul.f32 %v284, %v333
      %v342 = vmul.f32 %v285, %v334
      %351 = vrot.lane.b32.xlu0 %v286, 64
      %v352 = vpop.permute.xlu0 %351
      %353 = vrot.lane.b32.xlu0 %v287, 64
      %v354 = vpop.permute.xlu0 %353
      %355 = vrot.lane.b32.xlu0 %v288, 64
      %v356 = vpop.permute.xlu0 %355
      %357 = vrot.lane.b32.xlu0 %v289, 64
      %v358 = vpop.permute.xlu0 %357
      %359 = vrot.lane.b32.xlu0 %v290, 64
      %v360 = vpop.permute.xlu0 %359
      %361 = vrot.lane.b32.xlu0 %v291, 64
      %v362 = vpop.permute.xlu0 %361
      %363 = vrot.lane.b32.xlu0 %v292, 64
      %v364 = vpop.permute.xlu0 %363
      %365 = vrot.lane.b32.xlu0 %v293, 64
      %v366 = vpop.permute.xlu0 %365
      %v375 = vsel %vm294, %v352, 0.0
      %376 = vadd.xlane.f32.xlu0 %v375
      %v377 = vpop.xlane.xlu0 %376
      %v378 = vsel %vm294, %v354, 0.0
      %379 = vadd.xlane.f32.xlu0 %v378
      %v380 = vpop.xlane.xlu0 %379
      %v381 = vsel %vm294, %v356, 0.0
      %382 = vadd.xlane.f32.xlu0 %v381
      %v383 = vpop.xlane.xlu0 %382
      %v384 = vsel %vm294, %v358, 0.0
      %385 = vadd.xlane.f32.xlu0 %v384
      %v386 = vpop.xlane.xlu0 %385
      %v387 = vsel %vm294, %v360, 0.0
      %388 = vadd.xlane.f32.xlu0 %v387
      %v389 = vpop.xlane.xlu0 %388
      %v390 = vsel %vm294, %v362, 0.0
      %391 = vadd.xlane.f32.xlu0 %v390
      %v392 = vpop.xlane.xlu0 %391
      %v393 = vsel %vm294, %v364, 0.0
      %394 = vadd.xlane.f32.xlu0 %v393
      %v395 = vpop.xlane.xlu0 %394
      %v396 = vsel %vm294, %v366, 0.0
      %397 = vadd.xlane.f32.xlu0 %v396
      %v398 = vpop.xlane.xlu0 %397
      %v399 = vmax.f32 %v377, 1e-24
      %v400 = vmax.f32 %v380, 1e-24
      %v401 = vmax.f32 %v383, 1e-24
      %v402 = vmax.f32 %v386, 1e-24
      %v403 = vmax.f32 %v389, 1e-24
      %v404 = vmax.f32 %v392, 1e-24
      %v405 = vmax.f32 %v395, 1e-24
      %v406 = vmax.f32 %v398, 1e-24
      %v407 = vrsqrt.pop %v399
      %v408 = vrsqrt.pop %v400
      %v409 = vrsqrt.pop %v401
      %v410 = vrsqrt.pop %v402
      %v411 = vrsqrt.pop %v403
      %v412 = vrsqrt.pop %v404
      %v413 = vrsqrt.pop %v405
      %v414 = vrsqrt.pop %v406
      %v415 = vmul.f32 %v278, %v407
      %v416 = vmul.f32 %v279, %v408
      %v417 = vmul.f32 %v280, %v409
      %v418 = vmul.f32 %v281, %v410
      %v419 = vmul.f32 %v282, %v411
      %v420 = vmul.f32 %v283, %v412
      %v421 = vmul.f32 %v284, %v413
      %v422 = vmul.f32 %v285, %v414
      %431 = vrot.lane.b32.xlu0 %v415, 64
      %v432 = vpop.permute.xlu0 %431
      %433 = vrot.lane.b32.xlu0 %v416, 64
      %v434 = vpop.permute.xlu0 %433
      %435 = vrot.lane.b32.xlu0 %v417, 64
      %v436 = vpop.permute.xlu0 %435
      %437 = vrot.lane.b32.xlu0 %v418, 64
      %v438 = vpop.permute.xlu0 %437
      %439 = vrot.lane.b32.xlu0 %v419, 64
      %v440 = vpop.permute.xlu0 %439
      %441 = vrot.lane.b32.xlu0 %v420, 64
      %v442 = vpop.permute.xlu0 %441
      %443 = vrot.lane.b32.xlu0 %v421, 64
      %v444 = vpop.permute.xlu0 %443
      %445 = vrot.lane.b32.xlu0 %v422, 64
      %v446 = vpop.permute.xlu0 %445
      %v455 = vsub.f32 %v335, %v432
      %v456 = vsub.f32 %v336, %v434
      %v457 = vsub.f32 %v337, %v436
      %v458 = vsub.f32 %v338, %v438
      %v459 = vsub.f32 %v339, %v440
      %v460 = vsub.f32 %v340, %v442
      %v461 = vsub.f32 %v341, %v444
      %v462 = vsub.f32 %v342, %v446
      %v463 = vmul.f32 %v455, %v455
      %v464 = vmul.f32 %v456, %v456
      %v465 = vmul.f32 %v457, %v457
      %v466 = vmul.f32 %v458, %v458
      %v467 = vmul.f32 %v459, %v459
      %v468 = vmul.f32 %v460, %v460
      %v469 = vmul.f32 %v461, %v461
      %v470 = vmul.f32 %v462, %v462
      %v471 = vsel %vm294, %v463, 0.0
      %472 = vadd.xlane.f32.xlu0 %v471
      %v473 = vpop.xlane.xlu0 %472
      %v474 = vsel %vm294, %v464, 0.0
      %475 = vadd.xlane.f32.xlu0 %v474
      %v476 = vpop.xlane.xlu0 %475
      %v477 = vsel %vm294, %v465, 0.0
      %478 = vadd.xlane.f32.xlu0 %v477
      %v479 = vpop.xlane.xlu0 %478
      %v480 = vsel %vm294, %v466, 0.0
      %481 = vadd.xlane.f32.xlu0 %v480
      %v482 = vpop.xlane.xlu0 %481
      %v483 = vsel %vm294, %v467, 0.0
      %484 = vadd.xlane.f32.xlu0 %v483
      %v485 = vpop.xlane.xlu0 %484
      %v486 = vsel %vm294, %v468, 0.0
      %487 = vadd.xlane.f32.xlu0 %v486
      %v488 = vpop.xlane.xlu0 %487
      %v489 = vsel %vm294, %v469, 0.0
      %490 = vadd.xlane.f32.xlu0 %v489
      %v491 = vpop.xlane.xlu0 %490
      %v492 = vsel %vm294, %v470, 0.0
      %493 = vadd.xlane.f32.xlu0 %v492
      %v494 = vpop.xlane.xlu0 %493
      %v495 = vmul.f32 %v473, 0.5
      %v496 = vmul.f32 %v476, 0.5
      %v497 = vmul.f32 %v479, 0.5
      %v498 = vmul.f32 %v482, 0.5
      %v499 = vmul.f32 %v485, 0.5
      %v500 = vmul.f32 %v488, 0.5
      %v501 = vmul.f32 %v491, 0.5
      %v502 = vmul.f32 %v494, 0.5
      %v511 = vlaneseq
      %v512 = vand.u32 %v511, 127
      %v513 = vlaneseq
      %v514 = vshrl.u32 %v513, 7
      %v515 = vsub.s32 %v512, %v514
      %v516 = vrot.slane %v495, %v515
      %v517 = vlaneseq
      %v518 = vshrl.u32 %v517, 7
      %v519 = vsub.s32 %v512, %v518
      %v520 = vrot.slane %v496, %v519
      %v521 = vlaneseq
      %v522 = vshrl.u32 %v521, 7
      %v523 = vsub.s32 %v512, %v522
      %v524 = vrot.slane %v497, %v523
      %v525 = vlaneseq
      %v526 = vshrl.u32 %v525, 7
      %v527 = vsub.s32 %v512, %v526
      %v528 = vrot.slane %v498, %v527
      %v529 = vlaneseq
      %v530 = vshrl.u32 %v529, 7
      %v531 = vsub.s32 %v512, %v530
      %v532 = vrot.slane %v499, %v531
      %v533 = vlaneseq
      %v534 = vshrl.u32 %v533, 7
      %v535 = vsub.s32 %v512, %v534
      %v536 = vrot.slane %v500, %v535
      %v537 = vlaneseq
      %v538 = vshrl.u32 %v537, 7
      %v539 = vsub.s32 %v512, %v538
      %v540 = vrot.slane %v501, %v539
      %v541 = vlaneseq
      %v542 = vshrl.u32 %v541, 7
      %v543 = vsub.s32 %v512, %v542
      %v544 = vrot.slane %v502, %v543
      %vm545 = vcmask 1041409
      %v546 = vsel %vm545, %v520, %v516
      %vm547 = vcmask 1042434
      %v548 = vsel %vm547, %v524, %v546
      %vm549 = vcmask 1043459
      %v550 = vsel %vm549, %v528, %v548
      %vm551 = vcmask 1044484
      %v552 = vsel %vm551, %v532, %v550
      %vm553 = vcmask 1045509
      %v554 = vsel %vm553, %v536, %v552
      %vm555 = vcmask 1046534
      %v556 = vsel %vm555, %v540, %v554
      %vm557 = vcmask 1047559
      %v558 = vsel %vm557, %v544, %v556
      %vm560 = vcmask 64512
      %561 = vst.msk [vmem:[%s114] sm:$0xff] %vm560, %v558
      %p562 = scmp.lt.s32.totalorder %s12, 1
      %s563 = scalar_select %p562, %s12, 1
      %s564 = smul.addr %s563, 8
      %s565 = scalar_lea.vmem %s1, %s564
      // Predicated region
      $region25: #{ikd_forward.12} parent=23 // pred_check
        %p566 = pneg %p56
      $region26: #{ikd_forward.12} parent=23 // pred_check_branch
        %568 = sbr.rel (%p566) target = $region28
      $region27: #{ikd_forward.12} parent=23 // pred_region
        _
      $region28: #{ikd_forward.12} parent=23 // pred_fallthru
        _
    $region24: #{ikd_forward.12} parent=5 // pred_fallthru
      _
    %p569 = scmp.le.s32.totalorder 2, %s7
    // Predicated region
    $region29: #{ikd_forward.12} parent=5 // pred_check
      %p570 = pneg %p569
    $region30: #{ikd_forward.12} parent=5 // pred_check_branch
      %572 = sbr.rel (%p570) target = $region32
    $region31: #{ikd_forward.12} parent=5 // pred_region
      %s573 = ssub.s32 %s7, 2
      // Predicated region
      $region33: #{ikd_forward.12} parent=31 // pred_check
        %p574 = pneg %p62
      $region34: #{ikd_forward.12} parent=31 // pred_check_branch
        %576 = sbr.rel (%p574) target = $region36
      $region35: #{ikd_forward.12} parent=31 // pred_region
        %p577 = scmp.lt.s32.totalorder %s13, 1
        %s578 = scalar_select %p577, %s13, 1
        %s579 = smul.addr %s578, 8
        %s580 = scalar_lea.vmem %s1, %s579
      $region36: #{ikd_forward.12} parent=31 // pred_fallthru
        _
    $region32: #{ikd_forward.12} parent=5 // pred_fallthru
      _
  $region6: #{ikd_forward.12} parent=0 // loop_footer
    %s11 = sadd.s32 1, %s7
  $region7: #{ikd_forward.12} parent=0 // loop_footer_branch
    %6 = sbr.rel target = $region3
  $region8: #{ikd_forward.12} parent=0 // loop_exit
    _

// kernel: ikd_forward.13
$region0: #{ikd_forward.13}
  #allocation0 [shape = 'u32[]', space=smem, size = 0x4, offset = 0x4, fixed_abs, tag = 'smem constant byte address 0x4 - core index']
  #allocation1 [shape = 'u32[144,128]{1,0:T(1,128)}', space=vmem, size = 0x12000, scoped, tag = 'internal scratch']
  %s0 = inlined_call_operand.vmem [shape: f32[2,4096], index: 0, kind: input, shape index: {}]
  %s1 = inlined_call_operand.vmem [shape: f32[2,4096], index: 1, kind: input, shape index: {}]
  %s2 = inlined_call_operand.vmem [shape: f32[2,4096], index: 2, kind: input, shape index: {}]
  %s3 = inlined_call_operand.vmem [shape: f32[2,4096], index: 3, kind: output, shape index: {}]
  %s4 = sld [smem:[#allocation0]]
  $region22: #{ikd_forward.13} parent=0
    _
  %s6 = ssub.s32 1, %s4
  %s7 = scalar_select 0, %s6, %s4
  // Predicated region
  $region2: #{ikd_forward.13} parent=0 // pred_check
    _
  $region3: #{ikd_forward.13} parent=0 // pred_check_branch
    %9 = sbr.rel (0) target = $region5
  $region4: #{ikd_forward.13} parent=0 // pred_region
    _
  $region5: #{ikd_forward.13} parent=0 // pred_fallthru
    _
  // Predicated region
  $region6: #{ikd_forward.13} parent=0 // pred_check
    _
  $region7: #{ikd_forward.13} parent=0 // pred_check_branch
    %11 = sbr.rel (0) target = $region9
  $region8: #{ikd_forward.13} parent=0 // pred_region
    _
  $region9: #{ikd_forward.13} parent=0 // pred_fallthru
    _
  // Predicated region
  $region10: #{ikd_forward.13} parent=0 // pred_check
    _
  $region11: #{ikd_forward.13} parent=0 // pred_check_branch
    %13 = sbr.rel (0) target = $region13
  $region12: #{ikd_forward.13} parent=0 // pred_region
    _
  $region13: #{ikd_forward.13} parent=0 // pred_fallthru
    _
  %v14 = vld [vmem:[%s0] sm:$0xff]
  %v15 = vld [vmem:[%s0 + $0x8] sm:$0xff]
  %v16 = vld [vmem:[%s0 + $0x10] sm:$0xff]
  %v17 = vld [vmem:[%s0 + $0x18] sm:$0xff]
  %v18 = vld [vmem:[%s0 + $0x20] sm:$0xff]
  %v19 = vld [vmem:[%s0 + $0x28] sm:$0xff]
  %v20 = vld [vmem:[%s0 + $0x30] sm:$0xff]
  %v21 = vld [vmem:[%s0 + $0x38] sm:$0xff]
  %v22 = vld [vmem:[%s1] sm:$0xff]
  %v23 = vld [vmem:[%s1 + $0x8] sm:$0xff]
  %v24 = vld [vmem:[%s1 + $0x10] sm:$0xff]
  %v25 = vld [vmem:[%s1 + $0x18] sm:$0xff]
  %v26 = vld [vmem:[%s1 + $0x20] sm:$0xff]
  %v27 = vld [vmem:[%s1 + $0x28] sm:$0xff]
  %v28 = vld [vmem:[%s1 + $0x30] sm:$0xff]
  %v29 = vld [vmem:[%s1 + $0x38] sm:$0xff]
  %v30 = vmul.f32 %v14, %v22
  %v31 = vmul.f32 %v15, %v23
  %v32 = vmul.f32 %v16, %v24
  %v33 = vmul.f32 %v17, %v25
  %v34 = vmul.f32 %v18, %v26
  %v35 = vmul.f32 %v19, %v27
  %v36 = vmul.f32 %v20, %v28
  %v37 = vmul.f32 %v21, %v29
  %v38 = vld [vmem:[%s2] sm:$0xff]
  %v39 = vld [vmem:[%s2 + $0x8] sm:$0xff]
  %v40 = vld [vmem:[%s2 + $0x10] sm:$0xff]
  %v41 = vld [vmem:[%s2 + $0x18] sm:$0xff]
  %v42 = vld [vmem:[%s2 + $0x20] sm:$0xff]
  %v43 = vld [vmem:[%s2 + $0x28] sm:$0xff]
  %v44 = vld [vmem:[%s2 + $0x30] sm:$0xff]
  %v45 = vld [vmem:[%s2 + $0x38] sm:$0xff]
  %v46 = vmul.f32 %v30, %v38
  %v47 = vmul.f32 %v31, %v39
  %v48 = vmul.f32 %v32, %v40
  %v49 = vmul.f32 %v33, %v41
  %v50 = vmul.f32 %v34, %v42
  %v51 = vmul.f32 %v35, %v43
  %v52 = vmul.f32 %v36, %v44
  %v53 = vmul.f32 %v37, %v45
  %54 = vst [vmem:[%s3] sm:$0xff] %v46
  %55 = vst [vmem:[%s3 + $0x8] sm:$0xff] %v47
  %56 = vst [vmem:[%s3 + $0x10] sm:$0xff] %v48
  %57 = vst [vmem:[%s3 + $0x18] sm:$0xff] %v49
  %58 = vst [vmem:[%s3 + $0x20] sm:$0xff] %v50
  %59 = vst [vmem:[%s3 + $0x28] sm:$0xff] %v51
  %60 = vst [vmem:[%s3 + $0x30] sm:$0xff] %v52
  %61 = vst [vmem:[%s3 + $0x38] sm:$0xff] %v53
  // Predicated region
  $region14: #{ikd_forward.13} parent=0 // pred_check
    _
  $region15: #{ikd_forward.13} parent=0 // pred_check_branch
    %63 = sbr.rel (0) target = $region17
  $region16: #{ikd_forward.13} parent=0 // pred_region
    _
  $region17: #{ikd_forward.13} parent=0 // pred_fallthru
    _
  // Predicated region
  $region18: #{ikd_forward.13} parent=0 // pred_check
    _
  $region19: #{ikd_forward.13} parent=0 // pred_check_branch
    %65 = sbr.rel (0) target = $region21
  $region20: #{ikd_forward.13} parent=0 // pred_region
    _
  $region21: #{ikd_forward.13} parent=0 // pred_fallthru
    _

</llo_original>
